<compile_context>
chip_gen: v7x
topology: tpu7x:2x2x1
jax: 0.10.0
libtpu: 0.0.40
codegen_flags: <defaults>
</compile_context>

<pallas_src>
from functools import partial

import jax
import jax.numpy as jnp
from jax.experimental import pallas as pl
from jax.experimental.pallas import tpu as pltpu

LANE = 128
EPS = 1e-5
VMEM_LIMIT = 32 * 1024 * 1024


def _round_up(n, m):
    return ((n + m - 1) // m) * m


def _pick_tile(m, cap=512):
    """Largest row-tile <= cap that divides m (multiple of 8 if tiled)."""
    if m <= cap:
        return m
    for t in range(cap, 7, -1):
        if m % t == 0 and t % 8 == 0:
            return t
    return m


def _cparams(n_axes):
    # All axes "arbitrary": the M/batch axis carries the BN batch-stats
    # reduction via shared VMEM scratch, so it must stay on one core.
    return pltpu.CompilerParams(
        dimension_semantics=("arbitrary",) * n_axes,
        vmem_limit_bytes=VMEM_LIMIT)


# ----------------------------------------------------------------------------
# Kernel 1: 1x1 conv (matmul) + BN(batch stats) + optional ReLU, two-phase grid
# ----------------------------------------------------------------------------
def _mm_bn_kernel(x_ref, w_ref, g_ref, b_ref, o_ref, sum_ref, ssq_ref,
                  *, m_total, eps, relu):
    p = pl.program_id(0)   # phase: 0 = stats, 1 = apply
    i = pl.program_id(1)   # M tile

    @pl.when((p == 0) & (i == 0))
    def _():
        sum_ref[...] = jnp.zeros_like(sum_ref)
        ssq_ref[...] = jnp.zeros_like(ssq_ref)

    # bf16 x bf16 -> f32 on the MXU
    y = jnp.dot(x_ref[...], w_ref[...], preferred_element_type=jnp.float32)

    @pl.when(p == 0)
    def _():
        sum_ref[...] += jnp.sum(y, axis=0, keepdims=True)
        ssq_ref[...] += jnp.sum(y * y, axis=0, keepdims=True)

    @pl.when(p == 1)
    def _():
        inv_m = 1.0 / m_total
        mean = sum_ref[...] * inv_m
        # f32 accumulators; clamp guards the E[x^2]-E[x]^2 form against tiny
        # negative round-off.
        var = jnp.maximum(ssq_ref[...] * inv_m - mean * mean, 0.0)
        scale = jax.lax.rsqrt(var + eps) * g_ref[...]
        out = (y - mean) * scale + b_ref[...]
        if relu:
            out = jnp.maximum(out, 0.0)
        o_ref[...] = out.astype(o_ref.dtype)


def fused_matmul_bn(x, w, gamma, beta, *, relu=True, eps=EPS):
    """(M, K) @ (K, C) + BatchNorm(batch stats) + optional ReLU, one kernel."""
    M, K = x.shape
    _, C = w.shape
    tm = _pick_tile(M)
    mt = M // tm
    kernel = partial(_mm_bn_kernel, m_total=float(M), eps=eps, relu=relu)
    return pl.pallas_call(
        kernel,
        out_shape=jax.ShapeDtypeStruct((M, C), jnp.bfloat16),
        grid=(2, mt),
        in_specs=[
            pl.BlockSpec((tm, K), lambda p, i: (i, 0)),
            pl.BlockSpec((K, C), lambda p, i: (0, 0)),
            pl.BlockSpec((1, C), lambda p, i: (0, 0)),
            pl.BlockSpec((1, C), lambda p, i: (0, 0)),
        ],
        # Phase 0 never writes: park the output window on block 0 so only the
        # data written in phase 1 ever reaches HBM (single writeback per block).
        out_specs=pl.BlockSpec((tm, C), lambda p, i: (i * p, 0)),
        scratch_shapes=[pltpu.VMEM((1, C), jnp.float32),
                        pltpu.VMEM((1, C), jnp.float32)],
        compiler_params=_cparams(2),
    )(x, w, gamma, beta)


# ----------------------------------------------------------------------------
# Kernel 2: kxk conv (stride s) + BN + ReLU — shifted-window matmuls, no im2col
# ----------------------------------------------------------------------------
def _conv2_bn_kernel(xsub_ref, w_ref, g_ref, b_ref, o_ref, sum_ref, ssq_ref,
                     *, k, s, ho, wo, m_total, eps):
    p = pl.program_id(0)   # phase
    n = pl.program_id(1)   # batch element

    @pl.when((p == 0) & (n == 0))
    def _():
        sum_ref[...] = jnp.zeros_like(sum_ref)
        ssq_ref[...] = jnp.zeros_like(ssq_ref)

    cm = w_ref.shape[2]
    acc = jnp.zeros((ho * wo, cm), jnp.float32)
    # k*k taps, each a contiguous (ho, wo) window of one stride-phase subsample;
    # all slices are static, all inputs stay in VMEM.
    for di in range(k):
        for dj in range(k):
            sub = (di % s) * s + (dj % s)
            dh, dw = di // s, dj // s
            patch = xsub_ref[sub, dh:dh + ho, dw:dw + wo, :]
            patch = patch.reshape(ho * wo, cm)
            acc = acc + jnp.dot(patch, w_ref[di * k + dj],
                                preferred_element_type=jnp.float32)

    @pl.when(p == 0)
    def _():
        sum_ref[...] += jnp.sum(acc, axis=0, keepdims=True)
        ssq_ref[...] += jnp.sum(acc * acc, axis=0, keepdims=True)

    @pl.when(p == 1)
    def _():
        inv_m = 1.0 / m_total
        mean = sum_ref[...] * inv_m
        var = jnp.maximum(ssq_ref[...] * inv_m - mean * mean, 0.0)
        scale = jax.lax.rsqrt(var + eps) * g_ref[...]
        out = jnp.maximum((acc - mean) * scale + b_ref[...], 0.0)
        o_ref[...] = out.astype(o_ref.dtype)


def fused_conv_kxk_bn(x, w2, gamma, beta, k, s, *, eps=EPS):
    """kxk conv (stride s, padding k//2) + BN + ReLU.

    x: (N, H, W, C) bf16, C multiple of 128.  w2: (k*k, C, C) bf16, taps in
    (kh, kw) order.  Returns ((N*Ho*Wo, C) bf16, Ho, Wo).
    """
    N, H, W, C = x.shape
    pad = k // 2
    Ho = (H + 2 * pad - k) // s + 1
    Wo = (W + 2 * pad - k) // s + 1
    hs_req = (k - 1) // s + Ho
    ws_req = (k - 1) // s + Wo
    Hp = _round_up(max(H + 2 * pad, s * hs_req), s)
    Wp = _round_up(max(W + 2 * pad, s * ws_req), s)
    xp = jnp.pad(x, ((0, 0), (pad, Hp - H - pad), (pad, Wp - W - pad), (0, 0)))

    # Stride-phase subsampling: a pure re-arrangement of the activation
    # (~1x traffic) instead of a k*k-inflated im2col buffer in HBM.
    subs = jnp.stack([xp[:, a::s, b::s, :] for a in range(s) for b in range(s)],
                     axis=1)                                # (N, s*s, Hs, Ws, C)
    Hs, Ws = Hp // s, Wp // s
    subs = subs.reshape(N * s * s, Hs, Ws, C)

    M = N * Ho * Wo
    kernel = partial(_conv2_bn_kernel, k=k, s=s, ho=Ho, wo=Wo,
                     m_total=float(M), eps=eps)
    out = pl.pallas_call(
        kernel,
        out_shape=jax.ShapeDtypeStruct((M, C), jnp.bfloat16),
        grid=(2, N),
        in_specs=[
            pl.BlockSpec((s * s, Hs, Ws, C), lambda p, n: (n, 0, 0, 0)),
            pl.BlockSpec((k * k, C, C), lambda p, n: (0, 0, 0)),
            pl.BlockSpec((1, C), lambda p, n: (0, 0)),
            pl.BlockSpec((1, C), lambda p, n: (0, 0)),
        ],
        out_specs=pl.BlockSpec((Ho * Wo, C), lambda p, n: (n * p, 0)),
        scratch_shapes=[pltpu.VMEM((1, C), jnp.float32),
                        pltpu.VMEM((1, C), jnp.float32)],
        compiler_params=_cparams(2),
    )(subs, w2, gamma, beta)
    return out, Ho, Wo


# ----------------------------------------------------------------------------
# Kernel 3: conv3(1x1) + bn3 + shortcut(conv1x1+bn | identity) + add + ReLU
# ----------------------------------------------------------------------------
def _out_proj_kernel(y2_ref, w3_ref, g3_ref, b3_ref,
                     xs_ref, ws_ref, gs_ref, bs_ref, o_ref,
                     s3_ref, q3_ref, ss_ref, qs_ref, *, m_total, eps):
    p = pl.program_id(0)
    i = pl.program_id(1)

    @pl.when((p == 0) & (i == 0))
    def _():
        s3_ref[...] = jnp.zeros_like(s3_ref)
        q3_ref[...] = jnp.zeros_like(q3_ref)
        ss_ref[...] = jnp.zeros_like(ss_ref)
        qs_ref[...] = jnp.zeros_like(qs_ref)

    y3 = jnp.dot(y2_ref[...], w3_ref[...], preferred_element_type=jnp.float32)
    ys = jnp.dot(xs_ref[...], ws_ref[...], preferred_element_type=jnp.float32)

    @pl.when(p == 0)
    def _():
        s3_ref[...] += jnp.sum(y3, axis=0, keepdims=True)
        q3_ref[...] += jnp.sum(y3 * y3, axis=0, keepdims=True)
        ss_ref[...] += jnp.sum(ys, axis=0, keepdims=True)
        qs_ref[...] += jnp.sum(ys * ys, axis=0, keepdims=True)

    @pl.when(p == 1)
    def _():
        inv_m = 1.0 / m_total
        m3 = s3_ref[...] * inv_m
        v3 = jnp.maximum(q3_ref[...] * inv_m - m3 * m3, 0.0)
        main = (y3 - m3) * (jax.lax.rsqrt(v3 + eps) * g3_ref[...]) + b3_ref[...]
        ms = ss_ref[...] * inv_m
        vs = jnp.maximum(qs_ref[...] * inv_m - ms * ms, 0.0)
        sc = (ys - ms) * (jax.lax.rsqrt(vs + eps) * gs_ref[...]) + bs_ref[...]
        o_ref[...] = jnp.maximum(main + sc, 0.0).astype(o_ref.dtype)


def _out_id_kernel(y2_ref, w3_ref, g3_ref, b3_ref, xid_ref, o_ref,
                   s3_ref, q3_ref, *, m_total, eps):
    p = pl.program_id(0)
    i = pl.program_id(1)

    @pl.when((p == 0) & (i == 0))
    def _():
        s3_ref[...] = jnp.zeros_like(s3_ref)
        q3_ref[...] = jnp.zeros_like(q3_ref)

    y3 = jnp.dot(y2_ref[...], w3_ref[...], preferred_element_type=jnp.float32)

    @pl.when(p == 0)
    def _():
        s3_ref[...] += jnp.sum(y3, axis=0, keepdims=True)
        q3_ref[...] += jnp.sum(y3 * y3, axis=0, keepdims=True)

    @pl.when(p == 1)
    def _():
        inv_m = 1.0 / m_total
        m3 = s3_ref[...] * inv_m
        v3 = jnp.maximum(q3_ref[...] * inv_m - m3 * m3, 0.0)
        main = (y3 - m3) * (jax.lax.rsqrt(v3 + eps) * g3_ref[...]) + b3_ref[...]
        out = jnp.maximum(main + xid_ref[...].astype(jnp.float32), 0.0)
        o_ref[...] = out.astype(o_ref.dtype)


def fused_conv3_shortcut(y2, w3, g3, b3, shortcut, ws=None, gs=None, bs=None,
                         *, eps=EPS):
    """conv3 + bn3 + [projection shortcut conv+bn | identity] + add + ReLU."""
    M, K = y2.shape
    _, C = w3.shape
    tm = _pick_tile(M)
    mt = M // tm
    vec = pl.BlockSpec((1, C), lambda p, i: (0, 0))
    out_spec = pl.BlockSpec((tm, C), lambda p, i: (i * p, 0))

    if ws is not None:
        Ks = shortcut.shape[1]
        kernel = partial(_out_proj_kernel, m_total=float(M), eps=eps)
        in_specs = [
            pl.BlockSpec((tm, K), lambda p, i: (i, 0)),
            pl.BlockSpec((K, C), lambda p, i: (0, 0)),
            vec, vec,
            pl.BlockSpec((tm, Ks), lambda p, i: (i, 0)),
            pl.BlockSpec((Ks, C), lambda p, i: (0, 0)),
            vec, vec,
        ]
        args = (y2, w3, g3, b3, shortcut, ws, gs, bs)
        scratch = [pltpu.VMEM((1, C), jnp.float32)] * 4
    else:
        kernel = partial(_out_id_kernel, m_total=float(M), eps=eps)
        in_specs = [
            pl.BlockSpec((tm, K), lambda p, i: (i, 0)),
            pl.BlockSpec((K, C), lambda p, i: (0, 0)),
            vec, vec,
            pl.BlockSpec((tm, C), lambda p, i: (i, 0)),
        ]
        args = (y2, w3, g3, b3, shortcut)
        scratch = [pltpu.VMEM((1, C), jnp.float32)] * 2

    return pl.pallas_call(
        kernel,
        out_shape=jax.ShapeDtypeStruct((M, C), jnp.bfloat16),
        grid=(2, mt),
        in_specs=in_specs,
        out_specs=out_spec,
        scratch_shapes=scratch,
        compiler_params=_cparams(2),
    )(*args)


# ----------------------------------------------------------------------------
# Parameters (synthetic, pre-padded to lane-dense channels) and forward glue
# ----------------------------------------------------------------------------
def make_bottleneck_params(key, in_c, out_c, k, stride):
    mid = out_c // 4                      # expansion = 4
    cin_p = _round_up(in_c, LANE)
    mid_p = _round_up(mid, LANE)
    out_p = _round_up(out_c, LANE)
    keys = jax.random.split(key, 12)

    def wmat(kk, real_shape, pad_shape):
        w = 0.1 * jax.random.normal(kk, real_shape, dtype=jnp.float32)
        w = jnp.pad(w, [(0, pp - rr) for rr, pp in zip(real_shape, pad_shape)])
        return w.astype(jnp.bfloat16)

    def bnvec(kg, kb, c_real, c_pad):
        g = 1.0 + 0.1 * jax.random.normal(kg, (c_real,), dtype=jnp.float32)
        b = 0.1 * jax.random.normal(kb, (c_real,), dtype=jnp.float32)
        g = jnp.pad(g, (0, c_pad - c_real)).reshape(1, c_pad)
        b = jnp.pad(b, (0, c_pad - c_real)).reshape(1, c_pad)
        return g, b

    p = {}
    p["w1"] = wmat(keys[0], (in_c, mid), (cin_p, mid_p))               # 1x1
    p["g1"], p["b1"] = bnvec(keys[1], keys[2], mid, mid_p)
    p["w2"] = wmat(keys[3], (k * k, mid, mid), (k * k, mid_p, mid_p))  # kxk taps
    p["g2"], p["b2"] = bnvec(keys[4], keys[5], mid, mid_p)
    p["w3"] = wmat(keys[6], (mid, out_c), (mid_p, out_p))              # 1x1
    p["g3"], p["b3"] = bnvec(keys[7], keys[8], out_c, out_p)
    if stride != 1 or in_c != out_c:
        p["ws"] = wmat(keys[9], (in_c, out_c), (cin_p, out_p))         # shortcut
        p["gs"], p["bs"] = bnvec(keys[10], keys[11], out_c, out_p)
    else:
        p["ws"] = None
    return p


def make_block_params(key, in_channels, out_channels, kernel_size, stride,
                      num_bottleneck):
    keys = jax.random.split(key, num_bottleneck)
    return [make_bottleneck_params(
                keys[i],
                in_channels if i == 0 else out_channels,
                out_channels, kernel_size,
                stride if i == 0 else 1)
            for i in range(num_bottleneck)]


def bottleneck_forward(x, params, k, stride):
    """x: (N, H, W, Cin_padded) bf16 -> (N, Ho, Wo, Cout_padded) bf16."""
    N, H, W, Cinp = x.shape

    # conv1 (1x1) + bn1 + relu
    y1 = fused_matmul_bn(x.reshape(N * H * W, Cinp),
                         params["w1"], params["g1"], params["b1"], relu=True)
    Cmp = y1.shape[1]
    y1 = y1.reshape(N, H, W, Cmp)

    # conv2 (kxk, stride) + bn2 + relu  (no HBM im2col)
    y2, Ho, Wo = fused_conv_kxk_bn(y1, params["w2"], params["g2"], params["b2"],
                                   k, stride)

    # conv3 (1x1) + bn3 + shortcut + add + relu — single fused kernel
    if params["ws"] is not None:
        xsc = x[:, ::stride, ::stride, :].reshape(N * Ho * Wo, Cinp)
        out = fused_conv3_shortcut(y2, params["w3"], params["g3"], params["b3"],
                                   xsc, params["ws"], params["gs"], params["bs"])
    else:
        xid = x.reshape(N * Ho * Wo, Cinp)   # stride==1, in==out here
        out = fused_conv3_shortcut(y2, params["w3"], params["g3"], params["b3"],
                                   xid)
    return out.reshape(N, Ho, Wo, out.shape[1])


@partial(jax.jit, static_argnums=(2, 3, 4))
def cand_bottleneck_block(x_nchw, params, kernel_size, stride, out_channels):
    """CandBottleneckBlock.forward (training-mode BN). NCHW in/out like PyTorch."""
    N, Cin, H, W = x_nchw.shape
    cin_p = _round_up(Cin, LANE)
    x = jnp.transpose(x_nchw, (0, 2, 3, 1))                       # -> NHWC
    x = jnp.pad(x, ((0, 0), (0, 0), (0, 0), (0, cin_p - Cin)))    # lane-dense
    x = x.astype(jnp.bfloat16)
    for i, p in enumerate(params):
        x = bottleneck_forward(x, p, kernel_size, stride if i == 0 else 1)
    y = x[..., :out_channels].astype(jnp.float32)                 # drop padding
    return jnp.transpose(y, (0, 3, 1, 2))                         # -> NCHW


# ----------------------------------------------------------------------------
if __name__ == "__main__":
    key = jax.random.PRNGKey(0)
    kx, kp = jax.random.split(key)

    # in_channels=4, out_channels=16, kernel_size=3, stride=2, num_bottleneck=2
    # (first bottleneck: projection shortcut; second: identity shortcut)
    x = jax.random.normal(kx, (2, 4, 16, 16), dtype=jnp.float32)  # NCHW
    params = make_block_params(kp, in_channels=4, out_channels=16,
                               kernel_size=3, stride=2, num_bottleneck=2)

    y = cand_bottleneck_block(x, params, 3, 2, 16)
    jax.block_until_ready(y)
    assert y.shape == (2, 16, 8, 8), y.shape
    assert bool(jnp.isfinite(y).all())
    print("KERNEL_OK")
</pallas_src>

<mosaic_0001>
module attributes {stable_mosaic.version = 11 : i64} {
  func.func @_mm_bn_kernel(%arg0: i32, %arg1: i32, %arg2: memref<512x128xbf16, #tpu.memory_space<vmem>>, %arg3: memref<128x128xbf16, #tpu.memory_space<vmem>>, %arg4: memref<1x128xf32, #tpu.memory_space<vmem>>, %arg5: memref<1x128xf32, #tpu.memory_space<vmem>>, %arg6: memref<512x128xbf16, #tpu.memory_space<vmem>>, %arg7: memref<1x128xf32, #tpu.memory_space<vmem>>, %arg8: memref<1x128xf32, #tpu.memory_space<vmem>>) attributes {dimension_semantics = [#tpu.dimension_semantics<arbitrary>, #tpu.dimension_semantics<arbitrary>], iteration_bounds = array<i64: 2, 1>, scalar_prefetch = 0 : i64, scratch_operands = 2 : i64, tpu.core_type = #tpu.core_type<tc>, window_params = [{transform_indices = @transform_0, window_bounds = array<i64: 512, 128>}, {pipeline_mode = #tpu.pipeline_mode<synchronous>, transform_indices = @transform_1, window_bounds = array<i64: 128, 128>}, {pipeline_mode = #tpu.pipeline_mode<synchronous>, transform_indices = @transform_2, window_bounds = array<i64: 1, 128>}, {pipeline_mode = #tpu.pipeline_mode<synchronous>, transform_indices = @transform_3, window_bounds = array<i64: 1, 128>}, {transform_indices = @transform_4, window_bounds = array<i64: 512, 128>}]} {
    %c0_i32 = arith.constant 0 : i32
    %0 = arith.cmpi eq, %arg0, %c0_i32 : i32
    %c0_i32_0 = arith.constant 0 : i32
    %1 = arith.cmpi eq, %arg1, %c0_i32_0 : i32
    %2 = arith.andi %0, %1 : i1
    %3 = arith.extui %2 : i1 to i32
    %c0_i32_1 = arith.constant 0 : i32
    %4 = arith.cmpi ne, %3, %c0_i32_1 : i32
    scf.if %4 {
      %cst_8 = arith.constant 0.000000e+00 : f32
      %14 = vector.broadcast %cst_8 : f32 to vector<1x128xf32>
      %c0_9 = arith.constant 0 : index
      %c0_10 = arith.constant 0 : index
      %15 = vector.load %arg7[%c0_9, %c0_10] : memref<1x128xf32, #tpu.memory_space<vmem>>, vector<1x128xf32>
      tpu.vector_store %arg7[%c0_9, %c0_10], %14 {strides = array<i32>} : memref<1x128xf32, #tpu.memory_space<vmem>>, vector<1x128xf32>,
      %cst_11 = arith.constant 0.000000e+00 : f32
      %16 = vector.broadcast %cst_11 : f32 to vector<1x128xf32>
      %c0_12 = arith.constant 0 : index
      %c0_13 = arith.constant 0 : index
      %17 = vector.load %arg8[%c0_12, %c0_13] : memref<1x128xf32, #tpu.memory_space<vmem>>, vector<1x128xf32>
      tpu.vector_store %arg8[%c0_12, %c0_13], %16 {strides = array<i32>} : memref<1x128xf32, #tpu.memory_space<vmem>>, vector<1x128xf32>,
    } else {
    }
    %c0 = arith.constant 0 : index
    %c0_2 = arith.constant 0 : index
    %5 = vector.load %arg2[%c0, %c0_2] : memref<512x128xbf16, #tpu.memory_space<vmem>>, vector<512x128xbf16>
    %c0_3 = arith.constant 0 : index
    %c0_4 = arith.constant 0 : index
    %6 = vector.load %arg3[%c0_3, %c0_4] : memref<128x128xbf16, #tpu.memory_space<vmem>>, vector<128x128xbf16>
    %cst = arith.constant dense<0.000000e+00> : vector<512x128xf32>
    %7 = tpu.matmul %5, %6, %cst {dimension_numbers = #tpu.dot_dimension_numbers<[1], [0], [0], [1], [0, 0, 1, 1], [], []>} : vector<512x128xbf16>, vector<128x128xbf16>, vector<512x128xf32> -> vector<512x128xf32>
    %c0_i32_5 = arith.constant 0 : i32
    %8 = arith.cmpi eq, %arg0, %c0_i32_5 : i32
    %9 = arith.extui %8 : i1 to i32
    %c0_i32_6 = arith.constant 0 : i32
    %10 = arith.cmpi ne, %9, %c0_i32_6 : i32
    scf.if %10 {
      %c0_8 = arith.constant 0 : index
      %c0_9 = arith.constant 0 : index
      %14 = vector.load %arg7[%c0_8, %c0_9] : memref<1x128xf32, #tpu.memory_space<vmem>>, vector<1x128xf32>
      %cst_10 = arith.constant dense<0.000000e+00> : vector<128xf32>
      %15 = vector.multi_reduction <add>, %7, %cst_10 [0] : vector<512x128xf32> to vector<128xf32>
      %16 = vector.shape_cast %15 : vector<128xf32> to vector<1x128xf32>
      %17 = arith.addf %14, %16 : vector<1x128xf32>
      %c0_11 = arith.constant 0 : index
      %c0_12 = arith.constant 0 : index
      %18 = vector.load %arg7[%c0_11, %c0_12] : memref<1x128xf32, #tpu.memory_space<vmem>>, vector<1x128xf32>
      tpu.vector_store %arg7[%c0_11, %c0_12], %17 {strides = array<i32>} : memref<1x128xf32, #tpu.memory_space<vmem>>, vector<1x128xf32>,
      %c0_13 = arith.constant 0 : index
      %c0_14 = arith.constant 0 : index
      %19 = vector.load %arg8[%c0_13, %c0_14] : memref<1x128xf32, #tpu.memory_space<vmem>>, vector<1x128xf32>
      %20 = arith.mulf %7, %7 : vector<512x128xf32>
      %cst_15 = arith.constant dense<0.000000e+00> : vector<128xf32>
      %21 = vector.multi_reduction <add>, %20, %cst_15 [0] : vector<512x128xf32> to vector<128xf32>
      %22 = vector.shape_cast %21 : vector<128xf32> to vector<1x128xf32>
      %23 = arith.addf %19, %22 : vector<1x128xf32>
      %c0_16 = arith.constant 0 : index
      %c0_17 = arith.constant 0 : index
      %24 = vector.load %arg8[%c0_16, %c0_17] : memref<1x128xf32, #tpu.memory_space<vmem>>, vector<1x128xf32>
      tpu.vector_store %arg8[%c0_16, %c0_17], %23 {strides = array<i32>} : memref<1x128xf32, #tpu.memory_space<vmem>>, vector<1x128xf32>,
    } else {
    }
    %c1_i32 = arith.constant 1 : i32
    %11 = arith.cmpi eq, %arg0, %c1_i32 : i32
    %12 = arith.extui %11 : i1 to i32
    %c0_i32_7 = arith.constant 0 : i32
    %13 = arith.cmpi ne, %12, %c0_i32_7 : i32
    scf.if %13 {
      %c0_8 = arith.constant 0 : index
      %c0_9 = arith.constant 0 : index
      %14 = vector.load %arg7[%c0_8, %c0_9] : memref<1x128xf32, #tpu.memory_space<vmem>>, vector<1x128xf32>
      %cst_10 = arith.constant 0.001953125 : f32
      %15 = vector.broadcast %cst_10 : f32 to vector<1x128xf32>
      %16 = arith.mulf %14, %15 : vector<1x128xf32>
      %c0_11 = arith.constant 0 : index
      %c0_12 = arith.constant 0 : index
      %17 = vector.load %arg8[%c0_11, %c0_12] : memref<1x128xf32, #tpu.memory_space<vmem>>, vector<1x128xf32>
      %cst_13 = arith.constant 0.001953125 : f32
      %18 = vector.broadcast %cst_13 : f32 to vector<1x128xf32>
      %19 = arith.mulf %17, %18 : vector<1x128xf32>
      %20 = arith.mulf %16, %16 : vector<1x128xf32>
      %21 = arith.subf %19, %20 : vector<1x128xf32>
      %cst_14 = arith.constant 0.000000e+00 : f32
      %22 = vector.broadcast %cst_14 : f32 to vector<1x128xf32>
      %23 = arith.maximumf %21, %22 : vector<1x128xf32>
      %cst_15 = arith.constant 9.99999974E-6 : f32
      %24 = vector.broadcast %cst_15 : f32 to vector<1x128xf32>
      %25 = arith.addf %23, %24 : vector<1x128xf32>
      %26 = math.rsqrt %25 : vector<1x128xf32>
      %c0_16 = arith.constant 0 : index
      %c0_17 = arith.constant 0 : index
      %27 = vector.load %arg4[%c0_16, %c0_17] : memref<1x128xf32, #tpu.memory_space<vmem>>, vector<1x128xf32>
      %28 = arith.mulf %26, %27 : vector<1x128xf32>
      %29 = vector.broadcast %16 : vector<1x128xf32> to vector<512x128xf32>
      %30 = arith.subf %7, %29 : vector<512x128xf32>
      %31 = vector.broadcast %28 : vector<1x128xf32> to vector<512x128xf32>
      %32 = arith.mulf %30, %31 : vector<512x128xf32>
      %c0_18 = arith.constant 0 : index
      %c0_19 = arith.constant 0 : index
      %33 = vector.load %arg5[%c0_18, %c0_19] : memref<1x128xf32, #tpu.memory_space<vmem>>, vector<1x128xf32>
      %34 = vector.broadcast %33 : vector<1x128xf32> to vector<512x128xf32>
      %35 = arith.addf %32, %34 : vector<512x128xf32>
      %cst_20 = arith.constant 0.000000e+00 : f32
      %36 = vector.broadcast %cst_20 : f32 to vector<512x128xf32>
      %37 = arith.maximumf %35, %36 : vector<512x128xf32>
      %38 = arith.truncf %37 : vector<512x128xf32> to vector<512x128xbf16>
      %c0_21 = arith.constant 0 : index
      %c0_22 = arith.constant 0 : index
      %39 = vector.load %arg6[%c0_21, %c0_22] : memref<512x128xbf16, #tpu.memory_space<vmem>>, vector<512x128xbf16>
      tpu.vector_store %arg6[%c0_21, %c0_22], %38 {strides = array<i32>} : memref<512x128xbf16, #tpu.memory_space<vmem>>, vector<512x128xbf16>,
    } else {
    }
    return
  }
  func.func @transform_0(%arg0: i32, %arg1: i32) -> (i32, i32) {
    %c0_i32 = arith.constant 0 : i32
    %c0_i32_0 = arith.constant 0 : i32
    return %arg1, %c0_i32 : i32, i32
  }
  func.func @transform_1(%arg0: i32, %arg1: i32) -> (i32, i32) {
    %c0_i32 = arith.constant 0 : i32
    %c0_i32_0 = arith.constant 0 : i32
    %c0_i32_1 = arith.constant 0 : i32
    return %c0_i32, %c0_i32_0 : i32, i32
  }
  func.func @transform_2(%arg0: i32, %arg1: i32) -> (i32, i32) {
    %c0_i32 = arith.constant 0 : i32
    %c0_i32_0 = arith.constant 0 : i32
    %c0_i32_1 = arith.constant 0 : i32
    return %c0_i32, %c0_i32_0 : i32, i32
  }
  func.func @transform_3(%arg0: i32, %arg1: i32) -> (i32, i32) {
    %c0_i32 = arith.constant 0 : i32
    %c0_i32_0 = arith.constant 0 : i32
    %c0_i32_1 = arith.constant 0 : i32
    return %c0_i32, %c0_i32_0 : i32, i32
  }
  func.func @transform_4(%arg0: i32, %arg1: i32) -> (i32, i32) {
    %0 = arith.muli %arg1, %arg0 : i32
    %c0_i32 = arith.constant 0 : i32
    %c0_i32_0 = arith.constant 0 : i32
    return %0, %c0_i32 : i32, i32
  }
}

module attributes {stable_mosaic.version = 11 : i64} {
  func.func @_conv2_bn_kernel(%arg0: i32, %arg1: i32, %arg2: memref<4x9x9x128xbf16, #tpu.memory_space<vmem>>, %arg3: memref<9x128x128xbf16, #tpu.memory_space<vmem>>, %arg4: memref<1x128xf32, #tpu.memory_space<vmem>>, %arg5: memref<1x128xf32, #tpu.memory_space<vmem>>, %arg6: memref<64x128xbf16, #tpu.memory_space<vmem>>, %arg7: memref<1x128xf32, #tpu.memory_space<vmem>>, %arg8: memref<1x128xf32, #tpu.memory_space<vmem>>) attributes {dimension_semantics = [#tpu.dimension_semantics<arbitrary>, #tpu.dimension_semantics<arbitrary>], iteration_bounds = array<i64: 2, 2>, scalar_prefetch = 0 : i64, scratch_operands = 2 : i64, tpu.core_type = #tpu.core_type<tc>, window_params = [{transform_indices = @transform_0, window_bounds = array<i64: 4, 9, 9, 128>}, {pipeline_mode = #tpu.pipeline_mode<synchronous>, transform_indices = @transform_1, window_bounds = array<i64: 9, 128, 128>}, {pipeline_mode = #tpu.pipeline_mode<synchronous>, transform_indices = @transform_2, window_bounds = array<i64: 1, 128>}, {pipeline_mode = #tpu.pipeline_mode<synchronous>, transform_indices = @transform_3, window_bounds = array<i64: 1, 128>}, {transform_indices = @transform_4, window_bounds = array<i64: 64, 128>}]} {
    %c0_i32 = arith.constant 0 : i32
    %0 = arith.cmpi eq, %arg0, %c0_i32 : i32
    %c0_i32_0 = arith.constant 0 : i32
    %1 = arith.cmpi eq, %arg1, %c0_i32_0 : i32
    %2 = arith.andi %0, %1 : i1
    %3 = arith.extui %2 : i1 to i32
    %c0_i32_1 = arith.constant 0 : i32
    %4 = arith.cmpi ne, %3, %c0_i32_1 : i32
    scf.if %4 {
      %cst_68 = arith.constant 0.000000e+00 : f32
      %75 = vector.broadcast %cst_68 : f32 to vector<1x128xf32>
      %c0_69 = arith.constant 0 : index
      %c0_70 = arith.constant 0 : index
      %76 = vector.load %arg7[%c0_69, %c0_70] : memref<1x128xf32, #tpu.memory_space<vmem>>, vector<1x128xf32>
      tpu.vector_store %arg7[%c0_69, %c0_70], %75 {strides = array<i32>} : memref<1x128xf32, #tpu.memory_space<vmem>>, vector<1x128xf32>,
      %cst_71 = arith.constant 0.000000e+00 : f32
      %77 = vector.broadcast %cst_71 : f32 to vector<1x128xf32>
      %c0_72 = arith.constant 0 : index
      %c0_73 = arith.constant 0 : index
      %78 = vector.load %arg8[%c0_72, %c0_73] : memref<1x128xf32, #tpu.memory_space<vmem>>, vector<1x128xf32>
      tpu.vector_store %arg8[%c0_72, %c0_73], %77 {strides = array<i32>} : memref<1x128xf32, #tpu.memory_space<vmem>>, vector<1x128xf32>,
    } else {
    }
    %cst = arith.constant 0.000000e+00 : f32
    %5 = vector.broadcast %cst : f32 to vector<64x128xf32>
    %c0 = arith.constant 0 : index
    %c0_2 = arith.constant 0 : index
    %c0_3 = arith.constant 0 : index
    %c0_4 = arith.constant 0 : index
    %6 = vector.load %arg2[%c0, %c0_2, %c0_3, %c0_4] : memref<4x9x9x128xbf16, #tpu.memory_space<vmem>>, vector<1x8x8x128xbf16>
    %7 = vector.shape_cast %6 : vector<1x8x8x128xbf16> to vector<8x8x128xbf16>
    %8 = vector.shape_cast %7 : vector<8x8x128xbf16> to vector<64x128xbf16>
    %c0_5 = arith.constant 0 : index
    %c0_6 = arith.constant 0 : index
    %c0_7 = arith.constant 0 : index
    %9 = vector.load %arg3[%c0_5, %c0_6, %c0_7] : memref<9x128x128xbf16, #tpu.memory_space<vmem>>, vector<1x128x128xbf16>
    %10 = vector.shape_cast %9 : vector<1x128x128xbf16> to vector<128x128xbf16>
    %cst_8 = arith.constant dense<0.000000e+00> : vector<64x128xf32>
    %11 = tpu.matmul %8, %10, %cst_8 {dimension_numbers = #tpu.dot_dimension_numbers<[1], [0], [0], [1], [0, 0, 1, 1], [], []>} : vector<64x128xbf16>, vector<128x128xbf16>, vector<64x128xf32> -> vector<64x128xf32>
    %12 = arith.addf %5, %11 : vector<64x128xf32>
    %c1 = arith.constant 1 : index
    %c0_9 = arith.constant 0 : index
    %c0_10 = arith.constant 0 : index
    %c0_11 = arith.constant 0 : index
    %13 = vector.load %arg2[%c1, %c0_9, %c0_10, %c0_11] : memref<4x9x9x128xbf16, #tpu.memory_space<vmem>>, vector<1x8x8x128xbf16>
    %14 = vector.shape_cast %13 : vector<1x8x8x128xbf16> to vector<8x8x128xbf16>
    %15 = vector.shape_cast %14 : vector<8x8x128xbf16> to vector<64x128xbf16>
    %c1_12 = arith.constant 1 : index
    %c0_13 = arith.constant 0 : index
    %c0_14 = arith.constant 0 : index
    %16 = vector.load %arg3[%c1_12, %c0_13, %c0_14] : memref<9x128x128xbf16, #tpu.memory_space<vmem>>, vector<1x128x128xbf16>
    %17 = vector.shape_cast %16 : vector<1x128x128xbf16> to vector<128x128xbf16>
    %cst_15 = arith.constant dense<0.000000e+00> : vector<64x128xf32>
    %18 = tpu.matmul %15, %17, %cst_15 {dimension_numbers = #tpu.dot_dimension_numbers<[1], [0], [0], [1], [0, 0, 1, 1], [], []>} : vector<64x128xbf16>, vector<128x128xbf16>, vector<64x128xf32> -> vector<64x128xf32>
    %19 = arith.addf %12, %18 : vector<64x128xf32>
    %c0_16 = arith.constant 0 : index
    %c0_17 = arith.constant 0 : index
    %c1_18 = arith.constant 1 : index
    %c0_19 = arith.constant 0 : index
    %20 = vector.load %arg2[%c0_16, %c0_17, %c1_18, %c0_19] : memref<4x9x9x128xbf16, #tpu.memory_space<vmem>>, vector<1x8x8x128xbf16>
    %21 = vector.shape_cast %20 : vector<1x8x8x128xbf16> to vector<8x8x128xbf16>
    %22 = vector.shape_cast %21 : vector<8x8x128xbf16> to vector<64x128xbf16>
    %c2 = arith.constant 2 : index
    %c0_20 = arith.constant 0 : index
    %c0_21 = arith.constant 0 : index
    %23 = vector.load %arg3[%c2, %c0_20, %c0_21] : memref<9x128x128xbf16, #tpu.memory_space<vmem>>, vector<1x128x128xbf16>
    %24 = vector.shape_cast %23 : vector<1x128x128xbf16> to vector<128x128xbf16>
    %cst_22 = arith.constant dense<0.000000e+00> : vector<64x128xf32>
    %25 = tpu.matmul %22, %24, %cst_22 {dimension_numbers = #tpu.dot_dimension_numbers<[1], [0], [0], [1], [0, 0, 1, 1], [], []>} : vector<64x128xbf16>, vector<128x128xbf16>, vector<64x128xf32> -> vector<64x128xf32>
    %26 = arith.addf %19, %25 : vector<64x128xf32>
    %c2_23 = arith.constant 2 : index
    %c0_24 = arith.constant 0 : index
    %c0_25 = arith.constant 0 : index
    %c0_26 = arith.constant 0 : index
    %27 = vector.load %arg2[%c2_23, %c0_24, %c0_25, %c0_26] : memref<4x9x9x128xbf16, #tpu.memory_space<vmem>>, vector<1x8x8x128xbf16>
    %28 = vector.shape_cast %27 : vector<1x8x8x128xbf16> to vector<8x8x128xbf16>
    %29 = vector.shape_cast %28 : vector<8x8x128xbf16> to vector<64x128xbf16>
    %c3 = arith.constant 3 : index
    %c0_27 = arith.constant 0 : index
    %c0_28 = arith.constant 0 : index
    %30 = vector.load %arg3[%c3, %c0_27, %c0_28] : memref<9x128x128xbf16, #tpu.memory_space<vmem>>, vector<1x128x128xbf16>
    %31 = vector.shape_cast %30 : vector<1x128x128xbf16> to vector<128x128xbf16>
    %cst_29 = arith.constant dense<0.000000e+00> : vector<64x128xf32>
    %32 = tpu.matmul %29, %31, %cst_29 {dimension_numbers = #tpu.dot_dimension_numbers<[1], [0], [0], [1], [0, 0, 1, 1], [], []>} : vector<64x128xbf16>, vector<128x128xbf16>, vector<64x128xf32> -> vector<64x128xf32>
    %33 = arith.addf %26, %32 : vector<64x128xf32>
    %c3_30 = arith.constant 3 : index
    %c0_31 = arith.constant 0 : index
    %c0_32 = arith.constant 0 : index
    %c0_33 = arith.constant 0 : index
    %34 = vector.load %arg2[%c3_30, %c0_31, %c0_32, %c0_33] : memref<4x9x9x128xbf16, #tpu.memory_space<vmem>>, vector<1x8x8x128xbf16>
    %35 = vector.shape_cast %34 : vector<1x8x8x128xbf16> to vector<8x8x128xbf16>
    %36 = vector.shape_cast %35 : vector<8x8x128xbf16> to vector<64x128xbf16>
    %c4 = arith.constant 4 : index
    %c0_34 = arith.constant 0 : index
    %c0_35 = arith.constant 0 : index
    %37 = vector.load %arg3[%c4, %c0_34, %c0_35] : memref<9x128x128xbf16, #tpu.memory_space<vmem>>, vector<1x128x128xbf16>
    %38 = vector.shape_cast %37 : vector<1x128x128xbf16> to vector<128x128xbf16>
    %cst_36 = arith.constant dense<0.000000e+00> : vector<64x128xf32>
    %39 = tpu.matmul %36, %38, %cst_36 {dimension_numbers = #tpu.dot_dimension_numbers<[1], [0], [0], [1], [0, 0, 1, 1], [], []>} : vector<64x128xbf16>, vector<128x128xbf16>, vector<64x128xf32> -> vector<64x128xf32>
    %40 = arith.addf %33, %39 : vector<64x128xf32>
    %c2_37 = arith.constant 2 : index
    %c0_38 = arith.constant 0 : index
    %c1_39 = arith.constant 1 : index
    %c0_40 = arith.constant 0 : index
    %41 = vector.load %arg2[%c2_37, %c0_38, %c1_39, %c0_40] : memref<4x9x9x128xbf16, #tpu.memory_space<vmem>>, vector<1x8x8x128xbf16>
    %42 = vector.shape_cast %41 : vector<1x8x8x128xbf16> to vector<8x8x128xbf16>
    %43 = vector.shape_cast %42 : vector<8x8x128xbf16> to vector<64x128xbf16>
    %c5 = arith.constant 5 : index
    %c0_41 = arith.constant 0 : index
    %c0_42 = arith.constant 0 : index
    %44 = vector.load %arg3[%c5, %c0_41, %c0_42] : memref<9x128x128xbf16, #tpu.memory_space<vmem>>, vector<1x128x128xbf16>
    %45 = vector.shape_cast %44 : vector<1x128x128xbf16> to vector<128x128xbf16>
    %cst_43 = arith.constant dense<0.000000e+00> : vector<64x128xf32>
    %46 = tpu.matmul %43, %45, %cst_43 {dimension_numbers = #tpu.dot_dimension_numbers<[1], [0], [0], [1], [0, 0, 1, 1], [], []>} : vector<64x128xbf16>, vector<128x128xbf16>, vector<64x128xf32> -> vector<64x128xf32>
    %47 = arith.addf %40, %46 : vector<64x128xf32>
    %c0_44 = arith.constant 0 : index
    %c1_45 = arith.constant 1 : index
    %c0_46 = arith.constant 0 : index
    %c0_47 = arith.constant 0 : index
    %48 = vector.load %arg2[%c0_44, %c1_45, %c0_46, %c0_47] : memref<4x9x9x128xbf16, #tpu.memory_space<vmem>>, vector<1x8x8x128xbf16>
    %49 = vector.shape_cast %48 : vector<1x8x8x128xbf16> to vector<8x8x128xbf16>
    %50 = vector.shape_cast %49 : vector<8x8x128xbf16> to vector<64x128xbf16>
    %c6 = arith.constant 6 : index
    %c0_48 = arith.constant 0 : index
    %c0_49 = arith.constant 0 : index
    %51 = vector.load %arg3[%c6, %c0_48, %c0_49] : memref<9x128x128xbf16, #tpu.memory_space<vmem>>, vector<1x128x128xbf16>
    %52 = vector.shape_cast %51 : vector<1x128x128xbf16> to vector<128x128xbf16>
    %cst_50 = arith.constant dense<0.000000e+00> : vector<64x128xf32>
    %53 = tpu.matmul %50, %52, %cst_50 {dimension_numbers = #tpu.dot_dimension_numbers<[1], [0], [0], [1], [0, 0, 1, 1], [], []>} : vector<64x128xbf16>, vector<128x128xbf16>, vector<64x128xf32> -> vector<64x128xf32>
    %54 = arith.addf %47, %53 : vector<64x128xf32>
    %c1_51 = arith.constant 1 : index
    %c1_52 = arith.constant 1 : index
    %c0_53 = arith.constant 0 : index
    %c0_54 = arith.constant 0 : index
    %55 = vector.load %arg2[%c1_51, %c1_52, %c0_53, %c0_54] : memref<4x9x9x128xbf16, #tpu.memory_space<vmem>>, vector<1x8x8x128xbf16>
    %56 = vector.shape_cast %55 : vector<1x8x8x128xbf16> to vector<8x8x128xbf16>
    %57 = vector.shape_cast %56 : vector<8x8x128xbf16> to vector<64x128xbf16>
    %c7 = arith.constant 7 : index
    %c0_55 = arith.constant 0 : index
    %c0_56 = arith.constant 0 : index
    %58 = vector.load %arg3[%c7, %c0_55, %c0_56] : memref<9x128x128xbf16, #tpu.memory_space<vmem>>, vector<1x128x128xbf16>
    %59 = vector.shape_cast %58 : vector<1x128x128xbf16> to vector<128x128xbf16>
    %cst_57 = arith.constant dense<0.000000e+00> : vector<64x128xf32>
    %60 = tpu.matmul %57, %59, %cst_57 {dimension_numbers = #tpu.dot_dimension_numbers<[1], [0], [0], [1], [0, 0, 1, 1], [], []>} : vector<64x128xbf16>, vector<128x128xbf16>, vector<64x128xf32> -> vector<64x128xf32>
    %61 = arith.addf %54, %60 : vector<64x128xf32>
    %c0_58 = arith.constant 0 : index
    %c1_59 = arith.constant 1 : index
    %c1_60 = arith.constant 1 : index
    %c0_61 = arith.constant 0 : index
    %62 = vector.load %arg2[%c0_58, %c1_59, %c1_60, %c0_61] : memref<4x9x9x128xbf16, #tpu.memory_space<vmem>>, vector<1x8x8x128xbf16>
    %63 = vector.shape_cast %62 : vector<1x8x8x128xbf16> to vector<8x8x128xbf16>
    %64 = vector.shape_cast %63 : vector<8x8x128xbf16> to vector<64x128xbf16>
    %c8 = arith.constant 8 : index
    %c0_62 = arith.constant 0 : index
    %c0_63 = arith.constant 0 : index
    %65 = vector.load %arg3[%c8, %c0_62, %c0_63] : memref<9x128x128xbf16, #tpu.memory_space<vmem>>, vector<1x128x128xbf16>
    %66 = vector.shape_cast %65 : vector<1x128x128xbf16> to vector<128x128xbf16>
    %cst_64 = arith.constant dense<0.000000e+00> : vector<64x128xf32>
    %67 = tpu.matmul %64, %66, %cst_64 {dimension_numbers = #tpu.dot_dimension_numbers<[1], [0], [0], [1], [0, 0, 1, 1], [], []>} : vector<64x128xbf16>, vector<128x128xbf16>, vector<64x128xf32> -> vector<64x128xf32>
    %68 = arith.addf %61, %67 : vector<64x128xf32>
    %c0_i32_65 = arith.constant 0 : i32
    %69 = arith.cmpi eq, %arg0, %c0_i32_65 : i32
    %70 = arith.extui %69 : i1 to i32
    %c0_i32_66 = arith.constant 0 : i32
    %71 = arith.cmpi ne, %70, %c0_i32_66 : i32
    scf.if %71 {
      %c0_68 = arith.constant 0 : index
      %c0_69 = arith.constant 0 : index
      %75 = vector.load %arg7[%c0_68, %c0_69] : memref<1x128xf32, #tpu.memory_space<vmem>>, vector<1x128xf32>
      %cst_70 = arith.constant dense<0.000000e+00> : vector<128xf32>
      %76 = vector.multi_reduction <add>, %68, %cst_70 [0] : vector<64x128xf32> to vector<128xf32>
      %77 = vector.shape_cast %76 : vector<128xf32> to vector<1x128xf32>
      %78 = arith.addf %75, %77 : vector<1x128xf32>
      %c0_71 = arith.constant 0 : index
      %c0_72 = arith.constant 0 : index
      %79 = vector.load %arg7[%c0_71, %c0_72] : memref<1x128xf32, #tpu.memory_space<vmem>>, vector<1x128xf32>
      tpu.vector_store %arg7[%c0_71, %c0_72], %78 {strides = array<i32>} : memref<1x128xf32, #tpu.memory_space<vmem>>, vector<1x128xf32>,
      %c0_73 = arith.constant 0 : index
      %c0_74 = arith.constant 0 : index
      %80 = vector.load %arg8[%c0_73, %c0_74] : memref<1x128xf32, #tpu.memory_space<vmem>>, vector<1x128xf32>
      %81 = arith.mulf %68, %68 : vector<64x128xf32>
      %cst_75 = arith.constant dense<0.000000e+00> : vector<128xf32>
      %82 = vector.multi_reduction <add>, %81, %cst_75 [0] : vector<64x128xf32> to vector<128xf32>
      %83 = vector.shape_cast %82 : vector<128xf32> to vector<1x128xf32>
      %84 = arith.addf %80, %83 : vector<1x128xf32>
      %c0_76 = arith.constant 0 : index
      %c0_77 = arith.constant 0 : index
      %85 = vector.load %arg8[%c0_76, %c0_77] : memref<1x128xf32, #tpu.memory_space<vmem>>, vector<1x128xf32>
      tpu.vector_store %arg8[%c0_76, %c0_77], %84 {strides = array<i32>} : memref<1x128xf32, #tpu.memory_space<vmem>>, vector<1x128xf32>,
    } else {
    }
    %c1_i32 = arith.constant 1 : i32
    %72 = arith.cmpi eq, %arg0, %c1_i32 : i32
    %73 = arith.extui %72 : i1 to i32
    %c0_i32_67 = arith.constant 0 : i32
    %74 = arith.cmpi ne, %73, %c0_i32_67 : i32
    scf.if %74 {
      %c0_68 = arith.constant 0 : index
      %c0_69 = arith.constant 0 : index
      %75 = vector.load %arg7[%c0_68, %c0_69] : memref<1x128xf32, #tpu.memory_space<vmem>>, vector<1x128xf32>
      %cst_70 = arith.constant 7.812500e-03 : f32
      %76 = vector.broadcast %cst_70 : f32 to vector<1x128xf32>
      %77 = arith.mulf %75, %76 : vector<1x128xf32>
      %c0_71 = arith.constant 0 : index
      %c0_72 = arith.constant 0 : index
      %78 = vector.load %arg8[%c0_71, %c0_72] : memref<1x128xf32, #tpu.memory_space<vmem>>, vector<1x128xf32>
      %cst_73 = arith.constant 7.812500e-03 : f32
      %79 = vector.broadcast %cst_73 : f32 to vector<1x128xf32>
      %80 = arith.mulf %78, %79 : vector<1x128xf32>
      %81 = arith.mulf %77, %77 : vector<1x128xf32>
      %82 = arith.subf %80, %81 : vector<1x128xf32>
      %cst_74 = arith.constant 0.000000e+00 : f32
      %83 = vector.broadcast %cst_74 : f32 to vector<1x128xf32>
      %84 = arith.maximumf %82, %83 : vector<1x128xf32>
      %cst_75 = arith.constant 9.99999974E-6 : f32
      %85 = vector.broadcast %cst_75 : f32 to vector<1x128xf32>
      %86 = arith.addf %84, %85 : vector<1x128xf32>
      %87 = math.rsqrt %86 : vector<1x128xf32>
      %c0_76 = arith.constant 0 : index
      %c0_77 = arith.constant 0 : index
      %88 = vector.load %arg4[%c0_76, %c0_77] : memref<1x128xf32, #tpu.memory_space<vmem>>, vector<1x128xf32>
      %89 = arith.mulf %87, %88 : vector<1x128xf32>
      %90 = vector.broadcast %77 : vector<1x128xf32> to vector<64x128xf32>
      %91 = arith.subf %68, %90 : vector<64x128xf32>
      %92 = vector.broadcast %89 : vector<1x128xf32> to vector<64x128xf32>
      %93 = arith.mulf %91, %92 : vector<64x128xf32>
      %c0_78 = arith.constant 0 : index
      %c0_79 = arith.constant 0 : index
      %94 = vector.load %arg5[%c0_78, %c0_79] : memref<1x128xf32, #tpu.memory_space<vmem>>, vector<1x128xf32>
      %95 = vector.broadcast %94 : vector<1x128xf32> to vector<64x128xf32>
      %96 = arith.addf %93, %95 : vector<64x128xf32>
      %cst_80 = arith.constant 0.000000e+00 : f32
      %97 = vector.broadcast %cst_80 : f32 to vector<64x128xf32>
      %98 = arith.maximumf %96, %97 : vector<64x128xf32>
      %99 = arith.truncf %98 : vector<64x128xf32> to vector<64x128xbf16>
      %c0_81 = arith.constant 0 : index
      %c0_82 = arith.constant 0 : index
      %100 = vector.load %arg6[%c0_81, %c0_82] : memref<64x128xbf16, #tpu.memory_space<vmem>>, vector<64x128xbf16>
      tpu.vector_store %arg6[%c0_81, %c0_82], %99 {strides = array<i32>} : memref<64x128xbf16, #tpu.memory_space<vmem>>, vector<64x128xbf16>,
    } else {
    }
    return
  }
  func.func @transform_0(%arg0: i32, %arg1: i32) -> (i32, i32, i32, i32) {
    %c0_i32 = arith.constant 0 : i32
    %c0_i32_0 = arith.constant 0 : i32
    %c0_i32_1 = arith.constant 0 : i32
    %c0_i32_2 = arith.constant 0 : i32
    return %arg1, %c0_i32, %c0_i32_0, %c0_i32_1 : i32, i32, i32, i32
  }
  func.func @transform_1(%arg0: i32, %arg1: i32) -> (i32, i32, i32) {
    %c0_i32 = arith.constant 0 : i32
    %c0_i32_0 = arith.constant 0 : i32
    %c0_i32_1 = arith.constant 0 : i32
    %c0_i32_2 = arith.constant 0 : i32
    return %c0_i32, %c0_i32_0, %c0_i32_1 : i32, i32, i32
  }
  func.func @transform_2(%arg0: i32, %arg1: i32) -> (i32, i32) {
    %c0_i32 = arith.constant 0 : i32
    %c0_i32_0 = arith.constant 0 : i32
    %c0_i32_1 = arith.constant 0 : i32
    return %c0_i32, %c0_i32_0 : i32, i32
  }
  func.func @transform_3(%arg0: i32, %arg1: i32) -> (i32, i32) {
    %c0_i32 = arith.constant 0 : i32
    %c0_i32_0 = arith.constant 0 : i32
    %c0_i32_1 = arith.constant 0 : i32
    return %c0_i32, %c0_i32_0 : i32, i32
  }
  func.func @transform_4(%arg0: i32, %arg1: i32) -> (i32, i32) {
    %0 = arith.muli %arg1, %arg0 : i32
    %c0_i32 = arith.constant 0 : i32
    %c0_i32_0 = arith.constant 0 : i32
    return %0, %c0_i32 : i32, i32
  }
}

module attributes {stable_mosaic.version = 11 : i64} {
  func.func @_out_proj_kernel(%arg0: i32, %arg1: i32, %arg2: memref<128x128xbf16, #tpu.memory_space<vmem>>, %arg3: memref<128x128xbf16, #tpu.memory_space<vmem>>, %arg4: memref<1x128xf32, #tpu.memory_space<vmem>>, %arg5: memref<1x128xf32, #tpu.memory_space<vmem>>, %arg6: memref<128x128xbf16, #tpu.memory_space<vmem>>, %arg7: memref<128x128xbf16, #tpu.memory_space<vmem>>, %arg8: memref<1x128xf32, #tpu.memory_space<vmem>>, %arg9: memref<1x128xf32, #tpu.memory_space<vmem>>, %arg10: memref<128x128xbf16, #tpu.memory_space<vmem>>, %arg11: memref<1x128xf32, #tpu.memory_space<vmem>>, %arg12: memref<1x128xf32, #tpu.memory_space<vmem>>, %arg13: memref<1x128xf32, #tpu.memory_space<vmem>>, %arg14: memref<1x128xf32, #tpu.memory_space<vmem>>) attributes {dimension_semantics = [#tpu.dimension_semantics<arbitrary>, #tpu.dimension_semantics<arbitrary>], iteration_bounds = array<i64: 2, 1>, scalar_prefetch = 0 : i64, scratch_operands = 4 : i64, tpu.core_type = #tpu.core_type<tc>, window_params = [{transform_indices = @transform_0, window_bounds = array<i64: 128, 128>}, {pipeline_mode = #tpu.pipeline_mode<synchronous>, transform_indices = @transform_1, window_bounds = array<i64: 128, 128>}, {pipeline_mode = #tpu.pipeline_mode<synchronous>, transform_indices = @transform_2, window_bounds = array<i64: 1, 128>}, {pipeline_mode = #tpu.pipeline_mode<synchronous>, transform_indices = @transform_3, window_bounds = array<i64: 1, 128>}, {transform_indices = @transform_4, window_bounds = array<i64: 128, 128>}, {pipeline_mode = #tpu.pipeline_mode<synchronous>, transform_indices = @transform_5, window_bounds = array<i64: 128, 128>}, {pipeline_mode = #tpu.pipeline_mode<synchronous>, transform_indices = @transform_6, window_bounds = array<i64: 1, 128>}, {pipeline_mode = #tpu.pipeline_mode<synchronous>, transform_indices = @transform_7, window_bounds = array<i64: 1, 128>}, {transform_indices = @transform_8, window_bounds = array<i64: 128, 128>}]} {
    %c0_i32 = arith.constant 0 : i32
    %0 = arith.cmpi eq, %arg0, %c0_i32 : i32
    %c0_i32_0 = arith.constant 0 : i32
    %1 = arith.cmpi eq, %arg1, %c0_i32_0 : i32
    %2 = arith.andi %0, %1 : i1
    %3 = arith.extui %2 : i1 to i32
    %c0_i32_1 = arith.constant 0 : i32
    %4 = arith.cmpi ne, %3, %c0_i32_1 : i32
    scf.if %4 {
      %cst_13 = arith.constant 0.000000e+00 : f32
      %17 = vector.broadcast %cst_13 : f32 to vector<1x128xf32>
      %c0_14 = arith.constant 0 : index
      %c0_15 = arith.constant 0 : index
      %18 = vector.load %arg11[%c0_14, %c0_15] : memref<1x128xf32, #tpu.memory_space<vmem>>, vector<1x128xf32>
      tpu.vector_store %arg11[%c0_14, %c0_15], %17 {strides = array<i32>} : memref<1x128xf32, #tpu.memory_space<vmem>>, vector<1x128xf32>,
      %cst_16 = arith.constant 0.000000e+00 : f32
      %19 = vector.broadcast %cst_16 : f32 to vector<1x128xf32>
      %c0_17 = arith.constant 0 : index
      %c0_18 = arith.constant 0 : index
      %20 = vector.load %arg12[%c0_17, %c0_18] : memref<1x128xf32, #tpu.memory_space<vmem>>, vector<1x128xf32>
      tpu.vector_store %arg12[%c0_17, %c0_18], %19 {strides = array<i32>} : memref<1x128xf32, #tpu.memory_space<vmem>>, vector<1x128xf32>,
      %cst_19 = arith.constant 0.000000e+00 : f32
      %21 = vector.broadcast %cst_19 : f32 to vector<1x128xf32>
      %c0_20 = arith.constant 0 : index
      %c0_21 = arith.constant 0 : index
      %22 = vector.load %arg13[%c0_20, %c0_21] : memref<1x128xf32, #tpu.memory_space<vmem>>, vector<1x128xf32>
      tpu.vector_store %arg13[%c0_20, %c0_21], %21 {strides = array<i32>} : memref<1x128xf32, #tpu.memory_space<vmem>>, vector<1x128xf32>,
      %cst_22 = arith.constant 0.000000e+00 : f32
      %23 = vector.broadcast %cst_22 : f32 to vector<1x128xf32>
      %c0_23 = arith.constant 0 : index
      %c0_24 = arith.constant 0 : index
      %24 = vector.load %arg14[%c0_23, %c0_24] : memref<1x128xf32, #tpu.memory_space<vmem>>, vector<1x128xf32>
      tpu.vector_store %arg14[%c0_23, %c0_24], %23 {strides = array<i32>} : memref<1x128xf32, #tpu.memory_space<vmem>>, vector<1x128xf32>,
    } else {
    }
    %c0 = arith.constant 0 : index
    %c0_2 = arith.constant 0 : index
    %5 = vector.load %arg2[%c0, %c0_2] : memref<128x128xbf16, #tpu.memory_space<vmem>>, vector<128x128xbf16>
    %c0_3 = arith.constant 0 : index
    %c0_4 = arith.constant 0 : index
    %6 = vector.load %arg3[%c0_3, %c0_4] : memref<128x128xbf16, #tpu.memory_space<vmem>>, vector<128x128xbf16>
    %cst = arith.constant dense<0.000000e+00> : vector<128x128xf32>
    %7 = tpu.matmul %5, %6, %cst {dimension_numbers = #tpu.dot_dimension_numbers<[1], [0], [0], [1], [0, 0, 1, 1], [], []>} : vector<128x128xbf16>, vector<128x128xbf16>, vector<128x128xf32> -> vector<128x128xf32>
    %c0_5 = arith.constant 0 : index
    %c0_6 = arith.constant 0 : index
    %8 = vector.load %arg6[%c0_5, %c0_6] : memref<128x128xbf16, #tpu.memory_space<vmem>>, vector<128x128xbf16>
    %c0_7 = arith.constant 0 : index
    %c0_8 = arith.constant 0 : index
    %9 = vector.load %arg7[%c0_7, %c0_8] : memref<128x128xbf16, #tpu.memory_space<vmem>>, vector<128x128xbf16>
    %cst_9 = arith.constant dense<0.000000e+00> : vector<128x128xf32>
    %10 = tpu.matmul %8, %9, %cst_9 {dimension_numbers = #tpu.dot_dimension_numbers<[1], [0], [0], [1], [0, 0, 1, 1], [], []>} : vector<128x128xbf16>, vector<128x128xbf16>, vector<128x128xf32> -> vector<128x128xf32>
    %c0_i32_10 = arith.constant 0 : i32
    %11 = arith.cmpi eq, %arg0, %c0_i32_10 : i32
    %12 = arith.extui %11 : i1 to i32
    %c0_i32_11 = arith.constant 0 : i32
    %13 = arith.cmpi ne, %12, %c0_i32_11 : i32
    scf.if %13 {
      %c0_13 = arith.constant 0 : index
      %c0_14 = arith.constant 0 : index
      %17 = vector.load %arg11[%c0_13, %c0_14] : memref<1x128xf32, #tpu.memory_space<vmem>>, vector<1x128xf32>
      %cst_15 = arith.constant dense<0.000000e+00> : vector<128xf32>
      %18 = vector.multi_reduction <add>, %7, %cst_15 [0] : vector<128x128xf32> to vector<128xf32>
      %19 = vector.shape_cast %18 : vector<128xf32> to vector<1x128xf32>
      %20 = arith.addf %17, %19 : vector<1x128xf32>
      %c0_16 = arith.constant 0 : index
      %c0_17 = arith.constant 0 : index
      %21 = vector.load %arg11[%c0_16, %c0_17] : memref<1x128xf32, #tpu.memory_space<vmem>>, vector<1x128xf32>
      tpu.vector_store %arg11[%c0_16, %c0_17], %20 {strides = array<i32>} : memref<1x128xf32, #tpu.memory_space<vmem>>, vector<1x128xf32>,
      %c0_18 = arith.constant 0 : index
      %c0_19 = arith.constant 0 : index
      %22 = vector.load %arg12[%c0_18, %c0_19] : memref<1x128xf32, #tpu.memory_space<vmem>>, vector<1x128xf32>
      %23 = arith.mulf %7, %7 : vector<128x128xf32>
      %cst_20 = arith.constant dense<0.000000e+00> : vector<128xf32>
      %24 = vector.multi_reduction <add>, %23, %cst_20 [0] : vector<128x128xf32> to vector<128xf32>
      %25 = vector.shape_cast %24 : vector<128xf32> to vector<1x128xf32>
      %26 = arith.addf %22, %25 : vector<1x128xf32>
      %c0_21 = arith.constant 0 : index
      %c0_22 = arith.constant 0 : index
      %27 = vector.load %arg12[%c0_21, %c0_22] : memref<1x128xf32, #tpu.memory_space<vmem>>, vector<1x128xf32>
      tpu.vector_store %arg12[%c0_21, %c0_22], %26 {strides = array<i32>} : memref<1x128xf32, #tpu.memory_space<vmem>>, vector<1x128xf32>,
      %c0_23 = arith.constant 0 : index
      %c0_24 = arith.constant 0 : index
      %28 = vector.load %arg13[%c0_23, %c0_24] : memref<1x128xf32, #tpu.memory_space<vmem>>, vector<1x128xf32>
      %cst_25 = arith.constant dense<0.000000e+00> : vector<128xf32>
      %29 = vector.multi_reduction <add>, %10, %cst_25 [0] : vector<128x128xf32> to vector<128xf32>
      %30 = vector.shape_cast %29 : vector<128xf32> to vector<1x128xf32>
      %31 = arith.addf %28, %30 : vector<1x128xf32>
      %c0_26 = arith.constant 0 : index
      %c0_27 = arith.constant 0 : index
      %32 = vector.load %arg13[%c0_26, %c0_27] : memref<1x128xf32, #tpu.memory_space<vmem>>, vector<1x128xf32>
      tpu.vector_store %arg13[%c0_26, %c0_27], %31 {strides = array<i32>} : memref<1x128xf32, #tpu.memory_space<vmem>>, vector<1x128xf32>,
      %c0_28 = arith.constant 0 : index
      %c0_29 = arith.constant 0 : index
      %33 = vector.load %arg14[%c0_28, %c0_29] : memref<1x128xf32, #tpu.memory_space<vmem>>, vector<1x128xf32>
      %34 = arith.mulf %10, %10 : vector<128x128xf32>
      %cst_30 = arith.constant dense<0.000000e+00> : vector<128xf32>
      %35 = vector.multi_reduction <add>, %34, %cst_30 [0] : vector<128x128xf32> to vector<128xf32>
      %36 = vector.shape_cast %35 : vector<128xf32> to vector<1x128xf32>
      %37 = arith.addf %33, %36 : vector<1x128xf32>
      %c0_31 = arith.constant 0 : index
      %c0_32 = arith.constant 0 : index
      %38 = vector.load %arg14[%c0_31, %c0_32] : memref<1x128xf32, #tpu.memory_space<vmem>>, vector<1x128xf32>
      tpu.vector_store %arg14[%c0_31, %c0_32], %37 {strides = array<i32>} : memref<1x128xf32, #tpu.memory_space<vmem>>, vector<1x128xf32>,
    } else {
    }
    %c1_i32 = arith.constant 1 : i32
    %14 = arith.cmpi eq, %arg0, %c1_i32 : i32
    %15 = arith.extui %14 : i1 to i32
    %c0_i32_12 = arith.constant 0 : i32
    %16 = arith.cmpi ne, %15, %c0_i32_12 : i32
    scf.if %16 {
      %c0_13 = arith.constant 0 : index
      %c0_14 = arith.constant 0 : index
      %17 = vector.load %arg11[%c0_13, %c0_14] : memref<1x128xf32, #tpu.memory_space<vmem>>, vector<1x128xf32>
      %cst_15 = arith.constant 7.812500e-03 : f32
      %18 = vector.broadcast %cst_15 : f32 to vector<1x128xf32>
      %19 = arith.mulf %17, %18 : vector<1x128xf32>
      %c0_16 = arith.constant 0 : index
      %c0_17 = arith.constant 0 : index
      %20 = vector.load %arg12[%c0_16, %c0_17] : memref<1x128xf32, #tpu.memory_space<vmem>>, vector<1x128xf32>
      %cst_18 = arith.constant 7.812500e-03 : f32
      %21 = vector.broadcast %cst_18 : f32 to vector<1x128xf32>
      %22 = arith.mulf %20, %21 : vector<1x128xf32>
      %23 = arith.mulf %19, %19 : vector<1x128xf32>
      %24 = arith.subf %22, %23 : vector<1x128xf32>
      %cst_19 = arith.constant 0.000000e+00 : f32
      %25 = vector.broadcast %cst_19 : f32 to vector<1x128xf32>
      %26 = arith.maximumf %24, %25 : vector<1x128xf32>
      %27 = vector.broadcast %19 : vector<1x128xf32> to vector<128x128xf32>
      %28 = arith.subf %7, %27 : vector<128x128xf32>
      %cst_20 = arith.constant 9.99999974E-6 : f32
      %29 = vector.broadcast %cst_20 : f32 to vector<1x128xf32>
      %30 = arith.addf %26, %29 : vector<1x128xf32>
      %31 = math.rsqrt %30 : vector<1x128xf32>
      %c0_21 = arith.constant 0 : index
      %c0_22 = arith.constant 0 : index
      %32 = vector.load %arg4[%c0_21, %c0_22] : memref<1x128xf32, #tpu.memory_space<vmem>>, vector<1x128xf32>
      %33 = arith.mulf %31, %32 : vector<1x128xf32>
      %34 = vector.broadcast %33 : vector<1x128xf32> to vector<128x128xf32>
      %35 = arith.mulf %28, %34 : vector<128x128xf32>
      %c0_23 = arith.constant 0 : index
      %c0_24 = arith.constant 0 : index
      %36 = vector.load %arg5[%c0_23, %c0_24] : memref<1x128xf32, #tpu.memory_space<vmem>>, vector<1x128xf32>
      %37 = vector.broadcast %36 : vector<1x128xf32> to vector<128x128xf32>
      %38 = arith.addf %35, %37 : vector<128x128xf32>
      %c0_25 = arith.constant 0 : index
      %c0_26 = arith.constant 0 : index
      %39 = vector.load %arg13[%c0_25, %c0_26] : memref<1x128xf32, #tpu.memory_space<vmem>>, vector<1x128xf32>
      %cst_27 = arith.constant 7.812500e-03 : f32
      %40 = vector.broadcast %cst_27 : f32 to vector<1x128xf32>
      %41 = arith.mulf %39, %40 : vector<1x128xf32>
      %c0_28 = arith.constant 0 : index
      %c0_29 = arith.constant 0 : index
      %42 = vector.load %arg14[%c0_28, %c0_29] : memref<1x128xf32, #tpu.memory_space<vmem>>, vector<1x128xf32>
      %cst_30 = arith.constant 7.812500e-03 : f32
      %43 = vector.broadcast %cst_30 : f32 to vector<1x128xf32>
      %44 = arith.mulf %42, %43 : vector<1x128xf32>
      %45 = arith.mulf %41, %41 : vector<1x128xf32>
      %46 = arith.subf %44, %45 : vector<1x128xf32>
      %cst_31 = arith.constant 0.000000e+00 : f32
      %47 = vector.broadcast %cst_31 : f32 to vector<1x128xf32>
      %48 = arith.maximumf %46, %47 : vector<1x128xf32>
      %49 = vector.broadcast %41 : vector<1x128xf32> to vector<128x128xf32>
      %50 = arith.subf %10, %49 : vector<128x128xf32>
      %cst_32 = arith.constant 9.99999974E-6 : f32
      %51 = vector.broadcast %cst_32 : f32 to vector<1x128xf32>
      %52 = arith.addf %48, %51 : vector<1x128xf32>
      %53 = math.rsqrt %52 : vector<1x128xf32>
      %c0_33 = arith.constant 0 : index
      %c0_34 = arith.constant 0 : index
      %54 = vector.load %arg8[%c0_33, %c0_34] : memref<1x128xf32, #tpu.memory_space<vmem>>, vector<1x128xf32>
      %55 = arith.mulf %53, %54 : vector<1x128xf32>
      %56 = vector.broadcast %55 : vector<1x128xf32> to vector<128x128xf32>
      %57 = arith.mulf %50, %56 : vector<128x128xf32>
      %c0_35 = arith.constant 0 : index
      %c0_36 = arith.constant 0 : index
      %58 = vector.load %arg9[%c0_35, %c0_36] : memref<1x128xf32, #tpu.memory_space<vmem>>, vector<1x128xf32>
      %59 = vector.broadcast %58 : vector<1x128xf32> to vector<128x128xf32>
      %60 = arith.addf %57, %59 : vector<128x128xf32>
      %61 = arith.addf %38, %60 : vector<128x128xf32>
      %cst_37 = arith.constant 0.000000e+00 : f32
      %62 = vector.broadcast %cst_37 : f32 to vector<128x128xf32>
      %63 = arith.maximumf %61, %62 : vector<128x128xf32>
      %64 = arith.truncf %63 : vector<128x128xf32> to vector<128x128xbf16>
      %c0_38 = arith.constant 0 : index
      %c0_39 = arith.constant 0 : index
      %65 = vector.load %arg10[%c0_38, %c0_39] : memref<128x128xbf16, #tpu.memory_space<vmem>>, vector<128x128xbf16>
      tpu.vector_store %arg10[%c0_38, %c0_39], %64 {strides = array<i32>} : memref<128x128xbf16, #tpu.memory_space<vmem>>, vector<128x128xbf16>,
    } else {
    }
    return
  }
  func.func @transform_0(%arg0: i32, %arg1: i32) -> (i32, i32) {
    %c0_i32 = arith.constant 0 : i32
    %c0_i32_0 = arith.constant 0 : i32
    return %arg1, %c0_i32 : i32, i32
  }
  func.func @transform_1(%arg0: i32, %arg1: i32) -> (i32, i32) {
    %c0_i32 = arith.constant 0 : i32
    %c0_i32_0 = arith.constant 0 : i32
    %c0_i32_1 = arith.constant 0 : i32
    return %c0_i32, %c0_i32_0 : i32, i32
  }
  func.func @transform_2(%arg0: i32, %arg1: i32) -> (i32, i32) {
    %c0_i32 = arith.constant 0 : i32
    %c0_i32_0 = arith.constant 0 : i32
    %c0_i32_1 = arith.constant 0 : i32
    return %c0_i32, %c0_i32_0 : i32, i32
  }
  func.func @transform_3(%arg0: i32, %arg1: i32) -> (i32, i32) {
    %c0_i32 = arith.constant 0 : i32
    %c0_i32_0 = arith.constant 0 : i32
    %c0_i32_1 = arith.constant 0 : i32
    return %c0_i32, %c0_i32_0 : i32, i32
  }
  func.func @transform_4(%arg0: i32, %arg1: i32) -> (i32, i32) {
    %c0_i32 = arith.constant 0 : i32
    %c0_i32_0 = arith.constant 0 : i32
    return %arg1, %c0_i32 : i32, i32
  }
  func.func @transform_5(%arg0: i32, %arg1: i32) -> (i32, i32) {
    %c0_i32 = arith.constant 0 : i32
    %c0_i32_0 = arith.constant 0 : i32
    %c0_i32_1 = arith.constant 0 : i32
    return %c0_i32, %c0_i32_0 : i32, i32
  }
  func.func @transform_6(%arg0: i32, %arg1: i32) -> (i32, i32) {
    %c0_i32 = arith.constant 0 : i32
    %c0_i32_0 = arith.constant 0 : i32
    %c0_i32_1 = arith.constant 0 : i32
    return %c0_i32, %c0_i32_0 : i32, i32
  }
  func.func @transform_7(%arg0: i32, %arg1: i32) -> (i32, i32) {
    %c0_i32 = arith.constant 0 : i32
    %c0_i32_0 = arith.constant 0 : i32
    %c0_i32_1 = arith.constant 0 : i32
    return %c0_i32, %c0_i32_0 : i32, i32
  }
  func.func @transform_8(%arg0: i32, %arg1: i32) -> (i32, i32) {
    %0 = arith.muli %arg1, %arg0 : i32
    %c0_i32 = arith.constant 0 : i32
    %c0_i32_0 = arith.constant 0 : i32
    return %0, %c0_i32 : i32, i32
  }
}

module attributes {stable_mosaic.version = 11 : i64} {
  func.func @_mm_bn_kernel(%arg0: i32, %arg1: i32, %arg2: memref<128x128xbf16, #tpu.memory_space<vmem>>, %arg3: memref<128x128xbf16, #tpu.memory_space<vmem>>, %arg4: memref<1x128xf32, #tpu.memory_space<vmem>>, %arg5: memref<1x128xf32, #tpu.memory_space<vmem>>, %arg6: memref<128x128xbf16, #tpu.memory_space<vmem>>, %arg7: memref<1x128xf32, #tpu.memory_space<vmem>>, %arg8: memref<1x128xf32, #tpu.memory_space<vmem>>) attributes {dimension_semantics = [#tpu.dimension_semantics<arbitrary>, #tpu.dimension_semantics<arbitrary>], iteration_bounds = array<i64: 2, 1>, scalar_prefetch = 0 : i64, scratch_operands = 2 : i64, tpu.core_type = #tpu.core_type<tc>, window_params = [{transform_indices = @transform_0, window_bounds = array<i64: 128, 128>}, {pipeline_mode = #tpu.pipeline_mode<synchronous>, transform_indices = @transform_1, window_bounds = array<i64: 128, 128>}, {pipeline_mode = #tpu.pipeline_mode<synchronous>, transform_indices = @transform_2, window_bounds = array<i64: 1, 128>}, {pipeline_mode = #tpu.pipeline_mode<synchronous>, transform_indices = @transform_3, window_bounds = array<i64: 1, 128>}, {transform_indices = @transform_4, window_bounds = array<i64: 128, 128>}]} {
    %c0_i32 = arith.constant 0 : i32
    %0 = arith.cmpi eq, %arg0, %c0_i32 : i32
    %c0_i32_0 = arith.constant 0 : i32
    %1 = arith.cmpi eq, %arg1, %c0_i32_0 : i32
    %2 = arith.andi %0, %1 : i1
    %3 = arith.extui %2 : i1 to i32
    %c0_i32_1 = arith.constant 0 : i32
    %4 = arith.cmpi ne, %3, %c0_i32_1 : i32
    scf.if %4 {
      %cst_8 = arith.constant 0.000000e+00 : f32
      %14 = vector.broadcast %cst_8 : f32 to vector<1x128xf32>
      %c0_9 = arith.constant 0 : index
      %c0_10 = arith.constant 0 : index
      %15 = vector.load %arg7[%c0_9, %c0_10] : memref<1x128xf32, #tpu.memory_space<vmem>>, vector<1x128xf32>
      tpu.vector_store %arg7[%c0_9, %c0_10], %14 {strides = array<i32>} : memref<1x128xf32, #tpu.memory_space<vmem>>, vector<1x128xf32>,
      %cst_11 = arith.constant 0.000000e+00 : f32
      %16 = vector.broadcast %cst_11 : f32 to vector<1x128xf32>
      %c0_12 = arith.constant 0 : index
      %c0_13 = arith.constant 0 : index
      %17 = vector.load %arg8[%c0_12, %c0_13] : memref<1x128xf32, #tpu.memory_space<vmem>>, vector<1x128xf32>
      tpu.vector_store %arg8[%c0_12, %c0_13], %16 {strides = array<i32>} : memref<1x128xf32, #tpu.memory_space<vmem>>, vector<1x128xf32>,
    } else {
    }
    %c0 = arith.constant 0 : index
    %c0_2 = arith.constant 0 : index
    %5 = vector.load %arg2[%c0, %c0_2] : memref<128x128xbf16, #tpu.memory_space<vmem>>, vector<128x128xbf16>
    %c0_3 = arith.constant 0 : index
    %c0_4 = arith.constant 0 : index
    %6 = vector.load %arg3[%c0_3, %c0_4] : memref<128x128xbf16, #tpu.memory_space<vmem>>, vector<128x128xbf16>
    %cst = arith.constant dense<0.000000e+00> : vector<128x128xf32>
    %7 = tpu.matmul %5, %6, %cst {dimension_numbers = #tpu.dot_dimension_numbers<[1], [0], [0], [1], [0, 0, 1, 1], [], []>} : vector<128x128xbf16>, vector<128x128xbf16>, vector<128x128xf32> -> vector<128x128xf32>
    %c0_i32_5 = arith.constant 0 : i32
    %8 = arith.cmpi eq, %arg0, %c0_i32_5 : i32
    %9 = arith.extui %8 : i1 to i32
    %c0_i32_6 = arith.constant 0 : i32
    %10 = arith.cmpi ne, %9, %c0_i32_6 : i32
    scf.if %10 {
      %c0_8 = arith.constant 0 : index
      %c0_9 = arith.constant 0 : index
      %14 = vector.load %arg7[%c0_8, %c0_9] : memref<1x128xf32, #tpu.memory_space<vmem>>, vector<1x128xf32>
      %cst_10 = arith.constant dense<0.000000e+00> : vector<128xf32>
      %15 = vector.multi_reduction <add>, %7, %cst_10 [0] : vector<128x128xf32> to vector<128xf32>
      %16 = vector.shape_cast %15 : vector<128xf32> to vector<1x128xf32>
      %17 = arith.addf %14, %16 : vector<1x128xf32>
      %c0_11 = arith.constant 0 : index
      %c0_12 = arith.constant 0 : index
      %18 = vector.load %arg7[%c0_11, %c0_12] : memref<1x128xf32, #tpu.memory_space<vmem>>, vector<1x128xf32>
      tpu.vector_store %arg7[%c0_11, %c0_12], %17 {strides = array<i32>} : memref<1x128xf32, #tpu.memory_space<vmem>>, vector<1x128xf32>,
      %c0_13 = arith.constant 0 : index
      %c0_14 = arith.constant 0 : index
      %19 = vector.load %arg8[%c0_13, %c0_14] : memref<1x128xf32, #tpu.memory_space<vmem>>, vector<1x128xf32>
      %20 = arith.mulf %7, %7 : vector<128x128xf32>
      %cst_15 = arith.constant dense<0.000000e+00> : vector<128xf32>
      %21 = vector.multi_reduction <add>, %20, %cst_15 [0] : vector<128x128xf32> to vector<128xf32>
      %22 = vector.shape_cast %21 : vector<128xf32> to vector<1x128xf32>
      %23 = arith.addf %19, %22 : vector<1x128xf32>
      %c0_16 = arith.constant 0 : index
      %c0_17 = arith.constant 0 : index
      %24 = vector.load %arg8[%c0_16, %c0_17] : memref<1x128xf32, #tpu.memory_space<vmem>>, vector<1x128xf32>
      tpu.vector_store %arg8[%c0_16, %c0_17], %23 {strides = array<i32>} : memref<1x128xf32, #tpu.memory_space<vmem>>, vector<1x128xf32>,
    } else {
    }
    %c1_i32 = arith.constant 1 : i32
    %11 = arith.cmpi eq, %arg0, %c1_i32 : i32
    %12 = arith.extui %11 : i1 to i32
    %c0_i32_7 = arith.constant 0 : i32
    %13 = arith.cmpi ne, %12, %c0_i32_7 : i32
    scf.if %13 {
      %c0_8 = arith.constant 0 : index
      %c0_9 = arith.constant 0 : index
      %14 = vector.load %arg7[%c0_8, %c0_9] : memref<1x128xf32, #tpu.memory_space<vmem>>, vector<1x128xf32>
      %cst_10 = arith.constant 7.812500e-03 : f32
      %15 = vector.broadcast %cst_10 : f32 to vector<1x128xf32>
      %16 = arith.mulf %14, %15 : vector<1x128xf32>
      %c0_11 = arith.constant 0 : index
      %c0_12 = arith.constant 0 : index
      %17 = vector.load %arg8[%c0_11, %c0_12] : memref<1x128xf32, #tpu.memory_space<vmem>>, vector<1x128xf32>
      %cst_13 = arith.constant 7.812500e-03 : f32
      %18 = vector.broadcast %cst_13 : f32 to vector<1x128xf32>
      %19 = arith.mulf %17, %18 : vector<1x128xf32>
      %20 = arith.mulf %16, %16 : vector<1x128xf32>
      %21 = arith.subf %19, %20 : vector<1x128xf32>
      %cst_14 = arith.constant 0.000000e+00 : f32
      %22 = vector.broadcast %cst_14 : f32 to vector<1x128xf32>
      %23 = arith.maximumf %21, %22 : vector<1x128xf32>
      %cst_15 = arith.constant 9.99999974E-6 : f32
      %24 = vector.broadcast %cst_15 : f32 to vector<1x128xf32>
      %25 = arith.addf %23, %24 : vector<1x128xf32>
      %26 = math.rsqrt %25 : vector<1x128xf32>
      %c0_16 = arith.constant 0 : index
      %c0_17 = arith.constant 0 : index
      %27 = vector.load %arg4[%c0_16, %c0_17] : memref<1x128xf32, #tpu.memory_space<vmem>>, vector<1x128xf32>
      %28 = arith.mulf %26, %27 : vector<1x128xf32>
      %29 = vector.broadcast %16 : vector<1x128xf32> to vector<128x128xf32>
      %30 = arith.subf %7, %29 : vector<128x128xf32>
      %31 = vector.broadcast %28 : vector<1x128xf32> to vector<128x128xf32>
      %32 = arith.mulf %30, %31 : vector<128x128xf32>
      %c0_18 = arith.constant 0 : index
      %c0_19 = arith.constant 0 : index
      %33 = vector.load %arg5[%c0_18, %c0_19] : memref<1x128xf32, #tpu.memory_space<vmem>>, vector<1x128xf32>
      %34 = vector.broadcast %33 : vector<1x128xf32> to vector<128x128xf32>
      %35 = arith.addf %32, %34 : vector<128x128xf32>
      %cst_20 = arith.constant 0.000000e+00 : f32
      %36 = vector.broadcast %cst_20 : f32 to vector<128x128xf32>
      %37 = arith.maximumf %35, %36 : vector<128x128xf32>
      %38 = arith.truncf %37 : vector<128x128xf32> to vector<128x128xbf16>
      %c0_21 = arith.constant 0 : index
      %c0_22 = arith.constant 0 : index
      %39 = vector.load %arg6[%c0_21, %c0_22] : memref<128x128xbf16, #tpu.memory_space<vmem>>, vector<128x128xbf16>
      tpu.vector_store %arg6[%c0_21, %c0_22], %38 {strides = array<i32>} : memref<128x128xbf16, #tpu.memory_space<vmem>>, vector<128x128xbf16>,
    } else {
    }
    return
  }
  func.func @transform_0(%arg0: i32, %arg1: i32) -> (i32, i32) {
    %c0_i32 = arith.constant 0 : i32
    %c0_i32_0 = arith.constant 0 : i32
    return %arg1, %c0_i32 : i32, i32
  }
  func.func @transform_1(%arg0: i32, %arg1: i32) -> (i32, i32) {
    %c0_i32 = arith.constant 0 : i32
    %c0_i32_0 = arith.constant 0 : i32
    %c0_i32_1 = arith.constant 0 : i32
    return %c0_i32, %c0_i32_0 : i32, i32
  }
  func.func @transform_2(%arg0: i32, %arg1: i32) -> (i32, i32) {
    %c0_i32 = arith.constant 0 : i32
    %c0_i32_0 = arith.constant 0 : i32
    %c0_i32_1 = arith.constant 0 : i32
    return %c0_i32, %c0_i32_0 : i32, i32
  }
  func.func @transform_3(%arg0: i32, %arg1: i32) -> (i32, i32) {
    %c0_i32 = arith.constant 0 : i32
    %c0_i32_0 = arith.constant 0 : i32
    %c0_i32_1 = arith.constant 0 : i32
    return %c0_i32, %c0_i32_0 : i32, i32
  }
  func.func @transform_4(%arg0: i32, %arg1: i32) -> (i32, i32) {
    %0 = arith.muli %arg1, %arg0 : i32
    %c0_i32 = arith.constant 0 : i32
    %c0_i32_0 = arith.constant 0 : i32
    return %0, %c0_i32 : i32, i32
  }
}

module attributes {stable_mosaic.version = 11 : i64} {
  func.func @_conv2_bn_kernel(%arg0: i32, %arg1: i32, %arg2: memref<1x10x10x128xbf16, #tpu.memory_space<vmem>>, %arg3: memref<9x128x128xbf16, #tpu.memory_space<vmem>>, %arg4: memref<1x128xf32, #tpu.memory_space<vmem>>, %arg5: memref<1x128xf32, #tpu.memory_space<vmem>>, %arg6: memref<64x128xbf16, #tpu.memory_space<vmem>>, %arg7: memref<1x128xf32, #tpu.memory_space<vmem>>, %arg8: memref<1x128xf32, #tpu.memory_space<vmem>>) attributes {dimension_semantics = [#tpu.dimension_semantics<arbitrary>, #tpu.dimension_semantics<arbitrary>], iteration_bounds = array<i64: 2, 2>, scalar_prefetch = 0 : i64, scratch_operands = 2 : i64, tpu.core_type = #tpu.core_type<tc>, window_params = [{transform_indices = @transform_0, window_bounds = array<i64: 1, 10, 10, 128>}, {pipeline_mode = #tpu.pipeline_mode<synchronous>, transform_indices = @transform_1, window_bounds = array<i64: 9, 128, 128>}, {pipeline_mode = #tpu.pipeline_mode<synchronous>, transform_indices = @transform_2, window_bounds = array<i64: 1, 128>}, {pipeline_mode = #tpu.pipeline_mode<synchronous>, transform_indices = @transform_3, window_bounds = array<i64: 1, 128>}, {transform_indices = @transform_4, window_bounds = array<i64: 64, 128>}]} {
    %c0_i32 = arith.constant 0 : i32
    %0 = arith.cmpi eq, %arg0, %c0_i32 : i32
    %c0_i32_0 = arith.constant 0 : i32
    %1 = arith.cmpi eq, %arg1, %c0_i32_0 : i32
    %2 = arith.andi %0, %1 : i1
    %3 = arith.extui %2 : i1 to i32
    %c0_i32_1 = arith.constant 0 : i32
    %4 = arith.cmpi ne, %3, %c0_i32_1 : i32
    scf.if %4 {
      %cst_68 = arith.constant 0.000000e+00 : f32
      %75 = vector.broadcast %cst_68 : f32 to vector<1x128xf32>
      %c0_69 = arith.constant 0 : index
      %c0_70 = arith.constant 0 : index
      %76 = vector.load %arg7[%c0_69, %c0_70] : memref<1x128xf32, #tpu.memory_space<vmem>>, vector<1x128xf32>
      tpu.vector_store %arg7[%c0_69, %c0_70], %75 {strides = array<i32>} : memref<1x128xf32, #tpu.memory_space<vmem>>, vector<1x128xf32>,
      %cst_71 = arith.constant 0.000000e+00 : f32
      %77 = vector.broadcast %cst_71 : f32 to vector<1x128xf32>
      %c0_72 = arith.constant 0 : index
      %c0_73 = arith.constant 0 : index
      %78 = vector.load %arg8[%c0_72, %c0_73] : memref<1x128xf32, #tpu.memory_space<vmem>>, vector<1x128xf32>
      tpu.vector_store %arg8[%c0_72, %c0_73], %77 {strides = array<i32>} : memref<1x128xf32, #tpu.memory_space<vmem>>, vector<1x128xf32>,
    } else {
    }
    %cst = arith.constant 0.000000e+00 : f32
    %5 = vector.broadcast %cst : f32 to vector<64x128xf32>
    %c0 = arith.constant 0 : index
    %c0_2 = arith.constant 0 : index
    %c0_3 = arith.constant 0 : index
    %c0_4 = arith.constant 0 : index
    %6 = vector.load %arg2[%c0, %c0_2, %c0_3, %c0_4] : memref<1x10x10x128xbf16, #tpu.memory_space<vmem>>, vector<1x8x8x128xbf16>
    %7 = vector.shape_cast %6 : vector<1x8x8x128xbf16> to vector<8x8x128xbf16>
    %8 = vector.shape_cast %7 : vector<8x8x128xbf16> to vector<64x128xbf16>
    %c0_5 = arith.constant 0 : index
    %c0_6 = arith.constant 0 : index
    %c0_7 = arith.constant 0 : index
    %9 = vector.load %arg3[%c0_5, %c0_6, %c0_7] : memref<9x128x128xbf16, #tpu.memory_space<vmem>>, vector<1x128x128xbf16>
    %10 = vector.shape_cast %9 : vector<1x128x128xbf16> to vector<128x128xbf16>
    %cst_8 = arith.constant dense<0.000000e+00> : vector<64x128xf32>
    %11 = tpu.matmul %8, %10, %cst_8 {dimension_numbers = #tpu.dot_dimension_numbers<[1], [0], [0], [1], [0, 0, 1, 1], [], []>} : vector<64x128xbf16>, vector<128x128xbf16>, vector<64x128xf32> -> vector<64x128xf32>
    %12 = arith.addf %5, %11 : vector<64x128xf32>
    %c0_9 = arith.constant 0 : index
    %c0_10 = arith.constant 0 : index
    %c1 = arith.constant 1 : index
    %c0_11 = arith.constant 0 : index
    %13 = vector.load %arg2[%c0_9, %c0_10, %c1, %c0_11] : memref<1x10x10x128xbf16, #tpu.memory_space<vmem>>, vector<1x8x8x128xbf16>
    %14 = vector.shape_cast %13 : vector<1x8x8x128xbf16> to vector<8x8x128xbf16>
    %15 = vector.shape_cast %14 : vector<8x8x128xbf16> to vector<64x128xbf16>
    %c1_12 = arith.constant 1 : index
    %c0_13 = arith.constant 0 : index
    %c0_14 = arith.constant 0 : index
    %16 = vector.load %arg3[%c1_12, %c0_13, %c0_14] : memref<9x128x128xbf16, #tpu.memory_space<vmem>>, vector<1x128x128xbf16>
    %17 = vector.shape_cast %16 : vector<1x128x128xbf16> to vector<128x128xbf16>
    %cst_15 = arith.constant dense<0.000000e+00> : vector<64x128xf32>
    %18 = tpu.matmul %15, %17, %cst_15 {dimension_numbers = #tpu.dot_dimension_numbers<[1], [0], [0], [1], [0, 0, 1, 1], [], []>} : vector<64x128xbf16>, vector<128x128xbf16>, vector<64x128xf32> -> vector<64x128xf32>
    %19 = arith.addf %12, %18 : vector<64x128xf32>
    %c0_16 = arith.constant 0 : index
    %c0_17 = arith.constant 0 : index
    %c2 = arith.constant 2 : index
    %c0_18 = arith.constant 0 : index
    %20 = vector.load %arg2[%c0_16, %c0_17, %c2, %c0_18] : memref<1x10x10x128xbf16, #tpu.memory_space<vmem>>, vector<1x8x8x128xbf16>
    %21 = vector.shape_cast %20 : vector<1x8x8x128xbf16> to vector<8x8x128xbf16>
    %22 = vector.shape_cast %21 : vector<8x8x128xbf16> to vector<64x128xbf16>
    %c2_19 = arith.constant 2 : index
    %c0_20 = arith.constant 0 : index
    %c0_21 = arith.constant 0 : index
    %23 = vector.load %arg3[%c2_19, %c0_20, %c0_21] : memref<9x128x128xbf16, #tpu.memory_space<vmem>>, vector<1x128x128xbf16>
    %24 = vector.shape_cast %23 : vector<1x128x128xbf16> to vector<128x128xbf16>
    %cst_22 = arith.constant dense<0.000000e+00> : vector<64x128xf32>
    %25 = tpu.matmul %22, %24, %cst_22 {dimension_numbers = #tpu.dot_dimension_numbers<[1], [0], [0], [1], [0, 0, 1, 1], [], []>} : vector<64x128xbf16>, vector<128x128xbf16>, vector<64x128xf32> -> vector<64x128xf32>
    %26 = arith.addf %19, %25 : vector<64x128xf32>
    %c0_23 = arith.constant 0 : index
    %c1_24 = arith.constant 1 : index
    %c0_25 = arith.constant 0 : index
    %c0_26 = arith.constant 0 : index
    %27 = vector.load %arg2[%c0_23, %c1_24, %c0_25, %c0_26] : memref<1x10x10x128xbf16, #tpu.memory_space<vmem>>, vector<1x8x8x128xbf16>
    %28 = vector.shape_cast %27 : vector<1x8x8x128xbf16> to vector<8x8x128xbf16>
    %29 = vector.shape_cast %28 : vector<8x8x128xbf16> to vector<64x128xbf16>
    %c3 = arith.constant 3 : index
    %c0_27 = arith.constant 0 : index
    %c0_28 = arith.constant 0 : index
    %30 = vector.load %arg3[%c3, %c0_27, %c0_28] : memref<9x128x128xbf16, #tpu.memory_space<vmem>>, vector<1x128x128xbf16>
    %31 = vector.shape_cast %30 : vector<1x128x128xbf16> to vector<128x128xbf16>
    %cst_29 = arith.constant dense<0.000000e+00> : vector<64x128xf32>
    %32 = tpu.matmul %29, %31, %cst_29 {dimension_numbers = #tpu.dot_dimension_numbers<[1], [0], [0], [1], [0, 0, 1, 1], [], []>} : vector<64x128xbf16>, vector<128x128xbf16>, vector<64x128xf32> -> vector<64x128xf32>
    %33 = arith.addf %26, %32 : vector<64x128xf32>
    %c0_30 = arith.constant 0 : index
    %c1_31 = arith.constant 1 : index
    %c1_32 = arith.constant 1 : index
    %c0_33 = arith.constant 0 : index
    %34 = vector.load %arg2[%c0_30, %c1_31, %c1_32, %c0_33] : memref<1x10x10x128xbf16, #tpu.memory_space<vmem>>, vector<1x8x8x128xbf16>
    %35 = vector.shape_cast %34 : vector<1x8x8x128xbf16> to vector<8x8x128xbf16>
    %36 = vector.shape_cast %35 : vector<8x8x128xbf16> to vector<64x128xbf16>
    %c4 = arith.constant 4 : index
    %c0_34 = arith.constant 0 : index
    %c0_35 = arith.constant 0 : index
    %37 = vector.load %arg3[%c4, %c0_34, %c0_35] : memref<9x128x128xbf16, #tpu.memory_space<vmem>>, vector<1x128x128xbf16>
    %38 = vector.shape_cast %37 : vector<1x128x128xbf16> to vector<128x128xbf16>
    %cst_36 = arith.constant dense<0.000000e+00> : vector<64x128xf32>
    %39 = tpu.matmul %36, %38, %cst_36 {dimension_numbers = #tpu.dot_dimension_numbers<[1], [0], [0], [1], [0, 0, 1, 1], [], []>} : vector<64x128xbf16>, vector<128x128xbf16>, vector<64x128xf32> -> vector<64x128xf32>
    %40 = arith.addf %33, %39 : vector<64x128xf32>
    %c0_37 = arith.constant 0 : index
    %c1_38 = arith.constant 1 : index
    %c2_39 = arith.constant 2 : index
    %c0_40 = arith.constant 0 : index
    %41 = vector.load %arg2[%c0_37, %c1_38, %c2_39, %c0_40] : memref<1x10x10x128xbf16, #tpu.memory_space<vmem>>, vector<1x8x8x128xbf16>
    %42 = vector.shape_cast %41 : vector<1x8x8x128xbf16> to vector<8x8x128xbf16>
    %43 = vector.shape_cast %42 : vector<8x8x128xbf16> to vector<64x128xbf16>
    %c5 = arith.constant 5 : index
    %c0_41 = arith.constant 0 : index
    %c0_42 = arith.constant 0 : index
    %44 = vector.load %arg3[%c5, %c0_41, %c0_42] : memref<9x128x128xbf16, #tpu.memory_space<vmem>>, vector<1x128x128xbf16>
    %45 = vector.shape_cast %44 : vector<1x128x128xbf16> to vector<128x128xbf16>
    %cst_43 = arith.constant dense<0.000000e+00> : vector<64x128xf32>
    %46 = tpu.matmul %43, %45, %cst_43 {dimension_numbers = #tpu.dot_dimension_numbers<[1], [0], [0], [1], [0, 0, 1, 1], [], []>} : vector<64x128xbf16>, vector<128x128xbf16>, vector<64x128xf32> -> vector<64x128xf32>
    %47 = arith.addf %40, %46 : vector<64x128xf32>
    %c0_44 = arith.constant 0 : index
    %c2_45 = arith.constant 2 : index
    %c0_46 = arith.constant 0 : index
    %c0_47 = arith.constant 0 : index
    %48 = vector.load %arg2[%c0_44, %c2_45, %c0_46, %c0_47] : memref<1x10x10x128xbf16, #tpu.memory_space<vmem>>, vector<1x8x8x128xbf16>
    %49 = vector.shape_cast %48 : vector<1x8x8x128xbf16> to vector<8x8x128xbf16>
    %50 = vector.shape_cast %49 : vector<8x8x128xbf16> to vector<64x128xbf16>
    %c6 = arith.constant 6 : index
    %c0_48 = arith.constant 0 : index
    %c0_49 = arith.constant 0 : index
    %51 = vector.load %arg3[%c6, %c0_48, %c0_49] : memref<9x128x128xbf16, #tpu.memory_space<vmem>>, vector<1x128x128xbf16>
    %52 = vector.shape_cast %51 : vector<1x128x128xbf16> to vector<128x128xbf16>
    %cst_50 = arith.constant dense<0.000000e+00> : vector<64x128xf32>
    %53 = tpu.matmul %50, %52, %cst_50 {dimension_numbers = #tpu.dot_dimension_numbers<[1], [0], [0], [1], [0, 0, 1, 1], [], []>} : vector<64x128xbf16>, vector<128x128xbf16>, vector<64x128xf32> -> vector<64x128xf32>
    %54 = arith.addf %47, %53 : vector<64x128xf32>
    %c0_51 = arith.constant 0 : index
    %c2_52 = arith.constant 2 : index
    %c1_53 = arith.constant 1 : index
    %c0_54 = arith.constant 0 : index
    %55 = vector.load %arg2[%c0_51, %c2_52, %c1_53, %c0_54] : memref<1x10x10x128xbf16, #tpu.memory_space<vmem>>, vector<1x8x8x128xbf16>
    %56 = vector.shape_cast %55 : vector<1x8x8x128xbf16> to vector<8x8x128xbf16>
    %57 = vector.shape_cast %56 : vector<8x8x128xbf16> to vector<64x128xbf16>
    %c7 = arith.constant 7 : index
    %c0_55 = arith.constant 0 : index
    %c0_56 = arith.constant 0 : index
    %58 = vector.load %arg3[%c7, %c0_55, %c0_56] : memref<9x128x128xbf16, #tpu.memory_space<vmem>>, vector<1x128x128xbf16>
    %59 = vector.shape_cast %58 : vector<1x128x128xbf16> to vector<128x128xbf16>
    %cst_57 = arith.constant dense<0.000000e+00> : vector<64x128xf32>
    %60 = tpu.matmul %57, %59, %cst_57 {dimension_numbers = #tpu.dot_dimension_numbers<[1], [0], [0], [1], [0, 0, 1, 1], [], []>} : vector<64x128xbf16>, vector<128x128xbf16>, vector<64x128xf32> -> vector<64x128xf32>
    %61 = arith.addf %54, %60 : vector<64x128xf32>
    %c0_58 = arith.constant 0 : index
    %c2_59 = arith.constant 2 : index
    %c2_60 = arith.constant 2 : index
    %c0_61 = arith.constant 0 : index
    %62 = vector.load %arg2[%c0_58, %c2_59, %c2_60, %c0_61] : memref<1x10x10x128xbf16, #tpu.memory_space<vmem>>, vector<1x8x8x128xbf16>
    %63 = vector.shape_cast %62 : vector<1x8x8x128xbf16> to vector<8x8x128xbf16>
    %64 = vector.shape_cast %63 : vector<8x8x128xbf16> to vector<64x128xbf16>
    %c8 = arith.constant 8 : index
    %c0_62 = arith.constant 0 : index
    %c0_63 = arith.constant 0 : index
    %65 = vector.load %arg3[%c8, %c0_62, %c0_63] : memref<9x128x128xbf16, #tpu.memory_space<vmem>>, vector<1x128x128xbf16>
    %66 = vector.shape_cast %65 : vector<1x128x128xbf16> to vector<128x128xbf16>
    %cst_64 = arith.constant dense<0.000000e+00> : vector<64x128xf32>
    %67 = tpu.matmul %64, %66, %cst_64 {dimension_numbers = #tpu.dot_dimension_numbers<[1], [0], [0], [1], [0, 0, 1, 1], [], []>} : vector<64x128xbf16>, vector<128x128xbf16>, vector<64x128xf32> -> vector<64x128xf32>
    %68 = arith.addf %61, %67 : vector<64x128xf32>
    %c0_i32_65 = arith.constant 0 : i32
    %69 = arith.cmpi eq, %arg0, %c0_i32_65 : i32
    %70 = arith.extui %69 : i1 to i32
    %c0_i32_66 = arith.constant 0 : i32
    %71 = arith.cmpi ne, %70, %c0_i32_66 : i32
    scf.if %71 {
      %c0_68 = arith.constant 0 : index
      %c0_69 = arith.constant 0 : index
      %75 = vector.load %arg7[%c0_68, %c0_69] : memref<1x128xf32, #tpu.memory_space<vmem>>, vector<1x128xf32>
      %cst_70 = arith.constant dense<0.000000e+00> : vector<128xf32>
      %76 = vector.multi_reduction <add>, %68, %cst_70 [0] : vector<64x128xf32> to vector<128xf32>
      %77 = vector.shape_cast %76 : vector<128xf32> to vector<1x128xf32>
      %78 = arith.addf %75, %77 : vector<1x128xf32>
      %c0_71 = arith.constant 0 : index
      %c0_72 = arith.constant 0 : index
      %79 = vector.load %arg7[%c0_71, %c0_72] : memref<1x128xf32, #tpu.memory_space<vmem>>, vector<1x128xf32>
      tpu.vector_store %arg7[%c0_71, %c0_72], %78 {strides = array<i32>} : memref<1x128xf32, #tpu.memory_space<vmem>>, vector<1x128xf32>,
      %c0_73 = arith.constant 0 : index
      %c0_74 = arith.constant 0 : index
      %80 = vector.load %arg8[%c0_73, %c0_74] : memref<1x128xf32, #tpu.memory_space<vmem>>, vector<1x128xf32>
      %81 = arith.mulf %68, %68 : vector<64x128xf32>
      %cst_75 = arith.constant dense<0.000000e+00> : vector<128xf32>
      %82 = vector.multi_reduction <add>, %81, %cst_75 [0] : vector<64x128xf32> to vector<128xf32>
      %83 = vector.shape_cast %82 : vector<128xf32> to vector<1x128xf32>
      %84 = arith.addf %80, %83 : vector<1x128xf32>
      %c0_76 = arith.constant 0 : index
      %c0_77 = arith.constant 0 : index
      %85 = vector.load %arg8[%c0_76, %c0_77] : memref<1x128xf32, #tpu.memory_space<vmem>>, vector<1x128xf32>
      tpu.vector_store %arg8[%c0_76, %c0_77], %84 {strides = array<i32>} : memref<1x128xf32, #tpu.memory_space<vmem>>, vector<1x128xf32>,
    } else {
    }
    %c1_i32 = arith.constant 1 : i32
    %72 = arith.cmpi eq, %arg0, %c1_i32 : i32
    %73 = arith.extui %72 : i1 to i32
    %c0_i32_67 = arith.constant 0 : i32
    %74 = arith.cmpi ne, %73, %c0_i32_67 : i32
    scf.if %74 {
      %c0_68 = arith.constant 0 : index
      %c0_69 = arith.constant 0 : index
      %75 = vector.load %arg7[%c0_68, %c0_69] : memref<1x128xf32, #tpu.memory_space<vmem>>, vector<1x128xf32>
      %cst_70 = arith.constant 7.812500e-03 : f32
      %76 = vector.broadcast %cst_70 : f32 to vector<1x128xf32>
      %77 = arith.mulf %75, %76 : vector<1x128xf32>
      %c0_71 = arith.constant 0 : index
      %c0_72 = arith.constant 0 : index
      %78 = vector.load %arg8[%c0_71, %c0_72] : memref<1x128xf32, #tpu.memory_space<vmem>>, vector<1x128xf32>
      %cst_73 = arith.constant 7.812500e-03 : f32
      %79 = vector.broadcast %cst_73 : f32 to vector<1x128xf32>
      %80 = arith.mulf %78, %79 : vector<1x128xf32>
      %81 = arith.mulf %77, %77 : vector<1x128xf32>
      %82 = arith.subf %80, %81 : vector<1x128xf32>
      %cst_74 = arith.constant 0.000000e+00 : f32
      %83 = vector.broadcast %cst_74 : f32 to vector<1x128xf32>
      %84 = arith.maximumf %82, %83 : vector<1x128xf32>
      %cst_75 = arith.constant 9.99999974E-6 : f32
      %85 = vector.broadcast %cst_75 : f32 to vector<1x128xf32>
      %86 = arith.addf %84, %85 : vector<1x128xf32>
      %87 = math.rsqrt %86 : vector<1x128xf32>
      %c0_76 = arith.constant 0 : index
      %c0_77 = arith.constant 0 : index
      %88 = vector.load %arg4[%c0_76, %c0_77] : memref<1x128xf32, #tpu.memory_space<vmem>>, vector<1x128xf32>
      %89 = arith.mulf %87, %88 : vector<1x128xf32>
      %90 = vector.broadcast %77 : vector<1x128xf32> to vector<64x128xf32>
      %91 = arith.subf %68, %90 : vector<64x128xf32>
      %92 = vector.broadcast %89 : vector<1x128xf32> to vector<64x128xf32>
      %93 = arith.mulf %91, %92 : vector<64x128xf32>
      %c0_78 = arith.constant 0 : index
      %c0_79 = arith.constant 0 : index
      %94 = vector.load %arg5[%c0_78, %c0_79] : memref<1x128xf32, #tpu.memory_space<vmem>>, vector<1x128xf32>
      %95 = vector.broadcast %94 : vector<1x128xf32> to vector<64x128xf32>
      %96 = arith.addf %93, %95 : vector<64x128xf32>
      %cst_80 = arith.constant 0.000000e+00 : f32
      %97 = vector.broadcast %cst_80 : f32 to vector<64x128xf32>
      %98 = arith.maximumf %96, %97 : vector<64x128xf32>
      %99 = arith.truncf %98 : vector<64x128xf32> to vector<64x128xbf16>
      %c0_81 = arith.constant 0 : index
      %c0_82 = arith.constant 0 : index
      %100 = vector.load %arg6[%c0_81, %c0_82] : memref<64x128xbf16, #tpu.memory_space<vmem>>, vector<64x128xbf16>
      tpu.vector_store %arg6[%c0_81, %c0_82], %99 {strides = array<i32>} : memref<64x128xbf16, #tpu.memory_space<vmem>>, vector<64x128xbf16>,
    } else {
    }
    return
  }
  func.func @transform_0(%arg0: i32, %arg1: i32) -> (i32, i32, i32, i32) {
    %c0_i32 = arith.constant 0 : i32
    %c0_i32_0 = arith.constant 0 : i32
    %c0_i32_1 = arith.constant 0 : i32
    %c0_i32_2 = arith.constant 0 : i32
    return %arg1, %c0_i32, %c0_i32_0, %c0_i32_1 : i32, i32, i32, i32
  }
  func.func @transform_1(%arg0: i32, %arg1: i32) -> (i32, i32, i32) {
    %c0_i32 = arith.constant 0 : i32
    %c0_i32_0 = arith.constant 0 : i32
    %c0_i32_1 = arith.constant 0 : i32
    %c0_i32_2 = arith.constant 0 : i32
    return %c0_i32, %c0_i32_0, %c0_i32_1 : i32, i32, i32
  }
  func.func @transform_2(%arg0: i32, %arg1: i32) -> (i32, i32) {
    %c0_i32 = arith.constant 0 : i32
    %c0_i32_0 = arith.constant 0 : i32
    %c0_i32_1 = arith.constant 0 : i32
    return %c0_i32, %c0_i32_0 : i32, i32
  }
  func.func @transform_3(%arg0: i32, %arg1: i32) -> (i32, i32) {
    %c0_i32 = arith.constant 0 : i32
    %c0_i32_0 = arith.constant 0 : i32
    %c0_i32_1 = arith.constant 0 : i32
    return %c0_i32, %c0_i32_0 : i32, i32
  }
  func.func @transform_4(%arg0: i32, %arg1: i32) -> (i32, i32) {
    %0 = arith.muli %arg1, %arg0 : i32
    %c0_i32 = arith.constant 0 : i32
    %c0_i32_0 = arith.constant 0 : i32
    return %0, %c0_i32 : i32, i32
  }
}

module attributes {stable_mosaic.version = 11 : i64} {
  func.func @_out_id_kernel(%arg0: i32, %arg1: i32, %arg2: memref<128x128xbf16, #tpu.memory_space<vmem>>, %arg3: memref<128x128xbf16, #tpu.memory_space<vmem>>, %arg4: memref<1x128xf32, #tpu.memory_space<vmem>>, %arg5: memref<1x128xf32, #tpu.memory_space<vmem>>, %arg6: memref<128x128xbf16, #tpu.memory_space<vmem>>, %arg7: memref<128x128xbf16, #tpu.memory_space<vmem>>, %arg8: memref<1x128xf32, #tpu.memory_space<vmem>>, %arg9: memref<1x128xf32, #tpu.memory_space<vmem>>) attributes {dimension_semantics = [#tpu.dimension_semantics<arbitrary>, #tpu.dimension_semantics<arbitrary>], iteration_bounds = array<i64: 2, 1>, scalar_prefetch = 0 : i64, scratch_operands = 2 : i64, tpu.core_type = #tpu.core_type<tc>, window_params = [{transform_indices = @transform_0, window_bounds = array<i64: 128, 128>}, {pipeline_mode = #tpu.pipeline_mode<synchronous>, transform_indices = @transform_1, window_bounds = array<i64: 128, 128>}, {pipeline_mode = #tpu.pipeline_mode<synchronous>, transform_indices = @transform_2, window_bounds = array<i64: 1, 128>}, {pipeline_mode = #tpu.pipeline_mode<synchronous>, transform_indices = @transform_3, window_bounds = array<i64: 1, 128>}, {transform_indices = @transform_4, window_bounds = array<i64: 128, 128>}, {transform_indices = @transform_5, window_bounds = array<i64: 128, 128>}]} {
    %c0_i32 = arith.constant 0 : i32
    %0 = arith.cmpi eq, %arg0, %c0_i32 : i32
    %c0_i32_0 = arith.constant 0 : i32
    %1 = arith.cmpi eq, %arg1, %c0_i32_0 : i32
    %2 = arith.andi %0, %1 : i1
    %3 = arith.extui %2 : i1 to i32
    %c0_i32_1 = arith.constant 0 : i32
    %4 = arith.cmpi ne, %3, %c0_i32_1 : i32
    scf.if %4 {
      %cst_8 = arith.constant 0.000000e+00 : f32
      %14 = vector.broadcast %cst_8 : f32 to vector<1x128xf32>
      %c0_9 = arith.constant 0 : index
      %c0_10 = arith.constant 0 : index
      %15 = vector.load %arg8[%c0_9, %c0_10] : memref<1x128xf32, #tpu.memory_space<vmem>>, vector<1x128xf32>
      tpu.vector_store %arg8[%c0_9, %c0_10], %14 {strides = array<i32>} : memref<1x128xf32, #tpu.memory_space<vmem>>, vector<1x128xf32>,
      %cst_11 = arith.constant 0.000000e+00 : f32
      %16 = vector.broadcast %cst_11 : f32 to vector<1x128xf32>
      %c0_12 = arith.constant 0 : index
      %c0_13 = arith.constant 0 : index
      %17 = vector.load %arg9[%c0_12, %c0_13] : memref<1x128xf32, #tpu.memory_space<vmem>>, vector<1x128xf32>
      tpu.vector_store %arg9[%c0_12, %c0_13], %16 {strides = array<i32>} : memref<1x128xf32, #tpu.memory_space<vmem>>, vector<1x128xf32>,
    } else {
    }
    %c0 = arith.constant 0 : index
    %c0_2 = arith.constant 0 : index
    %5 = vector.load %arg2[%c0, %c0_2] : memref<128x128xbf16, #tpu.memory_space<vmem>>, vector<128x128xbf16>
    %c0_3 = arith.constant 0 : index
    %c0_4 = arith.constant 0 : index
    %6 = vector.load %arg3[%c0_3, %c0_4] : memref<128x128xbf16, #tpu.memory_space<vmem>>, vector<128x128xbf16>
    %cst = arith.constant dense<0.000000e+00> : vector<128x128xf32>
    %7 = tpu.matmul %5, %6, %cst {dimension_numbers = #tpu.dot_dimension_numbers<[1], [0], [0], [1], [0, 0, 1, 1], [], []>} : vector<128x128xbf16>, vector<128x128xbf16>, vector<128x128xf32> -> vector<128x128xf32>
    %c0_i32_5 = arith.constant 0 : i32
    %8 = arith.cmpi eq, %arg0, %c0_i32_5 : i32
    %9 = arith.extui %8 : i1 to i32
    %c0_i32_6 = arith.constant 0 : i32
    %10 = arith.cmpi ne, %9, %c0_i32_6 : i32
    scf.if %10 {
      %c0_8 = arith.constant 0 : index
      %c0_9 = arith.constant 0 : index
      %14 = vector.load %arg8[%c0_8, %c0_9] : memref<1x128xf32, #tpu.memory_space<vmem>>, vector<1x128xf32>
      %cst_10 = arith.constant dense<0.000000e+00> : vector<128xf32>
      %15 = vector.multi_reduction <add>, %7, %cst_10 [0] : vector<128x128xf32> to vector<128xf32>
      %16 = vector.shape_cast %15 : vector<128xf32> to vector<1x128xf32>
      %17 = arith.addf %14, %16 : vector<1x128xf32>
      %c0_11 = arith.constant 0 : index
      %c0_12 = arith.constant 0 : index
      %18 = vector.load %arg8[%c0_11, %c0_12] : memref<1x128xf32, #tpu.memory_space<vmem>>, vector<1x128xf32>
      tpu.vector_store %arg8[%c0_11, %c0_12], %17 {strides = array<i32>} : memref<1x128xf32, #tpu.memory_space<vmem>>, vector<1x128xf32>,
      %c0_13 = arith.constant 0 : index
      %c0_14 = arith.constant 0 : index
      %19 = vector.load %arg9[%c0_13, %c0_14] : memref<1x128xf32, #tpu.memory_space<vmem>>, vector<1x128xf32>
      %20 = arith.mulf %7, %7 : vector<128x128xf32>
      %cst_15 = arith.constant dense<0.000000e+00> : vector<128xf32>
      %21 = vector.multi_reduction <add>, %20, %cst_15 [0] : vector<128x128xf32> to vector<128xf32>
      %22 = vector.shape_cast %21 : vector<128xf32> to vector<1x128xf32>
      %23 = arith.addf %19, %22 : vector<1x128xf32>
      %c0_16 = arith.constant 0 : index
      %c0_17 = arith.constant 0 : index
      %24 = vector.load %arg9[%c0_16, %c0_17] : memref<1x128xf32, #tpu.memory_space<vmem>>, vector<1x128xf32>
      tpu.vector_store %arg9[%c0_16, %c0_17], %23 {strides = array<i32>} : memref<1x128xf32, #tpu.memory_space<vmem>>, vector<1x128xf32>,
    } else {
    }
    %c1_i32 = arith.constant 1 : i32
    %11 = arith.cmpi eq, %arg0, %c1_i32 : i32
    %12 = arith.extui %11 : i1 to i32
    %c0_i32_7 = arith.constant 0 : i32
    %13 = arith.cmpi ne, %12, %c0_i32_7 : i32
    scf.if %13 {
      %c0_8 = arith.constant 0 : index
      %c0_9 = arith.constant 0 : index
      %14 = vector.load %arg8[%c0_8, %c0_9] : memref<1x128xf32, #tpu.memory_space<vmem>>, vector<1x128xf32>
      %cst_10 = arith.constant 7.812500e-03 : f32
      %15 = vector.broadcast %cst_10 : f32 to vector<1x128xf32>
      %16 = arith.mulf %14, %15 : vector<1x128xf32>
      %c0_11 = arith.constant 0 : index
      %c0_12 = arith.constant 0 : index
      %17 = vector.load %arg9[%c0_11, %c0_12] : memref<1x128xf32, #tpu.memory_space<vmem>>, vector<1x128xf32>
      %cst_13 = arith.constant 7.812500e-03 : f32
      %18 = vector.broadcast %cst_13 : f32 to vector<1x128xf32>
      %19 = arith.mulf %17, %18 : vector<1x128xf32>
      %20 = arith.mulf %16, %16 : vector<1x128xf32>
      %21 = arith.subf %19, %20 : vector<1x128xf32>
      %cst_14 = arith.constant 0.000000e+00 : f32
      %22 = vector.broadcast %cst_14 : f32 to vector<1x128xf32>
      %23 = arith.maximumf %21, %22 : vector<1x128xf32>
      %24 = vector.broadcast %16 : vector<1x128xf32> to vector<128x128xf32>
      %25 = arith.subf %7, %24 : vector<128x128xf32>
      %cst_15 = arith.constant 9.99999974E-6 : f32
      %26 = vector.broadcast %cst_15 : f32 to vector<1x128xf32>
      %27 = arith.addf %23, %26 : vector<1x128xf32>
      %28 = math.rsqrt %27 : vector<1x128xf32>
      %c0_16 = arith.constant 0 : index
      %c0_17 = arith.constant 0 : index
      %29 = vector.load %arg4[%c0_16, %c0_17] : memref<1x128xf32, #tpu.memory_space<vmem>>, vector<1x128xf32>
      %30 = arith.mulf %28, %29 : vector<1x128xf32>
      %31 = vector.broadcast %30 : vector<1x128xf32> to vector<128x128xf32>
      %32 = arith.mulf %25, %31 : vector<128x128xf32>
      %c0_18 = arith.constant 0 : index
      %c0_19 = arith.constant 0 : index
      %33 = vector.load %arg5[%c0_18, %c0_19] : memref<1x128xf32, #tpu.memory_space<vmem>>, vector<1x128xf32>
      %34 = vector.broadcast %33 : vector<1x128xf32> to vector<128x128xf32>
      %35 = arith.addf %32, %34 : vector<128x128xf32>
      %c0_20 = arith.constant 0 : index
      %c0_21 = arith.constant 0 : index
      %36 = vector.load %arg6[%c0_20, %c0_21] : memref<128x128xbf16, #tpu.memory_space<vmem>>, vector<128x128xbf16>
      %37 = arith.extf %36 : vector<128x128xbf16> to vector<128x128xf32>
      %38 = arith.addf %35, %37 : vector<128x128xf32>
      %cst_22 = arith.constant 0.000000e+00 : f32
      %39 = vector.broadcast %cst_22 : f32 to vector<128x128xf32>
      %40 = arith.maximumf %38, %39 : vector<128x128xf32>
      %41 = arith.truncf %40 : vector<128x128xf32> to vector<128x128xbf16>
      %c0_23 = arith.constant 0 : index
      %c0_24 = arith.constant 0 : index
      %42 = vector.load %arg7[%c0_23, %c0_24] : memref<128x128xbf16, #tpu.memory_space<vmem>>, vector<128x128xbf16>
      tpu.vector_store %arg7[%c0_23, %c0_24], %41 {strides = array<i32>} : memref<128x128xbf16, #tpu.memory_space<vmem>>, vector<128x128xbf16>,
    } else {
    }
    return
  }
  func.func @transform_0(%arg0: i32, %arg1: i32) -> (i32, i32) {
    %c0_i32 = arith.constant 0 : i32
    %c0_i32_0 = arith.constant 0 : i32
    return %arg1, %c0_i32 : i32, i32
  }
  func.func @transform_1(%arg0: i32, %arg1: i32) -> (i32, i32) {
    %c0_i32 = arith.constant 0 : i32
    %c0_i32_0 = arith.constant 0 : i32
    %c0_i32_1 = arith.constant 0 : i32
    return %c0_i32, %c0_i32_0 : i32, i32
  }
  func.func @transform_2(%arg0: i32, %arg1: i32) -> (i32, i32) {
    %c0_i32 = arith.constant 0 : i32
    %c0_i32_0 = arith.constant 0 : i32
    %c0_i32_1 = arith.constant 0 : i32
    return %c0_i32, %c0_i32_0 : i32, i32
  }
  func.func @transform_3(%arg0: i32, %arg1: i32) -> (i32, i32) {
    %c0_i32 = arith.constant 0 : i32
    %c0_i32_0 = arith.constant 0 : i32
    %c0_i32_1 = arith.constant 0 : i32
    return %c0_i32, %c0_i32_0 : i32, i32
  }
  func.func @transform_4(%arg0: i32, %arg1: i32) -> (i32, i32) {
    %c0_i32 = arith.constant 0 : i32
    %c0_i32_0 = arith.constant 0 : i32
    return %arg1, %c0_i32 : i32, i32
  }
  func.func @transform_5(%arg0: i32, %arg1: i32) -> (i32, i32) {
    %0 = arith.muli %arg1, %arg0 : i32
    %c0_i32 = arith.constant 0 : i32
    %c0_i32_0 = arith.constant 0 : i32
    return %0, %c0_i32 : i32, i32
  }
}

</mosaic_0001>

<llo_original>
// kernel: cand_bottleneck_block.6
$region0: #{cand_bottleneck_block.6}
  #allocation0 [shape = 'u32[]', space=smem, size = 0x4, offset = 0x4, fixed_abs, tag = 'smem constant byte address 0x4 - core index']
  #allocation1 [shape = 'u32[144,128]{1,0:T(1,128)}', space=vmem, size = 0x12000, scoped, tag = 'internal scratch']
  #allocation2 [shape = 'f32[1,128]{1,0:T(1,128)}', space=vmem, size = 0x200, scoped, tag = 'scratch operand']
  #allocation3 [shape = 'f32[1,128]{1,0:T(1,128)}', space=vmem, size = 0x200, scoped, tag = 'scratch operand']
  %s0 = inlined_call_operand.vmem [shape: bf16[512,128], index: 0, kind: input, shape index: {}]
  %s1 = inlined_call_operand.vmem [shape: bf16[128,128], index: 1, kind: input, shape index: {}]
  %s2 = inlined_call_operand.vmem [shape: f32[1,128], index: 2, kind: input, shape index: {}]
  %s3 = inlined_call_operand.vmem [shape: f32[1,128], index: 3, kind: input, shape index: {}]
  %s4 = inlined_call_operand.vmem [shape: bf16[512,128], index: 4, kind: output, shape index: {}]
  %s5 = sld [smem:[#allocation0]]
  $region61: #{cand_bottleneck_block.6} parent=0
    _
  %s7 = ssub.s32 1, %s5
  %s8 = scalar_select 0, %s7, %s5
  loop: start=0, step=1, limit=4
  $region2: #{cand_bottleneck_block.6} parent=0 // loop_pre_header
    _
  $region3: #{cand_bottleneck_block.6} parent=0 // loop_header
    %s10 = sphi 0, %s14
    %p11 = scmp.ge.s32.totalorder %s10, 4
    %s17 = sphi 0, %s29
    %s18 = sphi 0, %s25
    %s19 = sphi 0, %s17
    %s20 = sphi 0, %s18
    %s21 = sphi 0, %s19
    %s22 = sphi 0, %s20
    %s32 = sphi 0, %s34
    %s35 = sphi 0, %s32
    %s36 = sphi 0, %s35
    %s52 = sphi 0, %s36
    %s56 = sphi 0, %s56
    %s58 = sphi 0, %s56
    %s59 = sphi 0, %s58
    %s73 = sphi 0, %s59
    %s77 = sphi 0, %s77
    %s79 = sphi 0, %s77
    %s80 = sphi 0, %s79
    %s94 = sphi 0, %s80
    %s98 = sphi 0, %s98
    %s100 = sphi 0, %s98
    %s101 = sphi 0, %s100
    %s115 = sphi 0, %s101
    %s123 = sphi 0, %s125
    %s126 = sphi 0, %s123
    %s127 = sphi 0, %s126
    %s143 = sphi 0, %s127
  $region4: #{cand_bottleneck_block.6} parent=0 // loop_header_branch
    %13 = sbr.rel (%p11) target = $region8
  $region5: #{cand_bottleneck_block.6} parent=0 // loop_body
    %s15 = ssub.s32 %s10, 1
    %s16 = ssub.s32 %s10, 2
    %s23 = sadd.s32 1, %s18
    %p24 = scmp.ge.s32.totalorder %s23, 1
    %s25 = scalar_select %p24, 0, %s23
    %s26 = sadd.s32 1, %s17
    %s27 = scalar_select %p24, %s26, %s17
    %p28 = scmp.ge.s32.totalorder %s27, 2
    %s29 = scalar_select %p28, 0, %s27
    %s30 = ssub.s32 %s18, %s25
    %p31 = scmp.eq.s32.totalorder %s30, 0
    %s33 = sadd.s32 %s32, 1
    %s34 = scalar_select %p31, %s32, %s33
    %p37 = pneg %p31
    %p38 = scmp.eq.s32.totalorder %s10, 1
    %p39 = por %p37, %p38
    %p40 = scmp.ne.s32.totalorder %s32, %s35
    %p41 = scmp.eq.s32.totalorder %s10, 0
    %p42 = por %p40, %p41
    %p43 = scmp.ne.s32.totalorder %s32, %s35
    %p44 = scmp.eq.s32.totalorder %s15, 1
    %p45 = por %p43, %p44
    %p46 = scmp.ne.s32.totalorder %s35, %s36
    %p47 = scmp.eq.s32.totalorder %s15, 0
    %p48 = por %p46, %p47
    %p49 = scmp.ne.s32.totalorder %s35, %s36
    %p50 = scmp.eq.s32.totalorder %s16, 1
    %p51 = por %p49, %p50
    %p53 = scmp.ne.s32.totalorder %s36, %s52
    %p54 = scmp.eq.s32.totalorder %s16, 0
    %p55 = por %p53, %p54
    %s57 = sadd.s32 %s56, 1
    %p60 = scmp.eq.s32.totalorder %s10, 1
    %p61 = scmp.ne.s32.totalorder %s56, %s58
    %p62 = scmp.eq.s32.totalorder %s10, 0
    %p63 = por %p61, %p62
    %p64 = scmp.ne.s32.totalorder %s56, %s58
    %p65 = scmp.eq.s32.totalorder %s15, 1
    %p66 = por %p64, %p65
    %p67 = scmp.ne.s32.totalorder %s58, %s59
    %p68 = scmp.eq.s32.totalorder %s15, 0
    %p69 = por %p67, %p68
    %p70 = scmp.ne.s32.totalorder %s58, %s59
    %p71 = scmp.eq.s32.totalorder %s16, 1
    %p72 = por %p70, %p71
    %p74 = scmp.ne.s32.totalorder %s59, %s73
    %p75 = scmp.eq.s32.totalorder %s16, 0
    %p76 = por %p74, %p75
    %s78 = sadd.s32 %s77, 1
    %p81 = scmp.eq.s32.totalorder %s10, 1
    %p82 = scmp.ne.s32.totalorder %s77, %s79
    %p83 = scmp.eq.s32.totalorder %s10, 0
    %p84 = por %p82, %p83
    %p85 = scmp.ne.s32.totalorder %s77, %s79
    %p86 = scmp.eq.s32.totalorder %s15, 1
    %p87 = por %p85, %p86
    %p88 = scmp.ne.s32.totalorder %s79, %s80
    %p89 = scmp.eq.s32.totalorder %s15, 0
    %p90 = por %p88, %p89
    %p91 = scmp.ne.s32.totalorder %s79, %s80
    %p92 = scmp.eq.s32.totalorder %s16, 1
    %p93 = por %p91, %p92
    %p95 = scmp.ne.s32.totalorder %s80, %s94
    %p96 = scmp.eq.s32.totalorder %s16, 0
    %p97 = por %p95, %p96
    %s99 = sadd.s32 %s98, 1
    %p102 = scmp.eq.s32.totalorder %s10, 1
    %p103 = scmp.ne.s32.totalorder %s98, %s100
    %p104 = scmp.eq.s32.totalorder %s10, 0
    %p105 = por %p103, %p104
    %p106 = scmp.ne.s32.totalorder %s98, %s100
    %p107 = scmp.eq.s32.totalorder %s15, 1
    %p108 = por %p106, %p107
    %p109 = scmp.ne.s32.totalorder %s100, %s101
    %p110 = scmp.eq.s32.totalorder %s15, 0
    %p111 = por %p109, %p110
    %p112 = scmp.ne.s32.totalorder %s100, %s101
    %p113 = scmp.eq.s32.totalorder %s16, 1
    %p114 = por %p112, %p113
    %p116 = scmp.ne.s32.totalorder %s101, %s115
    %p117 = scmp.eq.s32.totalorder %s16, 0
    %p118 = por %p116, %p117
    %s119 = smul.u32 %s18, %s17
    %s120 = smul.u32 %s25, %s29
    %s121 = ssub.s32 %s119, %s120
    %p122 = scmp.eq.s32.totalorder %s121, 0
    %s124 = sadd.s32 %s123, 1
    %s125 = scalar_select %p122, %s123, %s124
    %p128 = pneg %p122
    %p129 = scmp.eq.s32.totalorder %s10, 1
    %p130 = por %p128, %p129
    %p131 = scmp.ne.s32.totalorder %s123, %s126
    %p132 = scmp.eq.s32.totalorder %s10, 0
    %p133 = por %p131, %p132
    %p134 = scmp.ne.s32.totalorder %s123, %s126
    %p135 = scmp.eq.s32.totalorder %s15, 1
    %p136 = por %p134, %p135
    %p137 = scmp.ne.s32.totalorder %s126, %s127
    %p138 = scmp.eq.s32.totalorder %s15, 0
    %p139 = por %p137, %p138
    %p140 = scmp.ne.s32.totalorder %s126, %s127
    %p141 = scmp.eq.s32.totalorder %s16, 1
    %p142 = por %p140, %p141
    %p144 = scmp.ne.s32.totalorder %s127, %s143
    %p145 = scmp.eq.s32.totalorder %s16, 0
    %p146 = por %p144, %p145
    %p147 = scmp.le.s32.totalorder 1, %s10
    %p148 = scmp.lt.s32.totalorder %s10, 3
    %p149 = pnand %p147, %p148
    %p150 = pneg %p149
    // Predicated region
    $region9: #{cand_bottleneck_block.6} parent=5 // pred_check
      _
    $region10: #{cand_bottleneck_block.6} parent=5 // pred_check_branch
      %152 = sbr.rel (%p149) target = $region12
    $region11: #{cand_bottleneck_block.6} parent=5 // pred_region
      %s153 = ssub.s32 %s10, 1
      // Predicated region
      $region13: #{cand_bottleneck_block.6} parent=11 // pred_check
        %p154 = pneg %p48
      $region14: #{cand_bottleneck_block.6} parent=11 // pred_check_branch
        %156 = sbr.rel (%p154) target = $region16
      $region15: #{cand_bottleneck_block.6} parent=11 // pred_region
        %s157 = smul.u32 64, %s20
        %p158 = scmp.lt.s32.totalorder %s157, 63
        %s159 = scalar_select %p158, %s157, 63
        %s160 = smul.addr %s159, 4
        %s161 = scalar_lea.vmem %s0, %s160
        %s162 = smul.u32 64, %s20
      $region16: #{cand_bottleneck_block.6} parent=11 // pred_fallthru
        _
      // Predicated region
      $region17: #{cand_bottleneck_block.6} parent=11 // pred_check
        %p163 = pneg %p69
      $region18: #{cand_bottleneck_block.6} parent=11 // pred_check_branch
        %165 = sbr.rel (%p163) target = $region20
      $region19: #{cand_bottleneck_block.6} parent=11 // pred_region
        _
      $region20: #{cand_bottleneck_block.6} parent=11 // pred_fallthru
        _
      // Predicated region
      $region21: #{cand_bottleneck_block.6} parent=11 // pred_check
        %p166 = pneg %p90
      $region22: #{cand_bottleneck_block.6} parent=11 // pred_check_branch
        %168 = sbr.rel (%p166) target = $region24
      $region23: #{cand_bottleneck_block.6} parent=11 // pred_region
        _
      $region24: #{cand_bottleneck_block.6} parent=11 // pred_fallthru
        _
      // Predicated region
      $region25: #{cand_bottleneck_block.6} parent=11 // pred_check
        %p169 = pneg %p111
      $region26: #{cand_bottleneck_block.6} parent=11 // pred_check_branch
        %171 = sbr.rel (%p169) target = $region28
      $region27: #{cand_bottleneck_block.6} parent=11 // pred_region
        _
      $region28: #{cand_bottleneck_block.6} parent=11 // pred_fallthru
        _
    $region12: #{cand_bottleneck_block.6} parent=5 // pred_fallthru
      _
    %p172 = scmp.lt.s32.totalorder %s10, 2
    // Predicated region
    $region29: #{cand_bottleneck_block.6} parent=5 // pred_check
      %p173 = pneg %p172
    $region30: #{cand_bottleneck_block.6} parent=5 // pred_check_branch
      %175 = sbr.rel (%p173) target = $region32
    $region31: #{cand_bottleneck_block.6} parent=5 // pred_region
      _
    $region32: #{cand_bottleneck_block.6} parent=5 // pred_fallthru
      _
    %p176 = scmp.le.s32.totalorder 1, %s10
    %p177 = scmp.lt.s32.totalorder %s10, 3
    %p178 = pnand %p176, %p177
    %p179 = pneg %p178
    // Predicated region
    $region33: #{cand_bottleneck_block.6} parent=5 // pred_check
      _
    $region34: #{cand_bottleneck_block.6} parent=5 // pred_check_branch
      %181 = sbr.rel (%p178) target = $region36
    $region35: #{cand_bottleneck_block.6} parent=5 // pred_region
      %s182 = ssub.s32 %s10, 1
      %s183 = smul.u32 64, %s20
      %p184 = scmp.lt.s32.totalorder %s183, 63
      %s185 = scalar_select %p184, %s183, 63
      %s186 = smul.addr %s185, 4
      %s187 = scalar_lea.vmem %s0, %s186
      %p188 = pneg %p48
      %p189 = pneg %p45
      %p190 = pneg %p69
      %p191 = pneg %p66
      %p192 = pneg %p90
      %p193 = pneg %p87
      %p194 = pneg %p111
      %p195 = pneg %p108
      %p196 = pneg %p139
      %p197 = pneg %p136
      %s198 = smul.u32 %s20, %s19
      %s199 = smul.u32 64, %s198
      %p200 = scmp.lt.s32.totalorder %s199, 63
      %s201 = scalar_select %p200, %s199, 63
      %s202 = smul.addr %s201, 4
      %s203 = scalar_lea.vmem %s4, %s202
      %s204 = smul.u32 64, %s20
      %p205 = scmp.lt.s32.totalorder %s204, 63
      %s206 = scalar_select %p205, %s204, 63
      %s207 = smul.addr %s206, 4
      %s208 = scalar_lea.vmem %s0, %s207
      %s209 = smul.u32 64, %s20
      %s210 = smul.u32 %s20, %s19
      %s211 = smul.u32 64, %s210
      %p212 = scmp.lt.s32.totalorder %s211, 63
      %s213 = scalar_select %p212, %s211, 63
      %s214 = smul.addr %s213, 4
      %s215 = scalar_lea.vmem %s4, %s214
      %s216 = smul.u32 %s20, %s19
      %s217 = smul.u32 64, %s216
      %p219 = scmp.eq.s32.totalorder %s19, 0
      %p220 = scmp.eq.s32.totalorder %s20, 0
      %p221 = pnand %p219, %p220
      %p222 = pneg %p221
      // Predicated region
      $region37: #{cand_bottleneck_block.6} parent=35 // pred_check
        _
      $region38: #{cand_bottleneck_block.6} parent=35 // pred_check_branch
        %224 = sbr.rel (%p221) target = $region40
      $region39: #{cand_bottleneck_block.6} parent=35 // pred_region
        %225 = vst [vmem:[#allocation2] sm:$0x1] 0.0
        %226 = vst [vmem:[#allocation3] sm:$0x1] 0.0
      $region40: #{cand_bottleneck_block.6} parent=35 // pred_fallthru
        _
      %v227 = vld [vmem:[%s208] sm:$0xf]
      %v228 = vld [vmem:[%s208 + $0x4] sm:$0xf]
      %v229 = vld [vmem:[%s208 + $0x8] sm:$0xf]
      %v230 = vld [vmem:[%s208 + $0xc] sm:$0xf]
      %v231 = vld [vmem:[%s208 + $0x10] sm:$0xf]
      %v232 = vld [vmem:[%s208 + $0x14] sm:$0xf]
      %v233 = vld [vmem:[%s208 + $0x18] sm:$0xf]
      %v234 = vld [vmem:[%s208 + $0x1c] sm:$0xf]
      %v235 = vld [vmem:[%s208 + $0x20] sm:$0xf]
      %v236 = vld [vmem:[%s208 + $0x24] sm:$0xf]
      %v237 = vld [vmem:[%s208 + $0x28] sm:$0xf]
      %v238 = vld [vmem:[%s208 + $0x2c] sm:$0xf]
      %v239 = vld [vmem:[%s208 + $0x30] sm:$0xf]
      %v240 = vld [vmem:[%s208 + $0x34] sm:$0xf]
      %v241 = vld [vmem:[%s208 + $0x38] sm:$0xf]
      %v242 = vld [vmem:[%s208 + $0x3c] sm:$0xf]
      %v243 = vld [vmem:[%s208 + $0x40] sm:$0xf]
      %v244 = vld [vmem:[%s208 + $0x44] sm:$0xf]
      %v245 = vld [vmem:[%s208 + $0x48] sm:$0xf]
      %v246 = vld [vmem:[%s208 + $0x4c] sm:$0xf]
      %v247 = vld [vmem:[%s208 + $0x50] sm:$0xf]
      %v248 = vld [vmem:[%s208 + $0x54] sm:$0xf]
      %v249 = vld [vmem:[%s208 + $0x58] sm:$0xf]
      %v250 = vld [vmem:[%s208 + $0x5c] sm:$0xf]
      %v251 = vld [vmem:[%s208 + $0x60] sm:$0xf]
      %v252 = vld [vmem:[%s208 + $0x64] sm:$0xf]
      %v253 = vld [vmem:[%s208 + $0x68] sm:$0xf]
      %v254 = vld [vmem:[%s208 + $0x6c] sm:$0xf]
      %v255 = vld [vmem:[%s208 + $0x70] sm:$0xf]
      %v256 = vld [vmem:[%s208 + $0x74] sm:$0xf]
      %v257 = vld [vmem:[%s208 + $0x78] sm:$0xf]
      %v258 = vld [vmem:[%s208 + $0x7c] sm:$0xf]
      %v259 = vld [vmem:[%s208 + $0x80] sm:$0xf]
      %v260 = vld [vmem:[%s208 + $0x84] sm:$0xf]
      %v261 = vld [vmem:[%s208 + $0x88] sm:$0xf]
      %v262 = vld [vmem:[%s208 + $0x8c] sm:$0xf]
      %v263 = vld [vmem:[%s208 + $0x90] sm:$0xf]
      %v264 = vld [vmem:[%s208 + $0x94] sm:$0xf]
      %v265 = vld [vmem:[%s208 + $0x98] sm:$0xf]
      %v266 = vld [vmem:[%s208 + $0x9c] sm:$0xf]
      %v267 = vld [vmem:[%s208 + $0xa0] sm:$0xf]
      %v268 = vld [vmem:[%s208 + $0xa4] sm:$0xf]
      %v269 = vld [vmem:[%s208 + $0xa8] sm:$0xf]
      %v270 = vld [vmem:[%s208 + $0xac] sm:$0xf]
      %v271 = vld [vmem:[%s208 + $0xb0] sm:$0xf]
      %v272 = vld [vmem:[%s208 + $0xb4] sm:$0xf]
      %v273 = vld [vmem:[%s208 + $0xb8] sm:$0xf]
      %v274 = vld [vmem:[%s208 + $0xbc] sm:$0xf]
      %v275 = vld [vmem:[%s208 + $0xc0] sm:$0xf]
      %v276 = vld [vmem:[%s208 + $0xc4] sm:$0xf]
      %v277 = vld [vmem:[%s208 + $0xc8] sm:$0xf]
      %v278 = vld [vmem:[%s208 + $0xcc] sm:$0xf]
      %v279 = vld [vmem:[%s208 + $0xd0] sm:$0xf]
      %v280 = vld [vmem:[%s208 + $0xd4] sm:$0xf]
      %v281 = vld [vmem:[%s208 + $0xd8] sm:$0xf]
      %v282 = vld [vmem:[%s208 + $0xdc] sm:$0xf]
      %v283 = vld [vmem:[%s208 + $0xe0] sm:$0xf]
      %v284 = vld [vmem:[%s208 + $0xe4] sm:$0xf]
      %v285 = vld [vmem:[%s208 + $0xe8] sm:$0xf]
      %v286 = vld [vmem:[%s208 + $0xec] sm:$0xf]
      %v287 = vld [vmem:[%s208 + $0xf0] sm:$0xf]
      %v288 = vld [vmem:[%s208 + $0xf4] sm:$0xf]
      %v289 = vld [vmem:[%s208 + $0xf8] sm:$0xf]
      %v290 = vld [vmem:[%s208 + $0xfc] sm:$0xf]
      %v291 = vld [vmem:[%s1] sm:$0xf]
      %v292 = vld [vmem:[%s1 + $0x4] sm:$0xf]
      %v293 = vld [vmem:[%s1 + $0x8] sm:$0xf]
      %v294 = vld [vmem:[%s1 + $0xc] sm:$0xf]
      %v295 = vld [vmem:[%s1 + $0x10] sm:$0xf]
      %v296 = vld [vmem:[%s1 + $0x14] sm:$0xf]
      %v297 = vld [vmem:[%s1 + $0x18] sm:$0xf]
      %v298 = vld [vmem:[%s1 + $0x1c] sm:$0xf]
      %v299 = vld [vmem:[%s1 + $0x20] sm:$0xf]
      %v300 = vld [vmem:[%s1 + $0x24] sm:$0xf]
      %v301 = vld [vmem:[%s1 + $0x28] sm:$0xf]
      %v302 = vld [vmem:[%s1 + $0x2c] sm:$0xf]
      %v303 = vld [vmem:[%s1 + $0x30] sm:$0xf]
      %v304 = vld [vmem:[%s1 + $0x34] sm:$0xf]
      %v305 = vld [vmem:[%s1 + $0x38] sm:$0xf]
      %v306 = vld [vmem:[%s1 + $0x3c] sm:$0xf]
      %v371 = vunpack.c.l.b16 %v227
      %v372 = vunpack.c.l.b16 %v228
      %v373 = vunpack.c.l.b16 %v229
      %v374 = vunpack.c.l.b16 %v230
      %v375 = vunpack.c.l.b16 %v231
      %v376 = vunpack.c.l.b16 %v232
      %v377 = vunpack.c.l.b16 %v233
      %v378 = vunpack.c.l.b16 %v234
      %v379 = vunpack.c.l.b16 %v235
      %v380 = vunpack.c.l.b16 %v236
      %v381 = vunpack.c.l.b16 %v237
      %v382 = vunpack.c.l.b16 %v238
      %v383 = vunpack.c.l.b16 %v239
      %v384 = vunpack.c.l.b16 %v240
      %v385 = vunpack.c.l.b16 %v241
      %v386 = vunpack.c.l.b16 %v242
      %v387 = vunpack.c.l.b16 %v243
      %v388 = vunpack.c.l.b16 %v244
      %v389 = vunpack.c.l.b16 %v245
      %v390 = vunpack.c.l.b16 %v246
      %v391 = vunpack.c.l.b16 %v247
      %v392 = vunpack.c.l.b16 %v248
      %v393 = vunpack.c.l.b16 %v249
      %v394 = vunpack.c.l.b16 %v250
      %v395 = vunpack.c.l.b16 %v251
      %v396 = vunpack.c.l.b16 %v252
      %v397 = vunpack.c.l.b16 %v253
      %v398 = vunpack.c.l.b16 %v254
      %v399 = vunpack.c.l.b16 %v255
      %v400 = vunpack.c.l.b16 %v256
      %v401 = vunpack.c.l.b16 %v257
      %v402 = vunpack.c.l.b16 %v258
      %v403 = vunpack.c.l.b16 %v259
      %v404 = vunpack.c.l.b16 %v260
      %v405 = vunpack.c.l.b16 %v261
      %v406 = vunpack.c.l.b16 %v262
      %v407 = vunpack.c.l.b16 %v263
      %v408 = vunpack.c.l.b16 %v264
      %v409 = vunpack.c.l.b16 %v265
      %v410 = vunpack.c.l.b16 %v266
      %v411 = vunpack.c.l.b16 %v267
      %v412 = vunpack.c.l.b16 %v268
      %v413 = vunpack.c.l.b16 %v269
      %v414 = vunpack.c.l.b16 %v270
      %v415 = vunpack.c.l.b16 %v271
      %v416 = vunpack.c.l.b16 %v272
      %v417 = vunpack.c.l.b16 %v273
      %v418 = vunpack.c.l.b16 %v274
      %v419 = vunpack.c.l.b16 %v275
      %v420 = vunpack.c.l.b16 %v276
      %v421 = vunpack.c.l.b16 %v277
      %v422 = vunpack.c.l.b16 %v278
      %v423 = vunpack.c.l.b16 %v279
      %v424 = vunpack.c.l.b16 %v280
      %v425 = vunpack.c.l.b16 %v281
      %v426 = vunpack.c.l.b16 %v282
      %v427 = vunpack.c.l.b16 %v283
      %v428 = vunpack.c.l.b16 %v284
      %v429 = vunpack.c.l.b16 %v285
      %v430 = vunpack.c.l.b16 %v286
      %v431 = vunpack.c.l.b16 %v287
      %v432 = vunpack.c.l.b16 %v288
      %v433 = vunpack.c.l.b16 %v289
      %v434 = vunpack.c.l.b16 %v290
      %v435 = vpack.c.b16 %v372, %v371
      %v436 = vpack.c.b16 %v374, %v373
      %v437 = vpack.c.b16 %v376, %v375
      %v438 = vpack.c.b16 %v378, %v377
      %v439 = vpack.c.b16 %v380, %v379
      %v440 = vpack.c.b16 %v382, %v381
      %v441 = vpack.c.b16 %v384, %v383
      %v442 = vpack.c.b16 %v386, %v385
      %v443 = vpack.c.b16 %v388, %v387
      %v444 = vpack.c.b16 %v390, %v389
      %v445 = vpack.c.b16 %v392, %v391
      %v446 = vpack.c.b16 %v394, %v393
      %v447 = vpack.c.b16 %v396, %v395
      %v448 = vpack.c.b16 %v398, %v397
      %v449 = vpack.c.b16 %v400, %v399
      %v450 = vpack.c.b16 %v402, %v401
      %v451 = vpack.c.b16 %v404, %v403
      %v452 = vpack.c.b16 %v406, %v405
      %v453 = vpack.c.b16 %v408, %v407
      %v454 = vpack.c.b16 %v410, %v409
      %v455 = vpack.c.b16 %v412, %v411
      %v456 = vpack.c.b16 %v414, %v413
      %v457 = vpack.c.b16 %v416, %v415
      %v458 = vpack.c.b16 %v418, %v417
      %v459 = vpack.c.b16 %v420, %v419
      %v460 = vpack.c.b16 %v422, %v421
      %v461 = vpack.c.b16 %v424, %v423
      %v462 = vpack.c.b16 %v426, %v425
      %v463 = vpack.c.b16 %v428, %v427
      %v464 = vpack.c.b16 %v430, %v429
      %v465 = vpack.c.b16 %v432, %v431
      %v466 = vpack.c.b16 %v434, %v433
      %v515 = vunpack.c.l.b16 %v291
      %v516 = vunpack.c.l.b16 %v292
      %v517 = vunpack.c.l.b16 %v293
      %v518 = vunpack.c.l.b16 %v294
      %v519 = vunpack.c.l.b16 %v295
      %v520 = vunpack.c.l.b16 %v296
      %v521 = vunpack.c.l.b16 %v297
      %v522 = vunpack.c.l.b16 %v298
      %v523 = vunpack.c.l.b16 %v299
      %v524 = vunpack.c.l.b16 %v300
      %v525 = vunpack.c.l.b16 %v301
      %v526 = vunpack.c.l.b16 %v302
      %v527 = vunpack.c.l.b16 %v303
      %v528 = vunpack.c.l.b16 %v304
      %v529 = vunpack.c.l.b16 %v305
      %v530 = vunpack.c.l.b16 %v306
      %v531 = vpack.c.b16 %v516, %v515
      %v532 = vpack.c.b16 %v518, %v517
      %v533 = vpack.c.b16 %v520, %v519
      %v534 = vpack.c.b16 %v522, %v521
      %v535 = vpack.c.b16 %v524, %v523
      %v536 = vpack.c.b16 %v526, %v525
      %v537 = vpack.c.b16 %v528, %v527
      %v538 = vpack.c.b16 %v530, %v529
      %547 = vmatprep.subr.bf16.mxu0 0
      %548 = vmatpush1.bf16.msra.mxu0 %v531
      %549 = vmatprep.subr.bf16.mxu0 0
      %550 = vmatpush1.bf16.msra.mxu0 %v532
      %551 = vmatprep.subr.bf16.mxu0 0
      %552 = vmatpush1.bf16.msra.mxu0 %v533
      %553 = vmatprep.subr.bf16.mxu0 0
      %554 = vmatpush1.bf16.msra.mxu0 %v534
      %555 = vmatprep.subr.bf16.mxu0 0
      %556 = vmatpush1.bf16.msra.mxu0 %v535
      %557 = vmatprep.subr.bf16.mxu0 0
      %558 = vmatpush1.bf16.msra.mxu0 %v536
      %559 = vmatprep.subr.bf16.mxu0 0
      %560 = vmatpush1.bf16.msra.mxu0 %v537
      %561 = vmatprep.subr.bf16.mxu0 0
      %562 = vmatpush1.bf16.msra.mxu0 %v538
      %563 = vmatprep.subr.bf16.mxu0 0
      %564 = vmatpush1.bf16.msra.mxu0 0
      %565 = vmatprep.subr.bf16.mxu0 0
      %566 = vmatpush1.bf16.msra.mxu0 0
      %567 = vmatprep.subr.bf16.mxu0 0
      %568 = vmatpush1.bf16.msra.mxu0 0
      %569 = vmatprep.subr.bf16.mxu0 0
      %570 = vmatpush1.bf16.msra.mxu0 0
      %571 = vmatprep.subr.bf16.mxu0 0
      %572 = vmatpush1.bf16.msra.mxu0 0
      %573 = vmatprep.subr.bf16.mxu0 0
      %574 = vmatpush1.bf16.msra.mxu0 0
      %575 = vmatprep.subr.bf16.mxu0 0
      %576 = vmatpush1.bf16.msra.mxu0 0
      %577 = vmatprep.subr.bf16.mxu0 0
      %578 = vmatpush1.bf16.msra.mxu0 0
      %579 = vmatprep.mubr.bf16.mxu0 0
      %580 = vmatmul.mubr.bf16.gmra.mrb[0].mxu0 %v435
      %v581 = vpop.f32.mrb[0].mxu0
      %v582 = vadd.f32 0.0, %v581
      %v583 = vpop.f32.mrb[0].mxu0
      %v584 = vpop.f32.mrb[0].mxu0
      %v585 = vadd.f32 0.0, %v584
      %v586 = vpop.f32.mrb[0].mxu0
      %587 = vmatprep.mubr.bf16.mxu0 0
      %588 = vmatmul.mubr.bf16.gmra.mrb[0].mxu0 %v436
      %v589 = vpop.f32.mrb[0].mxu0
      %v590 = vadd.f32 0.0, %v589
      %v591 = vpop.f32.mrb[0].mxu0
      %v592 = vpop.f32.mrb[0].mxu0
      %v593 = vadd.f32 0.0, %v592
      %v594 = vpop.f32.mrb[0].mxu0
      %595 = vmatprep.mubr.bf16.mxu0 0
      %596 = vmatmul.mubr.bf16.gmra.mrb[0].mxu0 %v437
      %v597 = vpop.f32.mrb[0].mxu0
      %v598 = vadd.f32 0.0, %v597
      %v599 = vpop.f32.mrb[0].mxu0
      %v600 = vpop.f32.mrb[0].mxu0
      %v601 = vadd.f32 0.0, %v600
      %v602 = vpop.f32.mrb[0].mxu0
      %603 = vmatprep.mubr.bf16.mxu0 0
      %604 = vmatmul.mubr.bf16.gmra.mrb[0].mxu0 %v438
      %v605 = vpop.f32.mrb[0].mxu0
      %v606 = vadd.f32 0.0, %v605
      %v607 = vpop.f32.mrb[0].mxu0
      %v608 = vpop.f32.mrb[0].mxu0
      %v609 = vadd.f32 0.0, %v608
      %v610 = vpop.f32.mrb[0].mxu0
      %611 = vmatprep.mubr.bf16.mxu0 0
      %612 = vmatmul.mubr.bf16.gmra.mrb[0].mxu0 %v439
      %v613 = vpop.f32.mrb[0].mxu0
      %v614 = vadd.f32 0.0, %v613
      %v615 = vpop.f32.mrb[0].mxu0
      %v616 = vpop.f32.mrb[0].mxu0
      %v617 = vadd.f32 0.0, %v616
      %v618 = vpop.f32.mrb[0].mxu0
      %619 = vmatprep.mubr.bf16.mxu0 0
      %620 = vmatmul.mubr.bf16.gmra.mrb[0].mxu0 %v440
      %v621 = vpop.f32.mrb[0].mxu0
      %v622 = vadd.f32 0.0, %v621
      %v623 = vpop.f32.mrb[0].mxu0
      %v624 = vpop.f32.mrb[0].mxu0
      %v625 = vadd.f32 0.0, %v624
      %v626 = vpop.f32.mrb[0].mxu0
      %627 = vmatprep.mubr.bf16.mxu0 0
      %628 = vmatmul.mubr.bf16.gmra.mrb[0].mxu0 %v441
      %v629 = vpop.f32.mrb[0].mxu0
      %v630 = vadd.f32 0.0, %v629
      %v631 = vpop.f32.mrb[0].mxu0
      %v632 = vpop.f32.mrb[0].mxu0
      %v633 = vadd.f32 0.0, %v632
      %v634 = vpop.f32.mrb[0].mxu0
      %635 = vmatprep.mubr.bf16.mxu0 0
      %636 = vmatmul.mubr.bf16.gmra.mrb[0].mxu0 %v442
      %v637 = vpop.f32.mrb[0].mxu0
      %v638 = vadd.f32 0.0, %v637
      %v639 = vpop.f32.mrb[0].mxu0
      %v640 = vpop.f32.mrb[0].mxu0
      %v641 = vadd.f32 0.0, %v640
      %v642 = vpop.f32.mrb[0].mxu0
      %643 = vmatprep.mubr.bf16.mxu0 0
      %644 = vmatmul.mubr.bf16.gmra.mrb[0].mxu0 %v443
      %v645 = vpop.f32.mrb[0].mxu0
      %v646 = vadd.f32 0.0, %v645
      %v647 = vpop.f32.mrb[0].mxu0
      %v648 = vpop.f32.mrb[0].mxu0
      %v649 = vadd.f32 0.0, %v648
      %v650 = vpop.f32.mrb[0].mxu0
      %651 = vmatprep.mubr.bf16.mxu0 0
      %652 = vmatmul.mubr.bf16.gmra.mrb[0].mxu0 %v444
      %v653 = vpop.f32.mrb[0].mxu0
      %v654 = vadd.f32 0.0, %v653
      %v655 = vpop.f32.mrb[0].mxu0
      %v656 = vpop.f32.mrb[0].mxu0
      %v657 = vadd.f32 0.0, %v656
      %v658 = vpop.f32.mrb[0].mxu0
      %659 = vmatprep.mubr.bf16.mxu0 0
      %660 = vmatmul.mubr.bf16.gmra.mrb[0].mxu0 %v445
      %v661 = vpop.f32.mrb[0].mxu0
      %v662 = vadd.f32 0.0, %v661
      %v663 = vpop.f32.mrb[0].mxu0
      %v664 = vpop.f32.mrb[0].mxu0
      %v665 = vadd.f32 0.0, %v664
      %v666 = vpop.f32.mrb[0].mxu0
      %667 = vmatprep.mubr.bf16.mxu0 0
      %668 = vmatmul.mubr.bf16.gmra.mrb[0].mxu0 %v446
      %v669 = vpop.f32.mrb[0].mxu0
      %v670 = vadd.f32 0.0, %v669
      %v671 = vpop.f32.mrb[0].mxu0
      %v672 = vpop.f32.mrb[0].mxu0
      %v673 = vadd.f32 0.0, %v672
      %v674 = vpop.f32.mrb[0].mxu0
      %675 = vmatprep.mubr.bf16.mxu0 0
      %676 = vmatmul.mubr.bf16.gmra.mrb[0].mxu0 %v447
      %v677 = vpop.f32.mrb[0].mxu0
      %v678 = vadd.f32 0.0, %v677
      %v679 = vpop.f32.mrb[0].mxu0
      %v680 = vpop.f32.mrb[0].mxu0
      %v681 = vadd.f32 0.0, %v680
      %v682 = vpop.f32.mrb[0].mxu0
      %683 = vmatprep.mubr.bf16.mxu0 0
      %684 = vmatmul.mubr.bf16.gmra.mrb[0].mxu0 %v448
      %v685 = vpop.f32.mrb[0].mxu0
      %v686 = vadd.f32 0.0, %v685
      %v687 = vpop.f32.mrb[0].mxu0
      %v688 = vpop.f32.mrb[0].mxu0
      %v689 = vadd.f32 0.0, %v688
      %v690 = vpop.f32.mrb[0].mxu0
      %691 = vmatprep.mubr.bf16.mxu0 0
      %692 = vmatmul.mubr.bf16.gmra.mrb[0].mxu0 %v449
      %v693 = vpop.f32.mrb[0].mxu0
      %v694 = vadd.f32 0.0, %v693
      %v695 = vpop.f32.mrb[0].mxu0
      %v696 = vpop.f32.mrb[0].mxu0
      %v697 = vadd.f32 0.0, %v696
      %v698 = vpop.f32.mrb[0].mxu0
      %699 = vmatprep.mubr.bf16.mxu0 0
      %700 = vmatmul.mubr.bf16.gmra.mrb[0].mxu0 %v450
      %v701 = vpop.f32.mrb[0].mxu0
      %v702 = vadd.f32 0.0, %v701
      %v703 = vpop.f32.mrb[0].mxu0
      %v704 = vpop.f32.mrb[0].mxu0
      %v705 = vadd.f32 0.0, %v704
      %v706 = vpop.f32.mrb[0].mxu0
      %707 = vmatprep.mubr.bf16.mxu0 0
      %708 = vmatmul.mubr.bf16.gmra.mrb[0].mxu0 %v451
      %v709 = vpop.f32.mrb[0].mxu0
      %v710 = vadd.f32 0.0, %v709
      %v711 = vpop.f32.mrb[0].mxu0
      %v712 = vpop.f32.mrb[0].mxu0
      %v713 = vadd.f32 0.0, %v712
      %v714 = vpop.f32.mrb[0].mxu0
      %715 = vmatprep.mubr.bf16.mxu0 0
      %716 = vmatmul.mubr.bf16.gmra.mrb[0].mxu0 %v452
      %v717 = vpop.f32.mrb[0].mxu0
      %v718 = vadd.f32 0.0, %v717
      %v719 = vpop.f32.mrb[0].mxu0
      %v720 = vpop.f32.mrb[0].mxu0
      %v721 = vadd.f32 0.0, %v720
      %v722 = vpop.f32.mrb[0].mxu0
      %723 = vmatprep.mubr.bf16.mxu0 0
      %724 = vmatmul.mubr.bf16.gmra.mrb[0].mxu0 %v453
      %v725 = vpop.f32.mrb[0].mxu0
      %v726 = vadd.f32 0.0, %v725
      %v727 = vpop.f32.mrb[0].mxu0
      %v728 = vpop.f32.mrb[0].mxu0
      %v729 = vadd.f32 0.0, %v728
      %v730 = vpop.f32.mrb[0].mxu0
      %731 = vmatprep.mubr.bf16.mxu0 0
      %732 = vmatmul.mubr.bf16.gmra.mrb[0].mxu0 %v454
      %v733 = vpop.f32.mrb[0].mxu0
      %v734 = vadd.f32 0.0, %v733
      %v735 = vpop.f32.mrb[0].mxu0
      %v736 = vpop.f32.mrb[0].mxu0
      %v737 = vadd.f32 0.0, %v736
      %v738 = vpop.f32.mrb[0].mxu0
      %739 = vmatprep.mubr.bf16.mxu0 0
      %740 = vmatmul.mubr.bf16.gmra.mrb[0].mxu0 %v455
      %v741 = vpop.f32.mrb[0].mxu0
      %v742 = vadd.f32 0.0, %v741
      %v743 = vpop.f32.mrb[0].mxu0
      %v744 = vpop.f32.mrb[0].mxu0
      %v745 = vadd.f32 0.0, %v744
      %v746 = vpop.f32.mrb[0].mxu0
      %747 = vmatprep.mubr.bf16.mxu0 0
      %748 = vmatmul.mubr.bf16.gmra.mrb[0].mxu0 %v456
      %v749 = vpop.f32.mrb[0].mxu0
      %v750 = vadd.f32 0.0, %v749
      %v751 = vpop.f32.mrb[0].mxu0
      %v752 = vpop.f32.mrb[0].mxu0
      %v753 = vadd.f32 0.0, %v752
      %v754 = vpop.f32.mrb[0].mxu0
      %755 = vmatprep.mubr.bf16.mxu0 0
      %756 = vmatmul.mubr.bf16.gmra.mrb[0].mxu0 %v457
      %v757 = vpop.f32.mrb[0].mxu0
      %v758 = vadd.f32 0.0, %v757
      %v759 = vpop.f32.mrb[0].mxu0
      %v760 = vpop.f32.mrb[0].mxu0
      %v761 = vadd.f32 0.0, %v760
      %v762 = vpop.f32.mrb[0].mxu0
      %763 = vmatprep.mubr.bf16.mxu0 0
      %764 = vmatmul.mubr.bf16.gmra.mrb[0].mxu0 %v458
      %v765 = vpop.f32.mrb[0].mxu0
      %v766 = vadd.f32 0.0, %v765
      %v767 = vpop.f32.mrb[0].mxu0
      %v768 = vpop.f32.mrb[0].mxu0
      %v769 = vadd.f32 0.0, %v768
      %v770 = vpop.f32.mrb[0].mxu0
      %771 = vmatprep.mubr.bf16.mxu0 0
      %772 = vmatmul.mubr.bf16.gmra.mrb[0].mxu0 %v459
      %v773 = vpop.f32.mrb[0].mxu0
      %v774 = vadd.f32 0.0, %v773
      %v775 = vpop.f32.mrb[0].mxu0
      %v776 = vpop.f32.mrb[0].mxu0
      %v777 = vadd.f32 0.0, %v776
      %v778 = vpop.f32.mrb[0].mxu0
      %779 = vmatprep.mubr.bf16.mxu0 0
      %780 = vmatmul.mubr.bf16.gmra.mrb[0].mxu0 %v460
      %v781 = vpop.f32.mrb[0].mxu0
      %v782 = vadd.f32 0.0, %v781
      %v783 = vpop.f32.mrb[0].mxu0
      %v784 = vpop.f32.mrb[0].mxu0
      %v785 = vadd.f32 0.0, %v784
      %v786 = vpop.f32.mrb[0].mxu0
      %787 = vmatprep.mubr.bf16.mxu0 0
      %788 = vmatmul.mubr.bf16.gmra.mrb[0].mxu0 %v461
      %v789 = vpop.f32.mrb[0].mxu0
      %v790 = vadd.f32 0.0, %v789
      %v791 = vpop.f32.mrb[0].mxu0
      %v792 = vpop.f32.mrb[0].mxu0
      %v793 = vadd.f32 0.0, %v792
      %v794 = vpop.f32.mrb[0].mxu0
      %795 = vmatprep.mubr.bf16.mxu0 0
      %796 = vmatmul.mubr.bf16.gmra.mrb[0].mxu0 %v462
      %v797 = vpop.f32.mrb[0].mxu0
      %v798 = vadd.f32 0.0, %v797
      %v799 = vpop.f32.mrb[0].mxu0
      %v800 = vpop.f32.mrb[0].mxu0
      %v801 = vadd.f32 0.0, %v800
      %v802 = vpop.f32.mrb[0].mxu0
      %803 = vmatprep.mubr.bf16.mxu0 0
      %804 = vmatmul.mubr.bf16.gmra.mrb[0].mxu0 %v463
      %v805 = vpop.f32.mrb[0].mxu0
      %v806 = vadd.f32 0.0, %v805
      %v807 = vpop.f32.mrb[0].mxu0
      %v808 = vpop.f32.mrb[0].mxu0
      %v809 = vadd.f32 0.0, %v808
      %v810 = vpop.f32.mrb[0].mxu0
      %811 = vmatprep.mubr.bf16.mxu0 0
      %812 = vmatmul.mubr.bf16.gmra.mrb[0].mxu0 %v464
      %v813 = vpop.f32.mrb[0].mxu0
      %v814 = vadd.f32 0.0, %v813
      %v815 = vpop.f32.mrb[0].mxu0
      %v816 = vpop.f32.mrb[0].mxu0
      %v817 = vadd.f32 0.0, %v816
      %v818 = vpop.f32.mrb[0].mxu0
      %819 = vmatprep.mubr.bf16.mxu0 0
      %820 = vmatmul.mubr.bf16.gmra.mrb[0].mxu0 %v465
      %v821 = vpop.f32.mrb[0].mxu0
      %v822 = vadd.f32 0.0, %v821
      %v823 = vpop.f32.mrb[0].mxu0
      %v824 = vpop.f32.mrb[0].mxu0
      %v825 = vadd.f32 0.0, %v824
      %v826 = vpop.f32.mrb[0].mxu0
      %827 = vmatprep.mubr.bf16.mxu0 0
      %828 = vmatmul.mubr.bf16.gmra.mrb[0].mxu0 %v466
      %v829 = vpop.f32.mrb[0].mxu0
      %v830 = vadd.f32 0.0, %v829
      %v831 = vpop.f32.mrb[0].mxu0
      %v832 = vpop.f32.mrb[0].mxu0
      %v833 = vadd.f32 0.0, %v832
      %v834 = vpop.f32.mrb[0].mxu0
      %835 = vdwg.mxu0
      // Predicated region
      $region41: #{cand_bottleneck_block.6} parent=35 // pred_check
        %p836 = pneg %p219
      $region42: #{cand_bottleneck_block.6} parent=35 // pred_check_branch
        %838 = sbr.rel (%p836) target = $region44
      $region43: #{cand_bottleneck_block.6} parent=35 // pred_region
        %v839 = vld [vmem:[#allocation2] sm:$0x1]
        %v840 = vadd.f32 %v582, %v585
        %v841 = vadd.f32 %v840, %v590
        %v842 = vadd.f32 %v841, %v593
        %v843 = vadd.f32 %v842, %v598
        %v844 = vadd.f32 %v843, %v601
        %v845 = vadd.f32 %v844, %v606
        %v846 = vadd.f32 %v845, %v609
        %v847 = vadd.f32 %v846, %v614
        %v848 = vadd.f32 %v847, %v617
        %v849 = vadd.f32 %v848, %v622
        %v850 = vadd.f32 %v849, %v625
        %v851 = vadd.f32 %v850, %v630
        %v852 = vadd.f32 %v851, %v633
        %v853 = vadd.f32 %v852, %v638
        %v854 = vadd.f32 %v853, %v641
        %v855 = vadd.f32 %v854, %v646
        %v856 = vadd.f32 %v855, %v649
        %v857 = vadd.f32 %v856, %v654
        %v858 = vadd.f32 %v857, %v657
        %v859 = vadd.f32 %v858, %v662
        %v860 = vadd.f32 %v859, %v665
        %v861 = vadd.f32 %v860, %v670
        %v862 = vadd.f32 %v861, %v673
        %v863 = vadd.f32 %v862, %v678
        %v864 = vadd.f32 %v863, %v681
        %v865 = vadd.f32 %v864, %v686
        %v866 = vadd.f32 %v865, %v689
        %v867 = vadd.f32 %v866, %v694
        %v868 = vadd.f32 %v867, %v697
        %v869 = vadd.f32 %v868, %v702
        %v870 = vadd.f32 %v869, %v705
        %v871 = vadd.f32 %v870, %v710
        %v872 = vadd.f32 %v871, %v713
        %v873 = vadd.f32 %v872, %v718
        %v874 = vadd.f32 %v873, %v721
        %v875 = vadd.f32 %v874, %v726
        %v876 = vadd.f32 %v875, %v729
        %v877 = vadd.f32 %v876, %v734
        %v878 = vadd.f32 %v877, %v737
        %v879 = vadd.f32 %v878, %v742
        %v880 = vadd.f32 %v879, %v745
        %v881 = vadd.f32 %v880, %v750
        %v882 = vadd.f32 %v881, %v753
        %v883 = vadd.f32 %v882, %v758
        %v884 = vadd.f32 %v883, %v761
        %v885 = vadd.f32 %v884, %v766
        %v886 = vadd.f32 %v885, %v769
        %v887 = vadd.f32 %v886, %v774
        %v888 = vadd.f32 %v887, %v777
        %v889 = vadd.f32 %v888, %v782
        %v890 = vadd.f32 %v889, %v785
        %v891 = vadd.f32 %v890, %v790
        %v892 = vadd.f32 %v891, %v793
        %v893 = vadd.f32 %v892, %v798
        %v894 = vadd.f32 %v893, %v801
        %v895 = vadd.f32 %v894, %v806
        %v896 = vadd.f32 %v895, %v809
        %v897 = vadd.f32 %v896, %v814
        %v898 = vadd.f32 %v897, %v817
        %v899 = vadd.f32 %v898, %v822
        %v900 = vadd.f32 %v899, %v825
        %v901 = vadd.f32 %v900, %v830
        %v902 = vadd.f32 %v901, %v833
        %v903 = vrot.slane %v902, 4
        %v904 = vadd.f32 %v902, %v903
        %v905 = vrot.slane %v904, 2
        %v906 = vadd.f32 %v904, %v905
        %v907 = vrot.slane %v906, 1
        %v908 = vadd.f32 %v906, %v907
        %v909 = vadd.f32 %v839, %v908
        %910 = vst [vmem:[#allocation2] sm:$0x1] %v909
        %v911 = vld [vmem:[#allocation3] sm:$0x1]
        %v912 = vmul.f32 %v582, %v582
        %v913 = vmul.f32 %v585, %v585
        %v914 = vmul.f32 %v590, %v590
        %v915 = vmul.f32 %v593, %v593
        %v916 = vmul.f32 %v598, %v598
        %v917 = vmul.f32 %v601, %v601
        %v918 = vmul.f32 %v606, %v606
        %v919 = vmul.f32 %v609, %v609
        %v920 = vmul.f32 %v614, %v614
        %v921 = vmul.f32 %v617, %v617
        %v922 = vmul.f32 %v622, %v622
        %v923 = vmul.f32 %v625, %v625
        %v924 = vmul.f32 %v630, %v630
        %v925 = vmul.f32 %v633, %v633
        %v926 = vmul.f32 %v638, %v638
        %v927 = vmul.f32 %v641, %v641
        %v928 = vmul.f32 %v646, %v646
        %v929 = vmul.f32 %v649, %v649
        %v930 = vmul.f32 %v654, %v654
        %v931 = vmul.f32 %v657, %v657
        %v932 = vmul.f32 %v662, %v662
        %v933 = vmul.f32 %v665, %v665
        %v934 = vmul.f32 %v670, %v670
        %v935 = vmul.f32 %v673, %v673
        %v936 = vmul.f32 %v678, %v678
        %v937 = vmul.f32 %v681, %v681
        %v938 = vmul.f32 %v686, %v686
        %v939 = vmul.f32 %v689, %v689
        %v940 = vmul.f32 %v694, %v694
        %v941 = vmul.f32 %v697, %v697
        %v942 = vmul.f32 %v702, %v702
        %v943 = vmul.f32 %v705, %v705
        %v944 = vmul.f32 %v710, %v710
        %v945 = vmul.f32 %v713, %v713
        %v946 = vmul.f32 %v718, %v718
        %v947 = vmul.f32 %v721, %v721
        %v948 = vmul.f32 %v726, %v726
        %v949 = vmul.f32 %v729, %v729
        %v950 = vmul.f32 %v734, %v734
        %v951 = vmul.f32 %v737, %v737
        %v952 = vmul.f32 %v742, %v742
        %v953 = vmul.f32 %v745, %v745
        %v954 = vmul.f32 %v750, %v750
        %v955 = vmul.f32 %v753, %v753
        %v956 = vmul.f32 %v758, %v758
        %v957 = vmul.f32 %v761, %v761
        %v958 = vmul.f32 %v766, %v766
        %v959 = vmul.f32 %v769, %v769
        %v960 = vmul.f32 %v774, %v774
        %v961 = vmul.f32 %v777, %v777
        %v962 = vmul.f32 %v782, %v782
        %v963 = vmul.f32 %v785, %v785
        %v964 = vmul.f32 %v790, %v790
        %v965 = vmul.f32 %v793, %v793
        %v966 = vmul.f32 %v798, %v798
        %v967 = vmul.f32 %v801, %v801
        %v968 = vmul.f32 %v806, %v806
        %v969 = vmul.f32 %v809, %v809
        %v970 = vmul.f32 %v814, %v814
        %v971 = vmul.f32 %v817, %v817
        %v972 = vmul.f32 %v822, %v822
        %v973 = vmul.f32 %v825, %v825
        %v974 = vmul.f32 %v830, %v830
        %v975 = vmul.f32 %v833, %v833
        %v976 = vadd.f32 %v912, %v913
        %v977 = vadd.f32 %v976, %v914
        %v978 = vadd.f32 %v977, %v915
        %v979 = vadd.f32 %v978, %v916
        %v980 = vadd.f32 %v979, %v917
        %v981 = vadd.f32 %v980, %v918
        %v982 = vadd.f32 %v981, %v919
        %v983 = vadd.f32 %v982, %v920
        %v984 = vadd.f32 %v983, %v921
        %v985 = vadd.f32 %v984, %v922
        %v986 = vadd.f32 %v985, %v923
        %v987 = vadd.f32 %v986, %v924
        %v988 = vadd.f32 %v987, %v925
        %v989 = vadd.f32 %v988, %v926
        %v990 = vadd.f32 %v989, %v927
        %v991 = vadd.f32 %v990, %v928
        %v992 = vadd.f32 %v991, %v929
        %v993 = vadd.f32 %v992, %v930
        %v994 = vadd.f32 %v993, %v931
        %v995 = vadd.f32 %v994, %v932
        %v996 = vadd.f32 %v995, %v933
        %v997 = vadd.f32 %v996, %v934
        %v998 = vadd.f32 %v997, %v935
        %v999 = vadd.f32 %v998, %v936
        %v1000 = vadd.f32 %v999, %v937
        %v1001 = vadd.f32 %v1000, %v938
        %v1002 = vadd.f32 %v1001, %v939
        %v1003 = vadd.f32 %v1002, %v940
        %v1004 = vadd.f32 %v1003, %v941
        %v1005 = vadd.f32 %v1004, %v942
        %v1006 = vadd.f32 %v1005, %v943
        %v1007 = vadd.f32 %v1006, %v944
        %v1008 = vadd.f32 %v1007, %v945
        %v1009 = vadd.f32 %v1008, %v946
        %v1010 = vadd.f32 %v1009, %v947
        %v1011 = vadd.f32 %v1010, %v948
        %v1012 = vadd.f32 %v1011, %v949
        %v1013 = vadd.f32 %v1012, %v950
        %v1014 = vadd.f32 %v1013, %v951
        %v1015 = vadd.f32 %v1014, %v952
        %v1016 = vadd.f32 %v1015, %v953
        %v1017 = vadd.f32 %v1016, %v954
        %v1018 = vadd.f32 %v1017, %v955
        %v1019 = vadd.f32 %v1018, %v956
        %v1020 = vadd.f32 %v1019, %v957
        %v1021 = vadd.f32 %v1020, %v958
        %v1022 = vadd.f32 %v1021, %v959
        %v1023 = vadd.f32 %v1022, %v960
        %v1024 = vadd.f32 %v1023, %v961
        %v1025 = vadd.f32 %v1024, %v962
        %v1026 = vadd.f32 %v1025, %v963
        %v1027 = vadd.f32 %v1026, %v964
        %v1028 = vadd.f32 %v1027, %v965
        %v1029 = vadd.f32 %v1028, %v966
        %v1030 = vadd.f32 %v1029, %v967
        %v1031 = vadd.f32 %v1030, %v968
        %v1032 = vadd.f32 %v1031, %v969
        %v1033 = vadd.f32 %v1032, %v970
        %v1034 = vadd.f32 %v1033, %v971
        %v1035 = vadd.f32 %v1034, %v972
        %v1036 = vadd.f32 %v1035, %v973
        %v1037 = vadd.f32 %v1036, %v974
        %v1038 = vadd.f32 %v1037, %v975
        %v1039 = vrot.slane %v1038, 4
        %v1040 = vadd.f32 %v1038, %v1039
        %v1041 = vrot.slane %v1040, 2
        %v1042 = vadd.f32 %v1040, %v1041
        %v1043 = vrot.slane %v1042, 1
        %v1044 = vadd.f32 %v1042, %v1043
        %v1045 = vadd.f32 %v911, %v1044
        %1046 = vst [vmem:[#allocation3] sm:$0x1] %v1045
      $region44: #{cand_bottleneck_block.6} parent=35 // pred_fallthru
        _
      %p1047 = scmp.eq.s32.totalorder %s19, 1
      // Predicated region
      $region45: #{cand_bottleneck_block.6} parent=35 // pred_check
        %p1048 = pneg %p1047
      $region46: #{cand_bottleneck_block.6} parent=35 // pred_check_branch
        %1050 = sbr.rel (%p1048) target = $region48
      $region47: #{cand_bottleneck_block.6} parent=35 // pred_region
        %v1051 = vld [vmem:[#allocation2] sm:$0x1]
        %v1052 = vmul.f32 %v1051, 0.001953125
        %v1053 = vld [vmem:[#allocation3] sm:$0x1]
        %v1054 = vmul.f32 %v1053, 0.001953125
        %v1055 = vmul.f32 %v1052, %v1052
        %v1056 = vsub.f32 %v1054, %v1055
        %v1057 = vmax.f32 %v1056, 0.0
        %v1058 = vadd.f32 %v1057, 1e-05
        %v1059 = vrsqrt.pop %v1058
        %v1060 = vld [vmem:[%s2] sm:$0x1]
        %v1061 = vmul.f32 %v1059, %v1060
        %v1063 = vlaneseq
        %v1064 = vshrl.u32 %v1063, 7
        %v1065 = vsub.s32 0, %v1064
        %v1066 = vrot.slane %v1052, %v1065
        %v1068 = vsub.f32 %v582, %v1066
        %v1069 = vsub.f32 %v585, %v1066
        %v1070 = vsub.f32 %v590, %v1066
        %v1071 = vsub.f32 %v593, %v1066
        %v1072 = vsub.f32 %v598, %v1066
        %v1073 = vsub.f32 %v601, %v1066
        %v1074 = vsub.f32 %v606, %v1066
        %v1075 = vsub.f32 %v609, %v1066
        %v1076 = vsub.f32 %v614, %v1066
        %v1077 = vsub.f32 %v617, %v1066
        %v1078 = vsub.f32 %v622, %v1066
        %v1079 = vsub.f32 %v625, %v1066
        %v1080 = vsub.f32 %v630, %v1066
        %v1081 = vsub.f32 %v633, %v1066
        %v1082 = vsub.f32 %v638, %v1066
        %v1083 = vsub.f32 %v641, %v1066
        %v1084 = vsub.f32 %v646, %v1066
        %v1085 = vsub.f32 %v649, %v1066
        %v1086 = vsub.f32 %v654, %v1066
        %v1087 = vsub.f32 %v657, %v1066
        %v1088 = vsub.f32 %v662, %v1066
        %v1089 = vsub.f32 %v665, %v1066
        %v1090 = vsub.f32 %v670, %v1066
        %v1091 = vsub.f32 %v673, %v1066
        %v1092 = vsub.f32 %v678, %v1066
        %v1093 = vsub.f32 %v681, %v1066
        %v1094 = vsub.f32 %v686, %v1066
        %v1095 = vsub.f32 %v689, %v1066
        %v1096 = vsub.f32 %v694, %v1066
        %v1097 = vsub.f32 %v697, %v1066
        %v1098 = vsub.f32 %v702, %v1066
        %v1099 = vsub.f32 %v705, %v1066
        %v1100 = vsub.f32 %v710, %v1066
        %v1101 = vsub.f32 %v713, %v1066
        %v1102 = vsub.f32 %v718, %v1066
        %v1103 = vsub.f32 %v721, %v1066
        %v1104 = vsub.f32 %v726, %v1066
        %v1105 = vsub.f32 %v729, %v1066
        %v1106 = vsub.f32 %v734, %v1066
        %v1107 = vsub.f32 %v737, %v1066
        %v1108 = vsub.f32 %v742, %v1066
        %v1109 = vsub.f32 %v745, %v1066
        %v1110 = vsub.f32 %v750, %v1066
        %v1111 = vsub.f32 %v753, %v1066
        %v1112 = vsub.f32 %v758, %v1066
        %v1113 = vsub.f32 %v761, %v1066
        %v1114 = vsub.f32 %v766, %v1066
        %v1115 = vsub.f32 %v769, %v1066
        %v1116 = vsub.f32 %v774, %v1066
        %v1117 = vsub.f32 %v777, %v1066
        %v1118 = vsub.f32 %v782, %v1066
        %v1119 = vsub.f32 %v785, %v1066
        %v1120 = vsub.f32 %v790, %v1066
        %v1121 = vsub.f32 %v793, %v1066
        %v1122 = vsub.f32 %v798, %v1066
        %v1123 = vsub.f32 %v801, %v1066
        %v1124 = vsub.f32 %v806, %v1066
        %v1125 = vsub.f32 %v809, %v1066
        %v1126 = vsub.f32 %v814, %v1066
        %v1127 = vsub.f32 %v817, %v1066
        %v1128 = vsub.f32 %v822, %v1066
        %v1129 = vsub.f32 %v825, %v1066
        %v1130 = vsub.f32 %v830, %v1066
        %v1131 = vsub.f32 %v833, %v1066
        %v1133 = vlaneseq
        %v1134 = vshrl.u32 %v1133, 7
        %v1135 = vsub.s32 0, %v1134
        %v1136 = vrot.slane %v1061, %v1135
        %v1138 = vmul.f32 %v1068, %v1136
        %v1139 = vmul.f32 %v1069, %v1136
        %v1140 = vmul.f32 %v1070, %v1136
        %v1141 = vmul.f32 %v1071, %v1136
        %v1142 = vmul.f32 %v1072, %v1136
        %v1143 = vmul.f32 %v1073, %v1136
        %v1144 = vmul.f32 %v1074, %v1136
        %v1145 = vmul.f32 %v1075, %v1136
        %v1146 = vmul.f32 %v1076, %v1136
        %v1147 = vmul.f32 %v1077, %v1136
        %v1148 = vmul.f32 %v1078, %v1136
        %v1149 = vmul.f32 %v1079, %v1136
        %v1150 = vmul.f32 %v1080, %v1136
        %v1151 = vmul.f32 %v1081, %v1136
        %v1152 = vmul.f32 %v1082, %v1136
        %v1153 = vmul.f32 %v1083, %v1136
        %v1154 = vmul.f32 %v1084, %v1136
        %v1155 = vmul.f32 %v1085, %v1136
        %v1156 = vmul.f32 %v1086, %v1136
        %v1157 = vmul.f32 %v1087, %v1136
        %v1158 = vmul.f32 %v1088, %v1136
        %v1159 = vmul.f32 %v1089, %v1136
        %v1160 = vmul.f32 %v1090, %v1136
        %v1161 = vmul.f32 %v1091, %v1136
        %v1162 = vmul.f32 %v1092, %v1136
        %v1163 = vmul.f32 %v1093, %v1136
        %v1164 = vmul.f32 %v1094, %v1136
        %v1165 = vmul.f32 %v1095, %v1136
        %v1166 = vmul.f32 %v1096, %v1136
        %v1167 = vmul.f32 %v1097, %v1136
        %v1168 = vmul.f32 %v1098, %v1136
        %v1169 = vmul.f32 %v1099, %v1136
        %v1170 = vmul.f32 %v1100, %v1136
        %v1171 = vmul.f32 %v1101, %v1136
        %v1172 = vmul.f32 %v1102, %v1136
        %v1173 = vmul.f32 %v1103, %v1136
        %v1174 = vmul.f32 %v1104, %v1136
        %v1175 = vmul.f32 %v1105, %v1136
        %v1176 = vmul.f32 %v1106, %v1136
        %v1177 = vmul.f32 %v1107, %v1136
        %v1178 = vmul.f32 %v1108, %v1136
        %v1179 = vmul.f32 %v1109, %v1136
        %v1180 = vmul.f32 %v1110, %v1136
        %v1181 = vmul.f32 %v1111, %v1136
        %v1182 = vmul.f32 %v1112, %v1136
        %v1183 = vmul.f32 %v1113, %v1136
        %v1184 = vmul.f32 %v1114, %v1136
        %v1185 = vmul.f32 %v1115, %v1136
        %v1186 = vmul.f32 %v1116, %v1136
        %v1187 = vmul.f32 %v1117, %v1136
        %v1188 = vmul.f32 %v1118, %v1136
        %v1189 = vmul.f32 %v1119, %v1136
        %v1190 = vmul.f32 %v1120, %v1136
        %v1191 = vmul.f32 %v1121, %v1136
        %v1192 = vmul.f32 %v1122, %v1136
        %v1193 = vmul.f32 %v1123, %v1136
        %v1194 = vmul.f32 %v1124, %v1136
        %v1195 = vmul.f32 %v1125, %v1136
        %v1196 = vmul.f32 %v1126, %v1136
        %v1197 = vmul.f32 %v1127, %v1136
        %v1198 = vmul.f32 %v1128, %v1136
        %v1199 = vmul.f32 %v1129, %v1136
        %v1200 = vmul.f32 %v1130, %v1136
        %v1201 = vmul.f32 %v1131, %v1136
        %v1202 = vld [vmem:[%s3] sm:$0x1]
        %v1204 = vlaneseq
        %v1205 = vshrl.u32 %v1204, 7
        %v1206 = vsub.s32 0, %v1205
        %v1207 = vrot.slane %v1202, %v1206
        %v1209 = vadd.f32 %v1138, %v1207
        %v1210 = vadd.f32 %v1139, %v1207
        %v1211 = vadd.f32 %v1140, %v1207
        %v1212 = vadd.f32 %v1141, %v1207
        %v1213 = vadd.f32 %v1142, %v1207
        %v1214 = vadd.f32 %v1143, %v1207
        %v1215 = vadd.f32 %v1144, %v1207
        %v1216 = vadd.f32 %v1145, %v1207
        %v1217 = vadd.f32 %v1146, %v1207
        %v1218 = vadd.f32 %v1147, %v1207
        %v1219 = vadd.f32 %v1148, %v1207
        %v1220 = vadd.f32 %v1149, %v1207
        %v1221 = vadd.f32 %v1150, %v1207
        %v1222 = vadd.f32 %v1151, %v1207
        %v1223 = vadd.f32 %v1152, %v1207
        %v1224 = vadd.f32 %v1153, %v1207
        %v1225 = vadd.f32 %v1154, %v1207
        %v1226 = vadd.f32 %v1155, %v1207
        %v1227 = vadd.f32 %v1156, %v1207
        %v1228 = vadd.f32 %v1157, %v1207
        %v1229 = vadd.f32 %v1158, %v1207
        %v1230 = vadd.f32 %v1159, %v1207
        %v1231 = vadd.f32 %v1160, %v1207
        %v1232 = vadd.f32 %v1161, %v1207
        %v1233 = vadd.f32 %v1162, %v1207
        %v1234 = vadd.f32 %v1163, %v1207
        %v1235 = vadd.f32 %v1164, %v1207
        %v1236 = vadd.f32 %v1165, %v1207
        %v1237 = vadd.f32 %v1166, %v1207
        %v1238 = vadd.f32 %v1167, %v1207
        %v1239 = vadd.f32 %v1168, %v1207
        %v1240 = vadd.f32 %v1169, %v1207
        %v1241 = vadd.f32 %v1170, %v1207
        %v1242 = vadd.f32 %v1171, %v1207
        %v1243 = vadd.f32 %v1172, %v1207
        %v1244 = vadd.f32 %v1173, %v1207
        %v1245 = vadd.f32 %v1174, %v1207
        %v1246 = vadd.f32 %v1175, %v1207
        %v1247 = vadd.f32 %v1176, %v1207
        %v1248 = vadd.f32 %v1177, %v1207
        %v1249 = vadd.f32 %v1178, %v1207
        %v1250 = vadd.f32 %v1179, %v1207
        %v1251 = vadd.f32 %v1180, %v1207
        %v1252 = vadd.f32 %v1181, %v1207
        %v1253 = vadd.f32 %v1182, %v1207
        %v1254 = vadd.f32 %v1183, %v1207
        %v1255 = vadd.f32 %v1184, %v1207
        %v1256 = vadd.f32 %v1185, %v1207
        %v1257 = vadd.f32 %v1186, %v1207
        %v1258 = vadd.f32 %v1187, %v1207
        %v1259 = vadd.f32 %v1188, %v1207
        %v1260 = vadd.f32 %v1189, %v1207
        %v1261 = vadd.f32 %v1190, %v1207
        %v1262 = vadd.f32 %v1191, %v1207
        %v1263 = vadd.f32 %v1192, %v1207
        %v1264 = vadd.f32 %v1193, %v1207
        %v1265 = vadd.f32 %v1194, %v1207
        %v1266 = vadd.f32 %v1195, %v1207
        %v1267 = vadd.f32 %v1196, %v1207
        %v1268 = vadd.f32 %v1197, %v1207
        %v1269 = vadd.f32 %v1198, %v1207
        %v1270 = vadd.f32 %v1199, %v1207
        %v1271 = vadd.f32 %v1200, %v1207
        %v1272 = vadd.f32 %v1201, %v1207
        %v1273 = vmax.f32 %v1209, 0.0
        %v1274 = vmax.f32 %v1210, 0.0
        %v1275 = vmax.f32 %v1211, 0.0
        %v1276 = vmax.f32 %v1212, 0.0
        %v1277 = vmax.f32 %v1213, 0.0
        %v1278 = vmax.f32 %v1214, 0.0
        %v1279 = vmax.f32 %v1215, 0.0
        %v1280 = vmax.f32 %v1216, 0.0
        %v1281 = vmax.f32 %v1217, 0.0
        %v1282 = vmax.f32 %v1218, 0.0
        %v1283 = vmax.f32 %v1219, 0.0
        %v1284 = vmax.f32 %v1220, 0.0
        %v1285 = vmax.f32 %v1221, 0.0
        %v1286 = vmax.f32 %v1222, 0.0
        %v1287 = vmax.f32 %v1223, 0.0
        %v1288 = vmax.f32 %v1224, 0.0
        %v1289 = vmax.f32 %v1225, 0.0
        %v1290 = vmax.f32 %v1226, 0.0
        %v1291 = vmax.f32 %v1227, 0.0
        %v1292 = vmax.f32 %v1228, 0.0
        %v1293 = vmax.f32 %v1229, 0.0
        %v1294 = vmax.f32 %v1230, 0.0
        %v1295 = vmax.f32 %v1231, 0.0
        %v1296 = vmax.f32 %v1232, 0.0
        %v1297 = vmax.f32 %v1233, 0.0
        %v1298 = vmax.f32 %v1234, 0.0
        %v1299 = vmax.f32 %v1235, 0.0
        %v1300 = vmax.f32 %v1236, 0.0
        %v1301 = vmax.f32 %v1237, 0.0
        %v1302 = vmax.f32 %v1238, 0.0
        %v1303 = vmax.f32 %v1239, 0.0
        %v1304 = vmax.f32 %v1240, 0.0
        %v1305 = vmax.f32 %v1241, 0.0
        %v1306 = vmax.f32 %v1242, 0.0
        %v1307 = vmax.f32 %v1243, 0.0
        %v1308 = vmax.f32 %v1244, 0.0
        %v1309 = vmax.f32 %v1245, 0.0
        %v1310 = vmax.f32 %v1246, 0.0
        %v1311 = vmax.f32 %v1247, 0.0
        %v1312 = vmax.f32 %v1248, 0.0
        %v1313 = vmax.f32 %v1249, 0.0
        %v1314 = vmax.f32 %v1250, 0.0
        %v1315 = vmax.f32 %v1251, 0.0
        %v1316 = vmax.f32 %v1252, 0.0
        %v1317 = vmax.f32 %v1253, 0.0
        %v1318 = vmax.f32 %v1254, 0.0
        %v1319 = vmax.f32 %v1255, 0.0
        %v1320 = vmax.f32 %v1256, 0.0
        %v1321 = vmax.f32 %v1257, 0.0
        %v1322 = vmax.f32 %v1258, 0.0
        %v1323 = vmax.f32 %v1259, 0.0
        %v1324 = vmax.f32 %v1260, 0.0
        %v1325 = vmax.f32 %v1261, 0.0
        %v1326 = vmax.f32 %v1262, 0.0
        %v1327 = vmax.f32 %v1263, 0.0
        %v1328 = vmax.f32 %v1264, 0.0
        %v1329 = vmax.f32 %v1265, 0.0
        %v1330 = vmax.f32 %v1266, 0.0
        %v1331 = vmax.f32 %v1267, 0.0
        %v1332 = vmax.f32 %v1268, 0.0
        %v1333 = vmax.f32 %v1269, 0.0
        %v1334 = vmax.f32 %v1270, 0.0
        %v1335 = vmax.f32 %v1271, 0.0
        %v1336 = vmax.f32 %v1272, 0.0
        %v1337 = vpack.c.bf16 %v1274, %v1273
        %v1338 = vpack.c.bf16 %v1276, %v1275
        %v1339 = vpack.c.bf16 %v1278, %v1277
        %v1340 = vpack.c.bf16 %v1280, %v1279
        %v1341 = vpack.c.bf16 %v1282, %v1281
        %v1342 = vpack.c.bf16 %v1284, %v1283
        %v1343 = vpack.c.bf16 %v1286, %v1285
        %v1344 = vpack.c.bf16 %v1288, %v1287
        %v1345 = vpack.c.bf16 %v1290, %v1289
        %v1346 = vpack.c.bf16 %v1292, %v1291
        %v1347 = vpack.c.bf16 %v1294, %v1293
        %v1348 = vpack.c.bf16 %v1296, %v1295
        %v1349 = vpack.c.bf16 %v1298, %v1297
        %v1350 = vpack.c.bf16 %v1300, %v1299
        %v1351 = vpack.c.bf16 %v1302, %v1301
        %v1352 = vpack.c.bf16 %v1304, %v1303
        %v1353 = vpack.c.bf16 %v1306, %v1305
        %v1354 = vpack.c.bf16 %v1308, %v1307
        %v1355 = vpack.c.bf16 %v1310, %v1309
        %v1356 = vpack.c.bf16 %v1312, %v1311
        %v1357 = vpack.c.bf16 %v1314, %v1313
        %v1358 = vpack.c.bf16 %v1316, %v1315
        %v1359 = vpack.c.bf16 %v1318, %v1317
        %v1360 = vpack.c.bf16 %v1320, %v1319
        %v1361 = vpack.c.bf16 %v1322, %v1321
        %v1362 = vpack.c.bf16 %v1324, %v1323
        %v1363 = vpack.c.bf16 %v1326, %v1325
        %v1364 = vpack.c.bf16 %v1328, %v1327
        %v1365 = vpack.c.bf16 %v1330, %v1329
        %v1366 = vpack.c.bf16 %v1332, %v1331
        %v1367 = vpack.c.bf16 %v1334, %v1333
        %v1368 = vpack.c.bf16 %v1336, %v1335
        %v1401 = vunpack.c.l.b16 %v1337
        %v1402 = vunpack.c.h.b16 %v1337
        %v1403 = vunpack.c.l.b16 %v1338
        %v1404 = vunpack.c.h.b16 %v1338
        %v1405 = vunpack.c.l.b16 %v1339
        %v1406 = vunpack.c.h.b16 %v1339
        %v1407 = vunpack.c.l.b16 %v1340
        %v1408 = vunpack.c.h.b16 %v1340
        %v1409 = vunpack.c.l.b16 %v1341
        %v1410 = vunpack.c.h.b16 %v1341
        %v1411 = vunpack.c.l.b16 %v1342
        %v1412 = vunpack.c.h.b16 %v1342
        %v1413 = vunpack.c.l.b16 %v1343
        %v1414 = vunpack.c.h.b16 %v1343
        %v1415 = vunpack.c.l.b16 %v1344
        %v1416 = vunpack.c.h.b16 %v1344
        %v1417 = vunpack.c.l.b16 %v1345
        %v1418 = vunpack.c.h.b16 %v1345
        %v1419 = vunpack.c.l.b16 %v1346
        %v1420 = vunpack.c.h.b16 %v1346
        %v1421 = vunpack.c.l.b16 %v1347
        %v1422 = vunpack.c.h.b16 %v1347
        %v1423 = vunpack.c.l.b16 %v1348
        %v1424 = vunpack.c.h.b16 %v1348
        %v1425 = vunpack.c.l.b16 %v1349
        %v1426 = vunpack.c.h.b16 %v1349
        %v1427 = vunpack.c.l.b16 %v1350
        %v1428 = vunpack.c.h.b16 %v1350
        %v1429 = vunpack.c.l.b16 %v1351
        %v1430 = vunpack.c.h.b16 %v1351
        %v1431 = vunpack.c.l.b16 %v1352
        %v1432 = vunpack.c.h.b16 %v1352
        %v1433 = vunpack.c.l.b16 %v1353
        %v1434 = vunpack.c.h.b16 %v1353
        %v1435 = vunpack.c.l.b16 %v1354
        %v1436 = vunpack.c.h.b16 %v1354
        %v1437 = vunpack.c.l.b16 %v1355
        %v1438 = vunpack.c.h.b16 %v1355
        %v1439 = vunpack.c.l.b16 %v1356
        %v1440 = vunpack.c.h.b16 %v1356
        %v1441 = vunpack.c.l.b16 %v1357
        %v1442 = vunpack.c.h.b16 %v1357
        %v1443 = vunpack.c.l.b16 %v1358
        %v1444 = vunpack.c.h.b16 %v1358
        %v1445 = vunpack.c.l.b16 %v1359
        %v1446 = vunpack.c.h.b16 %v1359
        %v1447 = vunpack.c.l.b16 %v1360
        %v1448 = vunpack.c.h.b16 %v1360
        %v1449 = vunpack.c.l.b16 %v1361
        %v1450 = vunpack.c.h.b16 %v1361
        %v1451 = vunpack.c.l.b16 %v1362
        %v1452 = vunpack.c.h.b16 %v1362
        %v1453 = vunpack.c.l.b16 %v1363
        %v1454 = vunpack.c.h.b16 %v1363
        %v1455 = vunpack.c.l.b16 %v1364
        %v1456 = vunpack.c.h.b16 %v1364
        %v1457 = vunpack.c.l.b16 %v1365
        %v1458 = vunpack.c.h.b16 %v1365
        %v1459 = vunpack.c.l.b16 %v1366
        %v1460 = vunpack.c.h.b16 %v1366
        %v1461 = vunpack.c.l.b16 %v1367
        %v1462 = vunpack.c.h.b16 %v1367
        %v1463 = vunpack.c.l.b16 %v1368
        %v1464 = vunpack.c.h.b16 %v1368
        %v1465 = vpack.c.b16 %v1401, %v1401
        %v1466 = vpack.c.b16 %v1402, %v1402
        %v1467 = vpack.c.b16 %v1403, %v1403
        %v1468 = vpack.c.b16 %v1404, %v1404
        %v1469 = vpack.c.b16 %v1405, %v1405
        %v1470 = vpack.c.b16 %v1406, %v1406
        %v1471 = vpack.c.b16 %v1407, %v1407
        %v1472 = vpack.c.b16 %v1408, %v1408
        %v1473 = vpack.c.b16 %v1409, %v1409
        %v1474 = vpack.c.b16 %v1410, %v1410
        %v1475 = vpack.c.b16 %v1411, %v1411
        %v1476 = vpack.c.b16 %v1412, %v1412
        %v1477 = vpack.c.b16 %v1413, %v1413
        %v1478 = vpack.c.b16 %v1414, %v1414
        %v1479 = vpack.c.b16 %v1415, %v1415
        %v1480 = vpack.c.b16 %v1416, %v1416
        %v1481 = vpack.c.b16 %v1417, %v1417
        %v1482 = vpack.c.b16 %v1418, %v1418
        %v1483 = vpack.c.b16 %v1419, %v1419
        %v1484 = vpack.c.b16 %v1420, %v1420
        %v1485 = vpack.c.b16 %v1421, %v1421
        %v1486 = vpack.c.b16 %v1422, %v1422
        %v1487 = vpack.c.b16 %v1423, %v1423
        %v1488 = vpack.c.b16 %v1424, %v1424
        %v1489 = vpack.c.b16 %v1425, %v1425
        %v1490 = vpack.c.b16 %v1426, %v1426
        %v1491 = vpack.c.b16 %v1427, %v1427
        %v1492 = vpack.c.b16 %v1428, %v1428
        %v1493 = vpack.c.b16 %v1429, %v1429
        %v1494 = vpack.c.b16 %v1430, %v1430
        %v1495 = vpack.c.b16 %v1431, %v1431
        %v1496 = vpack.c.b16 %v1432, %v1432
        %v1497 = vpack.c.b16 %v1433, %v1433
        %v1498 = vpack.c.b16 %v1434, %v1434
        %v1499 = vpack.c.b16 %v1435, %v1435
        %v1500 = vpack.c.b16 %v1436, %v1436
        %v1501 = vpack.c.b16 %v1437, %v1437
        %v1502 = vpack.c.b16 %v1438, %v1438
        %v1503 = vpack.c.b16 %v1439, %v1439
        %v1504 = vpack.c.b16 %v1440, %v1440
        %v1505 = vpack.c.b16 %v1441, %v1441
        %v1506 = vpack.c.b16 %v1442, %v1442
        %v1507 = vpack.c.b16 %v1443, %v1443
        %v1508 = vpack.c.b16 %v1444, %v1444
        %v1509 = vpack.c.b16 %v1445, %v1445
        %v1510 = vpack.c.b16 %v1446, %v1446
        %v1511 = vpack.c.b16 %v1447, %v1447
        %v1512 = vpack.c.b16 %v1448, %v1448
        %v1513 = vpack.c.b16 %v1449, %v1449
        %v1514 = vpack.c.b16 %v1450, %v1450
        %v1515 = vpack.c.b16 %v1451, %v1451
        %v1516 = vpack.c.b16 %v1452, %v1452
        %v1517 = vpack.c.b16 %v1453, %v1453
        %v1518 = vpack.c.b16 %v1454, %v1454
        %v1519 = vpack.c.b16 %v1455, %v1455
        %v1520 = vpack.c.b16 %v1456, %v1456
        %v1521 = vpack.c.b16 %v1457, %v1457
        %v1522 = vpack.c.b16 %v1458, %v1458
        %v1523 = vpack.c.b16 %v1459, %v1459
        %v1524 = vpack.c.b16 %v1460, %v1460
        %v1525 = vpack.c.b16 %v1461, %v1461
        %v1526 = vpack.c.b16 %v1462, %v1462
        %v1527 = vpack.c.b16 %v1463, %v1463
        %v1528 = vpack.c.b16 %v1464, %v1464
        %1593 = vst [vmem:[%s215] sm:$0xf] %v1465
        %1594 = vst [vmem:[%s215 + $0x4] sm:$0xf] %v1466
        %1595 = vst [vmem:[%s215 + $0x8] sm:$0xf] %v1467
        %1596 = vst [vmem:[%s215 + $0xc] sm:$0xf] %v1468
        %1597 = vst [vmem:[%s215 + $0x10] sm:$0xf] %v1469
        %1598 = vst [vmem:[%s215 + $0x14] sm:$0xf] %v1470
        %1599 = vst [vmem:[%s215 + $0x18] sm:$0xf] %v1471
        %1600 = vst [vmem:[%s215 + $0x1c] sm:$0xf] %v1472
        %1601 = vst [vmem:[%s215 + $0x20] sm:$0xf] %v1473
        %1602 = vst [vmem:[%s215 + $0x24] sm:$0xf] %v1474
        %1603 = vst [vmem:[%s215 + $0x28] sm:$0xf] %v1475
        %1604 = vst [vmem:[%s215 + $0x2c] sm:$0xf] %v1476
        %1605 = vst [vmem:[%s215 + $0x30] sm:$0xf] %v1477
        %1606 = vst [vmem:[%s215 + $0x34] sm:$0xf] %v1478
        %1607 = vst [vmem:[%s215 + $0x38] sm:$0xf] %v1479
        %1608 = vst [vmem:[%s215 + $0x3c] sm:$0xf] %v1480
        %1609 = vst [vmem:[%s215 + $0x40] sm:$0xf] %v1481
        %1610 = vst [vmem:[%s215 + $0x44] sm:$0xf] %v1482
        %1611 = vst [vmem:[%s215 + $0x48] sm:$0xf] %v1483
        %1612 = vst [vmem:[%s215 + $0x4c] sm:$0xf] %v1484
        %1613 = vst [vmem:[%s215 + $0x50] sm:$0xf] %v1485
        %1614 = vst [vmem:[%s215 + $0x54] sm:$0xf] %v1486
        %1615 = vst [vmem:[%s215 + $0x58] sm:$0xf] %v1487
        %1616 = vst [vmem:[%s215 + $0x5c] sm:$0xf] %v1488
        %1617 = vst [vmem:[%s215 + $0x60] sm:$0xf] %v1489
        %1618 = vst [vmem:[%s215 + $0x64] sm:$0xf] %v1490
        %1619 = vst [vmem:[%s215 + $0x68] sm:$0xf] %v1491
        %1620 = vst [vmem:[%s215 + $0x6c] sm:$0xf] %v1492
        %1621 = vst [vmem:[%s215 + $0x70] sm:$0xf] %v1493
        %1622 = vst [vmem:[%s215 + $0x74] sm:$0xf] %v1494
        %1623 = vst [vmem:[%s215 + $0x78] sm:$0xf] %v1495
        %1624 = vst [vmem:[%s215 + $0x7c] sm:$0xf] %v1496
        %1625 = vst [vmem:[%s215 + $0x80] sm:$0xf] %v1497
        %1626 = vst [vmem:[%s215 + $0x84] sm:$0xf] %v1498
        %1627 = vst [vmem:[%s215 + $0x88] sm:$0xf] %v1499
        %1628 = vst [vmem:[%s215 + $0x8c] sm:$0xf] %v1500
        %1629 = vst [vmem:[%s215 + $0x90] sm:$0xf] %v1501
        %1630 = vst [vmem:[%s215 + $0x94] sm:$0xf] %v1502
        %1631 = vst [vmem:[%s215 + $0x98] sm:$0xf] %v1503
        %1632 = vst [vmem:[%s215 + $0x9c] sm:$0xf] %v1504
        %1633 = vst [vmem:[%s215 + $0xa0] sm:$0xf] %v1505
        %1634 = vst [vmem:[%s215 + $0xa4] sm:$0xf] %v1506
        %1635 = vst [vmem:[%s215 + $0xa8] sm:$0xf] %v1507
        %1636 = vst [vmem:[%s215 + $0xac] sm:$0xf] %v1508
        %1637 = vst [vmem:[%s215 + $0xb0] sm:$0xf] %v1509
        %1638 = vst [vmem:[%s215 + $0xb4] sm:$0xf] %v1510
        %1639 = vst [vmem:[%s215 + $0xb8] sm:$0xf] %v1511
        %1640 = vst [vmem:[%s215 + $0xbc] sm:$0xf] %v1512
        %1641 = vst [vmem:[%s215 + $0xc0] sm:$0xf] %v1513
        %1642 = vst [vmem:[%s215 + $0xc4] sm:$0xf] %v1514
        %1643 = vst [vmem:[%s215 + $0xc8] sm:$0xf] %v1515
        %1644 = vst [vmem:[%s215 + $0xcc] sm:$0xf] %v1516
        %1645 = vst [vmem:[%s215 + $0xd0] sm:$0xf] %v1517
        %1646 = vst [vmem:[%s215 + $0xd4] sm:$0xf] %v1518
        %1647 = vst [vmem:[%s215 + $0xd8] sm:$0xf] %v1519
        %1648 = vst [vmem:[%s215 + $0xdc] sm:$0xf] %v1520
        %1649 = vst [vmem:[%s215 + $0xe0] sm:$0xf] %v1521
        %1650 = vst [vmem:[%s215 + $0xe4] sm:$0xf] %v1522
        %1651 = vst [vmem:[%s215 + $0xe8] sm:$0xf] %v1523
        %1652 = vst [vmem:[%s215 + $0xec] sm:$0xf] %v1524
        %1653 = vst [vmem:[%s215 + $0xf0] sm:$0xf] %v1525
        %1654 = vst [vmem:[%s215 + $0xf4] sm:$0xf] %v1526
        %1655 = vst [vmem:[%s215 + $0xf8] sm:$0xf] %v1527
        %1656 = vst [vmem:[%s215 + $0xfc] sm:$0xf] %v1528
      $region48: #{cand_bottleneck_block.6} parent=35 // pred_fallthru
        _
      %s1657 = smul.u32 %s20, %s19
      %s1658 = smul.u32 64, %s1657
      %p1659 = scmp.lt.s32.totalorder %s1658, 63
      %s1660 = scalar_select %p1659, %s1658, 63
      %s1661 = smul.addr %s1660, 4
      %s1662 = scalar_lea.vmem %s4, %s1661
      // Predicated region
      $region49: #{cand_bottleneck_block.6} parent=35 // pred_check
        %p1663 = pneg %p136
      $region50: #{cand_bottleneck_block.6} parent=35 // pred_check_branch
        %1665 = sbr.rel (%p1663) target = $region52
      $region51: #{cand_bottleneck_block.6} parent=35 // pred_region
        %s1666 = smul.u32 %s20, %s19
        %s1667 = smul.u32 64, %s1666
      $region52: #{cand_bottleneck_block.6} parent=35 // pred_fallthru
        _
    $region36: #{cand_bottleneck_block.6} parent=5 // pred_fallthru
      _
    %p1668 = scmp.le.s32.totalorder 2, %s10
    // Predicated region
    $region53: #{cand_bottleneck_block.6} parent=5 // pred_check
      %p1669 = pneg %p1668
    $region54: #{cand_bottleneck_block.6} parent=5 // pred_check_branch
      %1671 = sbr.rel (%p1669) target = $region56
    $region55: #{cand_bottleneck_block.6} parent=5 // pred_region
      %s1672 = ssub.s32 %s10, 2
      // Predicated region
      $region57: #{cand_bottleneck_block.6} parent=55 // pred_check
        %p1673 = pneg %p142
      $region58: #{cand_bottleneck_block.6} parent=55 // pred_check_branch
        %1675 = sbr.rel (%p1673) target = $region60
      $region59: #{cand_bottleneck_block.6} parent=55 // pred_region
        %s1676 = smul.u32 %s22, %s21
        %s1677 = smul.u32 64, %s1676
        %p1678 = scmp.lt.s32.totalorder %s1677, 63
        %s1679 = scalar_select %p1678, %s1677, 63
        %s1680 = smul.addr %s1679, 4
        %s1681 = scalar_lea.vmem %s4, %s1680
      $region60: #{cand_bottleneck_block.6} parent=55 // pred_fallthru
        _
    $region56: #{cand_bottleneck_block.6} parent=5 // pred_fallthru
      _
  $region6: #{cand_bottleneck_block.6} parent=0 // loop_footer
    %s14 = sadd.s32 1, %s10
  $region7: #{cand_bottleneck_block.6} parent=0 // loop_footer_branch
    %9 = sbr.rel target = $region3
  $region8: #{cand_bottleneck_block.6} parent=0 // loop_exit
    _

// kernel: cand_bottleneck_block.7
$region0: #{cand_bottleneck_block.7}
  #allocation0 [shape = 'u32[]', space=smem, size = 0x4, offset = 0x4, fixed_abs, tag = 'smem constant byte address 0x4 - core index']
  #allocation1 [shape = 'u32[144,128]{1,0:T(1,128)}', space=vmem, size = 0x12000, scoped, tag = 'internal scratch']
  #allocation2 [shape = 'f32[1,128]{1,0:T(1,128)}', space=vmem, size = 0x200, scoped, tag = 'scratch operand']
  #allocation3 [shape = 'f32[1,128]{1,0:T(1,128)}', space=vmem, size = 0x200, scoped, tag = 'scratch operand']
  %s0 = inlined_call_operand.vmem [shape: bf16[8,9,9,128], index: 0, kind: input, shape index: {}]
  %s1 = inlined_call_operand.vmem [shape: bf16[9,128,128], index: 1, kind: input, shape index: {}]
  %s2 = inlined_call_operand.vmem [shape: f32[1,128], index: 2, kind: input, shape index: {}]
  %s3 = inlined_call_operand.vmem [shape: f32[1,128], index: 3, kind: input, shape index: {}]
  %s4 = inlined_call_operand.vmem [shape: bf16[128,128], index: 4, kind: output, shape index: {}]
  %s5 = sld [smem:[#allocation0]]
  $region61: #{cand_bottleneck_block.7} parent=0
    _
  %s7 = ssub.s32 1, %s5
  %s8 = scalar_select 0, %s7, %s5
  loop: start=0, step=1, limit=6
  $region2: #{cand_bottleneck_block.7} parent=0 // loop_pre_header
    _
  $region3: #{cand_bottleneck_block.7} parent=0 // loop_header
    %s10 = sphi 0, %s14
    %p11 = scmp.ge.s32.totalorder %s10, 6
    %s17 = sphi 0, %s29
    %s18 = sphi 0, %s25
    %s19 = sphi 0, %s17
    %s20 = sphi 0, %s18
    %s21 = sphi 0, %s19
    %s22 = sphi 0, %s20
    %s32 = sphi 0, %s34
    %s35 = sphi 0, %s32
    %s36 = sphi 0, %s35
    %s52 = sphi 0, %s36
    %s56 = sphi 0, %s56
    %s58 = sphi 0, %s56
    %s59 = sphi 0, %s58
    %s73 = sphi 0, %s59
    %s77 = sphi 0, %s77
    %s79 = sphi 0, %s77
    %s80 = sphi 0, %s79
    %s94 = sphi 0, %s80
    %s98 = sphi 0, %s98
    %s100 = sphi 0, %s98
    %s101 = sphi 0, %s100
    %s115 = sphi 0, %s101
    %s123 = sphi 0, %s125
    %s126 = sphi 0, %s123
    %s127 = sphi 0, %s126
    %s143 = sphi 0, %s127
  $region4: #{cand_bottleneck_block.7} parent=0 // loop_header_branch
    %13 = sbr.rel (%p11) target = $region8
  $region5: #{cand_bottleneck_block.7} parent=0 // loop_body
    %s15 = ssub.s32 %s10, 1
    %s16 = ssub.s32 %s10, 2
    %s23 = sadd.s32 1, %s18
    %p24 = scmp.ge.s32.totalorder %s23, 2
    %s25 = scalar_select %p24, 0, %s23
    %s26 = sadd.s32 1, %s17
    %s27 = scalar_select %p24, %s26, %s17
    %p28 = scmp.ge.s32.totalorder %s27, 2
    %s29 = scalar_select %p28, 0, %s27
    %s30 = ssub.s32 %s18, %s25
    %p31 = scmp.eq.s32.totalorder %s30, 0
    %s33 = sadd.s32 %s32, 1
    %s34 = scalar_select %p31, %s32, %s33
    %p37 = pneg %p31
    %p38 = scmp.eq.s32.totalorder %s10, 3
    %p39 = por %p37, %p38
    %p40 = scmp.ne.s32.totalorder %s32, %s35
    %p41 = scmp.eq.s32.totalorder %s10, 0
    %p42 = por %p40, %p41
    %p43 = scmp.ne.s32.totalorder %s32, %s35
    %p44 = scmp.eq.s32.totalorder %s15, 3
    %p45 = por %p43, %p44
    %p46 = scmp.ne.s32.totalorder %s35, %s36
    %p47 = scmp.eq.s32.totalorder %s15, 0
    %p48 = por %p46, %p47
    %p49 = scmp.ne.s32.totalorder %s35, %s36
    %p50 = scmp.eq.s32.totalorder %s16, 3
    %p51 = por %p49, %p50
    %p53 = scmp.ne.s32.totalorder %s36, %s52
    %p54 = scmp.eq.s32.totalorder %s16, 0
    %p55 = por %p53, %p54
    %s57 = sadd.s32 %s56, 1
    %p60 = scmp.eq.s32.totalorder %s10, 3
    %p61 = scmp.ne.s32.totalorder %s56, %s58
    %p62 = scmp.eq.s32.totalorder %s10, 0
    %p63 = por %p61, %p62
    %p64 = scmp.ne.s32.totalorder %s56, %s58
    %p65 = scmp.eq.s32.totalorder %s15, 3
    %p66 = por %p64, %p65
    %p67 = scmp.ne.s32.totalorder %s58, %s59
    %p68 = scmp.eq.s32.totalorder %s15, 0
    %p69 = por %p67, %p68
    %p70 = scmp.ne.s32.totalorder %s58, %s59
    %p71 = scmp.eq.s32.totalorder %s16, 3
    %p72 = por %p70, %p71
    %p74 = scmp.ne.s32.totalorder %s59, %s73
    %p75 = scmp.eq.s32.totalorder %s16, 0
    %p76 = por %p74, %p75
    %s78 = sadd.s32 %s77, 1
    %p81 = scmp.eq.s32.totalorder %s10, 3
    %p82 = scmp.ne.s32.totalorder %s77, %s79
    %p83 = scmp.eq.s32.totalorder %s10, 0
    %p84 = por %p82, %p83
    %p85 = scmp.ne.s32.totalorder %s77, %s79
    %p86 = scmp.eq.s32.totalorder %s15, 3
    %p87 = por %p85, %p86
    %p88 = scmp.ne.s32.totalorder %s79, %s80
    %p89 = scmp.eq.s32.totalorder %s15, 0
    %p90 = por %p88, %p89
    %p91 = scmp.ne.s32.totalorder %s79, %s80
    %p92 = scmp.eq.s32.totalorder %s16, 3
    %p93 = por %p91, %p92
    %p95 = scmp.ne.s32.totalorder %s80, %s94
    %p96 = scmp.eq.s32.totalorder %s16, 0
    %p97 = por %p95, %p96
    %s99 = sadd.s32 %s98, 1
    %p102 = scmp.eq.s32.totalorder %s10, 3
    %p103 = scmp.ne.s32.totalorder %s98, %s100
    %p104 = scmp.eq.s32.totalorder %s10, 0
    %p105 = por %p103, %p104
    %p106 = scmp.ne.s32.totalorder %s98, %s100
    %p107 = scmp.eq.s32.totalorder %s15, 3
    %p108 = por %p106, %p107
    %p109 = scmp.ne.s32.totalorder %s100, %s101
    %p110 = scmp.eq.s32.totalorder %s15, 0
    %p111 = por %p109, %p110
    %p112 = scmp.ne.s32.totalorder %s100, %s101
    %p113 = scmp.eq.s32.totalorder %s16, 3
    %p114 = por %p112, %p113
    %p116 = scmp.ne.s32.totalorder %s101, %s115
    %p117 = scmp.eq.s32.totalorder %s16, 0
    %p118 = por %p116, %p117
    %s119 = smul.u32 %s18, %s17
    %s120 = smul.u32 %s25, %s29
    %s121 = ssub.s32 %s119, %s120
    %p122 = scmp.eq.s32.totalorder %s121, 0
    %s124 = sadd.s32 %s123, 1
    %s125 = scalar_select %p122, %s123, %s124
    %p128 = pneg %p122
    %p129 = scmp.eq.s32.totalorder %s10, 3
    %p130 = por %p128, %p129
    %p131 = scmp.ne.s32.totalorder %s123, %s126
    %p132 = scmp.eq.s32.totalorder %s10, 0
    %p133 = por %p131, %p132
    %p134 = scmp.ne.s32.totalorder %s123, %s126
    %p135 = scmp.eq.s32.totalorder %s15, 3
    %p136 = por %p134, %p135
    %p137 = scmp.ne.s32.totalorder %s126, %s127
    %p138 = scmp.eq.s32.totalorder %s15, 0
    %p139 = por %p137, %p138
    %p140 = scmp.ne.s32.totalorder %s126, %s127
    %p141 = scmp.eq.s32.totalorder %s16, 3
    %p142 = por %p140, %p141
    %p144 = scmp.ne.s32.totalorder %s127, %s143
    %p145 = scmp.eq.s32.totalorder %s16, 0
    %p146 = por %p144, %p145
    %p147 = scmp.le.s32.totalorder 1, %s10
    %p148 = scmp.lt.s32.totalorder %s10, 5
    %p149 = pnand %p147, %p148
    %p150 = pneg %p149
    // Predicated region
    $region9: #{cand_bottleneck_block.7} parent=5 // pred_check
      _
    $region10: #{cand_bottleneck_block.7} parent=5 // pred_check_branch
      %152 = sbr.rel (%p149) target = $region12
    $region11: #{cand_bottleneck_block.7} parent=5 // pred_region
      %s153 = ssub.s32 %s10, 1
      // Predicated region
      $region13: #{cand_bottleneck_block.7} parent=11 // pred_check
        %p154 = pneg %p69
      $region14: #{cand_bottleneck_block.7} parent=11 // pred_check_branch
        %156 = sbr.rel (%p154) target = $region16
      $region15: #{cand_bottleneck_block.7} parent=11 // pred_region
        _
      $region16: #{cand_bottleneck_block.7} parent=11 // pred_fallthru
        _
      // Predicated region
      $region17: #{cand_bottleneck_block.7} parent=11 // pred_check
        %p157 = pneg %p90
      $region18: #{cand_bottleneck_block.7} parent=11 // pred_check_branch
        %159 = sbr.rel (%p157) target = $region20
      $region19: #{cand_bottleneck_block.7} parent=11 // pred_region
        _
      $region20: #{cand_bottleneck_block.7} parent=11 // pred_fallthru
        _
      // Predicated region
      $region21: #{cand_bottleneck_block.7} parent=11 // pred_check
        %p160 = pneg %p111
      $region22: #{cand_bottleneck_block.7} parent=11 // pred_check_branch
        %162 = sbr.rel (%p160) target = $region24
      $region23: #{cand_bottleneck_block.7} parent=11 // pred_region
        _
      $region24: #{cand_bottleneck_block.7} parent=11 // pred_fallthru
        _
    $region12: #{cand_bottleneck_block.7} parent=5 // pred_fallthru
      _
    %p163 = scmp.lt.s32.totalorder %s10, 4
    // Predicated region
    $region25: #{cand_bottleneck_block.7} parent=5 // pred_check
      %p164 = pneg %p163
    $region26: #{cand_bottleneck_block.7} parent=5 // pred_check_branch
      %166 = sbr.rel (%p164) target = $region28
    $region27: #{cand_bottleneck_block.7} parent=5 // pred_region
      // Predicated region
      $region29: #{cand_bottleneck_block.7} parent=27 // pred_check
        %p167 = pneg %p42
      $region30: #{cand_bottleneck_block.7} parent=27 // pred_check_branch
        %169 = sbr.rel (%p167) target = $region32
      $region31: #{cand_bottleneck_block.7} parent=27 // pred_region
        %s170 = smul.u32 4, %s18
        %p171 = scmp.lt.s32.totalorder %s170, 7
        %s172 = scalar_select %p171, %s170, 7
        %s173 = smul.addr %s172, 18
        %s174 = smul.addr %s173, 4
        %s175 = scalar_lea.vmem %s0, %s174
        %s176 = smul.u32 4, %s18
      $region32: #{cand_bottleneck_block.7} parent=27 // pred_fallthru
        _
    $region28: #{cand_bottleneck_block.7} parent=5 // pred_fallthru
      _
    %p177 = scmp.le.s32.totalorder 1, %s10
    %p178 = scmp.lt.s32.totalorder %s10, 5
    %p179 = pnand %p177, %p178
    %p180 = pneg %p179
    // Predicated region
    $region33: #{cand_bottleneck_block.7} parent=5 // pred_check
      _
    $region34: #{cand_bottleneck_block.7} parent=5 // pred_check_branch
      %182 = sbr.rel (%p179) target = $region36
    $region35: #{cand_bottleneck_block.7} parent=5 // pred_region
      %s183 = ssub.s32 %s10, 1
      %s184 = smul.u32 4, %s20
      %p185 = scmp.lt.s32.totalorder %s184, 7
      %s186 = scalar_select %p185, %s184, 7
      %s187 = smul.addr %s186, 18
      %s188 = smul.addr %s187, 4
      %s189 = scalar_lea.vmem %s0, %s188
      %p190 = pneg %p48
      %p191 = pneg %p45
      %p192 = pneg %p69
      %p193 = pneg %p66
      %p194 = pneg %p90
      %p195 = pneg %p87
      %p196 = pneg %p111
      %p197 = pneg %p108
      %p198 = pneg %p139
      %p199 = pneg %p136
      %s200 = smul.u32 %s20, %s19
      %s201 = smul.u32 8, %s200
      %p202 = scmp.lt.s32.totalorder %s201, 15
      %s203 = scalar_select %p202, %s201, 15
      %s204 = smul.addr %s203, 4
      %s205 = scalar_lea.vmem %s4, %s204
      %s206 = smul.u32 4, %s20
      %p207 = scmp.lt.s32.totalorder %s206, 7
      %s208 = scalar_select %p207, %s206, 7
      %s209 = smul.addr %s208, 18
      %s210 = smul.addr %s209, 4
      %s211 = scalar_lea.vmem %s0, %s210
      %s212 = smul.u32 4, %s20
      %s213 = smul.u32 %s20, %s19
      %s214 = smul.u32 8, %s213
      %p215 = scmp.lt.s32.totalorder %s214, 15
      %s216 = scalar_select %p215, %s214, 15
      %s217 = smul.addr %s216, 4
      %s218 = scalar_lea.vmem %s4, %s217
      %s219 = smul.u32 %s20, %s19
      %s220 = smul.u32 8, %s219
      %p222 = scmp.eq.s32.totalorder %s19, 0
      %p223 = scmp.eq.s32.totalorder %s20, 0
      %p224 = pnand %p222, %p223
      %p225 = pneg %p224
      // Predicated region
      $region37: #{cand_bottleneck_block.7} parent=35 // pred_check
        _
      $region38: #{cand_bottleneck_block.7} parent=35 // pred_check_branch
        %227 = sbr.rel (%p224) target = $region40
      $region39: #{cand_bottleneck_block.7} parent=35 // pred_region
        %228 = vst [vmem:[#allocation2] sm:$0x1] 0.0
        %229 = vst [vmem:[#allocation3] sm:$0x1] 0.0
      $region40: #{cand_bottleneck_block.7} parent=35 // pred_fallthru
        _
      %v230 = vld [vmem:[%s211] sm:$0xf]
      %v231 = vld [vmem:[%s211 + $0x8] sm:$0xf]
      %v232 = vld [vmem:[%s211 + $0x10] sm:$0xf]
      %v233 = vld [vmem:[%s211 + $0x18] sm:$0xf]
      %v234 = vld [vmem:[%s211 + $0x20] sm:$0xf]
      %v235 = vld [vmem:[%s211 + $0x28] sm:$0xf]
      %v236 = vld [vmem:[%s211 + $0x30] sm:$0xf]
      %v237 = vld [vmem:[%s211 + $0x38] sm:$0xf]
      %v238 = vld [vmem:[%s1] sm:$0xf]
      %v239 = vld [vmem:[%s1 + $0x4] sm:$0xf]
      %v240 = vld [vmem:[%s1 + $0x8] sm:$0xf]
      %v241 = vld [vmem:[%s1 + $0xc] sm:$0xf]
      %v242 = vld [vmem:[%s1 + $0x10] sm:$0xf]
      %v243 = vld [vmem:[%s1 + $0x14] sm:$0xf]
      %v244 = vld [vmem:[%s1 + $0x18] sm:$0xf]
      %v245 = vld [vmem:[%s1 + $0x1c] sm:$0xf]
      %v246 = vld [vmem:[%s1 + $0x20] sm:$0xf]
      %v247 = vld [vmem:[%s1 + $0x24] sm:$0xf]
      %v248 = vld [vmem:[%s1 + $0x28] sm:$0xf]
      %v249 = vld [vmem:[%s1 + $0x2c] sm:$0xf]
      %v250 = vld [vmem:[%s1 + $0x30] sm:$0xf]
      %v251 = vld [vmem:[%s1 + $0x34] sm:$0xf]
      %v252 = vld [vmem:[%s1 + $0x38] sm:$0xf]
      %v253 = vld [vmem:[%s1 + $0x3c] sm:$0xf]
      %s254 = scalar_lea.vmem %s211, 72
      %v255 = vld [vmem:[%s254] sm:$0xf]
      %v256 = vld [vmem:[%s254 + $0x8] sm:$0xf]
      %v257 = vld [vmem:[%s254 + $0x10] sm:$0xf]
      %v258 = vld [vmem:[%s254 + $0x18] sm:$0xf]
      %v259 = vld [vmem:[%s254 + $0x20] sm:$0xf]
      %v260 = vld [vmem:[%s254 + $0x28] sm:$0xf]
      %v261 = vld [vmem:[%s254 + $0x30] sm:$0xf]
      %v262 = vld [vmem:[%s254 + $0x38] sm:$0xf]
      %s263 = scalar_lea.vmem %s1, 64
      %v264 = vld [vmem:[%s263] sm:$0xf]
      %v265 = vld [vmem:[%s263 + $0x4] sm:$0xf]
      %v266 = vld [vmem:[%s263 + $0x8] sm:$0xf]
      %v267 = vld [vmem:[%s263 + $0xc] sm:$0xf]
      %v268 = vld [vmem:[%s263 + $0x10] sm:$0xf]
      %v269 = vld [vmem:[%s263 + $0x14] sm:$0xf]
      %v270 = vld [vmem:[%s263 + $0x18] sm:$0xf]
      %v271 = vld [vmem:[%s263 + $0x1c] sm:$0xf]
      %v272 = vld [vmem:[%s263 + $0x20] sm:$0xf]
      %v273 = vld [vmem:[%s263 + $0x24] sm:$0xf]
      %v274 = vld [vmem:[%s263 + $0x28] sm:$0xf]
      %v275 = vld [vmem:[%s263 + $0x2c] sm:$0xf]
      %v276 = vld [vmem:[%s263 + $0x30] sm:$0xf]
      %v277 = vld [vmem:[%s263 + $0x34] sm:$0xf]
      %v278 = vld [vmem:[%s263 + $0x38] sm:$0xf]
      %v279 = vld [vmem:[%s263 + $0x3c] sm:$0xf]
      %v288 = vunpack.c.l.b16 %v255
      %v289 = vunpack.c.l.b16 %v256
      %v290 = vunpack.c.l.b16 %v257
      %v291 = vunpack.c.l.b16 %v258
      %v292 = vunpack.c.l.b16 %v259
      %v293 = vunpack.c.l.b16 %v260
      %v294 = vunpack.c.l.b16 %v261
      %v295 = vunpack.c.l.b16 %v262
      %v296 = vpack.c.b16 %v289, %v288
      %v297 = vpack.c.b16 %v291, %v290
      %v298 = vpack.c.b16 %v293, %v292
      %v299 = vpack.c.b16 %v295, %v294
      %v320 = vunpack.c.l.b16 %v264
      %v321 = vunpack.c.l.b16 %v265
      %v322 = vunpack.c.l.b16 %v266
      %v323 = vunpack.c.l.b16 %v267
      %v324 = vunpack.c.l.b16 %v268
      %v325 = vunpack.c.l.b16 %v269
      %v326 = vunpack.c.l.b16 %v270
      %v327 = vunpack.c.l.b16 %v271
      %v328 = vunpack.c.l.b16 %v272
      %v329 = vunpack.c.l.b16 %v273
      %v330 = vunpack.c.l.b16 %v274
      %v331 = vunpack.c.l.b16 %v275
      %v332 = vunpack.c.l.b16 %v276
      %v333 = vunpack.c.l.b16 %v277
      %v334 = vunpack.c.l.b16 %v278
      %v335 = vunpack.c.l.b16 %v279
      %v336 = vpack.c.b16 %v321, %v320
      %v337 = vpack.c.b16 %v323, %v322
      %v338 = vpack.c.b16 %v325, %v324
      %v339 = vpack.c.b16 %v327, %v326
      %v340 = vpack.c.b16 %v329, %v328
      %v341 = vpack.c.b16 %v331, %v330
      %v342 = vpack.c.b16 %v333, %v332
      %v343 = vpack.c.b16 %v335, %v334
      %352 = vmatprep.subr.bf16.mxu0 0
      %353 = vmatpush1.bf16.msra.mxu0 %v336
      %354 = vmatprep.subr.bf16.mxu0 0
      %355 = vmatpush1.bf16.msra.mxu0 %v337
      %356 = vmatprep.subr.bf16.mxu0 0
      %357 = vmatpush1.bf16.msra.mxu0 %v338
      %358 = vmatprep.subr.bf16.mxu0 0
      %359 = vmatpush1.bf16.msra.mxu0 %v339
      %360 = vmatprep.subr.bf16.mxu0 0
      %361 = vmatpush1.bf16.msra.mxu0 %v340
      %362 = vmatprep.subr.bf16.mxu0 0
      %363 = vmatpush1.bf16.msra.mxu0 %v341
      %364 = vmatprep.subr.bf16.mxu0 0
      %365 = vmatpush1.bf16.msra.mxu0 %v342
      %366 = vmatprep.subr.bf16.mxu0 0
      %367 = vmatpush1.bf16.msra.mxu0 %v343
      %368 = vmatprep.subr.bf16.mxu0 0
      %369 = vmatpush1.bf16.msra.mxu0 0
      %370 = vmatprep.subr.bf16.mxu0 0
      %371 = vmatpush1.bf16.msra.mxu0 0
      %372 = vmatprep.subr.bf16.mxu0 0
      %373 = vmatpush1.bf16.msra.mxu0 0
      %374 = vmatprep.subr.bf16.mxu0 0
      %375 = vmatpush1.bf16.msra.mxu0 0
      %376 = vmatprep.subr.bf16.mxu0 0
      %377 = vmatpush1.bf16.msra.mxu0 0
      %378 = vmatprep.subr.bf16.mxu0 0
      %379 = vmatpush1.bf16.msra.mxu0 0
      %380 = vmatprep.subr.bf16.mxu0 0
      %381 = vmatpush1.bf16.msra.mxu0 0
      %382 = vmatprep.subr.bf16.mxu0 0
      %383 = vmatpush1.bf16.msra.mxu0 0
      %384 = vmatprep.mubr.bf16.mxu0 0
      %385 = vmatmul.mubr.bf16.gmra.mrb[0].mxu0 %v296
      %v386 = vpop.f32.mrb[0].mxu0
      %v387 = vadd.f32 0.0, %v386
      %v388 = vpop.f32.mrb[0].mxu0
      %v389 = vpop.f32.mrb[0].mxu0
      %v390 = vadd.f32 0.0, %v389
      %v391 = vpop.f32.mrb[0].mxu0
      %392 = vmatprep.mubr.bf16.mxu0 0
      %393 = vmatmul.mubr.bf16.gmra.mrb[0].mxu0 %v297
      %v394 = vpop.f32.mrb[0].mxu0
      %v395 = vadd.f32 0.0, %v394
      %v396 = vpop.f32.mrb[0].mxu0
      %v397 = vpop.f32.mrb[0].mxu0
      %v398 = vadd.f32 0.0, %v397
      %v399 = vpop.f32.mrb[0].mxu0
      %400 = vmatprep.mubr.bf16.mxu0 0
      %401 = vmatmul.mubr.bf16.gmra.mrb[0].mxu0 %v298
      %v402 = vpop.f32.mrb[0].mxu0
      %v403 = vadd.f32 0.0, %v402
      %v404 = vpop.f32.mrb[0].mxu0
      %v405 = vpop.f32.mrb[0].mxu0
      %v406 = vadd.f32 0.0, %v405
      %v407 = vpop.f32.mrb[0].mxu0
      %408 = vmatprep.mubr.bf16.mxu0 0
      %409 = vmatmul.mubr.bf16.gmra.mrb[0].mxu0 %v299
      %v410 = vpop.f32.mrb[0].mxu0
      %v411 = vadd.f32 0.0, %v410
      %v412 = vpop.f32.mrb[0].mxu0
      %v413 = vpop.f32.mrb[0].mxu0
      %v414 = vadd.f32 0.0, %v413
      %v415 = vpop.f32.mrb[0].mxu0
      %416 = vdwg.mxu0
      %v425 = vunpack.c.l.b16 %v230
      %v426 = vunpack.c.l.b16 %v231
      %v427 = vunpack.c.l.b16 %v232
      %v428 = vunpack.c.l.b16 %v233
      %v429 = vunpack.c.l.b16 %v234
      %v430 = vunpack.c.l.b16 %v235
      %v431 = vunpack.c.l.b16 %v236
      %v432 = vunpack.c.l.b16 %v237
      %v433 = vpack.c.b16 %v426, %v425
      %v434 = vpack.c.b16 %v428, %v427
      %v435 = vpack.c.b16 %v430, %v429
      %v436 = vpack.c.b16 %v432, %v431
      %v457 = vunpack.c.l.b16 %v238
      %v458 = vunpack.c.l.b16 %v239
      %v459 = vunpack.c.l.b16 %v240
      %v460 = vunpack.c.l.b16 %v241
      %v461 = vunpack.c.l.b16 %v242
      %v462 = vunpack.c.l.b16 %v243
      %v463 = vunpack.c.l.b16 %v244
      %v464 = vunpack.c.l.b16 %v245
      %v465 = vunpack.c.l.b16 %v246
      %v466 = vunpack.c.l.b16 %v247
      %v467 = vunpack.c.l.b16 %v248
      %v468 = vunpack.c.l.b16 %v249
      %v469 = vunpack.c.l.b16 %v250
      %v470 = vunpack.c.l.b16 %v251
      %v471 = vunpack.c.l.b16 %v252
      %v472 = vunpack.c.l.b16 %v253
      %v473 = vpack.c.b16 %v458, %v457
      %v474 = vpack.c.b16 %v460, %v459
      %v475 = vpack.c.b16 %v462, %v461
      %v476 = vpack.c.b16 %v464, %v463
      %v477 = vpack.c.b16 %v466, %v465
      %v478 = vpack.c.b16 %v468, %v467
      %v479 = vpack.c.b16 %v470, %v469
      %v480 = vpack.c.b16 %v472, %v471
      %489 = vmatprep.subr.bf16.mxu0 0
      %490 = vmatpush1.bf16.msra.mxu0 %v473
      %491 = vmatprep.subr.bf16.mxu0 0
      %492 = vmatpush1.bf16.msra.mxu0 %v474
      %493 = vmatprep.subr.bf16.mxu0 0
      %494 = vmatpush1.bf16.msra.mxu0 %v475
      %495 = vmatprep.subr.bf16.mxu0 0
      %496 = vmatpush1.bf16.msra.mxu0 %v476
      %497 = vmatprep.subr.bf16.mxu0 0
      %498 = vmatpush1.bf16.msra.mxu0 %v477
      %499 = vmatprep.subr.bf16.mxu0 0
      %500 = vmatpush1.bf16.msra.mxu0 %v478
      %501 = vmatprep.subr.bf16.mxu0 0
      %502 = vmatpush1.bf16.msra.mxu0 %v479
      %503 = vmatprep.subr.bf16.mxu0 0
      %504 = vmatpush1.bf16.msra.mxu0 %v480
      %505 = vmatprep.subr.bf16.mxu0 0
      %506 = vmatpush1.bf16.msra.mxu0 0
      %507 = vmatprep.subr.bf16.mxu0 0
      %508 = vmatpush1.bf16.msra.mxu0 0
      %509 = vmatprep.subr.bf16.mxu0 0
      %510 = vmatpush1.bf16.msra.mxu0 0
      %511 = vmatprep.subr.bf16.mxu0 0
      %512 = vmatpush1.bf16.msra.mxu0 0
      %513 = vmatprep.subr.bf16.mxu0 0
      %514 = vmatpush1.bf16.msra.mxu0 0
      %515 = vmatprep.subr.bf16.mxu0 0
      %516 = vmatpush1.bf16.msra.mxu0 0
      %517 = vmatprep.subr.bf16.mxu0 0
      %518 = vmatpush1.bf16.msra.mxu0 0
      %519 = vmatprep.subr.bf16.mxu0 0
      %520 = vmatpush1.bf16.msra.mxu0 0
      %521 = vmatprep.mubr.bf16.mxu0 0
      %522 = vmatmul.mubr.bf16.gmra.mrb[0].mxu0 %v433
      %v523 = vpop.f32.mrb[0].mxu0
      %v524 = vadd.f32 %v387, %v523
      %v525 = vpop.f32.mrb[0].mxu0
      %v526 = vpop.f32.mrb[0].mxu0
      %v527 = vadd.f32 %v390, %v526
      %v528 = vpop.f32.mrb[0].mxu0
      %529 = vmatprep.mubr.bf16.mxu0 0
      %530 = vmatmul.mubr.bf16.gmra.mrb[0].mxu0 %v434
      %v531 = vpop.f32.mrb[0].mxu0
      %v532 = vadd.f32 %v395, %v531
      %v533 = vpop.f32.mrb[0].mxu0
      %v534 = vpop.f32.mrb[0].mxu0
      %v535 = vadd.f32 %v398, %v534
      %v536 = vpop.f32.mrb[0].mxu0
      %537 = vmatprep.mubr.bf16.mxu0 0
      %538 = vmatmul.mubr.bf16.gmra.mrb[0].mxu0 %v435
      %v539 = vpop.f32.mrb[0].mxu0
      %v540 = vadd.f32 %v403, %v539
      %v541 = vpop.f32.mrb[0].mxu0
      %v542 = vpop.f32.mrb[0].mxu0
      %v543 = vadd.f32 %v406, %v542
      %v544 = vpop.f32.mrb[0].mxu0
      %545 = vmatprep.mubr.bf16.mxu0 0
      %546 = vmatmul.mubr.bf16.gmra.mrb[0].mxu0 %v436
      %v547 = vpop.f32.mrb[0].mxu0
      %v548 = vadd.f32 %v411, %v547
      %v549 = vpop.f32.mrb[0].mxu0
      %v550 = vpop.f32.mrb[0].mxu0
      %v551 = vadd.f32 %v414, %v550
      %v552 = vpop.f32.mrb[0].mxu0
      %553 = vdwg.mxu0
      %v554 = vld [vmem:[%s211] sm:$0xf]
      %v555 = vld [vmem:[%s211 + $0x4] sm:$0x1]
      %v556 = vld [vmem:[%s211 + $0x8] sm:$0xf]
      %v557 = vld [vmem:[%s211 + $0xc] sm:$0x1]
      %v558 = vld [vmem:[%s211 + $0x10] sm:$0xf]
      %v559 = vld [vmem:[%s211 + $0x14] sm:$0x1]
      %v560 = vld [vmem:[%s211 + $0x18] sm:$0xf]
      %v561 = vld [vmem:[%s211 + $0x1c] sm:$0x1]
      %v562 = vld [vmem:[%s211 + $0x20] sm:$0xf]
      %v563 = vld [vmem:[%s211 + $0x24] sm:$0x1]
      %v564 = vld [vmem:[%s211 + $0x28] sm:$0xf]
      %v565 = vld [vmem:[%s211 + $0x2c] sm:$0x1]
      %v566 = vld [vmem:[%s211 + $0x30] sm:$0xf]
      %v567 = vld [vmem:[%s211 + $0x34] sm:$0x1]
      %v568 = vld [vmem:[%s211 + $0x38] sm:$0xf]
      %v569 = vld [vmem:[%s211 + $0x3c] sm:$0x1]
      %vm570 = vsmask.f32 3328
      %vm571 = vsmask.f32 7440
      %vm572 = vmor %vm570, %vm571
      %v574 = vshrl.u32 %v554, 16
      %v576 = vrot.slane %v574, 4
      %v577 = vshll.u32 %v554, 16
      %v579 = vrot.slane %v577, 5
      %v580 = vor.u32 %v576, %v579
      %v581 = vrot.slane %v580, 4
      %v583 = vshll.u32 %v555, 16
      %v585 = vrot.slane %v583, 5
      %v586 = vsel %vm572, %v581, %v585
      %v588 = vshrl.u32 %v556, 16
      %v590 = vrot.slane %v588, 4
      %v591 = vshll.u32 %v556, 16
      %v593 = vrot.slane %v591, 5
      %v594 = vor.u32 %v590, %v593
      %v595 = vrot.slane %v594, 4
      %v597 = vshll.u32 %v557, 16
      %v599 = vrot.slane %v597, 5
      %v600 = vsel %vm572, %v595, %v599
      %v602 = vshrl.u32 %v558, 16
      %v604 = vrot.slane %v602, 4
      %v605 = vshll.u32 %v558, 16
      %v607 = vrot.slane %v605, 5
      %v608 = vor.u32 %v604, %v607
      %v609 = vrot.slane %v608, 4
      %v611 = vshll.u32 %v559, 16
      %v613 = vrot.slane %v611, 5
      %v614 = vsel %vm572, %v609, %v613
      %v616 = vshrl.u32 %v560, 16
      %v618 = vrot.slane %v616, 4
      %v619 = vshll.u32 %v560, 16
      %v621 = vrot.slane %v619, 5
      %v622 = vor.u32 %v618, %v621
      %v623 = vrot.slane %v622, 4
      %v625 = vshll.u32 %v561, 16
      %v627 = vrot.slane %v625, 5
      %v628 = vsel %vm572, %v623, %v627
      %v630 = vshrl.u32 %v562, 16
      %v632 = vrot.slane %v630, 4
      %v633 = vshll.u32 %v562, 16
      %v635 = vrot.slane %v633, 5
      %v636 = vor.u32 %v632, %v635
      %v637 = vrot.slane %v636, 4
      %v639 = vshll.u32 %v563, 16
      %v641 = vrot.slane %v639, 5
      %v642 = vsel %vm572, %v637, %v641
      %v644 = vshrl.u32 %v564, 16
      %v646 = vrot.slane %v644, 4
      %v647 = vshll.u32 %v564, 16
      %v649 = vrot.slane %v647, 5
      %v650 = vor.u32 %v646, %v649
      %v651 = vrot.slane %v650, 4
      %v653 = vshll.u32 %v565, 16
      %v655 = vrot.slane %v653, 5
      %v656 = vsel %vm572, %v651, %v655
      %v658 = vshrl.u32 %v566, 16
      %v660 = vrot.slane %v658, 4
      %v661 = vshll.u32 %v566, 16
      %v663 = vrot.slane %v661, 5
      %v664 = vor.u32 %v660, %v663
      %v665 = vrot.slane %v664, 4
      %v667 = vshll.u32 %v567, 16
      %v669 = vrot.slane %v667, 5
      %v670 = vsel %vm572, %v665, %v669
      %v672 = vshrl.u32 %v568, 16
      %v674 = vrot.slane %v672, 4
      %v675 = vshll.u32 %v568, 16
      %v677 = vrot.slane %v675, 5
      %v678 = vor.u32 %v674, %v677
      %v679 = vrot.slane %v678, 4
      %v681 = vshll.u32 %v569, 16
      %v683 = vrot.slane %v681, 5
      %v684 = vsel %vm572, %v679, %v683
      %s685 = scalar_lea.vmem %s1, 128
      %v686 = vld [vmem:[%s685] sm:$0xf]
      %v687 = vld [vmem:[%s685 + $0x4] sm:$0xf]
      %v688 = vld [vmem:[%s685 + $0x8] sm:$0xf]
      %v689 = vld [vmem:[%s685 + $0xc] sm:$0xf]
      %v690 = vld [vmem:[%s685 + $0x10] sm:$0xf]
      %v691 = vld [vmem:[%s685 + $0x14] sm:$0xf]
      %v692 = vld [vmem:[%s685 + $0x18] sm:$0xf]
      %v693 = vld [vmem:[%s685 + $0x1c] sm:$0xf]
      %v694 = vld [vmem:[%s685 + $0x20] sm:$0xf]
      %v695 = vld [vmem:[%s685 + $0x24] sm:$0xf]
      %v696 = vld [vmem:[%s685 + $0x28] sm:$0xf]
      %v697 = vld [vmem:[%s685 + $0x2c] sm:$0xf]
      %v698 = vld [vmem:[%s685 + $0x30] sm:$0xf]
      %v699 = vld [vmem:[%s685 + $0x34] sm:$0xf]
      %v700 = vld [vmem:[%s685 + $0x38] sm:$0xf]
      %v701 = vld [vmem:[%s685 + $0x3c] sm:$0xf]
      %v702 = vunpack.c.l.b16 %v586
      %v703 = vunpack.c.l.b16 %v600
      %v704 = vunpack.c.l.b16 %v614
      %v705 = vunpack.c.l.b16 %v628
      %v706 = vunpack.c.l.b16 %v642
      %v707 = vunpack.c.l.b16 %v656
      %v708 = vunpack.c.l.b16 %v670
      %v709 = vunpack.c.l.b16 %v684
      %v710 = vpack.c.b16 %v703, %v702
      %v711 = vpack.c.b16 %v705, %v704
      %v712 = vpack.c.b16 %v707, %v706
      %v713 = vpack.c.b16 %v709, %v708
      %v734 = vunpack.c.l.b16 %v686
      %v735 = vunpack.c.l.b16 %v687
      %v736 = vunpack.c.l.b16 %v688
      %v737 = vunpack.c.l.b16 %v689
      %v738 = vunpack.c.l.b16 %v690
      %v739 = vunpack.c.l.b16 %v691
      %v740 = vunpack.c.l.b16 %v692
      %v741 = vunpack.c.l.b16 %v693
      %v742 = vunpack.c.l.b16 %v694
      %v743 = vunpack.c.l.b16 %v695
      %v744 = vunpack.c.l.b16 %v696
      %v745 = vunpack.c.l.b16 %v697
      %v746 = vunpack.c.l.b16 %v698
      %v747 = vunpack.c.l.b16 %v699
      %v748 = vunpack.c.l.b16 %v700
      %v749 = vunpack.c.l.b16 %v701
      %v750 = vpack.c.b16 %v735, %v734
      %v751 = vpack.c.b16 %v737, %v736
      %v752 = vpack.c.b16 %v739, %v738
      %v753 = vpack.c.b16 %v741, %v740
      %v754 = vpack.c.b16 %v743, %v742
      %v755 = vpack.c.b16 %v745, %v744
      %v756 = vpack.c.b16 %v747, %v746
      %v757 = vpack.c.b16 %v749, %v748
      %766 = vmatprep.subr.bf16.mxu0 0
      %767 = vmatpush1.bf16.msra.mxu0 %v750
      %768 = vmatprep.subr.bf16.mxu0 0
      %769 = vmatpush1.bf16.msra.mxu0 %v751
      %770 = vmatprep.subr.bf16.mxu0 0
      %771 = vmatpush1.bf16.msra.mxu0 %v752
      %772 = vmatprep.subr.bf16.mxu0 0
      %773 = vmatpush1.bf16.msra.mxu0 %v753
      %774 = vmatprep.subr.bf16.mxu0 0
      %775 = vmatpush1.bf16.msra.mxu0 %v754
      %776 = vmatprep.subr.bf16.mxu0 0
      %777 = vmatpush1.bf16.msra.mxu0 %v755
      %778 = vmatprep.subr.bf16.mxu0 0
      %779 = vmatpush1.bf16.msra.mxu0 %v756
      %780 = vmatprep.subr.bf16.mxu0 0
      %781 = vmatpush1.bf16.msra.mxu0 %v757
      %782 = vmatprep.subr.bf16.mxu0 0
      %783 = vmatpush1.bf16.msra.mxu0 0
      %784 = vmatprep.subr.bf16.mxu0 0
      %785 = vmatpush1.bf16.msra.mxu0 0
      %786 = vmatprep.subr.bf16.mxu0 0
      %787 = vmatpush1.bf16.msra.mxu0 0
      %788 = vmatprep.subr.bf16.mxu0 0
      %789 = vmatpush1.bf16.msra.mxu0 0
      %790 = vmatprep.subr.bf16.mxu0 0
      %791 = vmatpush1.bf16.msra.mxu0 0
      %792 = vmatprep.subr.bf16.mxu0 0
      %793 = vmatpush1.bf16.msra.mxu0 0
      %794 = vmatprep.subr.bf16.mxu0 0
      %795 = vmatpush1.bf16.msra.mxu0 0
      %796 = vmatprep.subr.bf16.mxu0 0
      %797 = vmatpush1.bf16.msra.mxu0 0
      %798 = vmatprep.mubr.bf16.mxu0 0
      %799 = vmatmul.mubr.bf16.gmra.mrb[0].mxu0 %v710
      %v800 = vpop.f32.mrb[0].mxu0
      %v801 = vadd.f32 0.0, %v800
      %v802 = vpop.f32.mrb[0].mxu0
      %v803 = vpop.f32.mrb[0].mxu0
      %v804 = vadd.f32 0.0, %v803
      %v805 = vpop.f32.mrb[0].mxu0
      %806 = vmatprep.mubr.bf16.mxu0 0
      %807 = vmatmul.mubr.bf16.gmra.mrb[0].mxu0 %v711
      %v808 = vpop.f32.mrb[0].mxu0
      %v809 = vadd.f32 0.0, %v808
      %v810 = vpop.f32.mrb[0].mxu0
      %v811 = vpop.f32.mrb[0].mxu0
      %v812 = vadd.f32 0.0, %v811
      %v813 = vpop.f32.mrb[0].mxu0
      %814 = vmatprep.mubr.bf16.mxu0 0
      %815 = vmatmul.mubr.bf16.gmra.mrb[0].mxu0 %v712
      %v816 = vpop.f32.mrb[0].mxu0
      %v817 = vadd.f32 0.0, %v816
      %v818 = vpop.f32.mrb[0].mxu0
      %v819 = vpop.f32.mrb[0].mxu0
      %v820 = vadd.f32 0.0, %v819
      %v821 = vpop.f32.mrb[0].mxu0
      %822 = vmatprep.mubr.bf16.mxu0 0
      %823 = vmatmul.mubr.bf16.gmra.mrb[0].mxu0 %v713
      %v824 = vpop.f32.mrb[0].mxu0
      %v825 = vadd.f32 0.0, %v824
      %v826 = vpop.f32.mrb[0].mxu0
      %v827 = vpop.f32.mrb[0].mxu0
      %v828 = vadd.f32 0.0, %v827
      %v829 = vpop.f32.mrb[0].mxu0
      %830 = vdwg.mxu0
      %v831 = vadd.f32 %v524, %v801
      %v832 = vadd.f32 %v527, %v804
      %v833 = vadd.f32 %v532, %v809
      %v834 = vadd.f32 %v535, %v812
      %v835 = vadd.f32 %v540, %v817
      %v836 = vadd.f32 %v543, %v820
      %v837 = vadd.f32 %v548, %v825
      %v838 = vadd.f32 %v551, %v828
      %s839 = scalar_lea.vmem %s211, 144
      %v840 = vld [vmem:[%s839] sm:$0xf]
      %v841 = vld [vmem:[%s839 + $0x8] sm:$0xf]
      %v842 = vld [vmem:[%s839 + $0x10] sm:$0xf]
      %v843 = vld [vmem:[%s839 + $0x18] sm:$0xf]
      %v844 = vld [vmem:[%s839 + $0x20] sm:$0xf]
      %v845 = vld [vmem:[%s839 + $0x28] sm:$0xf]
      %v846 = vld [vmem:[%s839 + $0x30] sm:$0xf]
      %v847 = vld [vmem:[%s839 + $0x38] sm:$0xf]
      %s848 = scalar_lea.vmem %s1, 192
      %v849 = vld [vmem:[%s848] sm:$0xf]
      %v850 = vld [vmem:[%s848 + $0x4] sm:$0xf]
      %v851 = vld [vmem:[%s848 + $0x8] sm:$0xf]
      %v852 = vld [vmem:[%s848 + $0xc] sm:$0xf]
      %v853 = vld [vmem:[%s848 + $0x10] sm:$0xf]
      %v854 = vld [vmem:[%s848 + $0x14] sm:$0xf]
      %v855 = vld [vmem:[%s848 + $0x18] sm:$0xf]
      %v856 = vld [vmem:[%s848 + $0x1c] sm:$0xf]
      %v857 = vld [vmem:[%s848 + $0x20] sm:$0xf]
      %v858 = vld [vmem:[%s848 + $0x24] sm:$0xf]
      %v859 = vld [vmem:[%s848 + $0x28] sm:$0xf]
      %v860 = vld [vmem:[%s848 + $0x2c] sm:$0xf]
      %v861 = vld [vmem:[%s848 + $0x30] sm:$0xf]
      %v862 = vld [vmem:[%s848 + $0x34] sm:$0xf]
      %v863 = vld [vmem:[%s848 + $0x38] sm:$0xf]
      %v864 = vld [vmem:[%s848 + $0x3c] sm:$0xf]
      %v873 = vunpack.c.l.b16 %v840
      %v874 = vunpack.c.l.b16 %v841
      %v875 = vunpack.c.l.b16 %v842
      %v876 = vunpack.c.l.b16 %v843
      %v877 = vunpack.c.l.b16 %v844
      %v878 = vunpack.c.l.b16 %v845
      %v879 = vunpack.c.l.b16 %v846
      %v880 = vunpack.c.l.b16 %v847
      %v881 = vpack.c.b16 %v874, %v873
      %v882 = vpack.c.b16 %v876, %v875
      %v883 = vpack.c.b16 %v878, %v877
      %v884 = vpack.c.b16 %v880, %v879
      %v905 = vunpack.c.l.b16 %v849
      %v906 = vunpack.c.l.b16 %v850
      %v907 = vunpack.c.l.b16 %v851
      %v908 = vunpack.c.l.b16 %v852
      %v909 = vunpack.c.l.b16 %v853
      %v910 = vunpack.c.l.b16 %v854
      %v911 = vunpack.c.l.b16 %v855
      %v912 = vunpack.c.l.b16 %v856
      %v913 = vunpack.c.l.b16 %v857
      %v914 = vunpack.c.l.b16 %v858
      %v915 = vunpack.c.l.b16 %v859
      %v916 = vunpack.c.l.b16 %v860
      %v917 = vunpack.c.l.b16 %v861
      %v918 = vunpack.c.l.b16 %v862
      %v919 = vunpack.c.l.b16 %v863
      %v920 = vunpack.c.l.b16 %v864
      %v921 = vpack.c.b16 %v906, %v905
      %v922 = vpack.c.b16 %v908, %v907
      %v923 = vpack.c.b16 %v910, %v909
      %v924 = vpack.c.b16 %v912, %v911
      %v925 = vpack.c.b16 %v914, %v913
      %v926 = vpack.c.b16 %v916, %v915
      %v927 = vpack.c.b16 %v918, %v917
      %v928 = vpack.c.b16 %v920, %v919
      %937 = vmatprep.subr.bf16.mxu0 0
      %938 = vmatpush1.bf16.msra.mxu0 %v921
      %939 = vmatprep.subr.bf16.mxu0 0
      %940 = vmatpush1.bf16.msra.mxu0 %v922
      %941 = vmatprep.subr.bf16.mxu0 0
      %942 = vmatpush1.bf16.msra.mxu0 %v923
      %943 = vmatprep.subr.bf16.mxu0 0
      %944 = vmatpush1.bf16.msra.mxu0 %v924
      %945 = vmatprep.subr.bf16.mxu0 0
      %946 = vmatpush1.bf16.msra.mxu0 %v925
      %947 = vmatprep.subr.bf16.mxu0 0
      %948 = vmatpush1.bf16.msra.mxu0 %v926
      %949 = vmatprep.subr.bf16.mxu0 0
      %950 = vmatpush1.bf16.msra.mxu0 %v927
      %951 = vmatprep.subr.bf16.mxu0 0
      %952 = vmatpush1.bf16.msra.mxu0 %v928
      %953 = vmatprep.subr.bf16.mxu0 0
      %954 = vmatpush1.bf16.msra.mxu0 0
      %955 = vmatprep.subr.bf16.mxu0 0
      %956 = vmatpush1.bf16.msra.mxu0 0
      %957 = vmatprep.subr.bf16.mxu0 0
      %958 = vmatpush1.bf16.msra.mxu0 0
      %959 = vmatprep.subr.bf16.mxu0 0
      %960 = vmatpush1.bf16.msra.mxu0 0
      %961 = vmatprep.subr.bf16.mxu0 0
      %962 = vmatpush1.bf16.msra.mxu0 0
      %963 = vmatprep.subr.bf16.mxu0 0
      %964 = vmatpush1.bf16.msra.mxu0 0
      %965 = vmatprep.subr.bf16.mxu0 0
      %966 = vmatpush1.bf16.msra.mxu0 0
      %967 = vmatprep.subr.bf16.mxu0 0
      %968 = vmatpush1.bf16.msra.mxu0 0
      %969 = vmatprep.mubr.bf16.mxu0 0
      %970 = vmatmul.mubr.bf16.gmra.mrb[0].mxu0 %v881
      %v971 = vpop.f32.mrb[0].mxu0
      %v972 = vadd.f32 0.0, %v971
      %v973 = vpop.f32.mrb[0].mxu0
      %v974 = vpop.f32.mrb[0].mxu0
      %v975 = vadd.f32 0.0, %v974
      %v976 = vpop.f32.mrb[0].mxu0
      %977 = vmatprep.mubr.bf16.mxu0 0
      %978 = vmatmul.mubr.bf16.gmra.mrb[0].mxu0 %v882
      %v979 = vpop.f32.mrb[0].mxu0
      %v980 = vadd.f32 0.0, %v979
      %v981 = vpop.f32.mrb[0].mxu0
      %v982 = vpop.f32.mrb[0].mxu0
      %v983 = vadd.f32 0.0, %v982
      %v984 = vpop.f32.mrb[0].mxu0
      %985 = vmatprep.mubr.bf16.mxu0 0
      %986 = vmatmul.mubr.bf16.gmra.mrb[0].mxu0 %v883
      %v987 = vpop.f32.mrb[0].mxu0
      %v988 = vadd.f32 0.0, %v987
      %v989 = vpop.f32.mrb[0].mxu0
      %v990 = vpop.f32.mrb[0].mxu0
      %v991 = vadd.f32 0.0, %v990
      %v992 = vpop.f32.mrb[0].mxu0
      %993 = vmatprep.mubr.bf16.mxu0 0
      %994 = vmatmul.mubr.bf16.gmra.mrb[0].mxu0 %v884
      %v995 = vpop.f32.mrb[0].mxu0
      %v996 = vadd.f32 0.0, %v995
      %v997 = vpop.f32.mrb[0].mxu0
      %v998 = vpop.f32.mrb[0].mxu0
      %v999 = vadd.f32 0.0, %v998
      %v1000 = vpop.f32.mrb[0].mxu0
      %1001 = vdwg.mxu0
      %v1002 = vadd.f32 %v831, %v972
      %v1003 = vadd.f32 %v832, %v975
      %v1004 = vadd.f32 %v833, %v980
      %v1005 = vadd.f32 %v834, %v983
      %v1006 = vadd.f32 %v835, %v988
      %v1007 = vadd.f32 %v836, %v991
      %v1008 = vadd.f32 %v837, %v996
      %v1009 = vadd.f32 %v838, %v999
      %s1010 = scalar_lea.vmem %s211, 216
      %v1011 = vld [vmem:[%s1010] sm:$0xf]
      %v1012 = vld [vmem:[%s1010 + $0x8] sm:$0xf]
      %v1013 = vld [vmem:[%s1010 + $0x10] sm:$0xf]
      %v1014 = vld [vmem:[%s1010 + $0x18] sm:$0xf]
      %v1015 = vld [vmem:[%s1010 + $0x20] sm:$0xf]
      %v1016 = vld [vmem:[%s1010 + $0x28] sm:$0xf]
      %v1017 = vld [vmem:[%s1010 + $0x30] sm:$0xf]
      %v1018 = vld [vmem:[%s1010 + $0x38] sm:$0xf]
      %s1019 = scalar_lea.vmem %s1, 256
      %v1020 = vld [vmem:[%s1019] sm:$0xf]
      %v1021 = vld [vmem:[%s1019 + $0x4] sm:$0xf]
      %v1022 = vld [vmem:[%s1019 + $0x8] sm:$0xf]
      %v1023 = vld [vmem:[%s1019 + $0xc] sm:$0xf]
      %v1024 = vld [vmem:[%s1019 + $0x10] sm:$0xf]
      %v1025 = vld [vmem:[%s1019 + $0x14] sm:$0xf]
      %v1026 = vld [vmem:[%s1019 + $0x18] sm:$0xf]
      %v1027 = vld [vmem:[%s1019 + $0x1c] sm:$0xf]
      %v1028 = vld [vmem:[%s1019 + $0x20] sm:$0xf]
      %v1029 = vld [vmem:[%s1019 + $0x24] sm:$0xf]
      %v1030 = vld [vmem:[%s1019 + $0x28] sm:$0xf]
      %v1031 = vld [vmem:[%s1019 + $0x2c] sm:$0xf]
      %v1032 = vld [vmem:[%s1019 + $0x30] sm:$0xf]
      %v1033 = vld [vmem:[%s1019 + $0x34] sm:$0xf]
      %v1034 = vld [vmem:[%s1019 + $0x38] sm:$0xf]
      %v1035 = vld [vmem:[%s1019 + $0x3c] sm:$0xf]
      %v1044 = vunpack.c.l.b16 %v1011
      %v1045 = vunpack.c.l.b16 %v1012
      %v1046 = vunpack.c.l.b16 %v1013
      %v1047 = vunpack.c.l.b16 %v1014
      %v1048 = vunpack.c.l.b16 %v1015
      %v1049 = vunpack.c.l.b16 %v1016
      %v1050 = vunpack.c.l.b16 %v1017
      %v1051 = vunpack.c.l.b16 %v1018
      %v1052 = vpack.c.b16 %v1045, %v1044
      %v1053 = vpack.c.b16 %v1047, %v1046
      %v1054 = vpack.c.b16 %v1049, %v1048
      %v1055 = vpack.c.b16 %v1051, %v1050
      %v1076 = vunpack.c.l.b16 %v1020
      %v1077 = vunpack.c.l.b16 %v1021
      %v1078 = vunpack.c.l.b16 %v1022
      %v1079 = vunpack.c.l.b16 %v1023
      %v1080 = vunpack.c.l.b16 %v1024
      %v1081 = vunpack.c.l.b16 %v1025
      %v1082 = vunpack.c.l.b16 %v1026
      %v1083 = vunpack.c.l.b16 %v1027
      %v1084 = vunpack.c.l.b16 %v1028
      %v1085 = vunpack.c.l.b16 %v1029
      %v1086 = vunpack.c.l.b16 %v1030
      %v1087 = vunpack.c.l.b16 %v1031
      %v1088 = vunpack.c.l.b16 %v1032
      %v1089 = vunpack.c.l.b16 %v1033
      %v1090 = vunpack.c.l.b16 %v1034
      %v1091 = vunpack.c.l.b16 %v1035
      %v1092 = vpack.c.b16 %v1077, %v1076
      %v1093 = vpack.c.b16 %v1079, %v1078
      %v1094 = vpack.c.b16 %v1081, %v1080
      %v1095 = vpack.c.b16 %v1083, %v1082
      %v1096 = vpack.c.b16 %v1085, %v1084
      %v1097 = vpack.c.b16 %v1087, %v1086
      %v1098 = vpack.c.b16 %v1089, %v1088
      %v1099 = vpack.c.b16 %v1091, %v1090
      %1108 = vmatprep.subr.bf16.mxu0 0
      %1109 = vmatpush1.bf16.msra.mxu0 %v1092
      %1110 = vmatprep.subr.bf16.mxu0 0
      %1111 = vmatpush1.bf16.msra.mxu0 %v1093
      %1112 = vmatprep.subr.bf16.mxu0 0
      %1113 = vmatpush1.bf16.msra.mxu0 %v1094
      %1114 = vmatprep.subr.bf16.mxu0 0
      %1115 = vmatpush1.bf16.msra.mxu0 %v1095
      %1116 = vmatprep.subr.bf16.mxu0 0
      %1117 = vmatpush1.bf16.msra.mxu0 %v1096
      %1118 = vmatprep.subr.bf16.mxu0 0
      %1119 = vmatpush1.bf16.msra.mxu0 %v1097
      %1120 = vmatprep.subr.bf16.mxu0 0
      %1121 = vmatpush1.bf16.msra.mxu0 %v1098
      %1122 = vmatprep.subr.bf16.mxu0 0
      %1123 = vmatpush1.bf16.msra.mxu0 %v1099
      %1124 = vmatprep.subr.bf16.mxu0 0
      %1125 = vmatpush1.bf16.msra.mxu0 0
      %1126 = vmatprep.subr.bf16.mxu0 0
      %1127 = vmatpush1.bf16.msra.mxu0 0
      %1128 = vmatprep.subr.bf16.mxu0 0
      %1129 = vmatpush1.bf16.msra.mxu0 0
      %1130 = vmatprep.subr.bf16.mxu0 0
      %1131 = vmatpush1.bf16.msra.mxu0 0
      %1132 = vmatprep.subr.bf16.mxu0 0
      %1133 = vmatpush1.bf16.msra.mxu0 0
      %1134 = vmatprep.subr.bf16.mxu0 0
      %1135 = vmatpush1.bf16.msra.mxu0 0
      %1136 = vmatprep.subr.bf16.mxu0 0
      %1137 = vmatpush1.bf16.msra.mxu0 0
      %1138 = vmatprep.subr.bf16.mxu0 0
      %1139 = vmatpush1.bf16.msra.mxu0 0
      %1140 = vmatprep.mubr.bf16.mxu0 0
      %1141 = vmatmul.mubr.bf16.gmra.mrb[0].mxu0 %v1052
      %v1142 = vpop.f32.mrb[0].mxu0
      %v1143 = vadd.f32 0.0, %v1142
      %v1144 = vpop.f32.mrb[0].mxu0
      %v1145 = vpop.f32.mrb[0].mxu0
      %v1146 = vadd.f32 0.0, %v1145
      %v1147 = vpop.f32.mrb[0].mxu0
      %1148 = vmatprep.mubr.bf16.mxu0 0
      %1149 = vmatmul.mubr.bf16.gmra.mrb[0].mxu0 %v1053
      %v1150 = vpop.f32.mrb[0].mxu0
      %v1151 = vadd.f32 0.0, %v1150
      %v1152 = vpop.f32.mrb[0].mxu0
      %v1153 = vpop.f32.mrb[0].mxu0
      %v1154 = vadd.f32 0.0, %v1153
      %v1155 = vpop.f32.mrb[0].mxu0
      %1156 = vmatprep.mubr.bf16.mxu0 0
      %1157 = vmatmul.mubr.bf16.gmra.mrb[0].mxu0 %v1054
      %v1158 = vpop.f32.mrb[0].mxu0
      %v1159 = vadd.f32 0.0, %v1158
      %v1160 = vpop.f32.mrb[0].mxu0
      %v1161 = vpop.f32.mrb[0].mxu0
      %v1162 = vadd.f32 0.0, %v1161
      %v1163 = vpop.f32.mrb[0].mxu0
      %1164 = vmatprep.mubr.bf16.mxu0 0
      %1165 = vmatmul.mubr.bf16.gmra.mrb[0].mxu0 %v1055
      %v1166 = vpop.f32.mrb[0].mxu0
      %v1167 = vadd.f32 0.0, %v1166
      %v1168 = vpop.f32.mrb[0].mxu0
      %v1169 = vpop.f32.mrb[0].mxu0
      %v1170 = vadd.f32 0.0, %v1169
      %v1171 = vpop.f32.mrb[0].mxu0
      %1172 = vdwg.mxu0
      %v1173 = vadd.f32 %v1002, %v1143
      %v1174 = vadd.f32 %v1003, %v1146
      %v1175 = vadd.f32 %v1004, %v1151
      %v1176 = vadd.f32 %v1005, %v1154
      %v1177 = vadd.f32 %v1006, %v1159
      %v1178 = vadd.f32 %v1007, %v1162
      %v1179 = vadd.f32 %v1008, %v1167
      %v1180 = vadd.f32 %v1009, %v1170
      %v1181 = vld [vmem:[%s839] sm:$0xf]
      %v1182 = vld [vmem:[%s839 + $0x4] sm:$0x1]
      %v1183 = vld [vmem:[%s839 + $0x8] sm:$0xf]
      %v1184 = vld [vmem:[%s839 + $0xc] sm:$0x1]
      %v1185 = vld [vmem:[%s839 + $0x10] sm:$0xf]
      %v1186 = vld [vmem:[%s839 + $0x14] sm:$0x1]
      %v1187 = vld [vmem:[%s839 + $0x18] sm:$0xf]
      %v1188 = vld [vmem:[%s839 + $0x1c] sm:$0x1]
      %v1189 = vld [vmem:[%s839 + $0x20] sm:$0xf]
      %v1190 = vld [vmem:[%s839 + $0x24] sm:$0x1]
      %v1191 = vld [vmem:[%s839 + $0x28] sm:$0xf]
      %v1192 = vld [vmem:[%s839 + $0x2c] sm:$0x1]
      %v1193 = vld [vmem:[%s839 + $0x30] sm:$0xf]
      %v1194 = vld [vmem:[%s839 + $0x34] sm:$0x1]
      %v1195 = vld [vmem:[%s839 + $0x38] sm:$0xf]
      %v1196 = vld [vmem:[%s839 + $0x3c] sm:$0x1]
      %v1198 = vshrl.u32 %v1181, 16
      %v1200 = vrot.slane %v1198, 4
      %v1201 = vshll.u32 %v1181, 16
      %v1203 = vrot.slane %v1201, 5
      %v1204 = vor.u32 %v1200, %v1203
      %v1205 = vrot.slane %v1204, 4
      %v1207 = vshll.u32 %v1182, 16
      %v1209 = vrot.slane %v1207, 5
      %v1210 = vsel %vm572, %v1205, %v1209
      %v1212 = vshrl.u32 %v1183, 16
      %v1214 = vrot.slane %v1212, 4
      %v1215 = vshll.u32 %v1183, 16
      %v1217 = vrot.slane %v1215, 5
      %v1218 = vor.u32 %v1214, %v1217
      %v1219 = vrot.slane %v1218, 4
      %v1221 = vshll.u32 %v1184, 16
      %v1223 = vrot.slane %v1221, 5
      %v1224 = vsel %vm572, %v1219, %v1223
      %v1226 = vshrl.u32 %v1185, 16
      %v1228 = vrot.slane %v1226, 4
      %v1229 = vshll.u32 %v1185, 16
      %v1231 = vrot.slane %v1229, 5
      %v1232 = vor.u32 %v1228, %v1231
      %v1233 = vrot.slane %v1232, 4
      %v1235 = vshll.u32 %v1186, 16
      %v1237 = vrot.slane %v1235, 5
      %v1238 = vsel %vm572, %v1233, %v1237
      %v1240 = vshrl.u32 %v1187, 16
      %v1242 = vrot.slane %v1240, 4
      %v1243 = vshll.u32 %v1187, 16
      %v1245 = vrot.slane %v1243, 5
      %v1246 = vor.u32 %v1242, %v1245
      %v1247 = vrot.slane %v1246, 4
      %v1249 = vshll.u32 %v1188, 16
      %v1251 = vrot.slane %v1249, 5
      %v1252 = vsel %vm572, %v1247, %v1251
      %v1254 = vshrl.u32 %v1189, 16
      %v1256 = vrot.slane %v1254, 4
      %v1257 = vshll.u32 %v1189, 16
      %v1259 = vrot.slane %v1257, 5
      %v1260 = vor.u32 %v1256, %v1259
      %v1261 = vrot.slane %v1260, 4
      %v1263 = vshll.u32 %v1190, 16
      %v1265 = vrot.slane %v1263, 5
      %v1266 = vsel %vm572, %v1261, %v1265
      %v1268 = vshrl.u32 %v1191, 16
      %v1270 = vrot.slane %v1268, 4
      %v1271 = vshll.u32 %v1191, 16
      %v1273 = vrot.slane %v1271, 5
      %v1274 = vor.u32 %v1270, %v1273
      %v1275 = vrot.slane %v1274, 4
      %v1277 = vshll.u32 %v1192, 16
      %v1279 = vrot.slane %v1277, 5
      %v1280 = vsel %vm572, %v1275, %v1279
      %v1282 = vshrl.u32 %v1193, 16
      %v1284 = vrot.slane %v1282, 4
      %v1285 = vshll.u32 %v1193, 16
      %v1287 = vrot.slane %v1285, 5
      %v1288 = vor.u32 %v1284, %v1287
      %v1289 = vrot.slane %v1288, 4
      %v1291 = vshll.u32 %v1194, 16
      %v1293 = vrot.slane %v1291, 5
      %v1294 = vsel %vm572, %v1289, %v1293
      %v1296 = vshrl.u32 %v1195, 16
      %v1298 = vrot.slane %v1296, 4
      %v1299 = vshll.u32 %v1195, 16
      %v1301 = vrot.slane %v1299, 5
      %v1302 = vor.u32 %v1298, %v1301
      %v1303 = vrot.slane %v1302, 4
      %v1305 = vshll.u32 %v1196, 16
      %v1307 = vrot.slane %v1305, 5
      %v1308 = vsel %vm572, %v1303, %v1307
      %s1309 = scalar_lea.vmem %s1, 320
      %v1310 = vld [vmem:[%s1309] sm:$0xf]
      %v1311 = vld [vmem:[%s1309 + $0x4] sm:$0xf]
      %v1312 = vld [vmem:[%s1309 + $0x8] sm:$0xf]
      %v1313 = vld [vmem:[%s1309 + $0xc] sm:$0xf]
      %v1314 = vld [vmem:[%s1309 + $0x10] sm:$0xf]
      %v1315 = vld [vmem:[%s1309 + $0x14] sm:$0xf]
      %v1316 = vld [vmem:[%s1309 + $0x18] sm:$0xf]
      %v1317 = vld [vmem:[%s1309 + $0x1c] sm:$0xf]
      %v1318 = vld [vmem:[%s1309 + $0x20] sm:$0xf]
      %v1319 = vld [vmem:[%s1309 + $0x24] sm:$0xf]
      %v1320 = vld [vmem:[%s1309 + $0x28] sm:$0xf]
      %v1321 = vld [vmem:[%s1309 + $0x2c] sm:$0xf]
      %v1322 = vld [vmem:[%s1309 + $0x30] sm:$0xf]
      %v1323 = vld [vmem:[%s1309 + $0x34] sm:$0xf]
      %v1324 = vld [vmem:[%s1309 + $0x38] sm:$0xf]
      %v1325 = vld [vmem:[%s1309 + $0x3c] sm:$0xf]
      %v1326 = vunpack.c.l.b16 %v1210
      %v1327 = vunpack.c.l.b16 %v1224
      %v1328 = vunpack.c.l.b16 %v1238
      %v1329 = vunpack.c.l.b16 %v1252
      %v1330 = vunpack.c.l.b16 %v1266
      %v1331 = vunpack.c.l.b16 %v1280
      %v1332 = vunpack.c.l.b16 %v1294
      %v1333 = vunpack.c.l.b16 %v1308
      %v1334 = vpack.c.b16 %v1327, %v1326
      %v1335 = vpack.c.b16 %v1329, %v1328
      %v1336 = vpack.c.b16 %v1331, %v1330
      %v1337 = vpack.c.b16 %v1333, %v1332
      %v1358 = vunpack.c.l.b16 %v1310
      %v1359 = vunpack.c.l.b16 %v1311
      %v1360 = vunpack.c.l.b16 %v1312
      %v1361 = vunpack.c.l.b16 %v1313
      %v1362 = vunpack.c.l.b16 %v1314
      %v1363 = vunpack.c.l.b16 %v1315
      %v1364 = vunpack.c.l.b16 %v1316
      %v1365 = vunpack.c.l.b16 %v1317
      %v1366 = vunpack.c.l.b16 %v1318
      %v1367 = vunpack.c.l.b16 %v1319
      %v1368 = vunpack.c.l.b16 %v1320
      %v1369 = vunpack.c.l.b16 %v1321
      %v1370 = vunpack.c.l.b16 %v1322
      %v1371 = vunpack.c.l.b16 %v1323
      %v1372 = vunpack.c.l.b16 %v1324
      %v1373 = vunpack.c.l.b16 %v1325
      %v1374 = vpack.c.b16 %v1359, %v1358
      %v1375 = vpack.c.b16 %v1361, %v1360
      %v1376 = vpack.c.b16 %v1363, %v1362
      %v1377 = vpack.c.b16 %v1365, %v1364
      %v1378 = vpack.c.b16 %v1367, %v1366
      %v1379 = vpack.c.b16 %v1369, %v1368
      %v1380 = vpack.c.b16 %v1371, %v1370
      %v1381 = vpack.c.b16 %v1373, %v1372
      %1390 = vmatprep.subr.bf16.mxu0 0
      %1391 = vmatpush1.bf16.msra.mxu0 %v1374
      %1392 = vmatprep.subr.bf16.mxu0 0
      %1393 = vmatpush1.bf16.msra.mxu0 %v1375
      %1394 = vmatprep.subr.bf16.mxu0 0
      %1395 = vmatpush1.bf16.msra.mxu0 %v1376
      %1396 = vmatprep.subr.bf16.mxu0 0
      %1397 = vmatpush1.bf16.msra.mxu0 %v1377
      %1398 = vmatprep.subr.bf16.mxu0 0
      %1399 = vmatpush1.bf16.msra.mxu0 %v1378
      %1400 = vmatprep.subr.bf16.mxu0 0
      %1401 = vmatpush1.bf16.msra.mxu0 %v1379
      %1402 = vmatprep.subr.bf16.mxu0 0
      %1403 = vmatpush1.bf16.msra.mxu0 %v1380
      %1404 = vmatprep.subr.bf16.mxu0 0
      %1405 = vmatpush1.bf16.msra.mxu0 %v1381
      %1406 = vmatprep.subr.bf16.mxu0 0
      %1407 = vmatpush1.bf16.msra.mxu0 0
      %1408 = vmatprep.subr.bf16.mxu0 0
      %1409 = vmatpush1.bf16.msra.mxu0 0
      %1410 = vmatprep.subr.bf16.mxu0 0
      %1411 = vmatpush1.bf16.msra.mxu0 0
      %1412 = vmatprep.subr.bf16.mxu0 0
      %1413 = vmatpush1.bf16.msra.mxu0 0
      %1414 = vmatprep.subr.bf16.mxu0 0
      %1415 = vmatpush1.bf16.msra.mxu0 0
      %1416 = vmatprep.subr.bf16.mxu0 0
      %1417 = vmatpush1.bf16.msra.mxu0 0
      %1418 = vmatprep.subr.bf16.mxu0 0
      %1419 = vmatpush1.bf16.msra.mxu0 0
      %1420 = vmatprep.subr.bf16.mxu0 0
      %1421 = vmatpush1.bf16.msra.mxu0 0
      %1422 = vmatprep.mubr.bf16.mxu0 0
      %1423 = vmatmul.mubr.bf16.gmra.mrb[0].mxu0 %v1334
      %v1424 = vpop.f32.mrb[0].mxu0
      %v1425 = vadd.f32 0.0, %v1424
      %v1426 = vpop.f32.mrb[0].mxu0
      %v1427 = vpop.f32.mrb[0].mxu0
      %v1428 = vadd.f32 0.0, %v1427
      %v1429 = vpop.f32.mrb[0].mxu0
      %1430 = vmatprep.mubr.bf16.mxu0 0
      %1431 = vmatmul.mubr.bf16.gmra.mrb[0].mxu0 %v1335
      %v1432 = vpop.f32.mrb[0].mxu0
      %v1433 = vadd.f32 0.0, %v1432
      %v1434 = vpop.f32.mrb[0].mxu0
      %v1435 = vpop.f32.mrb[0].mxu0
      %v1436 = vadd.f32 0.0, %v1435
      %v1437 = vpop.f32.mrb[0].mxu0
      %1438 = vmatprep.mubr.bf16.mxu0 0
      %1439 = vmatmul.mubr.bf16.gmra.mrb[0].mxu0 %v1336
      %v1440 = vpop.f32.mrb[0].mxu0
      %v1441 = vadd.f32 0.0, %v1440
      %v1442 = vpop.f32.mrb[0].mxu0
      %v1443 = vpop.f32.mrb[0].mxu0
      %v1444 = vadd.f32 0.0, %v1443
      %v1445 = vpop.f32.mrb[0].mxu0
      %1446 = vmatprep.mubr.bf16.mxu0 0
      %1447 = vmatmul.mubr.bf16.gmra.mrb[0].mxu0 %v1337
      %v1448 = vpop.f32.mrb[0].mxu0
      %v1449 = vadd.f32 0.0, %v1448
      %v1450 = vpop.f32.mrb[0].mxu0
      %v1451 = vpop.f32.mrb[0].mxu0
      %v1452 = vadd.f32 0.0, %v1451
      %v1453 = vpop.f32.mrb[0].mxu0
      %1454 = vdwg.mxu0
      %v1455 = vadd.f32 %v1173, %v1425
      %v1456 = vadd.f32 %v1174, %v1428
      %v1457 = vadd.f32 %v1175, %v1433
      %v1458 = vadd.f32 %v1176, %v1436
      %v1459 = vadd.f32 %v1177, %v1441
      %v1460 = vadd.f32 %v1178, %v1444
      %v1461 = vadd.f32 %v1179, %v1449
      %v1462 = vadd.f32 %v1180, %v1452
      %s1463 = scalar_lea.vmem %s211, 8
      %v1464 = vld [vmem:[%s1463] sm:$0xf]
      %v1465 = vld [vmem:[%s1463 + $0x8] sm:$0xf]
      %v1466 = vld [vmem:[%s1463 + $0x10] sm:$0xf]
      %v1467 = vld [vmem:[%s1463 + $0x18] sm:$0xf]
      %v1468 = vld [vmem:[%s1463 + $0x20] sm:$0xf]
      %v1469 = vld [vmem:[%s1463 + $0x28] sm:$0xf]
      %v1470 = vld [vmem:[%s1463 + $0x30] sm:$0xf]
      %v1471 = vld [vmem:[%s1463 + $0x38] sm:$0xf]
      %s1472 = scalar_lea.vmem %s1, 384
      %v1473 = vld [vmem:[%s1472] sm:$0xf]
      %v1474 = vld [vmem:[%s1472 + $0x4] sm:$0xf]
      %v1475 = vld [vmem:[%s1472 + $0x8] sm:$0xf]
      %v1476 = vld [vmem:[%s1472 + $0xc] sm:$0xf]
      %v1477 = vld [vmem:[%s1472 + $0x10] sm:$0xf]
      %v1478 = vld [vmem:[%s1472 + $0x14] sm:$0xf]
      %v1479 = vld [vmem:[%s1472 + $0x18] sm:$0xf]
      %v1480 = vld [vmem:[%s1472 + $0x1c] sm:$0xf]
      %v1481 = vld [vmem:[%s1472 + $0x20] sm:$0xf]
      %v1482 = vld [vmem:[%s1472 + $0x24] sm:$0xf]
      %v1483 = vld [vmem:[%s1472 + $0x28] sm:$0xf]
      %v1484 = vld [vmem:[%s1472 + $0x2c] sm:$0xf]
      %v1485 = vld [vmem:[%s1472 + $0x30] sm:$0xf]
      %v1486 = vld [vmem:[%s1472 + $0x34] sm:$0xf]
      %v1487 = vld [vmem:[%s1472 + $0x38] sm:$0xf]
      %v1488 = vld [vmem:[%s1472 + $0x3c] sm:$0xf]
      %v1497 = vunpack.c.l.b16 %v1464
      %v1498 = vunpack.c.l.b16 %v1465
      %v1499 = vunpack.c.l.b16 %v1466
      %v1500 = vunpack.c.l.b16 %v1467
      %v1501 = vunpack.c.l.b16 %v1468
      %v1502 = vunpack.c.l.b16 %v1469
      %v1503 = vunpack.c.l.b16 %v1470
      %v1504 = vunpack.c.l.b16 %v1471
      %v1505 = vpack.c.b16 %v1498, %v1497
      %v1506 = vpack.c.b16 %v1500, %v1499
      %v1507 = vpack.c.b16 %v1502, %v1501
      %v1508 = vpack.c.b16 %v1504, %v1503
      %v1529 = vunpack.c.l.b16 %v1473
      %v1530 = vunpack.c.l.b16 %v1474
      %v1531 = vunpack.c.l.b16 %v1475
      %v1532 = vunpack.c.l.b16 %v1476
      %v1533 = vunpack.c.l.b16 %v1477
      %v1534 = vunpack.c.l.b16 %v1478
      %v1535 = vunpack.c.l.b16 %v1479
      %v1536 = vunpack.c.l.b16 %v1480
      %v1537 = vunpack.c.l.b16 %v1481
      %v1538 = vunpack.c.l.b16 %v1482
      %v1539 = vunpack.c.l.b16 %v1483
      %v1540 = vunpack.c.l.b16 %v1484
      %v1541 = vunpack.c.l.b16 %v1485
      %v1542 = vunpack.c.l.b16 %v1486
      %v1543 = vunpack.c.l.b16 %v1487
      %v1544 = vunpack.c.l.b16 %v1488
      %v1545 = vpack.c.b16 %v1530, %v1529
      %v1546 = vpack.c.b16 %v1532, %v1531
      %v1547 = vpack.c.b16 %v1534, %v1533
      %v1548 = vpack.c.b16 %v1536, %v1535
      %v1549 = vpack.c.b16 %v1538, %v1537
      %v1550 = vpack.c.b16 %v1540, %v1539
      %v1551 = vpack.c.b16 %v1542, %v1541
      %v1552 = vpack.c.b16 %v1544, %v1543
      %1561 = vmatprep.subr.bf16.mxu0 0
      %1562 = vmatpush1.bf16.msra.mxu0 %v1545
      %1563 = vmatprep.subr.bf16.mxu0 0
      %1564 = vmatpush1.bf16.msra.mxu0 %v1546
      %1565 = vmatprep.subr.bf16.mxu0 0
      %1566 = vmatpush1.bf16.msra.mxu0 %v1547
      %1567 = vmatprep.subr.bf16.mxu0 0
      %1568 = vmatpush1.bf16.msra.mxu0 %v1548
      %1569 = vmatprep.subr.bf16.mxu0 0
      %1570 = vmatpush1.bf16.msra.mxu0 %v1549
      %1571 = vmatprep.subr.bf16.mxu0 0
      %1572 = vmatpush1.bf16.msra.mxu0 %v1550
      %1573 = vmatprep.subr.bf16.mxu0 0
      %1574 = vmatpush1.bf16.msra.mxu0 %v1551
      %1575 = vmatprep.subr.bf16.mxu0 0
      %1576 = vmatpush1.bf16.msra.mxu0 %v1552
      %1577 = vmatprep.subr.bf16.mxu0 0
      %1578 = vmatpush1.bf16.msra.mxu0 0
      %1579 = vmatprep.subr.bf16.mxu0 0
      %1580 = vmatpush1.bf16.msra.mxu0 0
      %1581 = vmatprep.subr.bf16.mxu0 0
      %1582 = vmatpush1.bf16.msra.mxu0 0
      %1583 = vmatprep.subr.bf16.mxu0 0
      %1584 = vmatpush1.bf16.msra.mxu0 0
      %1585 = vmatprep.subr.bf16.mxu0 0
      %1586 = vmatpush1.bf16.msra.mxu0 0
      %1587 = vmatprep.subr.bf16.mxu0 0
      %1588 = vmatpush1.bf16.msra.mxu0 0
      %1589 = vmatprep.subr.bf16.mxu0 0
      %1590 = vmatpush1.bf16.msra.mxu0 0
      %1591 = vmatprep.subr.bf16.mxu0 0
      %1592 = vmatpush1.bf16.msra.mxu0 0
      %1593 = vmatprep.mubr.bf16.mxu0 0
      %1594 = vmatmul.mubr.bf16.gmra.mrb[0].mxu0 %v1505
      %v1595 = vpop.f32.mrb[0].mxu0
      %v1596 = vadd.f32 0.0, %v1595
      %v1597 = vpop.f32.mrb[0].mxu0
      %v1598 = vpop.f32.mrb[0].mxu0
      %v1599 = vadd.f32 0.0, %v1598
      %v1600 = vpop.f32.mrb[0].mxu0
      %1601 = vmatprep.mubr.bf16.mxu0 0
      %1602 = vmatmul.mubr.bf16.gmra.mrb[0].mxu0 %v1506
      %v1603 = vpop.f32.mrb[0].mxu0
      %v1604 = vadd.f32 0.0, %v1603
      %v1605 = vpop.f32.mrb[0].mxu0
      %v1606 = vpop.f32.mrb[0].mxu0
      %v1607 = vadd.f32 0.0, %v1606
      %v1608 = vpop.f32.mrb[0].mxu0
      %1609 = vmatprep.mubr.bf16.mxu0 0
      %1610 = vmatmul.mubr.bf16.gmra.mrb[0].mxu0 %v1507
      %v1611 = vpop.f32.mrb[0].mxu0
      %v1612 = vadd.f32 0.0, %v1611
      %v1613 = vpop.f32.mrb[0].mxu0
      %v1614 = vpop.f32.mrb[0].mxu0
      %v1615 = vadd.f32 0.0, %v1614
      %v1616 = vpop.f32.mrb[0].mxu0
      %1617 = vmatprep.mubr.bf16.mxu0 0
      %1618 = vmatmul.mubr.bf16.gmra.mrb[0].mxu0 %v1508
      %v1619 = vpop.f32.mrb[0].mxu0
      %v1620 = vadd.f32 0.0, %v1619
      %v1621 = vpop.f32.mrb[0].mxu0
      %v1622 = vpop.f32.mrb[0].mxu0
      %v1623 = vadd.f32 0.0, %v1622
      %v1624 = vpop.f32.mrb[0].mxu0
      %1625 = vdwg.mxu0
      %v1626 = vadd.f32 %v1455, %v1596
      %v1627 = vadd.f32 %v1456, %v1599
      %v1628 = vadd.f32 %v1457, %v1604
      %v1629 = vadd.f32 %v1458, %v1607
      %v1630 = vadd.f32 %v1459, %v1612
      %v1631 = vadd.f32 %v1460, %v1615
      %v1632 = vadd.f32 %v1461, %v1620
      %v1633 = vadd.f32 %v1462, %v1623
      %s1634 = scalar_lea.vmem %s211, 80
      %v1635 = vld [vmem:[%s1634] sm:$0xf]
      %v1636 = vld [vmem:[%s1634 + $0x8] sm:$0xf]
      %v1637 = vld [vmem:[%s1634 + $0x10] sm:$0xf]
      %v1638 = vld [vmem:[%s1634 + $0x18] sm:$0xf]
      %v1639 = vld [vmem:[%s1634 + $0x20] sm:$0xf]
      %v1640 = vld [vmem:[%s1634 + $0x28] sm:$0xf]
      %v1641 = vld [vmem:[%s1634 + $0x30] sm:$0xf]
      %v1642 = vld [vmem:[%s1634 + $0x38] sm:$0xf]
      %s1643 = scalar_lea.vmem %s1, 448
      %v1644 = vld [vmem:[%s1643] sm:$0xf]
      %v1645 = vld [vmem:[%s1643 + $0x4] sm:$0xf]
      %v1646 = vld [vmem:[%s1643 + $0x8] sm:$0xf]
      %v1647 = vld [vmem:[%s1643 + $0xc] sm:$0xf]
      %v1648 = vld [vmem:[%s1643 + $0x10] sm:$0xf]
      %v1649 = vld [vmem:[%s1643 + $0x14] sm:$0xf]
      %v1650 = vld [vmem:[%s1643 + $0x18] sm:$0xf]
      %v1651 = vld [vmem:[%s1643 + $0x1c] sm:$0xf]
      %v1652 = vld [vmem:[%s1643 + $0x20] sm:$0xf]
      %v1653 = vld [vmem:[%s1643 + $0x24] sm:$0xf]
      %v1654 = vld [vmem:[%s1643 + $0x28] sm:$0xf]
      %v1655 = vld [vmem:[%s1643 + $0x2c] sm:$0xf]
      %v1656 = vld [vmem:[%s1643 + $0x30] sm:$0xf]
      %v1657 = vld [vmem:[%s1643 + $0x34] sm:$0xf]
      %v1658 = vld [vmem:[%s1643 + $0x38] sm:$0xf]
      %v1659 = vld [vmem:[%s1643 + $0x3c] sm:$0xf]
      %v1668 = vunpack.c.l.b16 %v1635
      %v1669 = vunpack.c.l.b16 %v1636
      %v1670 = vunpack.c.l.b16 %v1637
      %v1671 = vunpack.c.l.b16 %v1638
      %v1672 = vunpack.c.l.b16 %v1639
      %v1673 = vunpack.c.l.b16 %v1640
      %v1674 = vunpack.c.l.b16 %v1641
      %v1675 = vunpack.c.l.b16 %v1642
      %v1676 = vpack.c.b16 %v1669, %v1668
      %v1677 = vpack.c.b16 %v1671, %v1670
      %v1678 = vpack.c.b16 %v1673, %v1672
      %v1679 = vpack.c.b16 %v1675, %v1674
      %v1700 = vunpack.c.l.b16 %v1644
      %v1701 = vunpack.c.l.b16 %v1645
      %v1702 = vunpack.c.l.b16 %v1646
      %v1703 = vunpack.c.l.b16 %v1647
      %v1704 = vunpack.c.l.b16 %v1648
      %v1705 = vunpack.c.l.b16 %v1649
      %v1706 = vunpack.c.l.b16 %v1650
      %v1707 = vunpack.c.l.b16 %v1651
      %v1708 = vunpack.c.l.b16 %v1652
      %v1709 = vunpack.c.l.b16 %v1653
      %v1710 = vunpack.c.l.b16 %v1654
      %v1711 = vunpack.c.l.b16 %v1655
      %v1712 = vunpack.c.l.b16 %v1656
      %v1713 = vunpack.c.l.b16 %v1657
      %v1714 = vunpack.c.l.b16 %v1658
      %v1715 = vunpack.c.l.b16 %v1659
      %v1716 = vpack.c.b16 %v1701, %v1700
      %v1717 = vpack.c.b16 %v1703, %v1702
      %v1718 = vpack.c.b16 %v1705, %v1704
      %v1719 = vpack.c.b16 %v1707, %v1706
      %v1720 = vpack.c.b16 %v1709, %v1708
      %v1721 = vpack.c.b16 %v1711, %v1710
      %v1722 = vpack.c.b16 %v1713, %v1712
      %v1723 = vpack.c.b16 %v1715, %v1714
      %1732 = vmatprep.subr.bf16.mxu0 0
      %1733 = vmatpush1.bf16.msra.mxu0 %v1716
      %1734 = vmatprep.subr.bf16.mxu0 0
      %1735 = vmatpush1.bf16.msra.mxu0 %v1717
      %1736 = vmatprep.subr.bf16.mxu0 0
      %1737 = vmatpush1.bf16.msra.mxu0 %v1718
      %1738 = vmatprep.subr.bf16.mxu0 0
      %1739 = vmatpush1.bf16.msra.mxu0 %v1719
      %1740 = vmatprep.subr.bf16.mxu0 0
      %1741 = vmatpush1.bf16.msra.mxu0 %v1720
      %1742 = vmatprep.subr.bf16.mxu0 0
      %1743 = vmatpush1.bf16.msra.mxu0 %v1721
      %1744 = vmatprep.subr.bf16.mxu0 0
      %1745 = vmatpush1.bf16.msra.mxu0 %v1722
      %1746 = vmatprep.subr.bf16.mxu0 0
      %1747 = vmatpush1.bf16.msra.mxu0 %v1723
      %1748 = vmatprep.subr.bf16.mxu0 0
      %1749 = vmatpush1.bf16.msra.mxu0 0
      %1750 = vmatprep.subr.bf16.mxu0 0
      %1751 = vmatpush1.bf16.msra.mxu0 0
      %1752 = vmatprep.subr.bf16.mxu0 0
      %1753 = vmatpush1.bf16.msra.mxu0 0
      %1754 = vmatprep.subr.bf16.mxu0 0
      %1755 = vmatpush1.bf16.msra.mxu0 0
      %1756 = vmatprep.subr.bf16.mxu0 0
      %1757 = vmatpush1.bf16.msra.mxu0 0
      %1758 = vmatprep.subr.bf16.mxu0 0
      %1759 = vmatpush1.bf16.msra.mxu0 0
      %1760 = vmatprep.subr.bf16.mxu0 0
      %1761 = vmatpush1.bf16.msra.mxu0 0
      %1762 = vmatprep.subr.bf16.mxu0 0
      %1763 = vmatpush1.bf16.msra.mxu0 0
      %1764 = vmatprep.mubr.bf16.mxu0 0
      %1765 = vmatmul.mubr.bf16.gmra.mrb[0].mxu0 %v1676
      %v1766 = vpop.f32.mrb[0].mxu0
      %v1767 = vadd.f32 0.0, %v1766
      %v1768 = vpop.f32.mrb[0].mxu0
      %v1769 = vpop.f32.mrb[0].mxu0
      %v1770 = vadd.f32 0.0, %v1769
      %v1771 = vpop.f32.mrb[0].mxu0
      %1772 = vmatprep.mubr.bf16.mxu0 0
      %1773 = vmatmul.mubr.bf16.gmra.mrb[0].mxu0 %v1677
      %v1774 = vpop.f32.mrb[0].mxu0
      %v1775 = vadd.f32 0.0, %v1774
      %v1776 = vpop.f32.mrb[0].mxu0
      %v1777 = vpop.f32.mrb[0].mxu0
      %v1778 = vadd.f32 0.0, %v1777
      %v1779 = vpop.f32.mrb[0].mxu0
      %1780 = vmatprep.mubr.bf16.mxu0 0
      %1781 = vmatmul.mubr.bf16.gmra.mrb[0].mxu0 %v1678
      %v1782 = vpop.f32.mrb[0].mxu0
      %v1783 = vadd.f32 0.0, %v1782
      %v1784 = vpop.f32.mrb[0].mxu0
      %v1785 = vpop.f32.mrb[0].mxu0
      %v1786 = vadd.f32 0.0, %v1785
      %v1787 = vpop.f32.mrb[0].mxu0
      %1788 = vmatprep.mubr.bf16.mxu0 0
      %1789 = vmatmul.mubr.bf16.gmra.mrb[0].mxu0 %v1679
      %v1790 = vpop.f32.mrb[0].mxu0
      %v1791 = vadd.f32 0.0, %v1790
      %v1792 = vpop.f32.mrb[0].mxu0
      %v1793 = vpop.f32.mrb[0].mxu0
      %v1794 = vadd.f32 0.0, %v1793
      %v1795 = vpop.f32.mrb[0].mxu0
      %1796 = vdwg.mxu0
      %v1797 = vadd.f32 %v1626, %v1767
      %v1798 = vadd.f32 %v1627, %v1770
      %v1799 = vadd.f32 %v1628, %v1775
      %v1800 = vadd.f32 %v1629, %v1778
      %v1801 = vadd.f32 %v1630, %v1783
      %v1802 = vadd.f32 %v1631, %v1786
      %v1803 = vadd.f32 %v1632, %v1791
      %v1804 = vadd.f32 %v1633, %v1794
      %v1805 = vld [vmem:[%s1463] sm:$0xf]
      %v1806 = vld [vmem:[%s1463 + $0x4] sm:$0x1]
      %v1807 = vld [vmem:[%s1463 + $0x8] sm:$0xf]
      %v1808 = vld [vmem:[%s1463 + $0xc] sm:$0x1]
      %v1809 = vld [vmem:[%s1463 + $0x10] sm:$0xf]
      %v1810 = vld [vmem:[%s1463 + $0x14] sm:$0x1]
      %v1811 = vld [vmem:[%s1463 + $0x18] sm:$0xf]
      %v1812 = vld [vmem:[%s1463 + $0x1c] sm:$0x1]
      %v1813 = vld [vmem:[%s1463 + $0x20] sm:$0xf]
      %v1814 = vld [vmem:[%s1463 + $0x24] sm:$0x1]
      %v1815 = vld [vmem:[%s1463 + $0x28] sm:$0xf]
      %v1816 = vld [vmem:[%s1463 + $0x2c] sm:$0x1]
      %v1817 = vld [vmem:[%s1463 + $0x30] sm:$0xf]
      %v1818 = vld [vmem:[%s1463 + $0x34] sm:$0x1]
      %v1819 = vld [vmem:[%s1463 + $0x38] sm:$0xf]
      %v1820 = vld [vmem:[%s1463 + $0x3c] sm:$0x1]
      %v1822 = vshrl.u32 %v1805, 16
      %v1824 = vrot.slane %v1822, 4
      %v1825 = vshll.u32 %v1805, 16
      %v1827 = vrot.slane %v1825, 5
      %v1828 = vor.u32 %v1824, %v1827
      %v1829 = vrot.slane %v1828, 4
      %v1831 = vshll.u32 %v1806, 16
      %v1833 = vrot.slane %v1831, 5
      %v1834 = vsel %vm572, %v1829, %v1833
      %v1836 = vshrl.u32 %v1807, 16
      %v1838 = vrot.slane %v1836, 4
      %v1839 = vshll.u32 %v1807, 16
      %v1841 = vrot.slane %v1839, 5
      %v1842 = vor.u32 %v1838, %v1841
      %v1843 = vrot.slane %v1842, 4
      %v1845 = vshll.u32 %v1808, 16
      %v1847 = vrot.slane %v1845, 5
      %v1848 = vsel %vm572, %v1843, %v1847
      %v1850 = vshrl.u32 %v1809, 16
      %v1852 = vrot.slane %v1850, 4
      %v1853 = vshll.u32 %v1809, 16
      %v1855 = vrot.slane %v1853, 5
      %v1856 = vor.u32 %v1852, %v1855
      %v1857 = vrot.slane %v1856, 4
      %v1859 = vshll.u32 %v1810, 16
      %v1861 = vrot.slane %v1859, 5
      %v1862 = vsel %vm572, %v1857, %v1861
      %v1864 = vshrl.u32 %v1811, 16
      %v1866 = vrot.slane %v1864, 4
      %v1867 = vshll.u32 %v1811, 16
      %v1869 = vrot.slane %v1867, 5
      %v1870 = vor.u32 %v1866, %v1869
      %v1871 = vrot.slane %v1870, 4
      %v1873 = vshll.u32 %v1812, 16
      %v1875 = vrot.slane %v1873, 5
      %v1876 = vsel %vm572, %v1871, %v1875
      %v1878 = vshrl.u32 %v1813, 16
      %v1880 = vrot.slane %v1878, 4
      %v1881 = vshll.u32 %v1813, 16
      %v1883 = vrot.slane %v1881, 5
      %v1884 = vor.u32 %v1880, %v1883
      %v1885 = vrot.slane %v1884, 4
      %v1887 = vshll.u32 %v1814, 16
      %v1889 = vrot.slane %v1887, 5
      %v1890 = vsel %vm572, %v1885, %v1889
      %v1892 = vshrl.u32 %v1815, 16
      %v1894 = vrot.slane %v1892, 4
      %v1895 = vshll.u32 %v1815, 16
      %v1897 = vrot.slane %v1895, 5
      %v1898 = vor.u32 %v1894, %v1897
      %v1899 = vrot.slane %v1898, 4
      %v1901 = vshll.u32 %v1816, 16
      %v1903 = vrot.slane %v1901, 5
      %v1904 = vsel %vm572, %v1899, %v1903
      %v1906 = vshrl.u32 %v1817, 16
      %v1908 = vrot.slane %v1906, 4
      %v1909 = vshll.u32 %v1817, 16
      %v1911 = vrot.slane %v1909, 5
      %v1912 = vor.u32 %v1908, %v1911
      %v1913 = vrot.slane %v1912, 4
      %v1915 = vshll.u32 %v1818, 16
      %v1917 = vrot.slane %v1915, 5
      %v1918 = vsel %vm572, %v1913, %v1917
      %v1920 = vshrl.u32 %v1819, 16
      %v1922 = vrot.slane %v1920, 4
      %v1923 = vshll.u32 %v1819, 16
      %v1925 = vrot.slane %v1923, 5
      %v1926 = vor.u32 %v1922, %v1925
      %v1927 = vrot.slane %v1926, 4
      %v1929 = vshll.u32 %v1820, 16
      %v1931 = vrot.slane %v1929, 5
      %v1932 = vsel %vm572, %v1927, %v1931
      %s1933 = scalar_lea.vmem %s1, 512
      %v1934 = vld [vmem:[%s1933] sm:$0xf]
      %v1935 = vld [vmem:[%s1933 + $0x4] sm:$0xf]
      %v1936 = vld [vmem:[%s1933 + $0x8] sm:$0xf]
      %v1937 = vld [vmem:[%s1933 + $0xc] sm:$0xf]
      %v1938 = vld [vmem:[%s1933 + $0x10] sm:$0xf]
      %v1939 = vld [vmem:[%s1933 + $0x14] sm:$0xf]
      %v1940 = vld [vmem:[%s1933 + $0x18] sm:$0xf]
      %v1941 = vld [vmem:[%s1933 + $0x1c] sm:$0xf]
      %v1942 = vld [vmem:[%s1933 + $0x20] sm:$0xf]
      %v1943 = vld [vmem:[%s1933 + $0x24] sm:$0xf]
      %v1944 = vld [vmem:[%s1933 + $0x28] sm:$0xf]
      %v1945 = vld [vmem:[%s1933 + $0x2c] sm:$0xf]
      %v1946 = vld [vmem:[%s1933 + $0x30] sm:$0xf]
      %v1947 = vld [vmem:[%s1933 + $0x34] sm:$0xf]
      %v1948 = vld [vmem:[%s1933 + $0x38] sm:$0xf]
      %v1949 = vld [vmem:[%s1933 + $0x3c] sm:$0xf]
      %v1950 = vunpack.c.l.b16 %v1834
      %v1951 = vunpack.c.l.b16 %v1848
      %v1952 = vunpack.c.l.b16 %v1862
      %v1953 = vunpack.c.l.b16 %v1876
      %v1954 = vunpack.c.l.b16 %v1890
      %v1955 = vunpack.c.l.b16 %v1904
      %v1956 = vunpack.c.l.b16 %v1918
      %v1957 = vunpack.c.l.b16 %v1932
      %v1958 = vpack.c.b16 %v1951, %v1950
      %v1959 = vpack.c.b16 %v1953, %v1952
      %v1960 = vpack.c.b16 %v1955, %v1954
      %v1961 = vpack.c.b16 %v1957, %v1956
      %v1982 = vunpack.c.l.b16 %v1934
      %v1983 = vunpack.c.l.b16 %v1935
      %v1984 = vunpack.c.l.b16 %v1936
      %v1985 = vunpack.c.l.b16 %v1937
      %v1986 = vunpack.c.l.b16 %v1938
      %v1987 = vunpack.c.l.b16 %v1939
      %v1988 = vunpack.c.l.b16 %v1940
      %v1989 = vunpack.c.l.b16 %v1941
      %v1990 = vunpack.c.l.b16 %v1942
      %v1991 = vunpack.c.l.b16 %v1943
      %v1992 = vunpack.c.l.b16 %v1944
      %v1993 = vunpack.c.l.b16 %v1945
      %v1994 = vunpack.c.l.b16 %v1946
      %v1995 = vunpack.c.l.b16 %v1947
      %v1996 = vunpack.c.l.b16 %v1948
      %v1997 = vunpack.c.l.b16 %v1949
      %v1998 = vpack.c.b16 %v1983, %v1982
      %v1999 = vpack.c.b16 %v1985, %v1984
      %v2000 = vpack.c.b16 %v1987, %v1986
      %v2001 = vpack.c.b16 %v1989, %v1988
      %v2002 = vpack.c.b16 %v1991, %v1990
      %v2003 = vpack.c.b16 %v1993, %v1992
      %v2004 = vpack.c.b16 %v1995, %v1994
      %v2005 = vpack.c.b16 %v1997, %v1996
      %2014 = vmatprep.subr.bf16.mxu0 0
      %2015 = vmatpush1.bf16.msra.mxu0 %v1998
      %2016 = vmatprep.subr.bf16.mxu0 0
      %2017 = vmatpush1.bf16.msra.mxu0 %v1999
      %2018 = vmatprep.subr.bf16.mxu0 0
      %2019 = vmatpush1.bf16.msra.mxu0 %v2000
      %2020 = vmatprep.subr.bf16.mxu0 0
      %2021 = vmatpush1.bf16.msra.mxu0 %v2001
      %2022 = vmatprep.subr.bf16.mxu0 0
      %2023 = vmatpush1.bf16.msra.mxu0 %v2002
      %2024 = vmatprep.subr.bf16.mxu0 0
      %2025 = vmatpush1.bf16.msra.mxu0 %v2003
      %2026 = vmatprep.subr.bf16.mxu0 0
      %2027 = vmatpush1.bf16.msra.mxu0 %v2004
      %2028 = vmatprep.subr.bf16.mxu0 0
      %2029 = vmatpush1.bf16.msra.mxu0 %v2005
      %2030 = vmatprep.subr.bf16.mxu0 0
      %2031 = vmatpush1.bf16.msra.mxu0 0
      %2032 = vmatprep.subr.bf16.mxu0 0
      %2033 = vmatpush1.bf16.msra.mxu0 0
      %2034 = vmatprep.subr.bf16.mxu0 0
      %2035 = vmatpush1.bf16.msra.mxu0 0
      %2036 = vmatprep.subr.bf16.mxu0 0
      %2037 = vmatpush1.bf16.msra.mxu0 0
      %2038 = vmatprep.subr.bf16.mxu0 0
      %2039 = vmatpush1.bf16.msra.mxu0 0
      %2040 = vmatprep.subr.bf16.mxu0 0
      %2041 = vmatpush1.bf16.msra.mxu0 0
      %2042 = vmatprep.subr.bf16.mxu0 0
      %2043 = vmatpush1.bf16.msra.mxu0 0
      %2044 = vmatprep.subr.bf16.mxu0 0
      %2045 = vmatpush1.bf16.msra.mxu0 0
      %2046 = vmatprep.mubr.bf16.mxu0 0
      %2047 = vmatmul.mubr.bf16.gmra.mrb[0].mxu0 %v1958
      %v2048 = vpop.f32.mrb[0].mxu0
      %v2049 = vadd.f32 0.0, %v2048
      %v2050 = vpop.f32.mrb[0].mxu0
      %v2051 = vpop.f32.mrb[0].mxu0
      %v2052 = vadd.f32 0.0, %v2051
      %v2053 = vpop.f32.mrb[0].mxu0
      %2054 = vmatprep.mubr.bf16.mxu0 0
      %2055 = vmatmul.mubr.bf16.gmra.mrb[0].mxu0 %v1959
      %v2056 = vpop.f32.mrb[0].mxu0
      %v2057 = vadd.f32 0.0, %v2056
      %v2058 = vpop.f32.mrb[0].mxu0
      %v2059 = vpop.f32.mrb[0].mxu0
      %v2060 = vadd.f32 0.0, %v2059
      %v2061 = vpop.f32.mrb[0].mxu0
      %2062 = vmatprep.mubr.bf16.mxu0 0
      %2063 = vmatmul.mubr.bf16.gmra.mrb[0].mxu0 %v1960
      %v2064 = vpop.f32.mrb[0].mxu0
      %v2065 = vadd.f32 0.0, %v2064
      %v2066 = vpop.f32.mrb[0].mxu0
      %v2067 = vpop.f32.mrb[0].mxu0
      %v2068 = vadd.f32 0.0, %v2067
      %v2069 = vpop.f32.mrb[0].mxu0
      %2070 = vmatprep.mubr.bf16.mxu0 0
      %2071 = vmatmul.mubr.bf16.gmra.mrb[0].mxu0 %v1961
      %v2072 = vpop.f32.mrb[0].mxu0
      %v2073 = vadd.f32 0.0, %v2072
      %v2074 = vpop.f32.mrb[0].mxu0
      %v2075 = vpop.f32.mrb[0].mxu0
      %v2076 = vadd.f32 0.0, %v2075
      %v2077 = vpop.f32.mrb[0].mxu0
      %2078 = vdwg.mxu0
      %v2079 = vadd.f32 %v1797, %v2049
      %v2080 = vadd.f32 %v1798, %v2052
      %v2081 = vadd.f32 %v1799, %v2057
      %v2082 = vadd.f32 %v1800, %v2060
      %v2083 = vadd.f32 %v1801, %v2065
      %v2084 = vadd.f32 %v1802, %v2068
      %v2085 = vadd.f32 %v1803, %v2073
      %v2086 = vadd.f32 %v1804, %v2076
      // Predicated region
      $region41: #{cand_bottleneck_block.7} parent=35 // pred_check
        %p2087 = pneg %p222
      $region42: #{cand_bottleneck_block.7} parent=35 // pred_check_branch
        %2089 = sbr.rel (%p2087) target = $region44
      $region43: #{cand_bottleneck_block.7} parent=35 // pred_region
        %v2090 = vld [vmem:[#allocation2] sm:$0x1]
        %v2091 = vadd.f32 %v2079, %v2080
        %v2092 = vadd.f32 %v2091, %v2081
        %v2093 = vadd.f32 %v2092, %v2082
        %v2094 = vadd.f32 %v2093, %v2083
        %v2095 = vadd.f32 %v2094, %v2084
        %v2096 = vadd.f32 %v2095, %v2085
        %v2097 = vadd.f32 %v2096, %v2086
        %v2098 = vrot.slane %v2097, 4
        %v2099 = vadd.f32 %v2097, %v2098
        %v2100 = vrot.slane %v2099, 2
        %v2101 = vadd.f32 %v2099, %v2100
        %v2102 = vrot.slane %v2101, 1
        %v2103 = vadd.f32 %v2101, %v2102
        %v2104 = vadd.f32 %v2090, %v2103
        %2105 = vst [vmem:[#allocation2] sm:$0x1] %v2104
        %v2106 = vld [vmem:[#allocation3] sm:$0x1]
        %v2107 = vmul.f32 %v2079, %v2079
        %v2108 = vmul.f32 %v2080, %v2080
        %v2109 = vmul.f32 %v2081, %v2081
        %v2110 = vmul.f32 %v2082, %v2082
        %v2111 = vmul.f32 %v2083, %v2083
        %v2112 = vmul.f32 %v2084, %v2084
        %v2113 = vmul.f32 %v2085, %v2085
        %v2114 = vmul.f32 %v2086, %v2086
        %v2115 = vadd.f32 %v2107, %v2108
        %v2116 = vadd.f32 %v2115, %v2109
        %v2117 = vadd.f32 %v2116, %v2110
        %v2118 = vadd.f32 %v2117, %v2111
        %v2119 = vadd.f32 %v2118, %v2112
        %v2120 = vadd.f32 %v2119, %v2113
        %v2121 = vadd.f32 %v2120, %v2114
        %v2122 = vrot.slane %v2121, 4
        %v2123 = vadd.f32 %v2121, %v2122
        %v2124 = vrot.slane %v2123, 2
        %v2125 = vadd.f32 %v2123, %v2124
        %v2126 = vrot.slane %v2125, 1
        %v2127 = vadd.f32 %v2125, %v2126
        %v2128 = vadd.f32 %v2106, %v2127
        %2129 = vst [vmem:[#allocation3] sm:$0x1] %v2128
      $region44: #{cand_bottleneck_block.7} parent=35 // pred_fallthru
        _
      %p2130 = scmp.eq.s32.totalorder %s19, 1
      // Predicated region
      $region45: #{cand_bottleneck_block.7} parent=35 // pred_check
        %p2131 = pneg %p2130
      $region46: #{cand_bottleneck_block.7} parent=35 // pred_check_branch
        %2133 = sbr.rel (%p2131) target = $region48
      $region47: #{cand_bottleneck_block.7} parent=35 // pred_region
        %v2134 = vld [vmem:[#allocation2] sm:$0x1]
        %v2135 = vmul.f32 %v2134, 0.0078125
        %v2136 = vld [vmem:[#allocation3] sm:$0x1]
        %v2137 = vmul.f32 %v2136, 0.0078125
        %v2138 = vmul.f32 %v2135, %v2135
        %v2139 = vsub.f32 %v2137, %v2138
        %v2140 = vmax.f32 %v2139, 0.0
        %v2141 = vadd.f32 %v2140, 1e-05
        %v2142 = vrsqrt.pop %v2141
        %v2143 = vld [vmem:[%s2] sm:$0x1]
        %v2144 = vmul.f32 %v2142, %v2143
        %v2146 = vlaneseq
        %v2147 = vshrl.u32 %v2146, 7
        %v2148 = vsub.s32 0, %v2147
        %v2149 = vrot.slane %v2135, %v2148
        %v2151 = vsub.f32 %v2079, %v2149
        %v2152 = vsub.f32 %v2080, %v2149
        %v2153 = vsub.f32 %v2081, %v2149
        %v2154 = vsub.f32 %v2082, %v2149
        %v2155 = vsub.f32 %v2083, %v2149
        %v2156 = vsub.f32 %v2084, %v2149
        %v2157 = vsub.f32 %v2085, %v2149
        %v2158 = vsub.f32 %v2086, %v2149
        %v2160 = vlaneseq
        %v2161 = vshrl.u32 %v2160, 7
        %v2162 = vsub.s32 0, %v2161
        %v2163 = vrot.slane %v2144, %v2162
        %v2165 = vmul.f32 %v2151, %v2163
        %v2166 = vmul.f32 %v2152, %v2163
        %v2167 = vmul.f32 %v2153, %v2163
        %v2168 = vmul.f32 %v2154, %v2163
        %v2169 = vmul.f32 %v2155, %v2163
        %v2170 = vmul.f32 %v2156, %v2163
        %v2171 = vmul.f32 %v2157, %v2163
        %v2172 = vmul.f32 %v2158, %v2163
        %v2173 = vld [vmem:[%s3] sm:$0x1]
        %v2175 = vlaneseq
        %v2176 = vshrl.u32 %v2175, 7
        %v2177 = vsub.s32 0, %v2176
        %v2178 = vrot.slane %v2173, %v2177
        %v2180 = vadd.f32 %v2165, %v2178
        %v2181 = vadd.f32 %v2166, %v2178
        %v2182 = vadd.f32 %v2167, %v2178
        %v2183 = vadd.f32 %v2168, %v2178
        %v2184 = vadd.f32 %v2169, %v2178
        %v2185 = vadd.f32 %v2170, %v2178
        %v2186 = vadd.f32 %v2171, %v2178
        %v2187 = vadd.f32 %v2172, %v2178
        %v2188 = vmax.f32 %v2180, 0.0
        %v2189 = vmax.f32 %v2181, 0.0
        %v2190 = vmax.f32 %v2182, 0.0
        %v2191 = vmax.f32 %v2183, 0.0
        %v2192 = vmax.f32 %v2184, 0.0
        %v2193 = vmax.f32 %v2185, 0.0
        %v2194 = vmax.f32 %v2186, 0.0
        %v2195 = vmax.f32 %v2187, 0.0
        %v2196 = vpack.c.bf16 %v2189, %v2188
        %v2197 = vpack.c.bf16 %v2191, %v2190
        %v2198 = vpack.c.bf16 %v2193, %v2192
        %v2199 = vpack.c.bf16 %v2195, %v2194
        %v2204 = vunpack.c.l.b16 %v2196
        %v2205 = vunpack.c.h.b16 %v2196
        %v2206 = vunpack.c.l.b16 %v2197
        %v2207 = vunpack.c.h.b16 %v2197
        %v2208 = vunpack.c.l.b16 %v2198
        %v2209 = vunpack.c.h.b16 %v2198
        %v2210 = vunpack.c.l.b16 %v2199
        %v2211 = vunpack.c.h.b16 %v2199
        %v2212 = vpack.c.b16 %v2204, %v2204
        %v2213 = vpack.c.b16 %v2205, %v2205
        %v2214 = vpack.c.b16 %v2206, %v2206
        %v2215 = vpack.c.b16 %v2207, %v2207
        %v2216 = vpack.c.b16 %v2208, %v2208
        %v2217 = vpack.c.b16 %v2209, %v2209
        %v2218 = vpack.c.b16 %v2210, %v2210
        %v2219 = vpack.c.b16 %v2211, %v2211
        %2228 = vst [vmem:[%s218] sm:$0xf] %v2212
        %2229 = vst [vmem:[%s218 + $0x4] sm:$0xf] %v2213
        %2230 = vst [vmem:[%s218 + $0x8] sm:$0xf] %v2214
        %2231 = vst [vmem:[%s218 + $0xc] sm:$0xf] %v2215
        %2232 = vst [vmem:[%s218 + $0x10] sm:$0xf] %v2216
        %2233 = vst [vmem:[%s218 + $0x14] sm:$0xf] %v2217
        %2234 = vst [vmem:[%s218 + $0x18] sm:$0xf] %v2218
        %2235 = vst [vmem:[%s218 + $0x1c] sm:$0xf] %v2219
      $region48: #{cand_bottleneck_block.7} parent=35 // pred_fallthru
        _
      %s2236 = smul.u32 %s20, %s19
      %s2237 = smul.u32 8, %s2236
      %p2238 = scmp.lt.s32.totalorder %s2237, 15
      %s2239 = scalar_select %p2238, %s2237, 15
      %s2240 = smul.addr %s2239, 4
      %s2241 = scalar_lea.vmem %s4, %s2240
      // Predicated region
      $region49: #{cand_bottleneck_block.7} parent=35 // pred_check
        %p2242 = pneg %p136
      $region50: #{cand_bottleneck_block.7} parent=35 // pred_check_branch
        %2244 = sbr.rel (%p2242) target = $region52
      $region51: #{cand_bottleneck_block.7} parent=35 // pred_region
        %s2245 = smul.u32 %s20, %s19
        %s2246 = smul.u32 8, %s2245
      $region52: #{cand_bottleneck_block.7} parent=35 // pred_fallthru
        _
    $region36: #{cand_bottleneck_block.7} parent=5 // pred_fallthru
      _
    %p2247 = scmp.le.s32.totalorder 2, %s10
    // Predicated region
    $region53: #{cand_bottleneck_block.7} parent=5 // pred_check
      %p2248 = pneg %p2247
    $region54: #{cand_bottleneck_block.7} parent=5 // pred_check_branch
      %2250 = sbr.rel (%p2248) target = $region56
    $region55: #{cand_bottleneck_block.7} parent=5 // pred_region
      %s2251 = ssub.s32 %s10, 2
      // Predicated region
      $region57: #{cand_bottleneck_block.7} parent=55 // pred_check
        %p2252 = pneg %p142
      $region58: #{cand_bottleneck_block.7} parent=55 // pred_check_branch
        %2254 = sbr.rel (%p2252) target = $region60
      $region59: #{cand_bottleneck_block.7} parent=55 // pred_region
        %s2255 = smul.u32 %s22, %s21
        %s2256 = smul.u32 8, %s2255
        %p2257 = scmp.lt.s32.totalorder %s2256, 15
        %s2258 = scalar_select %p2257, %s2256, 15
        %s2259 = smul.addr %s2258, 4
        %s2260 = scalar_lea.vmem %s4, %s2259
      $region60: #{cand_bottleneck_block.7} parent=55 // pred_fallthru
        _
    $region56: #{cand_bottleneck_block.7} parent=5 // pred_fallthru
      _
  $region6: #{cand_bottleneck_block.7} parent=0 // loop_footer
    %s14 = sadd.s32 1, %s10
  $region7: #{cand_bottleneck_block.7} parent=0 // loop_footer_branch
    %9 = sbr.rel target = $region3
  $region8: #{cand_bottleneck_block.7} parent=0 // loop_exit
    _

// kernel: cand_bottleneck_block.8
$region0: #{cand_bottleneck_block.8}
  #allocation0 [shape = 'u32[]', space=smem, size = 0x4, offset = 0x4, fixed_abs, tag = 'smem constant byte address 0x4 - core index']
  #allocation1 [shape = 'u32[144,128]{1,0:T(1,128)}', space=vmem, size = 0x12000, scoped, tag = 'internal scratch']
  #allocation2 [shape = 'f32[1,128]{1,0:T(1,128)}', space=vmem, size = 0x200, scoped, tag = 'scratch operand']
  #allocation3 [shape = 'f32[1,128]{1,0:T(1,128)}', space=vmem, size = 0x200, scoped, tag = 'scratch operand']
  #allocation4 [shape = 'f32[1,128]{1,0:T(1,128)}', space=vmem, size = 0x200, scoped, tag = 'scratch operand']
  #allocation5 [shape = 'f32[1,128]{1,0:T(1,128)}', space=vmem, size = 0x200, scoped, tag = 'scratch operand']
  %s0 = inlined_call_operand.vmem [shape: bf16[128,128], index: 0, kind: input, shape index: {}]
  %s1 = inlined_call_operand.vmem [shape: bf16[128,128], index: 1, kind: input, shape index: {}]
  %s2 = inlined_call_operand.vmem [shape: f32[1,128], index: 2, kind: input, shape index: {}]
  %s3 = inlined_call_operand.vmem [shape: f32[1,128], index: 3, kind: input, shape index: {}]
  %s4 = inlined_call_operand.vmem [shape: bf16[128,128], index: 4, kind: input, shape index: {}]
  %s5 = inlined_call_operand.vmem [shape: bf16[128,128], index: 5, kind: input, shape index: {}]
  %s6 = inlined_call_operand.vmem [shape: f32[1,128], index: 6, kind: input, shape index: {}]
  %s7 = inlined_call_operand.vmem [shape: f32[1,128], index: 7, kind: input, shape index: {}]
  %s8 = inlined_call_operand.vmem [shape: bf16[128,128], index: 8, kind: output, shape index: {}]
  %s9 = sld [smem:[#allocation0]]
  $region77: #{cand_bottleneck_block.8} parent=0
    _
  %s11 = ssub.s32 1, %s9
  %s12 = scalar_select 0, %s11, %s9
  loop: start=0, step=1, limit=4
  $region2: #{cand_bottleneck_block.8} parent=0 // loop_pre_header
    _
  $region3: #{cand_bottleneck_block.8} parent=0 // loop_header
    %s14 = sphi 0, %s18
    %p15 = scmp.ge.s32.totalorder %s14, 4
    %s21 = sphi 0, %s33
    %s22 = sphi 0, %s29
    %s23 = sphi 0, %s21
    %s24 = sphi 0, %s22
    %s25 = sphi 0, %s23
    %s26 = sphi 0, %s24
    %s36 = sphi 0, %s38
    %s39 = sphi 0, %s36
    %s40 = sphi 0, %s39
    %s56 = sphi 0, %s40
    %s60 = sphi 0, %s60
    %s62 = sphi 0, %s60
    %s63 = sphi 0, %s62
    %s77 = sphi 0, %s63
    %s81 = sphi 0, %s81
    %s83 = sphi 0, %s81
    %s84 = sphi 0, %s83
    %s98 = sphi 0, %s84
    %s102 = sphi 0, %s102
    %s104 = sphi 0, %s102
    %s105 = sphi 0, %s104
    %s119 = sphi 0, %s105
    %s125 = sphi 0, %s127
    %s128 = sphi 0, %s125
    %s129 = sphi 0, %s128
    %s145 = sphi 0, %s129
    %s149 = sphi 0, %s149
    %s151 = sphi 0, %s149
    %s152 = sphi 0, %s151
    %s166 = sphi 0, %s152
    %s170 = sphi 0, %s170
    %s172 = sphi 0, %s170
    %s173 = sphi 0, %s172
    %s187 = sphi 0, %s173
    %s191 = sphi 0, %s191
    %s193 = sphi 0, %s191
    %s194 = sphi 0, %s193
    %s208 = sphi 0, %s194
    %s216 = sphi 0, %s218
    %s219 = sphi 0, %s216
    %s220 = sphi 0, %s219
    %s236 = sphi 0, %s220
  $region4: #{cand_bottleneck_block.8} parent=0 // loop_header_branch
    %17 = sbr.rel (%p15) target = $region8
  $region5: #{cand_bottleneck_block.8} parent=0 // loop_body
    %s19 = ssub.s32 %s14, 1
    %s20 = ssub.s32 %s14, 2
    %s27 = sadd.s32 1, %s22
    %p28 = scmp.ge.s32.totalorder %s27, 1
    %s29 = scalar_select %p28, 0, %s27
    %s30 = sadd.s32 1, %s21
    %s31 = scalar_select %p28, %s30, %s21
    %p32 = scmp.ge.s32.totalorder %s31, 2
    %s33 = scalar_select %p32, 0, %s31
    %s34 = ssub.s32 %s22, %s29
    %p35 = scmp.eq.s32.totalorder %s34, 0
    %s37 = sadd.s32 %s36, 1
    %s38 = scalar_select %p35, %s36, %s37
    %p41 = pneg %p35
    %p42 = scmp.eq.s32.totalorder %s14, 1
    %p43 = por %p41, %p42
    %p44 = scmp.ne.s32.totalorder %s36, %s39
    %p45 = scmp.eq.s32.totalorder %s14, 0
    %p46 = por %p44, %p45
    %p47 = scmp.ne.s32.totalorder %s36, %s39
    %p48 = scmp.eq.s32.totalorder %s19, 1
    %p49 = por %p47, %p48
    %p50 = scmp.ne.s32.totalorder %s39, %s40
    %p51 = scmp.eq.s32.totalorder %s19, 0
    %p52 = por %p50, %p51
    %p53 = scmp.ne.s32.totalorder %s39, %s40
    %p54 = scmp.eq.s32.totalorder %s20, 1
    %p55 = por %p53, %p54
    %p57 = scmp.ne.s32.totalorder %s40, %s56
    %p58 = scmp.eq.s32.totalorder %s20, 0
    %p59 = por %p57, %p58
    %s61 = sadd.s32 %s60, 1
    %p64 = scmp.eq.s32.totalorder %s14, 1
    %p65 = scmp.ne.s32.totalorder %s60, %s62
    %p66 = scmp.eq.s32.totalorder %s14, 0
    %p67 = por %p65, %p66
    %p68 = scmp.ne.s32.totalorder %s60, %s62
    %p69 = scmp.eq.s32.totalorder %s19, 1
    %p70 = por %p68, %p69
    %p71 = scmp.ne.s32.totalorder %s62, %s63
    %p72 = scmp.eq.s32.totalorder %s19, 0
    %p73 = por %p71, %p72
    %p74 = scmp.ne.s32.totalorder %s62, %s63
    %p75 = scmp.eq.s32.totalorder %s20, 1
    %p76 = por %p74, %p75
    %p78 = scmp.ne.s32.totalorder %s63, %s77
    %p79 = scmp.eq.s32.totalorder %s20, 0
    %p80 = por %p78, %p79
    %s82 = sadd.s32 %s81, 1
    %p85 = scmp.eq.s32.totalorder %s14, 1
    %p86 = scmp.ne.s32.totalorder %s81, %s83
    %p87 = scmp.eq.s32.totalorder %s14, 0
    %p88 = por %p86, %p87
    %p89 = scmp.ne.s32.totalorder %s81, %s83
    %p90 = scmp.eq.s32.totalorder %s19, 1
    %p91 = por %p89, %p90
    %p92 = scmp.ne.s32.totalorder %s83, %s84
    %p93 = scmp.eq.s32.totalorder %s19, 0
    %p94 = por %p92, %p93
    %p95 = scmp.ne.s32.totalorder %s83, %s84
    %p96 = scmp.eq.s32.totalorder %s20, 1
    %p97 = por %p95, %p96
    %p99 = scmp.ne.s32.totalorder %s84, %s98
    %p100 = scmp.eq.s32.totalorder %s20, 0
    %p101 = por %p99, %p100
    %s103 = sadd.s32 %s102, 1
    %p106 = scmp.eq.s32.totalorder %s14, 1
    %p107 = scmp.ne.s32.totalorder %s102, %s104
    %p108 = scmp.eq.s32.totalorder %s14, 0
    %p109 = por %p107, %p108
    %p110 = scmp.ne.s32.totalorder %s102, %s104
    %p111 = scmp.eq.s32.totalorder %s19, 1
    %p112 = por %p110, %p111
    %p113 = scmp.ne.s32.totalorder %s104, %s105
    %p114 = scmp.eq.s32.totalorder %s19, 0
    %p115 = por %p113, %p114
    %p116 = scmp.ne.s32.totalorder %s104, %s105
    %p117 = scmp.eq.s32.totalorder %s20, 1
    %p118 = por %p116, %p117
    %p120 = scmp.ne.s32.totalorder %s105, %s119
    %p121 = scmp.eq.s32.totalorder %s20, 0
    %p122 = por %p120, %p121
    %s123 = ssub.s32 %s22, %s29
    %p124 = scmp.eq.s32.totalorder %s123, 0
    %s126 = sadd.s32 %s125, 1
    %s127 = scalar_select %p124, %s125, %s126
    %p130 = pneg %p124
    %p131 = scmp.eq.s32.totalorder %s14, 1
    %p132 = por %p130, %p131
    %p133 = scmp.ne.s32.totalorder %s125, %s128
    %p134 = scmp.eq.s32.totalorder %s14, 0
    %p135 = por %p133, %p134
    %p136 = scmp.ne.s32.totalorder %s125, %s128
    %p137 = scmp.eq.s32.totalorder %s19, 1
    %p138 = por %p136, %p137
    %p139 = scmp.ne.s32.totalorder %s128, %s129
    %p140 = scmp.eq.s32.totalorder %s19, 0
    %p141 = por %p139, %p140
    %p142 = scmp.ne.s32.totalorder %s128, %s129
    %p143 = scmp.eq.s32.totalorder %s20, 1
    %p144 = por %p142, %p143
    %p146 = scmp.ne.s32.totalorder %s129, %s145
    %p147 = scmp.eq.s32.totalorder %s20, 0
    %p148 = por %p146, %p147
    %s150 = sadd.s32 %s149, 1
    %p153 = scmp.eq.s32.totalorder %s14, 1
    %p154 = scmp.ne.s32.totalorder %s149, %s151
    %p155 = scmp.eq.s32.totalorder %s14, 0
    %p156 = por %p154, %p155
    %p157 = scmp.ne.s32.totalorder %s149, %s151
    %p158 = scmp.eq.s32.totalorder %s19, 1
    %p159 = por %p157, %p158
    %p160 = scmp.ne.s32.totalorder %s151, %s152
    %p161 = scmp.eq.s32.totalorder %s19, 0
    %p162 = por %p160, %p161
    %p163 = scmp.ne.s32.totalorder %s151, %s152
    %p164 = scmp.eq.s32.totalorder %s20, 1
    %p165 = por %p163, %p164
    %p167 = scmp.ne.s32.totalorder %s152, %s166
    %p168 = scmp.eq.s32.totalorder %s20, 0
    %p169 = por %p167, %p168
    %s171 = sadd.s32 %s170, 1
    %p174 = scmp.eq.s32.totalorder %s14, 1
    %p175 = scmp.ne.s32.totalorder %s170, %s172
    %p176 = scmp.eq.s32.totalorder %s14, 0
    %p177 = por %p175, %p176
    %p178 = scmp.ne.s32.totalorder %s170, %s172
    %p179 = scmp.eq.s32.totalorder %s19, 1
    %p180 = por %p178, %p179
    %p181 = scmp.ne.s32.totalorder %s172, %s173
    %p182 = scmp.eq.s32.totalorder %s19, 0
    %p183 = por %p181, %p182
    %p184 = scmp.ne.s32.totalorder %s172, %s173
    %p185 = scmp.eq.s32.totalorder %s20, 1
    %p186 = por %p184, %p185
    %p188 = scmp.ne.s32.totalorder %s173, %s187
    %p189 = scmp.eq.s32.totalorder %s20, 0
    %p190 = por %p188, %p189
    %s192 = sadd.s32 %s191, 1
    %p195 = scmp.eq.s32.totalorder %s14, 1
    %p196 = scmp.ne.s32.totalorder %s191, %s193
    %p197 = scmp.eq.s32.totalorder %s14, 0
    %p198 = por %p196, %p197
    %p199 = scmp.ne.s32.totalorder %s191, %s193
    %p200 = scmp.eq.s32.totalorder %s19, 1
    %p201 = por %p199, %p200
    %p202 = scmp.ne.s32.totalorder %s193, %s194
    %p203 = scmp.eq.s32.totalorder %s19, 0
    %p204 = por %p202, %p203
    %p205 = scmp.ne.s32.totalorder %s193, %s194
    %p206 = scmp.eq.s32.totalorder %s20, 1
    %p207 = por %p205, %p206
    %p209 = scmp.ne.s32.totalorder %s194, %s208
    %p210 = scmp.eq.s32.totalorder %s20, 0
    %p211 = por %p209, %p210
    %s212 = smul.u32 %s22, %s21
    %s213 = smul.u32 %s29, %s33
    %s214 = ssub.s32 %s212, %s213
    %p215 = scmp.eq.s32.totalorder %s214, 0
    %s217 = sadd.s32 %s216, 1
    %s218 = scalar_select %p215, %s216, %s217
    %p221 = pneg %p215
    %p222 = scmp.eq.s32.totalorder %s14, 1
    %p223 = por %p221, %p222
    %p224 = scmp.ne.s32.totalorder %s216, %s219
    %p225 = scmp.eq.s32.totalorder %s14, 0
    %p226 = por %p224, %p225
    %p227 = scmp.ne.s32.totalorder %s216, %s219
    %p228 = scmp.eq.s32.totalorder %s19, 1
    %p229 = por %p227, %p228
    %p230 = scmp.ne.s32.totalorder %s219, %s220
    %p231 = scmp.eq.s32.totalorder %s19, 0
    %p232 = por %p230, %p231
    %p233 = scmp.ne.s32.totalorder %s219, %s220
    %p234 = scmp.eq.s32.totalorder %s20, 1
    %p235 = por %p233, %p234
    %p237 = scmp.ne.s32.totalorder %s220, %s236
    %p238 = scmp.eq.s32.totalorder %s20, 0
    %p239 = por %p237, %p238
    %p240 = scmp.le.s32.totalorder 1, %s14
    %p241 = scmp.lt.s32.totalorder %s14, 3
    %p242 = pnand %p240, %p241
    %p243 = pneg %p242
    // Predicated region
    $region9: #{cand_bottleneck_block.8} parent=5 // pred_check
      _
    $region10: #{cand_bottleneck_block.8} parent=5 // pred_check_branch
      %245 = sbr.rel (%p242) target = $region12
    $region11: #{cand_bottleneck_block.8} parent=5 // pred_region
      %s246 = ssub.s32 %s14, 1
      // Predicated region
      $region13: #{cand_bottleneck_block.8} parent=11 // pred_check
        %p247 = pneg %p52
      $region14: #{cand_bottleneck_block.8} parent=11 // pred_check_branch
        %249 = sbr.rel (%p247) target = $region16
      $region15: #{cand_bottleneck_block.8} parent=11 // pred_region
        %s250 = smul.u32 16, %s24
        %p251 = scmp.lt.s32.totalorder %s250, 15
        %s252 = scalar_select %p251, %s250, 15
        %s253 = smul.addr %s252, 4
        %s254 = scalar_lea.vmem %s0, %s253
        %s255 = smul.u32 16, %s24
      $region16: #{cand_bottleneck_block.8} parent=11 // pred_fallthru
        _
      // Predicated region
      $region17: #{cand_bottleneck_block.8} parent=11 // pred_check
        %p256 = pneg %p73
      $region18: #{cand_bottleneck_block.8} parent=11 // pred_check_branch
        %258 = sbr.rel (%p256) target = $region20
      $region19: #{cand_bottleneck_block.8} parent=11 // pred_region
        _
      $region20: #{cand_bottleneck_block.8} parent=11 // pred_fallthru
        _
      // Predicated region
      $region21: #{cand_bottleneck_block.8} parent=11 // pred_check
        %p259 = pneg %p94
      $region22: #{cand_bottleneck_block.8} parent=11 // pred_check_branch
        %261 = sbr.rel (%p259) target = $region24
      $region23: #{cand_bottleneck_block.8} parent=11 // pred_region
        _
      $region24: #{cand_bottleneck_block.8} parent=11 // pred_fallthru
        _
      // Predicated region
      $region25: #{cand_bottleneck_block.8} parent=11 // pred_check
        %p262 = pneg %p115
      $region26: #{cand_bottleneck_block.8} parent=11 // pred_check_branch
        %264 = sbr.rel (%p262) target = $region28
      $region27: #{cand_bottleneck_block.8} parent=11 // pred_region
        _
      $region28: #{cand_bottleneck_block.8} parent=11 // pred_fallthru
        _
      // Predicated region
      $region29: #{cand_bottleneck_block.8} parent=11 // pred_check
        %p265 = pneg %p141
      $region30: #{cand_bottleneck_block.8} parent=11 // pred_check_branch
        %267 = sbr.rel (%p265) target = $region32
      $region31: #{cand_bottleneck_block.8} parent=11 // pred_region
        %s268 = smul.u32 16, %s24
        %p269 = scmp.lt.s32.totalorder %s268, 15
        %s270 = scalar_select %p269, %s268, 15
        %s271 = smul.addr %s270, 4
        %s272 = scalar_lea.vmem %s4, %s271
        %s273 = smul.u32 16, %s24
      $region32: #{cand_bottleneck_block.8} parent=11 // pred_fallthru
        _
      // Predicated region
      $region33: #{cand_bottleneck_block.8} parent=11 // pred_check
        %p274 = pneg %p162
      $region34: #{cand_bottleneck_block.8} parent=11 // pred_check_branch
        %276 = sbr.rel (%p274) target = $region36
      $region35: #{cand_bottleneck_block.8} parent=11 // pred_region
        _
      $region36: #{cand_bottleneck_block.8} parent=11 // pred_fallthru
        _
      // Predicated region
      $region37: #{cand_bottleneck_block.8} parent=11 // pred_check
        %p277 = pneg %p183
      $region38: #{cand_bottleneck_block.8} parent=11 // pred_check_branch
        %279 = sbr.rel (%p277) target = $region40
      $region39: #{cand_bottleneck_block.8} parent=11 // pred_region
        _
      $region40: #{cand_bottleneck_block.8} parent=11 // pred_fallthru
        _
      // Predicated region
      $region41: #{cand_bottleneck_block.8} parent=11 // pred_check
        %p280 = pneg %p204
      $region42: #{cand_bottleneck_block.8} parent=11 // pred_check_branch
        %282 = sbr.rel (%p280) target = $region44
      $region43: #{cand_bottleneck_block.8} parent=11 // pred_region
        _
      $region44: #{cand_bottleneck_block.8} parent=11 // pred_fallthru
        _
    $region12: #{cand_bottleneck_block.8} parent=5 // pred_fallthru
      _
    %p283 = scmp.lt.s32.totalorder %s14, 2
    // Predicated region
    $region45: #{cand_bottleneck_block.8} parent=5 // pred_check
      %p284 = pneg %p283
    $region46: #{cand_bottleneck_block.8} parent=5 // pred_check_branch
      %286 = sbr.rel (%p284) target = $region48
    $region47: #{cand_bottleneck_block.8} parent=5 // pred_region
      _
    $region48: #{cand_bottleneck_block.8} parent=5 // pred_fallthru
      _
    %p287 = scmp.le.s32.totalorder 1, %s14
    %p288 = scmp.lt.s32.totalorder %s14, 3
    %p289 = pnand %p287, %p288
    %p290 = pneg %p289
    // Predicated region
    $region49: #{cand_bottleneck_block.8} parent=5 // pred_check
      _
    $region50: #{cand_bottleneck_block.8} parent=5 // pred_check_branch
      %292 = sbr.rel (%p289) target = $region52
    $region51: #{cand_bottleneck_block.8} parent=5 // pred_region
      %s293 = ssub.s32 %s14, 1
      %s294 = smul.u32 16, %s24
      %p295 = scmp.lt.s32.totalorder %s294, 15
      %s296 = scalar_select %p295, %s294, 15
      %s297 = smul.addr %s296, 4
      %s298 = scalar_lea.vmem %s0, %s297
      %p299 = pneg %p52
      %p300 = pneg %p49
      %p301 = pneg %p73
      %p302 = pneg %p70
      %p303 = pneg %p94
      %p304 = pneg %p91
      %p305 = pneg %p115
      %p306 = pneg %p112
      %s307 = smul.u32 16, %s24
      %p308 = scmp.lt.s32.totalorder %s307, 15
      %s309 = scalar_select %p308, %s307, 15
      %s310 = smul.addr %s309, 4
      %s311 = scalar_lea.vmem %s4, %s310
      %p312 = pneg %p141
      %p313 = pneg %p138
      %p314 = pneg %p162
      %p315 = pneg %p159
      %p316 = pneg %p183
      %p317 = pneg %p180
      %p318 = pneg %p204
      %p319 = pneg %p201
      %p320 = pneg %p232
      %p321 = pneg %p229
      %s322 = smul.u32 %s24, %s23
      %s323 = smul.u32 16, %s322
      %p324 = scmp.lt.s32.totalorder %s323, 15
      %s325 = scalar_select %p324, %s323, 15
      %s326 = smul.addr %s325, 4
      %s327 = scalar_lea.vmem %s8, %s326
      %s328 = smul.u32 16, %s24
      %p329 = scmp.lt.s32.totalorder %s328, 15
      %s330 = scalar_select %p329, %s328, 15
      %s331 = smul.addr %s330, 4
      %s332 = scalar_lea.vmem %s0, %s331
      %s333 = smul.u32 16, %s24
      %s334 = smul.u32 16, %s24
      %p335 = scmp.lt.s32.totalorder %s334, 15
      %s336 = scalar_select %p335, %s334, 15
      %s337 = smul.addr %s336, 4
      %s338 = scalar_lea.vmem %s4, %s337
      %s339 = smul.u32 16, %s24
      %s340 = smul.u32 %s24, %s23
      %s341 = smul.u32 16, %s340
      %p342 = scmp.lt.s32.totalorder %s341, 15
      %s343 = scalar_select %p342, %s341, 15
      %s344 = smul.addr %s343, 4
      %s345 = scalar_lea.vmem %s8, %s344
      %s346 = smul.u32 %s24, %s23
      %s347 = smul.u32 16, %s346
      %p349 = scmp.eq.s32.totalorder %s23, 0
      %p350 = scmp.eq.s32.totalorder %s24, 0
      %p351 = pnand %p349, %p350
      %p352 = pneg %p351
      // Predicated region
      $region53: #{cand_bottleneck_block.8} parent=51 // pred_check
        _
      $region54: #{cand_bottleneck_block.8} parent=51 // pred_check_branch
        %354 = sbr.rel (%p351) target = $region56
      $region55: #{cand_bottleneck_block.8} parent=51 // pred_region
        %355 = vst [vmem:[#allocation2] sm:$0x1] 0.0
        %356 = vst [vmem:[#allocation3] sm:$0x1] 0.0
        %357 = vst [vmem:[#allocation4] sm:$0x1] 0.0
        %358 = vst [vmem:[#allocation5] sm:$0x1] 0.0
      $region56: #{cand_bottleneck_block.8} parent=51 // pred_fallthru
        _
      %v359 = vld [vmem:[%s332] sm:$0xf]
      %v360 = vld [vmem:[%s332 + $0x4] sm:$0xf]
      %v361 = vld [vmem:[%s332 + $0x8] sm:$0xf]
      %v362 = vld [vmem:[%s332 + $0xc] sm:$0xf]
      %v363 = vld [vmem:[%s332 + $0x10] sm:$0xf]
      %v364 = vld [vmem:[%s332 + $0x14] sm:$0xf]
      %v365 = vld [vmem:[%s332 + $0x18] sm:$0xf]
      %v366 = vld [vmem:[%s332 + $0x1c] sm:$0xf]
      %v367 = vld [vmem:[%s332 + $0x20] sm:$0xf]
      %v368 = vld [vmem:[%s332 + $0x24] sm:$0xf]
      %v369 = vld [vmem:[%s332 + $0x28] sm:$0xf]
      %v370 = vld [vmem:[%s332 + $0x2c] sm:$0xf]
      %v371 = vld [vmem:[%s332 + $0x30] sm:$0xf]
      %v372 = vld [vmem:[%s332 + $0x34] sm:$0xf]
      %v373 = vld [vmem:[%s332 + $0x38] sm:$0xf]
      %v374 = vld [vmem:[%s332 + $0x3c] sm:$0xf]
      %v375 = vld [vmem:[%s1] sm:$0xf]
      %v376 = vld [vmem:[%s1 + $0x4] sm:$0xf]
      %v377 = vld [vmem:[%s1 + $0x8] sm:$0xf]
      %v378 = vld [vmem:[%s1 + $0xc] sm:$0xf]
      %v379 = vld [vmem:[%s1 + $0x10] sm:$0xf]
      %v380 = vld [vmem:[%s1 + $0x14] sm:$0xf]
      %v381 = vld [vmem:[%s1 + $0x18] sm:$0xf]
      %v382 = vld [vmem:[%s1 + $0x1c] sm:$0xf]
      %v383 = vld [vmem:[%s1 + $0x20] sm:$0xf]
      %v384 = vld [vmem:[%s1 + $0x24] sm:$0xf]
      %v385 = vld [vmem:[%s1 + $0x28] sm:$0xf]
      %v386 = vld [vmem:[%s1 + $0x2c] sm:$0xf]
      %v387 = vld [vmem:[%s1 + $0x30] sm:$0xf]
      %v388 = vld [vmem:[%s1 + $0x34] sm:$0xf]
      %v389 = vld [vmem:[%s1 + $0x38] sm:$0xf]
      %v390 = vld [vmem:[%s1 + $0x3c] sm:$0xf]
      %v407 = vunpack.c.l.b16 %v359
      %v408 = vunpack.c.l.b16 %v360
      %v409 = vunpack.c.l.b16 %v361
      %v410 = vunpack.c.l.b16 %v362
      %v411 = vunpack.c.l.b16 %v363
      %v412 = vunpack.c.l.b16 %v364
      %v413 = vunpack.c.l.b16 %v365
      %v414 = vunpack.c.l.b16 %v366
      %v415 = vunpack.c.l.b16 %v367
      %v416 = vunpack.c.l.b16 %v368
      %v417 = vunpack.c.l.b16 %v369
      %v418 = vunpack.c.l.b16 %v370
      %v419 = vunpack.c.l.b16 %v371
      %v420 = vunpack.c.l.b16 %v372
      %v421 = vunpack.c.l.b16 %v373
      %v422 = vunpack.c.l.b16 %v374
      %v423 = vpack.c.b16 %v408, %v407
      %v424 = vpack.c.b16 %v410, %v409
      %v425 = vpack.c.b16 %v412, %v411
      %v426 = vpack.c.b16 %v414, %v413
      %v427 = vpack.c.b16 %v416, %v415
      %v428 = vpack.c.b16 %v418, %v417
      %v429 = vpack.c.b16 %v420, %v419
      %v430 = vpack.c.b16 %v422, %v421
      %v455 = vunpack.c.l.b16 %v375
      %v456 = vunpack.c.l.b16 %v376
      %v457 = vunpack.c.l.b16 %v377
      %v458 = vunpack.c.l.b16 %v378
      %v459 = vunpack.c.l.b16 %v379
      %v460 = vunpack.c.l.b16 %v380
      %v461 = vunpack.c.l.b16 %v381
      %v462 = vunpack.c.l.b16 %v382
      %v463 = vunpack.c.l.b16 %v383
      %v464 = vunpack.c.l.b16 %v384
      %v465 = vunpack.c.l.b16 %v385
      %v466 = vunpack.c.l.b16 %v386
      %v467 = vunpack.c.l.b16 %v387
      %v468 = vunpack.c.l.b16 %v388
      %v469 = vunpack.c.l.b16 %v389
      %v470 = vunpack.c.l.b16 %v390
      %v471 = vpack.c.b16 %v456, %v455
      %v472 = vpack.c.b16 %v458, %v457
      %v473 = vpack.c.b16 %v460, %v459
      %v474 = vpack.c.b16 %v462, %v461
      %v475 = vpack.c.b16 %v464, %v463
      %v476 = vpack.c.b16 %v466, %v465
      %v477 = vpack.c.b16 %v468, %v467
      %v478 = vpack.c.b16 %v470, %v469
      %487 = vmatprep.subr.bf16.mxu0 0
      %488 = vmatpush1.bf16.msra.mxu0 %v471
      %489 = vmatprep.subr.bf16.mxu0 0
      %490 = vmatpush1.bf16.msra.mxu0 %v472
      %491 = vmatprep.subr.bf16.mxu0 0
      %492 = vmatpush1.bf16.msra.mxu0 %v473
      %493 = vmatprep.subr.bf16.mxu0 0
      %494 = vmatpush1.bf16.msra.mxu0 %v474
      %495 = vmatprep.subr.bf16.mxu0 0
      %496 = vmatpush1.bf16.msra.mxu0 %v475
      %497 = vmatprep.subr.bf16.mxu0 0
      %498 = vmatpush1.bf16.msra.mxu0 %v476
      %499 = vmatprep.subr.bf16.mxu0 0
      %500 = vmatpush1.bf16.msra.mxu0 %v477
      %501 = vmatprep.subr.bf16.mxu0 0
      %502 = vmatpush1.bf16.msra.mxu0 %v478
      %503 = vmatprep.subr.bf16.mxu0 0
      %504 = vmatpush1.bf16.msra.mxu0 0
      %505 = vmatprep.subr.bf16.mxu0 0
      %506 = vmatpush1.bf16.msra.mxu0 0
      %507 = vmatprep.subr.bf16.mxu0 0
      %508 = vmatpush1.bf16.msra.mxu0 0
      %509 = vmatprep.subr.bf16.mxu0 0
      %510 = vmatpush1.bf16.msra.mxu0 0
      %511 = vmatprep.subr.bf16.mxu0 0
      %512 = vmatpush1.bf16.msra.mxu0 0
      %513 = vmatprep.subr.bf16.mxu0 0
      %514 = vmatpush1.bf16.msra.mxu0 0
      %515 = vmatprep.subr.bf16.mxu0 0
      %516 = vmatpush1.bf16.msra.mxu0 0
      %517 = vmatprep.subr.bf16.mxu0 0
      %518 = vmatpush1.bf16.msra.mxu0 0
      %519 = vmatprep.mubr.bf16.mxu0 0
      %520 = vmatmul.mubr.bf16.gmra.mrb[0].mxu0 %v423
      %v521 = vpop.f32.mrb[0].mxu0
      %v522 = vadd.f32 0.0, %v521
      %v523 = vpop.f32.mrb[0].mxu0
      %v524 = vpop.f32.mrb[0].mxu0
      %v525 = vadd.f32 0.0, %v524
      %v526 = vpop.f32.mrb[0].mxu0
      %527 = vmatprep.mubr.bf16.mxu0 0
      %528 = vmatmul.mubr.bf16.gmra.mrb[0].mxu0 %v424
      %v529 = vpop.f32.mrb[0].mxu0
      %v530 = vadd.f32 0.0, %v529
      %v531 = vpop.f32.mrb[0].mxu0
      %v532 = vpop.f32.mrb[0].mxu0
      %v533 = vadd.f32 0.0, %v532
      %v534 = vpop.f32.mrb[0].mxu0
      %535 = vmatprep.mubr.bf16.mxu0 0
      %536 = vmatmul.mubr.bf16.gmra.mrb[0].mxu0 %v425
      %v537 = vpop.f32.mrb[0].mxu0
      %v538 = vadd.f32 0.0, %v537
      %v539 = vpop.f32.mrb[0].mxu0
      %v540 = vpop.f32.mrb[0].mxu0
      %v541 = vadd.f32 0.0, %v540
      %v542 = vpop.f32.mrb[0].mxu0
      %543 = vmatprep.mubr.bf16.mxu0 0
      %544 = vmatmul.mubr.bf16.gmra.mrb[0].mxu0 %v426
      %v545 = vpop.f32.mrb[0].mxu0
      %v546 = vadd.f32 0.0, %v545
      %v547 = vpop.f32.mrb[0].mxu0
      %v548 = vpop.f32.mrb[0].mxu0
      %v549 = vadd.f32 0.0, %v548
      %v550 = vpop.f32.mrb[0].mxu0
      %551 = vmatprep.mubr.bf16.mxu0 0
      %552 = vmatmul.mubr.bf16.gmra.mrb[0].mxu0 %v427
      %v553 = vpop.f32.mrb[0].mxu0
      %v554 = vadd.f32 0.0, %v553
      %v555 = vpop.f32.mrb[0].mxu0
      %v556 = vpop.f32.mrb[0].mxu0
      %v557 = vadd.f32 0.0, %v556
      %v558 = vpop.f32.mrb[0].mxu0
      %559 = vmatprep.mubr.bf16.mxu0 0
      %560 = vmatmul.mubr.bf16.gmra.mrb[0].mxu0 %v428
      %v561 = vpop.f32.mrb[0].mxu0
      %v562 = vadd.f32 0.0, %v561
      %v563 = vpop.f32.mrb[0].mxu0
      %v564 = vpop.f32.mrb[0].mxu0
      %v565 = vadd.f32 0.0, %v564
      %v566 = vpop.f32.mrb[0].mxu0
      %567 = vmatprep.mubr.bf16.mxu0 0
      %568 = vmatmul.mubr.bf16.gmra.mrb[0].mxu0 %v429
      %v569 = vpop.f32.mrb[0].mxu0
      %v570 = vadd.f32 0.0, %v569
      %v571 = vpop.f32.mrb[0].mxu0
      %v572 = vpop.f32.mrb[0].mxu0
      %v573 = vadd.f32 0.0, %v572
      %v574 = vpop.f32.mrb[0].mxu0
      %575 = vmatprep.mubr.bf16.mxu0 0
      %576 = vmatmul.mubr.bf16.gmra.mrb[0].mxu0 %v430
      %v577 = vpop.f32.mrb[0].mxu0
      %v578 = vadd.f32 0.0, %v577
      %v579 = vpop.f32.mrb[0].mxu0
      %v580 = vpop.f32.mrb[0].mxu0
      %v581 = vadd.f32 0.0, %v580
      %v582 = vpop.f32.mrb[0].mxu0
      %583 = vdwg.mxu0
      %v584 = vld [vmem:[%s338] sm:$0xf]
      %v585 = vld [vmem:[%s338 + $0x4] sm:$0xf]
      %v586 = vld [vmem:[%s338 + $0x8] sm:$0xf]
      %v587 = vld [vmem:[%s338 + $0xc] sm:$0xf]
      %v588 = vld [vmem:[%s338 + $0x10] sm:$0xf]
      %v589 = vld [vmem:[%s338 + $0x14] sm:$0xf]
      %v590 = vld [vmem:[%s338 + $0x18] sm:$0xf]
      %v591 = vld [vmem:[%s338 + $0x1c] sm:$0xf]
      %v592 = vld [vmem:[%s338 + $0x20] sm:$0xf]
      %v593 = vld [vmem:[%s338 + $0x24] sm:$0xf]
      %v594 = vld [vmem:[%s338 + $0x28] sm:$0xf]
      %v595 = vld [vmem:[%s338 + $0x2c] sm:$0xf]
      %v596 = vld [vmem:[%s338 + $0x30] sm:$0xf]
      %v597 = vld [vmem:[%s338 + $0x34] sm:$0xf]
      %v598 = vld [vmem:[%s338 + $0x38] sm:$0xf]
      %v599 = vld [vmem:[%s338 + $0x3c] sm:$0xf]
      %v600 = vld [vmem:[%s5] sm:$0xf]
      %v601 = vld [vmem:[%s5 + $0x4] sm:$0xf]
      %v602 = vld [vmem:[%s5 + $0x8] sm:$0xf]
      %v603 = vld [vmem:[%s5 + $0xc] sm:$0xf]
      %v604 = vld [vmem:[%s5 + $0x10] sm:$0xf]
      %v605 = vld [vmem:[%s5 + $0x14] sm:$0xf]
      %v606 = vld [vmem:[%s5 + $0x18] sm:$0xf]
      %v607 = vld [vmem:[%s5 + $0x1c] sm:$0xf]
      %v608 = vld [vmem:[%s5 + $0x20] sm:$0xf]
      %v609 = vld [vmem:[%s5 + $0x24] sm:$0xf]
      %v610 = vld [vmem:[%s5 + $0x28] sm:$0xf]
      %v611 = vld [vmem:[%s5 + $0x2c] sm:$0xf]
      %v612 = vld [vmem:[%s5 + $0x30] sm:$0xf]
      %v613 = vld [vmem:[%s5 + $0x34] sm:$0xf]
      %v614 = vld [vmem:[%s5 + $0x38] sm:$0xf]
      %v615 = vld [vmem:[%s5 + $0x3c] sm:$0xf]
      %v632 = vunpack.c.l.b16 %v584
      %v633 = vunpack.c.l.b16 %v585
      %v634 = vunpack.c.l.b16 %v586
      %v635 = vunpack.c.l.b16 %v587
      %v636 = vunpack.c.l.b16 %v588
      %v637 = vunpack.c.l.b16 %v589
      %v638 = vunpack.c.l.b16 %v590
      %v639 = vunpack.c.l.b16 %v591
      %v640 = vunpack.c.l.b16 %v592
      %v641 = vunpack.c.l.b16 %v593
      %v642 = vunpack.c.l.b16 %v594
      %v643 = vunpack.c.l.b16 %v595
      %v644 = vunpack.c.l.b16 %v596
      %v645 = vunpack.c.l.b16 %v597
      %v646 = vunpack.c.l.b16 %v598
      %v647 = vunpack.c.l.b16 %v599
      %v648 = vpack.c.b16 %v633, %v632
      %v649 = vpack.c.b16 %v635, %v634
      %v650 = vpack.c.b16 %v637, %v636
      %v651 = vpack.c.b16 %v639, %v638
      %v652 = vpack.c.b16 %v641, %v640
      %v653 = vpack.c.b16 %v643, %v642
      %v654 = vpack.c.b16 %v645, %v644
      %v655 = vpack.c.b16 %v647, %v646
      %v680 = vunpack.c.l.b16 %v600
      %v681 = vunpack.c.l.b16 %v601
      %v682 = vunpack.c.l.b16 %v602
      %v683 = vunpack.c.l.b16 %v603
      %v684 = vunpack.c.l.b16 %v604
      %v685 = vunpack.c.l.b16 %v605
      %v686 = vunpack.c.l.b16 %v606
      %v687 = vunpack.c.l.b16 %v607
      %v688 = vunpack.c.l.b16 %v608
      %v689 = vunpack.c.l.b16 %v609
      %v690 = vunpack.c.l.b16 %v610
      %v691 = vunpack.c.l.b16 %v611
      %v692 = vunpack.c.l.b16 %v612
      %v693 = vunpack.c.l.b16 %v613
      %v694 = vunpack.c.l.b16 %v614
      %v695 = vunpack.c.l.b16 %v615
      %v696 = vpack.c.b16 %v681, %v680
      %v697 = vpack.c.b16 %v683, %v682
      %v698 = vpack.c.b16 %v685, %v684
      %v699 = vpack.c.b16 %v687, %v686
      %v700 = vpack.c.b16 %v689, %v688
      %v701 = vpack.c.b16 %v691, %v690
      %v702 = vpack.c.b16 %v693, %v692
      %v703 = vpack.c.b16 %v695, %v694
      %712 = vmatprep.subr.bf16.mxu0 0
      %713 = vmatpush1.bf16.msra.mxu0 %v696
      %714 = vmatprep.subr.bf16.mxu0 0
      %715 = vmatpush1.bf16.msra.mxu0 %v697
      %716 = vmatprep.subr.bf16.mxu0 0
      %717 = vmatpush1.bf16.msra.mxu0 %v698
      %718 = vmatprep.subr.bf16.mxu0 0
      %719 = vmatpush1.bf16.msra.mxu0 %v699
      %720 = vmatprep.subr.bf16.mxu0 0
      %721 = vmatpush1.bf16.msra.mxu0 %v700
      %722 = vmatprep.subr.bf16.mxu0 0
      %723 = vmatpush1.bf16.msra.mxu0 %v701
      %724 = vmatprep.subr.bf16.mxu0 0
      %725 = vmatpush1.bf16.msra.mxu0 %v702
      %726 = vmatprep.subr.bf16.mxu0 0
      %727 = vmatpush1.bf16.msra.mxu0 %v703
      %728 = vmatprep.subr.bf16.mxu0 0
      %729 = vmatpush1.bf16.msra.mxu0 0
      %730 = vmatprep.subr.bf16.mxu0 0
      %731 = vmatpush1.bf16.msra.mxu0 0
      %732 = vmatprep.subr.bf16.mxu0 0
      %733 = vmatpush1.bf16.msra.mxu0 0
      %734 = vmatprep.subr.bf16.mxu0 0
      %735 = vmatpush1.bf16.msra.mxu0 0
      %736 = vmatprep.subr.bf16.mxu0 0
      %737 = vmatpush1.bf16.msra.mxu0 0
      %738 = vmatprep.subr.bf16.mxu0 0
      %739 = vmatpush1.bf16.msra.mxu0 0
      %740 = vmatprep.subr.bf16.mxu0 0
      %741 = vmatpush1.bf16.msra.mxu0 0
      %742 = vmatprep.subr.bf16.mxu0 0
      %743 = vmatpush1.bf16.msra.mxu0 0
      %744 = vmatprep.mubr.bf16.mxu0 0
      %745 = vmatmul.mubr.bf16.gmra.mrb[0].mxu0 %v648
      %v746 = vpop.f32.mrb[0].mxu0
      %v747 = vadd.f32 0.0, %v746
      %v748 = vpop.f32.mrb[0].mxu0
      %v749 = vpop.f32.mrb[0].mxu0
      %v750 = vadd.f32 0.0, %v749
      %v751 = vpop.f32.mrb[0].mxu0
      %752 = vmatprep.mubr.bf16.mxu0 0
      %753 = vmatmul.mubr.bf16.gmra.mrb[0].mxu0 %v649
      %v754 = vpop.f32.mrb[0].mxu0
      %v755 = vadd.f32 0.0, %v754
      %v756 = vpop.f32.mrb[0].mxu0
      %v757 = vpop.f32.mrb[0].mxu0
      %v758 = vadd.f32 0.0, %v757
      %v759 = vpop.f32.mrb[0].mxu0
      %760 = vmatprep.mubr.bf16.mxu0 0
      %761 = vmatmul.mubr.bf16.gmra.mrb[0].mxu0 %v650
      %v762 = vpop.f32.mrb[0].mxu0
      %v763 = vadd.f32 0.0, %v762
      %v764 = vpop.f32.mrb[0].mxu0
      %v765 = vpop.f32.mrb[0].mxu0
      %v766 = vadd.f32 0.0, %v765
      %v767 = vpop.f32.mrb[0].mxu0
      %768 = vmatprep.mubr.bf16.mxu0 0
      %769 = vmatmul.mubr.bf16.gmra.mrb[0].mxu0 %v651
      %v770 = vpop.f32.mrb[0].mxu0
      %v771 = vadd.f32 0.0, %v770
      %v772 = vpop.f32.mrb[0].mxu0
      %v773 = vpop.f32.mrb[0].mxu0
      %v774 = vadd.f32 0.0, %v773
      %v775 = vpop.f32.mrb[0].mxu0
      %776 = vmatprep.mubr.bf16.mxu0 0
      %777 = vmatmul.mubr.bf16.gmra.mrb[0].mxu0 %v652
      %v778 = vpop.f32.mrb[0].mxu0
      %v779 = vadd.f32 0.0, %v778
      %v780 = vpop.f32.mrb[0].mxu0
      %v781 = vpop.f32.mrb[0].mxu0
      %v782 = vadd.f32 0.0, %v781
      %v783 = vpop.f32.mrb[0].mxu0
      %784 = vmatprep.mubr.bf16.mxu0 0
      %785 = vmatmul.mubr.bf16.gmra.mrb[0].mxu0 %v653
      %v786 = vpop.f32.mrb[0].mxu0
      %v787 = vadd.f32 0.0, %v786
      %v788 = vpop.f32.mrb[0].mxu0
      %v789 = vpop.f32.mrb[0].mxu0
      %v790 = vadd.f32 0.0, %v789
      %v791 = vpop.f32.mrb[0].mxu0
      %792 = vmatprep.mubr.bf16.mxu0 0
      %793 = vmatmul.mubr.bf16.gmra.mrb[0].mxu0 %v654
      %v794 = vpop.f32.mrb[0].mxu0
      %v795 = vadd.f32 0.0, %v794
      %v796 = vpop.f32.mrb[0].mxu0
      %v797 = vpop.f32.mrb[0].mxu0
      %v798 = vadd.f32 0.0, %v797
      %v799 = vpop.f32.mrb[0].mxu0
      %800 = vmatprep.mubr.bf16.mxu0 0
      %801 = vmatmul.mubr.bf16.gmra.mrb[0].mxu0 %v655
      %v802 = vpop.f32.mrb[0].mxu0
      %v803 = vadd.f32 0.0, %v802
      %v804 = vpop.f32.mrb[0].mxu0
      %v805 = vpop.f32.mrb[0].mxu0
      %v806 = vadd.f32 0.0, %v805
      %v807 = vpop.f32.mrb[0].mxu0
      %808 = vdwg.mxu0
      // Predicated region
      $region57: #{cand_bottleneck_block.8} parent=51 // pred_check
        %p809 = pneg %p349
      $region58: #{cand_bottleneck_block.8} parent=51 // pred_check_branch
        %811 = sbr.rel (%p809) target = $region60
      $region59: #{cand_bottleneck_block.8} parent=51 // pred_region
        %v812 = vld [vmem:[#allocation2] sm:$0x1]
        %v813 = vadd.f32 %v522, %v525
        %v814 = vadd.f32 %v813, %v530
        %v815 = vadd.f32 %v814, %v533
        %v816 = vadd.f32 %v815, %v538
        %v817 = vadd.f32 %v816, %v541
        %v818 = vadd.f32 %v817, %v546
        %v819 = vadd.f32 %v818, %v549
        %v820 = vadd.f32 %v819, %v554
        %v821 = vadd.f32 %v820, %v557
        %v822 = vadd.f32 %v821, %v562
        %v823 = vadd.f32 %v822, %v565
        %v824 = vadd.f32 %v823, %v570
        %v825 = vadd.f32 %v824, %v573
        %v826 = vadd.f32 %v825, %v578
        %v827 = vadd.f32 %v826, %v581
        %v828 = vrot.slane %v827, 4
        %v829 = vadd.f32 %v827, %v828
        %v830 = vrot.slane %v829, 2
        %v831 = vadd.f32 %v829, %v830
        %v832 = vrot.slane %v831, 1
        %v833 = vadd.f32 %v831, %v832
        %v834 = vadd.f32 %v812, %v833
        %835 = vst [vmem:[#allocation2] sm:$0x1] %v834
        %v836 = vld [vmem:[#allocation3] sm:$0x1]
        %v837 = vmul.f32 %v522, %v522
        %v838 = vmul.f32 %v525, %v525
        %v839 = vmul.f32 %v530, %v530
        %v840 = vmul.f32 %v533, %v533
        %v841 = vmul.f32 %v538, %v538
        %v842 = vmul.f32 %v541, %v541
        %v843 = vmul.f32 %v546, %v546
        %v844 = vmul.f32 %v549, %v549
        %v845 = vmul.f32 %v554, %v554
        %v846 = vmul.f32 %v557, %v557
        %v847 = vmul.f32 %v562, %v562
        %v848 = vmul.f32 %v565, %v565
        %v849 = vmul.f32 %v570, %v570
        %v850 = vmul.f32 %v573, %v573
        %v851 = vmul.f32 %v578, %v578
        %v852 = vmul.f32 %v581, %v581
        %v853 = vadd.f32 %v837, %v838
        %v854 = vadd.f32 %v853, %v839
        %v855 = vadd.f32 %v854, %v840
        %v856 = vadd.f32 %v855, %v841
        %v857 = vadd.f32 %v856, %v842
        %v858 = vadd.f32 %v857, %v843
        %v859 = vadd.f32 %v858, %v844
        %v860 = vadd.f32 %v859, %v845
        %v861 = vadd.f32 %v860, %v846
        %v862 = vadd.f32 %v861, %v847
        %v863 = vadd.f32 %v862, %v848
        %v864 = vadd.f32 %v863, %v849
        %v865 = vadd.f32 %v864, %v850
        %v866 = vadd.f32 %v865, %v851
        %v867 = vadd.f32 %v866, %v852
        %v868 = vrot.slane %v867, 4
        %v869 = vadd.f32 %v867, %v868
        %v870 = vrot.slane %v869, 2
        %v871 = vadd.f32 %v869, %v870
        %v872 = vrot.slane %v871, 1
        %v873 = vadd.f32 %v871, %v872
        %v874 = vadd.f32 %v836, %v873
        %875 = vst [vmem:[#allocation3] sm:$0x1] %v874
        %v876 = vld [vmem:[#allocation4] sm:$0x1]
        %v877 = vadd.f32 %v747, %v750
        %v878 = vadd.f32 %v877, %v755
        %v879 = vadd.f32 %v878, %v758
        %v880 = vadd.f32 %v879, %v763
        %v881 = vadd.f32 %v880, %v766
        %v882 = vadd.f32 %v881, %v771
        %v883 = vadd.f32 %v882, %v774
        %v884 = vadd.f32 %v883, %v779
        %v885 = vadd.f32 %v884, %v782
        %v886 = vadd.f32 %v885, %v787
        %v887 = vadd.f32 %v886, %v790
        %v888 = vadd.f32 %v887, %v795
        %v889 = vadd.f32 %v888, %v798
        %v890 = vadd.f32 %v889, %v803
        %v891 = vadd.f32 %v890, %v806
        %v892 = vrot.slane %v891, 4
        %v893 = vadd.f32 %v891, %v892
        %v894 = vrot.slane %v893, 2
        %v895 = vadd.f32 %v893, %v894
        %v896 = vrot.slane %v895, 1
        %v897 = vadd.f32 %v895, %v896
        %v898 = vadd.f32 %v876, %v897
        %899 = vst [vmem:[#allocation4] sm:$0x1] %v898
        %v900 = vld [vmem:[#allocation5] sm:$0x1]
        %v901 = vmul.f32 %v747, %v747
        %v902 = vmul.f32 %v750, %v750
        %v903 = vmul.f32 %v755, %v755
        %v904 = vmul.f32 %v758, %v758
        %v905 = vmul.f32 %v763, %v763
        %v906 = vmul.f32 %v766, %v766
        %v907 = vmul.f32 %v771, %v771
        %v908 = vmul.f32 %v774, %v774
        %v909 = vmul.f32 %v779, %v779
        %v910 = vmul.f32 %v782, %v782
        %v911 = vmul.f32 %v787, %v787
        %v912 = vmul.f32 %v790, %v790
        %v913 = vmul.f32 %v795, %v795
        %v914 = vmul.f32 %v798, %v798
        %v915 = vmul.f32 %v803, %v803
        %v916 = vmul.f32 %v806, %v806
        %v917 = vadd.f32 %v901, %v902
        %v918 = vadd.f32 %v917, %v903
        %v919 = vadd.f32 %v918, %v904
        %v920 = vadd.f32 %v919, %v905
        %v921 = vadd.f32 %v920, %v906
        %v922 = vadd.f32 %v921, %v907
        %v923 = vadd.f32 %v922, %v908
        %v924 = vadd.f32 %v923, %v909
        %v925 = vadd.f32 %v924, %v910
        %v926 = vadd.f32 %v925, %v911
        %v927 = vadd.f32 %v926, %v912
        %v928 = vadd.f32 %v927, %v913
        %v929 = vadd.f32 %v928, %v914
        %v930 = vadd.f32 %v929, %v915
        %v931 = vadd.f32 %v930, %v916
        %v932 = vrot.slane %v931, 4
        %v933 = vadd.f32 %v931, %v932
        %v934 = vrot.slane %v933, 2
        %v935 = vadd.f32 %v933, %v934
        %v936 = vrot.slane %v935, 1
        %v937 = vadd.f32 %v935, %v936
        %v938 = vadd.f32 %v900, %v937
        %939 = vst [vmem:[#allocation5] sm:$0x1] %v938
      $region60: #{cand_bottleneck_block.8} parent=51 // pred_fallthru
        _
      %p940 = scmp.eq.s32.totalorder %s23, 1
      // Predicated region
      $region61: #{cand_bottleneck_block.8} parent=51 // pred_check
        %p941 = pneg %p940
      $region62: #{cand_bottleneck_block.8} parent=51 // pred_check_branch
        %943 = sbr.rel (%p941) target = $region64
      $region63: #{cand_bottleneck_block.8} parent=51 // pred_region
        %v944 = vld [vmem:[#allocation2] sm:$0x1]
        %v945 = vmul.f32 %v944, 0.0078125
        %v946 = vld [vmem:[#allocation3] sm:$0x1]
        %v947 = vmul.f32 %v946, 0.0078125
        %v948 = vmul.f32 %v945, %v945
        %v949 = vsub.f32 %v947, %v948
        %v950 = vmax.f32 %v949, 0.0
        %v952 = vlaneseq
        %v953 = vshrl.u32 %v952, 7
        %v954 = vsub.s32 0, %v953
        %v955 = vrot.slane %v945, %v954
        %v957 = vsub.f32 %v522, %v955
        %v958 = vsub.f32 %v525, %v955
        %v959 = vsub.f32 %v530, %v955
        %v960 = vsub.f32 %v533, %v955
        %v961 = vsub.f32 %v538, %v955
        %v962 = vsub.f32 %v541, %v955
        %v963 = vsub.f32 %v546, %v955
        %v964 = vsub.f32 %v549, %v955
        %v965 = vsub.f32 %v554, %v955
        %v966 = vsub.f32 %v557, %v955
        %v967 = vsub.f32 %v562, %v955
        %v968 = vsub.f32 %v565, %v955
        %v969 = vsub.f32 %v570, %v955
        %v970 = vsub.f32 %v573, %v955
        %v971 = vsub.f32 %v578, %v955
        %v972 = vsub.f32 %v581, %v955
        %v973 = vadd.f32 %v950, 1e-05
        %v974 = vrsqrt.pop %v973
        %v975 = vld [vmem:[%s2] sm:$0x1]
        %v976 = vmul.f32 %v974, %v975
        %v978 = vlaneseq
        %v979 = vshrl.u32 %v978, 7
        %v980 = vsub.s32 0, %v979
        %v981 = vrot.slane %v976, %v980
        %v983 = vmul.f32 %v957, %v981
        %v984 = vmul.f32 %v958, %v981
        %v985 = vmul.f32 %v959, %v981
        %v986 = vmul.f32 %v960, %v981
        %v987 = vmul.f32 %v961, %v981
        %v988 = vmul.f32 %v962, %v981
        %v989 = vmul.f32 %v963, %v981
        %v990 = vmul.f32 %v964, %v981
        %v991 = vmul.f32 %v965, %v981
        %v992 = vmul.f32 %v966, %v981
        %v993 = vmul.f32 %v967, %v981
        %v994 = vmul.f32 %v968, %v981
        %v995 = vmul.f32 %v969, %v981
        %v996 = vmul.f32 %v970, %v981
        %v997 = vmul.f32 %v971, %v981
        %v998 = vmul.f32 %v972, %v981
        %v999 = vld [vmem:[%s3] sm:$0x1]
        %v1001 = vlaneseq
        %v1002 = vshrl.u32 %v1001, 7
        %v1003 = vsub.s32 0, %v1002
        %v1004 = vrot.slane %v999, %v1003
        %v1006 = vadd.f32 %v983, %v1004
        %v1007 = vadd.f32 %v984, %v1004
        %v1008 = vadd.f32 %v985, %v1004
        %v1009 = vadd.f32 %v986, %v1004
        %v1010 = vadd.f32 %v987, %v1004
        %v1011 = vadd.f32 %v988, %v1004
        %v1012 = vadd.f32 %v989, %v1004
        %v1013 = vadd.f32 %v990, %v1004
        %v1014 = vadd.f32 %v991, %v1004
        %v1015 = vadd.f32 %v992, %v1004
        %v1016 = vadd.f32 %v993, %v1004
        %v1017 = vadd.f32 %v994, %v1004
        %v1018 = vadd.f32 %v995, %v1004
        %v1019 = vadd.f32 %v996, %v1004
        %v1020 = vadd.f32 %v997, %v1004
        %v1021 = vadd.f32 %v998, %v1004
        %v1022 = vld [vmem:[#allocation4] sm:$0x1]
        %v1023 = vmul.f32 %v1022, 0.0078125
        %v1024 = vld [vmem:[#allocation5] sm:$0x1]
        %v1025 = vmul.f32 %v1024, 0.0078125
        %v1026 = vmul.f32 %v1023, %v1023
        %v1027 = vsub.f32 %v1025, %v1026
        %v1028 = vmax.f32 %v1027, 0.0
        %v1030 = vlaneseq
        %v1031 = vshrl.u32 %v1030, 7
        %v1032 = vsub.s32 0, %v1031
        %v1033 = vrot.slane %v1023, %v1032
        %v1035 = vsub.f32 %v747, %v1033
        %v1036 = vsub.f32 %v750, %v1033
        %v1037 = vsub.f32 %v755, %v1033
        %v1038 = vsub.f32 %v758, %v1033
        %v1039 = vsub.f32 %v763, %v1033
        %v1040 = vsub.f32 %v766, %v1033
        %v1041 = vsub.f32 %v771, %v1033
        %v1042 = vsub.f32 %v774, %v1033
        %v1043 = vsub.f32 %v779, %v1033
        %v1044 = vsub.f32 %v782, %v1033
        %v1045 = vsub.f32 %v787, %v1033
        %v1046 = vsub.f32 %v790, %v1033
        %v1047 = vsub.f32 %v795, %v1033
        %v1048 = vsub.f32 %v798, %v1033
        %v1049 = vsub.f32 %v803, %v1033
        %v1050 = vsub.f32 %v806, %v1033
        %v1051 = vadd.f32 %v1028, 1e-05
        %v1052 = vrsqrt.pop %v1051
        %v1053 = vld [vmem:[%s6] sm:$0x1]
        %v1054 = vmul.f32 %v1052, %v1053
        %v1056 = vlaneseq
        %v1057 = vshrl.u32 %v1056, 7
        %v1058 = vsub.s32 0, %v1057
        %v1059 = vrot.slane %v1054, %v1058
        %v1061 = vmul.f32 %v1035, %v1059
        %v1062 = vmul.f32 %v1036, %v1059
        %v1063 = vmul.f32 %v1037, %v1059
        %v1064 = vmul.f32 %v1038, %v1059
        %v1065 = vmul.f32 %v1039, %v1059
        %v1066 = vmul.f32 %v1040, %v1059
        %v1067 = vmul.f32 %v1041, %v1059
        %v1068 = vmul.f32 %v1042, %v1059
        %v1069 = vmul.f32 %v1043, %v1059
        %v1070 = vmul.f32 %v1044, %v1059
        %v1071 = vmul.f32 %v1045, %v1059
        %v1072 = vmul.f32 %v1046, %v1059
        %v1073 = vmul.f32 %v1047, %v1059
        %v1074 = vmul.f32 %v1048, %v1059
        %v1075 = vmul.f32 %v1049, %v1059
        %v1076 = vmul.f32 %v1050, %v1059
        %v1077 = vld [vmem:[%s7] sm:$0x1]
        %v1079 = vlaneseq
        %v1080 = vshrl.u32 %v1079, 7
        %v1081 = vsub.s32 0, %v1080
        %v1082 = vrot.slane %v1077, %v1081
        %v1084 = vadd.f32 %v1061, %v1082
        %v1085 = vadd.f32 %v1062, %v1082
        %v1086 = vadd.f32 %v1063, %v1082
        %v1087 = vadd.f32 %v1064, %v1082
        %v1088 = vadd.f32 %v1065, %v1082
        %v1089 = vadd.f32 %v1066, %v1082
        %v1090 = vadd.f32 %v1067, %v1082
        %v1091 = vadd.f32 %v1068, %v1082
        %v1092 = vadd.f32 %v1069, %v1082
        %v1093 = vadd.f32 %v1070, %v1082
        %v1094 = vadd.f32 %v1071, %v1082
        %v1095 = vadd.f32 %v1072, %v1082
        %v1096 = vadd.f32 %v1073, %v1082
        %v1097 = vadd.f32 %v1074, %v1082
        %v1098 = vadd.f32 %v1075, %v1082
        %v1099 = vadd.f32 %v1076, %v1082
        %v1100 = vadd.f32 %v1006, %v1084
        %v1101 = vadd.f32 %v1007, %v1085
        %v1102 = vadd.f32 %v1008, %v1086
        %v1103 = vadd.f32 %v1009, %v1087
        %v1104 = vadd.f32 %v1010, %v1088
        %v1105 = vadd.f32 %v1011, %v1089
        %v1106 = vadd.f32 %v1012, %v1090
        %v1107 = vadd.f32 %v1013, %v1091
        %v1108 = vadd.f32 %v1014, %v1092
        %v1109 = vadd.f32 %v1015, %v1093
        %v1110 = vadd.f32 %v1016, %v1094
        %v1111 = vadd.f32 %v1017, %v1095
        %v1112 = vadd.f32 %v1018, %v1096
        %v1113 = vadd.f32 %v1019, %v1097
        %v1114 = vadd.f32 %v1020, %v1098
        %v1115 = vadd.f32 %v1021, %v1099
        %v1116 = vmax.f32 %v1100, 0.0
        %v1117 = vmax.f32 %v1101, 0.0
        %v1118 = vmax.f32 %v1102, 0.0
        %v1119 = vmax.f32 %v1103, 0.0
        %v1120 = vmax.f32 %v1104, 0.0
        %v1121 = vmax.f32 %v1105, 0.0
        %v1122 = vmax.f32 %v1106, 0.0
        %v1123 = vmax.f32 %v1107, 0.0
        %v1124 = vmax.f32 %v1108, 0.0
        %v1125 = vmax.f32 %v1109, 0.0
        %v1126 = vmax.f32 %v1110, 0.0
        %v1127 = vmax.f32 %v1111, 0.0
        %v1128 = vmax.f32 %v1112, 0.0
        %v1129 = vmax.f32 %v1113, 0.0
        %v1130 = vmax.f32 %v1114, 0.0
        %v1131 = vmax.f32 %v1115, 0.0
        %v1132 = vpack.c.bf16 %v1117, %v1116
        %v1133 = vpack.c.bf16 %v1119, %v1118
        %v1134 = vpack.c.bf16 %v1121, %v1120
        %v1135 = vpack.c.bf16 %v1123, %v1122
        %v1136 = vpack.c.bf16 %v1125, %v1124
        %v1137 = vpack.c.bf16 %v1127, %v1126
        %v1138 = vpack.c.bf16 %v1129, %v1128
        %v1139 = vpack.c.bf16 %v1131, %v1130
        %v1148 = vunpack.c.l.b16 %v1132
        %v1149 = vunpack.c.h.b16 %v1132
        %v1150 = vunpack.c.l.b16 %v1133
        %v1151 = vunpack.c.h.b16 %v1133
        %v1152 = vunpack.c.l.b16 %v1134
        %v1153 = vunpack.c.h.b16 %v1134
        %v1154 = vunpack.c.l.b16 %v1135
        %v1155 = vunpack.c.h.b16 %v1135
        %v1156 = vunpack.c.l.b16 %v1136
        %v1157 = vunpack.c.h.b16 %v1136
        %v1158 = vunpack.c.l.b16 %v1137
        %v1159 = vunpack.c.h.b16 %v1137
        %v1160 = vunpack.c.l.b16 %v1138
        %v1161 = vunpack.c.h.b16 %v1138
        %v1162 = vunpack.c.l.b16 %v1139
        %v1163 = vunpack.c.h.b16 %v1139
        %v1164 = vpack.c.b16 %v1148, %v1148
        %v1165 = vpack.c.b16 %v1149, %v1149
        %v1166 = vpack.c.b16 %v1150, %v1150
        %v1167 = vpack.c.b16 %v1151, %v1151
        %v1168 = vpack.c.b16 %v1152, %v1152
        %v1169 = vpack.c.b16 %v1153, %v1153
        %v1170 = vpack.c.b16 %v1154, %v1154
        %v1171 = vpack.c.b16 %v1155, %v1155
        %v1172 = vpack.c.b16 %v1156, %v1156
        %v1173 = vpack.c.b16 %v1157, %v1157
        %v1174 = vpack.c.b16 %v1158, %v1158
        %v1175 = vpack.c.b16 %v1159, %v1159
        %v1176 = vpack.c.b16 %v1160, %v1160
        %v1177 = vpack.c.b16 %v1161, %v1161
        %v1178 = vpack.c.b16 %v1162, %v1162
        %v1179 = vpack.c.b16 %v1163, %v1163
        %1196 = vst [vmem:[%s345] sm:$0xf] %v1164
        %1197 = vst [vmem:[%s345 + $0x4] sm:$0xf] %v1165
        %1198 = vst [vmem:[%s345 + $0x8] sm:$0xf] %v1166
        %1199 = vst [vmem:[%s345 + $0xc] sm:$0xf] %v1167
        %1200 = vst [vmem:[%s345 + $0x10] sm:$0xf] %v1168
        %1201 = vst [vmem:[%s345 + $0x14] sm:$0xf] %v1169
        %1202 = vst [vmem:[%s345 + $0x18] sm:$0xf] %v1170
        %1203 = vst [vmem:[%s345 + $0x1c] sm:$0xf] %v1171
        %1204 = vst [vmem:[%s345 + $0x20] sm:$0xf] %v1172
        %1205 = vst [vmem:[%s345 + $0x24] sm:$0xf] %v1173
        %1206 = vst [vmem:[%s345 + $0x28] sm:$0xf] %v1174
        %1207 = vst [vmem:[%s345 + $0x2c] sm:$0xf] %v1175
        %1208 = vst [vmem:[%s345 + $0x30] sm:$0xf] %v1176
        %1209 = vst [vmem:[%s345 + $0x34] sm:$0xf] %v1177
        %1210 = vst [vmem:[%s345 + $0x38] sm:$0xf] %v1178
        %1211 = vst [vmem:[%s345 + $0x3c] sm:$0xf] %v1179
      $region64: #{cand_bottleneck_block.8} parent=51 // pred_fallthru
        _
      %s1212 = smul.u32 %s24, %s23
      %s1213 = smul.u32 16, %s1212
      %p1214 = scmp.lt.s32.totalorder %s1213, 15
      %s1215 = scalar_select %p1214, %s1213, 15
      %s1216 = smul.addr %s1215, 4
      %s1217 = scalar_lea.vmem %s8, %s1216
      // Predicated region
      $region65: #{cand_bottleneck_block.8} parent=51 // pred_check
        %p1218 = pneg %p229
      $region66: #{cand_bottleneck_block.8} parent=51 // pred_check_branch
        %1220 = sbr.rel (%p1218) target = $region68
      $region67: #{cand_bottleneck_block.8} parent=51 // pred_region
        %s1221 = smul.u32 %s24, %s23
        %s1222 = smul.u32 16, %s1221
      $region68: #{cand_bottleneck_block.8} parent=51 // pred_fallthru
        _
    $region52: #{cand_bottleneck_block.8} parent=5 // pred_fallthru
      _
    %p1223 = scmp.le.s32.totalorder 2, %s14
    // Predicated region
    $region69: #{cand_bottleneck_block.8} parent=5 // pred_check
      %p1224 = pneg %p1223
    $region70: #{cand_bottleneck_block.8} parent=5 // pred_check_branch
      %1226 = sbr.rel (%p1224) target = $region72
    $region71: #{cand_bottleneck_block.8} parent=5 // pred_region
      %s1227 = ssub.s32 %s14, 2
      // Predicated region
      $region73: #{cand_bottleneck_block.8} parent=71 // pred_check
        %p1228 = pneg %p235
      $region74: #{cand_bottleneck_block.8} parent=71 // pred_check_branch
        %1230 = sbr.rel (%p1228) target = $region76
      $region75: #{cand_bottleneck_block.8} parent=71 // pred_region
        %s1231 = smul.u32 %s26, %s25
        %s1232 = smul.u32 16, %s1231
        %p1233 = scmp.lt.s32.totalorder %s1232, 15
        %s1234 = scalar_select %p1233, %s1232, 15
        %s1235 = smul.addr %s1234, 4
        %s1236 = scalar_lea.vmem %s8, %s1235
      $region76: #{cand_bottleneck_block.8} parent=71 // pred_fallthru
        _
    $region72: #{cand_bottleneck_block.8} parent=5 // pred_fallthru
      _
  $region6: #{cand_bottleneck_block.8} parent=0 // loop_footer
    %s18 = sadd.s32 1, %s14
  $region7: #{cand_bottleneck_block.8} parent=0 // loop_footer_branch
    %13 = sbr.rel target = $region3
  $region8: #{cand_bottleneck_block.8} parent=0 // loop_exit
    _

// kernel: cand_bottleneck_block.9
$region0: #{cand_bottleneck_block.9}
  #allocation0 [shape = 'u32[]', space=smem, size = 0x4, offset = 0x4, fixed_abs, tag = 'smem constant byte address 0x4 - core index']
  #allocation1 [shape = 'u32[144,128]{1,0:T(1,128)}', space=vmem, size = 0x12000, scoped, tag = 'internal scratch']
  #allocation2 [shape = 'f32[1,128]{1,0:T(1,128)}', space=vmem, size = 0x200, scoped, tag = 'scratch operand']
  #allocation3 [shape = 'f32[1,128]{1,0:T(1,128)}', space=vmem, size = 0x200, scoped, tag = 'scratch operand']
  %s0 = inlined_call_operand.vmem [shape: bf16[128,128], index: 0, kind: input, shape index: {}]
  %s1 = inlined_call_operand.vmem [shape: bf16[128,128], index: 1, kind: input, shape index: {}]
  %s2 = inlined_call_operand.vmem [shape: f32[1,128], index: 2, kind: input, shape index: {}]
  %s3 = inlined_call_operand.vmem [shape: f32[1,128], index: 3, kind: input, shape index: {}]
  %s4 = inlined_call_operand.vmem [shape: bf16[128,128], index: 4, kind: output, shape index: {}]
  %s5 = sld [smem:[#allocation0]]
  $region61: #{cand_bottleneck_block.9} parent=0
    _
  %s7 = ssub.s32 1, %s5
  %s8 = scalar_select 0, %s7, %s5
  loop: start=0, step=1, limit=4
  $region2: #{cand_bottleneck_block.9} parent=0 // loop_pre_header
    _
  $region3: #{cand_bottleneck_block.9} parent=0 // loop_header
    %s10 = sphi 0, %s14
    %p11 = scmp.ge.s32.totalorder %s10, 4
    %s17 = sphi 0, %s29
    %s18 = sphi 0, %s25
    %s19 = sphi 0, %s17
    %s20 = sphi 0, %s18
    %s21 = sphi 0, %s19
    %s22 = sphi 0, %s20
    %s32 = sphi 0, %s34
    %s35 = sphi 0, %s32
    %s36 = sphi 0, %s35
    %s52 = sphi 0, %s36
    %s56 = sphi 0, %s56
    %s58 = sphi 0, %s56
    %s59 = sphi 0, %s58
    %s73 = sphi 0, %s59
    %s77 = sphi 0, %s77
    %s79 = sphi 0, %s77
    %s80 = sphi 0, %s79
    %s94 = sphi 0, %s80
    %s98 = sphi 0, %s98
    %s100 = sphi 0, %s98
    %s101 = sphi 0, %s100
    %s115 = sphi 0, %s101
    %s123 = sphi 0, %s125
    %s126 = sphi 0, %s123
    %s127 = sphi 0, %s126
    %s143 = sphi 0, %s127
  $region4: #{cand_bottleneck_block.9} parent=0 // loop_header_branch
    %13 = sbr.rel (%p11) target = $region8
  $region5: #{cand_bottleneck_block.9} parent=0 // loop_body
    %s15 = ssub.s32 %s10, 1
    %s16 = ssub.s32 %s10, 2
    %s23 = sadd.s32 1, %s18
    %p24 = scmp.ge.s32.totalorder %s23, 1
    %s25 = scalar_select %p24, 0, %s23
    %s26 = sadd.s32 1, %s17
    %s27 = scalar_select %p24, %s26, %s17
    %p28 = scmp.ge.s32.totalorder %s27, 2
    %s29 = scalar_select %p28, 0, %s27
    %s30 = ssub.s32 %s18, %s25
    %p31 = scmp.eq.s32.totalorder %s30, 0
    %s33 = sadd.s32 %s32, 1
    %s34 = scalar_select %p31, %s32, %s33
    %p37 = pneg %p31
    %p38 = scmp.eq.s32.totalorder %s10, 1
    %p39 = por %p37, %p38
    %p40 = scmp.ne.s32.totalorder %s32, %s35
    %p41 = scmp.eq.s32.totalorder %s10, 0
    %p42 = por %p40, %p41
    %p43 = scmp.ne.s32.totalorder %s32, %s35
    %p44 = scmp.eq.s32.totalorder %s15, 1
    %p45 = por %p43, %p44
    %p46 = scmp.ne.s32.totalorder %s35, %s36
    %p47 = scmp.eq.s32.totalorder %s15, 0
    %p48 = por %p46, %p47
    %p49 = scmp.ne.s32.totalorder %s35, %s36
    %p50 = scmp.eq.s32.totalorder %s16, 1
    %p51 = por %p49, %p50
    %p53 = scmp.ne.s32.totalorder %s36, %s52
    %p54 = scmp.eq.s32.totalorder %s16, 0
    %p55 = por %p53, %p54
    %s57 = sadd.s32 %s56, 1
    %p60 = scmp.eq.s32.totalorder %s10, 1
    %p61 = scmp.ne.s32.totalorder %s56, %s58
    %p62 = scmp.eq.s32.totalorder %s10, 0
    %p63 = por %p61, %p62
    %p64 = scmp.ne.s32.totalorder %s56, %s58
    %p65 = scmp.eq.s32.totalorder %s15, 1
    %p66 = por %p64, %p65
    %p67 = scmp.ne.s32.totalorder %s58, %s59
    %p68 = scmp.eq.s32.totalorder %s15, 0
    %p69 = por %p67, %p68
    %p70 = scmp.ne.s32.totalorder %s58, %s59
    %p71 = scmp.eq.s32.totalorder %s16, 1
    %p72 = por %p70, %p71
    %p74 = scmp.ne.s32.totalorder %s59, %s73
    %p75 = scmp.eq.s32.totalorder %s16, 0
    %p76 = por %p74, %p75
    %s78 = sadd.s32 %s77, 1
    %p81 = scmp.eq.s32.totalorder %s10, 1
    %p82 = scmp.ne.s32.totalorder %s77, %s79
    %p83 = scmp.eq.s32.totalorder %s10, 0
    %p84 = por %p82, %p83
    %p85 = scmp.ne.s32.totalorder %s77, %s79
    %p86 = scmp.eq.s32.totalorder %s15, 1
    %p87 = por %p85, %p86
    %p88 = scmp.ne.s32.totalorder %s79, %s80
    %p89 = scmp.eq.s32.totalorder %s15, 0
    %p90 = por %p88, %p89
    %p91 = scmp.ne.s32.totalorder %s79, %s80
    %p92 = scmp.eq.s32.totalorder %s16, 1
    %p93 = por %p91, %p92
    %p95 = scmp.ne.s32.totalorder %s80, %s94
    %p96 = scmp.eq.s32.totalorder %s16, 0
    %p97 = por %p95, %p96
    %s99 = sadd.s32 %s98, 1
    %p102 = scmp.eq.s32.totalorder %s10, 1
    %p103 = scmp.ne.s32.totalorder %s98, %s100
    %p104 = scmp.eq.s32.totalorder %s10, 0
    %p105 = por %p103, %p104
    %p106 = scmp.ne.s32.totalorder %s98, %s100
    %p107 = scmp.eq.s32.totalorder %s15, 1
    %p108 = por %p106, %p107
    %p109 = scmp.ne.s32.totalorder %s100, %s101
    %p110 = scmp.eq.s32.totalorder %s15, 0
    %p111 = por %p109, %p110
    %p112 = scmp.ne.s32.totalorder %s100, %s101
    %p113 = scmp.eq.s32.totalorder %s16, 1
    %p114 = por %p112, %p113
    %p116 = scmp.ne.s32.totalorder %s101, %s115
    %p117 = scmp.eq.s32.totalorder %s16, 0
    %p118 = por %p116, %p117
    %s119 = smul.u32 %s18, %s17
    %s120 = smul.u32 %s25, %s29
    %s121 = ssub.s32 %s119, %s120
    %p122 = scmp.eq.s32.totalorder %s121, 0
    %s124 = sadd.s32 %s123, 1
    %s125 = scalar_select %p122, %s123, %s124
    %p128 = pneg %p122
    %p129 = scmp.eq.s32.totalorder %s10, 1
    %p130 = por %p128, %p129
    %p131 = scmp.ne.s32.totalorder %s123, %s126
    %p132 = scmp.eq.s32.totalorder %s10, 0
    %p133 = por %p131, %p132
    %p134 = scmp.ne.s32.totalorder %s123, %s126
    %p135 = scmp.eq.s32.totalorder %s15, 1
    %p136 = por %p134, %p135
    %p137 = scmp.ne.s32.totalorder %s126, %s127
    %p138 = scmp.eq.s32.totalorder %s15, 0
    %p139 = por %p137, %p138
    %p140 = scmp.ne.s32.totalorder %s126, %s127
    %p141 = scmp.eq.s32.totalorder %s16, 1
    %p142 = por %p140, %p141
    %p144 = scmp.ne.s32.totalorder %s127, %s143
    %p145 = scmp.eq.s32.totalorder %s16, 0
    %p146 = por %p144, %p145
    %p147 = scmp.le.s32.totalorder 1, %s10
    %p148 = scmp.lt.s32.totalorder %s10, 3
    %p149 = pnand %p147, %p148
    %p150 = pneg %p149
    // Predicated region
    $region9: #{cand_bottleneck_block.9} parent=5 // pred_check
      _
    $region10: #{cand_bottleneck_block.9} parent=5 // pred_check_branch
      %152 = sbr.rel (%p149) target = $region12
    $region11: #{cand_bottleneck_block.9} parent=5 // pred_region
      %s153 = ssub.s32 %s10, 1
      // Predicated region
      $region13: #{cand_bottleneck_block.9} parent=11 // pred_check
        %p154 = pneg %p48
      $region14: #{cand_bottleneck_block.9} parent=11 // pred_check_branch
        %156 = sbr.rel (%p154) target = $region16
      $region15: #{cand_bottleneck_block.9} parent=11 // pred_region
        %s157 = smul.u32 16, %s20
        %p158 = scmp.lt.s32.totalorder %s157, 15
        %s159 = scalar_select %p158, %s157, 15
        %s160 = smul.addr %s159, 4
        %s161 = scalar_lea.vmem %s0, %s160
        %s162 = smul.u32 16, %s20
      $region16: #{cand_bottleneck_block.9} parent=11 // pred_fallthru
        _
      // Predicated region
      $region17: #{cand_bottleneck_block.9} parent=11 // pred_check
        %p163 = pneg %p69
      $region18: #{cand_bottleneck_block.9} parent=11 // pred_check_branch
        %165 = sbr.rel (%p163) target = $region20
      $region19: #{cand_bottleneck_block.9} parent=11 // pred_region
        _
      $region20: #{cand_bottleneck_block.9} parent=11 // pred_fallthru
        _
      // Predicated region
      $region21: #{cand_bottleneck_block.9} parent=11 // pred_check
        %p166 = pneg %p90
      $region22: #{cand_bottleneck_block.9} parent=11 // pred_check_branch
        %168 = sbr.rel (%p166) target = $region24
      $region23: #{cand_bottleneck_block.9} parent=11 // pred_region
        _
      $region24: #{cand_bottleneck_block.9} parent=11 // pred_fallthru
        _
      // Predicated region
      $region25: #{cand_bottleneck_block.9} parent=11 // pred_check
        %p169 = pneg %p111
      $region26: #{cand_bottleneck_block.9} parent=11 // pred_check_branch
        %171 = sbr.rel (%p169) target = $region28
      $region27: #{cand_bottleneck_block.9} parent=11 // pred_region
        _
      $region28: #{cand_bottleneck_block.9} parent=11 // pred_fallthru
        _
    $region12: #{cand_bottleneck_block.9} parent=5 // pred_fallthru
      _
    %p172 = scmp.lt.s32.totalorder %s10, 2
    // Predicated region
    $region29: #{cand_bottleneck_block.9} parent=5 // pred_check
      %p173 = pneg %p172
    $region30: #{cand_bottleneck_block.9} parent=5 // pred_check_branch
      %175 = sbr.rel (%p173) target = $region32
    $region31: #{cand_bottleneck_block.9} parent=5 // pred_region
      _
    $region32: #{cand_bottleneck_block.9} parent=5 // pred_fallthru
      _
    %p176 = scmp.le.s32.totalorder 1, %s10
    %p177 = scmp.lt.s32.totalorder %s10, 3
    %p178 = pnand %p176, %p177
    %p179 = pneg %p178
    // Predicated region
    $region33: #{cand_bottleneck_block.9} parent=5 // pred_check
      _
    $region34: #{cand_bottleneck_block.9} parent=5 // pred_check_branch
      %181 = sbr.rel (%p178) target = $region36
    $region35: #{cand_bottleneck_block.9} parent=5 // pred_region
      %s182 = ssub.s32 %s10, 1
      %s183 = smul.u32 16, %s20
      %p184 = scmp.lt.s32.totalorder %s183, 15
      %s185 = scalar_select %p184, %s183, 15
      %s186 = smul.addr %s185, 4
      %s187 = scalar_lea.vmem %s0, %s186
      %p188 = pneg %p48
      %p189 = pneg %p45
      %p190 = pneg %p69
      %p191 = pneg %p66
      %p192 = pneg %p90
      %p193 = pneg %p87
      %p194 = pneg %p111
      %p195 = pneg %p108
      %p196 = pneg %p139
      %p197 = pneg %p136
      %s198 = smul.u32 %s20, %s19
      %s199 = smul.u32 16, %s198
      %p200 = scmp.lt.s32.totalorder %s199, 15
      %s201 = scalar_select %p200, %s199, 15
      %s202 = smul.addr %s201, 4
      %s203 = scalar_lea.vmem %s4, %s202
      %s204 = smul.u32 16, %s20
      %p205 = scmp.lt.s32.totalorder %s204, 15
      %s206 = scalar_select %p205, %s204, 15
      %s207 = smul.addr %s206, 4
      %s208 = scalar_lea.vmem %s0, %s207
      %s209 = smul.u32 16, %s20
      %s210 = smul.u32 %s20, %s19
      %s211 = smul.u32 16, %s210
      %p212 = scmp.lt.s32.totalorder %s211, 15
      %s213 = scalar_select %p212, %s211, 15
      %s214 = smul.addr %s213, 4
      %s215 = scalar_lea.vmem %s4, %s214
      %s216 = smul.u32 %s20, %s19
      %s217 = smul.u32 16, %s216
      %p219 = scmp.eq.s32.totalorder %s19, 0
      %p220 = scmp.eq.s32.totalorder %s20, 0
      %p221 = pnand %p219, %p220
      %p222 = pneg %p221
      // Predicated region
      $region37: #{cand_bottleneck_block.9} parent=35 // pred_check
        _
      $region38: #{cand_bottleneck_block.9} parent=35 // pred_check_branch
        %224 = sbr.rel (%p221) target = $region40
      $region39: #{cand_bottleneck_block.9} parent=35 // pred_region
        %225 = vst [vmem:[#allocation2] sm:$0x1] 0.0
        %226 = vst [vmem:[#allocation3] sm:$0x1] 0.0
      $region40: #{cand_bottleneck_block.9} parent=35 // pred_fallthru
        _
      %v227 = vld [vmem:[%s208] sm:$0xf]
      %v228 = vld [vmem:[%s208 + $0x4] sm:$0xf]
      %v229 = vld [vmem:[%s208 + $0x8] sm:$0xf]
      %v230 = vld [vmem:[%s208 + $0xc] sm:$0xf]
      %v231 = vld [vmem:[%s208 + $0x10] sm:$0xf]
      %v232 = vld [vmem:[%s208 + $0x14] sm:$0xf]
      %v233 = vld [vmem:[%s208 + $0x18] sm:$0xf]
      %v234 = vld [vmem:[%s208 + $0x1c] sm:$0xf]
      %v235 = vld [vmem:[%s208 + $0x20] sm:$0xf]
      %v236 = vld [vmem:[%s208 + $0x24] sm:$0xf]
      %v237 = vld [vmem:[%s208 + $0x28] sm:$0xf]
      %v238 = vld [vmem:[%s208 + $0x2c] sm:$0xf]
      %v239 = vld [vmem:[%s208 + $0x30] sm:$0xf]
      %v240 = vld [vmem:[%s208 + $0x34] sm:$0xf]
      %v241 = vld [vmem:[%s208 + $0x38] sm:$0xf]
      %v242 = vld [vmem:[%s208 + $0x3c] sm:$0xf]
      %v243 = vld [vmem:[%s1] sm:$0xf]
      %v244 = vld [vmem:[%s1 + $0x4] sm:$0xf]
      %v245 = vld [vmem:[%s1 + $0x8] sm:$0xf]
      %v246 = vld [vmem:[%s1 + $0xc] sm:$0xf]
      %v247 = vld [vmem:[%s1 + $0x10] sm:$0xf]
      %v248 = vld [vmem:[%s1 + $0x14] sm:$0xf]
      %v249 = vld [vmem:[%s1 + $0x18] sm:$0xf]
      %v250 = vld [vmem:[%s1 + $0x1c] sm:$0xf]
      %v251 = vld [vmem:[%s1 + $0x20] sm:$0xf]
      %v252 = vld [vmem:[%s1 + $0x24] sm:$0xf]
      %v253 = vld [vmem:[%s1 + $0x28] sm:$0xf]
      %v254 = vld [vmem:[%s1 + $0x2c] sm:$0xf]
      %v255 = vld [vmem:[%s1 + $0x30] sm:$0xf]
      %v256 = vld [vmem:[%s1 + $0x34] sm:$0xf]
      %v257 = vld [vmem:[%s1 + $0x38] sm:$0xf]
      %v258 = vld [vmem:[%s1 + $0x3c] sm:$0xf]
      %v275 = vunpack.c.l.b16 %v227
      %v276 = vunpack.c.l.b16 %v228
      %v277 = vunpack.c.l.b16 %v229
      %v278 = vunpack.c.l.b16 %v230
      %v279 = vunpack.c.l.b16 %v231
      %v280 = vunpack.c.l.b16 %v232
      %v281 = vunpack.c.l.b16 %v233
      %v282 = vunpack.c.l.b16 %v234
      %v283 = vunpack.c.l.b16 %v235
      %v284 = vunpack.c.l.b16 %v236
      %v285 = vunpack.c.l.b16 %v237
      %v286 = vunpack.c.l.b16 %v238
      %v287 = vunpack.c.l.b16 %v239
      %v288 = vunpack.c.l.b16 %v240
      %v289 = vunpack.c.l.b16 %v241
      %v290 = vunpack.c.l.b16 %v242
      %v291 = vpack.c.b16 %v276, %v275
      %v292 = vpack.c.b16 %v278, %v277
      %v293 = vpack.c.b16 %v280, %v279
      %v294 = vpack.c.b16 %v282, %v281
      %v295 = vpack.c.b16 %v284, %v283
      %v296 = vpack.c.b16 %v286, %v285
      %v297 = vpack.c.b16 %v288, %v287
      %v298 = vpack.c.b16 %v290, %v289
      %v323 = vunpack.c.l.b16 %v243
      %v324 = vunpack.c.l.b16 %v244
      %v325 = vunpack.c.l.b16 %v245
      %v326 = vunpack.c.l.b16 %v246
      %v327 = vunpack.c.l.b16 %v247
      %v328 = vunpack.c.l.b16 %v248
      %v329 = vunpack.c.l.b16 %v249
      %v330 = vunpack.c.l.b16 %v250
      %v331 = vunpack.c.l.b16 %v251
      %v332 = vunpack.c.l.b16 %v252
      %v333 = vunpack.c.l.b16 %v253
      %v334 = vunpack.c.l.b16 %v254
      %v335 = vunpack.c.l.b16 %v255
      %v336 = vunpack.c.l.b16 %v256
      %v337 = vunpack.c.l.b16 %v257
      %v338 = vunpack.c.l.b16 %v258
      %v339 = vpack.c.b16 %v324, %v323
      %v340 = vpack.c.b16 %v326, %v325
      %v341 = vpack.c.b16 %v328, %v327
      %v342 = vpack.c.b16 %v330, %v329
      %v343 = vpack.c.b16 %v332, %v331
      %v344 = vpack.c.b16 %v334, %v333
      %v345 = vpack.c.b16 %v336, %v335
      %v346 = vpack.c.b16 %v338, %v337
      %355 = vmatprep.subr.bf16.mxu0 0
      %356 = vmatpush1.bf16.msra.mxu0 %v339
      %357 = vmatprep.subr.bf16.mxu0 0
      %358 = vmatpush1.bf16.msra.mxu0 %v340
      %359 = vmatprep.subr.bf16.mxu0 0
      %360 = vmatpush1.bf16.msra.mxu0 %v341
      %361 = vmatprep.subr.bf16.mxu0 0
      %362 = vmatpush1.bf16.msra.mxu0 %v342
      %363 = vmatprep.subr.bf16.mxu0 0
      %364 = vmatpush1.bf16.msra.mxu0 %v343
      %365 = vmatprep.subr.bf16.mxu0 0
      %366 = vmatpush1.bf16.msra.mxu0 %v344
      %367 = vmatprep.subr.bf16.mxu0 0
      %368 = vmatpush1.bf16.msra.mxu0 %v345
      %369 = vmatprep.subr.bf16.mxu0 0
      %370 = vmatpush1.bf16.msra.mxu0 %v346
      %371 = vmatprep.subr.bf16.mxu0 0
      %372 = vmatpush1.bf16.msra.mxu0 0
      %373 = vmatprep.subr.bf16.mxu0 0
      %374 = vmatpush1.bf16.msra.mxu0 0
      %375 = vmatprep.subr.bf16.mxu0 0
      %376 = vmatpush1.bf16.msra.mxu0 0
      %377 = vmatprep.subr.bf16.mxu0 0
      %378 = vmatpush1.bf16.msra.mxu0 0
      %379 = vmatprep.subr.bf16.mxu0 0
      %380 = vmatpush1.bf16.msra.mxu0 0
      %381 = vmatprep.subr.bf16.mxu0 0
      %382 = vmatpush1.bf16.msra.mxu0 0
      %383 = vmatprep.subr.bf16.mxu0 0
      %384 = vmatpush1.bf16.msra.mxu0 0
      %385 = vmatprep.subr.bf16.mxu0 0
      %386 = vmatpush1.bf16.msra.mxu0 0
      %387 = vmatprep.mubr.bf16.mxu0 0
      %388 = vmatmul.mubr.bf16.gmra.mrb[0].mxu0 %v291
      %v389 = vpop.f32.mrb[0].mxu0
      %v390 = vadd.f32 0.0, %v389
      %v391 = vpop.f32.mrb[0].mxu0
      %v392 = vpop.f32.mrb[0].mxu0
      %v393 = vadd.f32 0.0, %v392
      %v394 = vpop.f32.mrb[0].mxu0
      %395 = vmatprep.mubr.bf16.mxu0 0
      %396 = vmatmul.mubr.bf16.gmra.mrb[0].mxu0 %v292
      %v397 = vpop.f32.mrb[0].mxu0
      %v398 = vadd.f32 0.0, %v397
      %v399 = vpop.f32.mrb[0].mxu0
      %v400 = vpop.f32.mrb[0].mxu0
      %v401 = vadd.f32 0.0, %v400
      %v402 = vpop.f32.mrb[0].mxu0
      %403 = vmatprep.mubr.bf16.mxu0 0
      %404 = vmatmul.mubr.bf16.gmra.mrb[0].mxu0 %v293
      %v405 = vpop.f32.mrb[0].mxu0
      %v406 = vadd.f32 0.0, %v405
      %v407 = vpop.f32.mrb[0].mxu0
      %v408 = vpop.f32.mrb[0].mxu0
      %v409 = vadd.f32 0.0, %v408
      %v410 = vpop.f32.mrb[0].mxu0
      %411 = vmatprep.mubr.bf16.mxu0 0
      %412 = vmatmul.mubr.bf16.gmra.mrb[0].mxu0 %v294
      %v413 = vpop.f32.mrb[0].mxu0
      %v414 = vadd.f32 0.0, %v413
      %v415 = vpop.f32.mrb[0].mxu0
      %v416 = vpop.f32.mrb[0].mxu0
      %v417 = vadd.f32 0.0, %v416
      %v418 = vpop.f32.mrb[0].mxu0
      %419 = vmatprep.mubr.bf16.mxu0 0
      %420 = vmatmul.mubr.bf16.gmra.mrb[0].mxu0 %v295
      %v421 = vpop.f32.mrb[0].mxu0
      %v422 = vadd.f32 0.0, %v421
      %v423 = vpop.f32.mrb[0].mxu0
      %v424 = vpop.f32.mrb[0].mxu0
      %v425 = vadd.f32 0.0, %v424
      %v426 = vpop.f32.mrb[0].mxu0
      %427 = vmatprep.mubr.bf16.mxu0 0
      %428 = vmatmul.mubr.bf16.gmra.mrb[0].mxu0 %v296
      %v429 = vpop.f32.mrb[0].mxu0
      %v430 = vadd.f32 0.0, %v429
      %v431 = vpop.f32.mrb[0].mxu0
      %v432 = vpop.f32.mrb[0].mxu0
      %v433 = vadd.f32 0.0, %v432
      %v434 = vpop.f32.mrb[0].mxu0
      %435 = vmatprep.mubr.bf16.mxu0 0
      %436 = vmatmul.mubr.bf16.gmra.mrb[0].mxu0 %v297
      %v437 = vpop.f32.mrb[0].mxu0
      %v438 = vadd.f32 0.0, %v437
      %v439 = vpop.f32.mrb[0].mxu0
      %v440 = vpop.f32.mrb[0].mxu0
      %v441 = vadd.f32 0.0, %v440
      %v442 = vpop.f32.mrb[0].mxu0
      %443 = vmatprep.mubr.bf16.mxu0 0
      %444 = vmatmul.mubr.bf16.gmra.mrb[0].mxu0 %v298
      %v445 = vpop.f32.mrb[0].mxu0
      %v446 = vadd.f32 0.0, %v445
      %v447 = vpop.f32.mrb[0].mxu0
      %v448 = vpop.f32.mrb[0].mxu0
      %v449 = vadd.f32 0.0, %v448
      %v450 = vpop.f32.mrb[0].mxu0
      %451 = vdwg.mxu0
      // Predicated region
      $region41: #{cand_bottleneck_block.9} parent=35 // pred_check
        %p452 = pneg %p219
      $region42: #{cand_bottleneck_block.9} parent=35 // pred_check_branch
        %454 = sbr.rel (%p452) target = $region44
      $region43: #{cand_bottleneck_block.9} parent=35 // pred_region
        %v455 = vld [vmem:[#allocation2] sm:$0x1]
        %v456 = vadd.f32 %v390, %v393
        %v457 = vadd.f32 %v456, %v398
        %v458 = vadd.f32 %v457, %v401
        %v459 = vadd.f32 %v458, %v406
        %v460 = vadd.f32 %v459, %v409
        %v461 = vadd.f32 %v460, %v414
        %v462 = vadd.f32 %v461, %v417
        %v463 = vadd.f32 %v462, %v422
        %v464 = vadd.f32 %v463, %v425
        %v465 = vadd.f32 %v464, %v430
        %v466 = vadd.f32 %v465, %v433
        %v467 = vadd.f32 %v466, %v438
        %v468 = vadd.f32 %v467, %v441
        %v469 = vadd.f32 %v468, %v446
        %v470 = vadd.f32 %v469, %v449
        %v471 = vrot.slane %v470, 4
        %v472 = vadd.f32 %v470, %v471
        %v473 = vrot.slane %v472, 2
        %v474 = vadd.f32 %v472, %v473
        %v475 = vrot.slane %v474, 1
        %v476 = vadd.f32 %v474, %v475
        %v477 = vadd.f32 %v455, %v476
        %478 = vst [vmem:[#allocation2] sm:$0x1] %v477
        %v479 = vld [vmem:[#allocation3] sm:$0x1]
        %v480 = vmul.f32 %v390, %v390
        %v481 = vmul.f32 %v393, %v393
        %v482 = vmul.f32 %v398, %v398
        %v483 = vmul.f32 %v401, %v401
        %v484 = vmul.f32 %v406, %v406
        %v485 = vmul.f32 %v409, %v409
        %v486 = vmul.f32 %v414, %v414
        %v487 = vmul.f32 %v417, %v417
        %v488 = vmul.f32 %v422, %v422
        %v489 = vmul.f32 %v425, %v425
        %v490 = vmul.f32 %v430, %v430
        %v491 = vmul.f32 %v433, %v433
        %v492 = vmul.f32 %v438, %v438
        %v493 = vmul.f32 %v441, %v441
        %v494 = vmul.f32 %v446, %v446
        %v495 = vmul.f32 %v449, %v449
        %v496 = vadd.f32 %v480, %v481
        %v497 = vadd.f32 %v496, %v482
        %v498 = vadd.f32 %v497, %v483
        %v499 = vadd.f32 %v498, %v484
        %v500 = vadd.f32 %v499, %v485
        %v501 = vadd.f32 %v500, %v486
        %v502 = vadd.f32 %v501, %v487
        %v503 = vadd.f32 %v502, %v488
        %v504 = vadd.f32 %v503, %v489
        %v505 = vadd.f32 %v504, %v490
        %v506 = vadd.f32 %v505, %v491
        %v507 = vadd.f32 %v506, %v492
        %v508 = vadd.f32 %v507, %v493
        %v509 = vadd.f32 %v508, %v494
        %v510 = vadd.f32 %v509, %v495
        %v511 = vrot.slane %v510, 4
        %v512 = vadd.f32 %v510, %v511
        %v513 = vrot.slane %v512, 2
        %v514 = vadd.f32 %v512, %v513
        %v515 = vrot.slane %v514, 1
        %v516 = vadd.f32 %v514, %v515
        %v517 = vadd.f32 %v479, %v516
        %518 = vst [vmem:[#allocation3] sm:$0x1] %v517
      $region44: #{cand_bottleneck_block.9} parent=35 // pred_fallthru
        _
      %p519 = scmp.eq.s32.totalorder %s19, 1
      // Predicated region
      $region45: #{cand_bottleneck_block.9} parent=35 // pred_check
        %p520 = pneg %p519
      $region46: #{cand_bottleneck_block.9} parent=35 // pred_check_branch
        %522 = sbr.rel (%p520) target = $region48
      $region47: #{cand_bottleneck_block.9} parent=35 // pred_region
        %v523 = vld [vmem:[#allocation2] sm:$0x1]
        %v524 = vmul.f32 %v523, 0.0078125
        %v525 = vld [vmem:[#allocation3] sm:$0x1]
        %v526 = vmul.f32 %v525, 0.0078125
        %v527 = vmul.f32 %v524, %v524
        %v528 = vsub.f32 %v526, %v527
        %v529 = vmax.f32 %v528, 0.0
        %v530 = vadd.f32 %v529, 1e-05
        %v531 = vrsqrt.pop %v530
        %v532 = vld [vmem:[%s2] sm:$0x1]
        %v533 = vmul.f32 %v531, %v532
        %v535 = vlaneseq
        %v536 = vshrl.u32 %v535, 7
        %v537 = vsub.s32 0, %v536
        %v538 = vrot.slane %v524, %v537
        %v540 = vsub.f32 %v390, %v538
        %v541 = vsub.f32 %v393, %v538
        %v542 = vsub.f32 %v398, %v538
        %v543 = vsub.f32 %v401, %v538
        %v544 = vsub.f32 %v406, %v538
        %v545 = vsub.f32 %v409, %v538
        %v546 = vsub.f32 %v414, %v538
        %v547 = vsub.f32 %v417, %v538
        %v548 = vsub.f32 %v422, %v538
        %v549 = vsub.f32 %v425, %v538
        %v550 = vsub.f32 %v430, %v538
        %v551 = vsub.f32 %v433, %v538
        %v552 = vsub.f32 %v438, %v538
        %v553 = vsub.f32 %v441, %v538
        %v554 = vsub.f32 %v446, %v538
        %v555 = vsub.f32 %v449, %v538
        %v557 = vlaneseq
        %v558 = vshrl.u32 %v557, 7
        %v559 = vsub.s32 0, %v558
        %v560 = vrot.slane %v533, %v559
        %v562 = vmul.f32 %v540, %v560
        %v563 = vmul.f32 %v541, %v560
        %v564 = vmul.f32 %v542, %v560
        %v565 = vmul.f32 %v543, %v560
        %v566 = vmul.f32 %v544, %v560
        %v567 = vmul.f32 %v545, %v560
        %v568 = vmul.f32 %v546, %v560
        %v569 = vmul.f32 %v547, %v560
        %v570 = vmul.f32 %v548, %v560
        %v571 = vmul.f32 %v549, %v560
        %v572 = vmul.f32 %v550, %v560
        %v573 = vmul.f32 %v551, %v560
        %v574 = vmul.f32 %v552, %v560
        %v575 = vmul.f32 %v553, %v560
        %v576 = vmul.f32 %v554, %v560
        %v577 = vmul.f32 %v555, %v560
        %v578 = vld [vmem:[%s3] sm:$0x1]
        %v580 = vlaneseq
        %v581 = vshrl.u32 %v580, 7
        %v582 = vsub.s32 0, %v581
        %v583 = vrot.slane %v578, %v582
        %v585 = vadd.f32 %v562, %v583
        %v586 = vadd.f32 %v563, %v583
        %v587 = vadd.f32 %v564, %v583
        %v588 = vadd.f32 %v565, %v583
        %v589 = vadd.f32 %v566, %v583
        %v590 = vadd.f32 %v567, %v583
        %v591 = vadd.f32 %v568, %v583
        %v592 = vadd.f32 %v569, %v583
        %v593 = vadd.f32 %v570, %v583
        %v594 = vadd.f32 %v571, %v583
        %v595 = vadd.f32 %v572, %v583
        %v596 = vadd.f32 %v573, %v583
        %v597 = vadd.f32 %v574, %v583
        %v598 = vadd.f32 %v575, %v583
        %v599 = vadd.f32 %v576, %v583
        %v600 = vadd.f32 %v577, %v583
        %v601 = vmax.f32 %v585, 0.0
        %v602 = vmax.f32 %v586, 0.0
        %v603 = vmax.f32 %v587, 0.0
        %v604 = vmax.f32 %v588, 0.0
        %v605 = vmax.f32 %v589, 0.0
        %v606 = vmax.f32 %v590, 0.0
        %v607 = vmax.f32 %v591, 0.0
        %v608 = vmax.f32 %v592, 0.0
        %v609 = vmax.f32 %v593, 0.0
        %v610 = vmax.f32 %v594, 0.0
        %v611 = vmax.f32 %v595, 0.0
        %v612 = vmax.f32 %v596, 0.0
        %v613 = vmax.f32 %v597, 0.0
        %v614 = vmax.f32 %v598, 0.0
        %v615 = vmax.f32 %v599, 0.0
        %v616 = vmax.f32 %v600, 0.0
        %v617 = vpack.c.bf16 %v602, %v601
        %v618 = vpack.c.bf16 %v604, %v603
        %v619 = vpack.c.bf16 %v606, %v605
        %v620 = vpack.c.bf16 %v608, %v607
        %v621 = vpack.c.bf16 %v610, %v609
        %v622 = vpack.c.bf16 %v612, %v611
        %v623 = vpack.c.bf16 %v614, %v613
        %v624 = vpack.c.bf16 %v616, %v615
        %v633 = vunpack.c.l.b16 %v617
        %v634 = vunpack.c.h.b16 %v617
        %v635 = vunpack.c.l.b16 %v618
        %v636 = vunpack.c.h.b16 %v618
        %v637 = vunpack.c.l.b16 %v619
        %v638 = vunpack.c.h.b16 %v619
        %v639 = vunpack.c.l.b16 %v620
        %v640 = vunpack.c.h.b16 %v620
        %v641 = vunpack.c.l.b16 %v621
        %v642 = vunpack.c.h.b16 %v621
        %v643 = vunpack.c.l.b16 %v622
        %v644 = vunpack.c.h.b16 %v622
        %v645 = vunpack.c.l.b16 %v623
        %v646 = vunpack.c.h.b16 %v623
        %v647 = vunpack.c.l.b16 %v624
        %v648 = vunpack.c.h.b16 %v624
        %v649 = vpack.c.b16 %v633, %v633
        %v650 = vpack.c.b16 %v634, %v634
        %v651 = vpack.c.b16 %v635, %v635
        %v652 = vpack.c.b16 %v636, %v636
        %v653 = vpack.c.b16 %v637, %v637
        %v654 = vpack.c.b16 %v638, %v638
        %v655 = vpack.c.b16 %v639, %v639
        %v656 = vpack.c.b16 %v640, %v640
        %v657 = vpack.c.b16 %v641, %v641
        %v658 = vpack.c.b16 %v642, %v642
        %v659 = vpack.c.b16 %v643, %v643
        %v660 = vpack.c.b16 %v644, %v644
        %v661 = vpack.c.b16 %v645, %v645
        %v662 = vpack.c.b16 %v646, %v646
        %v663 = vpack.c.b16 %v647, %v647
        %v664 = vpack.c.b16 %v648, %v648
        %681 = vst [vmem:[%s215] sm:$0xf] %v649
        %682 = vst [vmem:[%s215 + $0x4] sm:$0xf] %v650
        %683 = vst [vmem:[%s215 + $0x8] sm:$0xf] %v651
        %684 = vst [vmem:[%s215 + $0xc] sm:$0xf] %v652
        %685 = vst [vmem:[%s215 + $0x10] sm:$0xf] %v653
        %686 = vst [vmem:[%s215 + $0x14] sm:$0xf] %v654
        %687 = vst [vmem:[%s215 + $0x18] sm:$0xf] %v655
        %688 = vst [vmem:[%s215 + $0x1c] sm:$0xf] %v656
        %689 = vst [vmem:[%s215 + $0x20] sm:$0xf] %v657
        %690 = vst [vmem:[%s215 + $0x24] sm:$0xf] %v658
        %691 = vst [vmem:[%s215 + $0x28] sm:$0xf] %v659
        %692 = vst [vmem:[%s215 + $0x2c] sm:$0xf] %v660
        %693 = vst [vmem:[%s215 + $0x30] sm:$0xf] %v661
        %694 = vst [vmem:[%s215 + $0x34] sm:$0xf] %v662
        %695 = vst [vmem:[%s215 + $0x38] sm:$0xf] %v663
        %696 = vst [vmem:[%s215 + $0x3c] sm:$0xf] %v664
      $region48: #{cand_bottleneck_block.9} parent=35 // pred_fallthru
        _
      %s697 = smul.u32 %s20, %s19
      %s698 = smul.u32 16, %s697
      %p699 = scmp.lt.s32.totalorder %s698, 15
      %s700 = scalar_select %p699, %s698, 15
      %s701 = smul.addr %s700, 4
      %s702 = scalar_lea.vmem %s4, %s701
      // Predicated region
      $region49: #{cand_bottleneck_block.9} parent=35 // pred_check
        %p703 = pneg %p136
      $region50: #{cand_bottleneck_block.9} parent=35 // pred_check_branch
        %705 = sbr.rel (%p703) target = $region52
      $region51: #{cand_bottleneck_block.9} parent=35 // pred_region
        %s706 = smul.u32 %s20, %s19
        %s707 = smul.u32 16, %s706
      $region52: #{cand_bottleneck_block.9} parent=35 // pred_fallthru
        _
    $region36: #{cand_bottleneck_block.9} parent=5 // pred_fallthru
      _
    %p708 = scmp.le.s32.totalorder 2, %s10
    // Predicated region
    $region53: #{cand_bottleneck_block.9} parent=5 // pred_check
      %p709 = pneg %p708
    $region54: #{cand_bottleneck_block.9} parent=5 // pred_check_branch
      %711 = sbr.rel (%p709) target = $region56
    $region55: #{cand_bottleneck_block.9} parent=5 // pred_region
      %s712 = ssub.s32 %s10, 2
      // Predicated region
      $region57: #{cand_bottleneck_block.9} parent=55 // pred_check
        %p713 = pneg %p142
      $region58: #{cand_bottleneck_block.9} parent=55 // pred_check_branch
        %715 = sbr.rel (%p713) target = $region60
      $region59: #{cand_bottleneck_block.9} parent=55 // pred_region
        %s716 = smul.u32 %s22, %s21
        %s717 = smul.u32 16, %s716
        %p718 = scmp.lt.s32.totalorder %s717, 15
        %s719 = scalar_select %p718, %s717, 15
        %s720 = smul.addr %s719, 4
        %s721 = scalar_lea.vmem %s4, %s720
      $region60: #{cand_bottleneck_block.9} parent=55 // pred_fallthru
        _
    $region56: #{cand_bottleneck_block.9} parent=5 // pred_fallthru
      _
  $region6: #{cand_bottleneck_block.9} parent=0 // loop_footer
    %s14 = sadd.s32 1, %s10
  $region7: #{cand_bottleneck_block.9} parent=0 // loop_footer_branch
    %9 = sbr.rel target = $region3
  $region8: #{cand_bottleneck_block.9} parent=0 // loop_exit
    _

// kernel: cand_bottleneck_block.11
$region0: #{cand_bottleneck_block.11}
  #allocation0 [shape = 'u32[]', space=smem, size = 0x4, offset = 0x4, fixed_abs, tag = 'smem constant byte address 0x4 - core index']
  #allocation1 [shape = 'u32[144,128]{1,0:T(1,128)}', space=vmem, size = 0x12000, scoped, tag = 'internal scratch']
  #allocation2 [shape = 'f32[1,128]{1,0:T(1,128)}', space=vmem, size = 0x200, scoped, tag = 'scratch operand']
  #allocation3 [shape = 'f32[1,128]{1,0:T(1,128)}', space=vmem, size = 0x200, scoped, tag = 'scratch operand']
  %s0 = inlined_call_operand.vmem [shape: bf16[128,128], index: 0, kind: input, shape index: {}]
  %s1 = inlined_call_operand.vmem [shape: bf16[128,128], index: 1, kind: input, shape index: {}]
  %s2 = inlined_call_operand.vmem [shape: f32[1,128], index: 2, kind: input, shape index: {}]
  %s3 = inlined_call_operand.vmem [shape: f32[1,128], index: 3, kind: input, shape index: {}]
  %s4 = inlined_call_operand.vmem [shape: bf16[128,128], index: 4, kind: input, shape index: {}]
  %s5 = inlined_call_operand.vmem [shape: bf16[128,128], index: 5, kind: output, shape index: {}]
  %s6 = sld [smem:[#allocation0]]
  $region65: #{cand_bottleneck_block.11} parent=0
    _
  %s8 = ssub.s32 1, %s6
  %s9 = scalar_select 0, %s8, %s6
  loop: start=0, step=1, limit=4
  $region2: #{cand_bottleneck_block.11} parent=0 // loop_pre_header
    _
  $region3: #{cand_bottleneck_block.11} parent=0 // loop_header
    %s11 = sphi 0, %s15
    %p12 = scmp.ge.s32.totalorder %s11, 4
    %s18 = sphi 0, %s30
    %s19 = sphi 0, %s26
    %s20 = sphi 0, %s18
    %s21 = sphi 0, %s19
    %s22 = sphi 0, %s20
    %s23 = sphi 0, %s21
    %s33 = sphi 0, %s35
    %s36 = sphi 0, %s33
    %s37 = sphi 0, %s36
    %s53 = sphi 0, %s37
    %s57 = sphi 0, %s57
    %s59 = sphi 0, %s57
    %s60 = sphi 0, %s59
    %s74 = sphi 0, %s60
    %s78 = sphi 0, %s78
    %s80 = sphi 0, %s78
    %s81 = sphi 0, %s80
    %s95 = sphi 0, %s81
    %s99 = sphi 0, %s99
    %s101 = sphi 0, %s99
    %s102 = sphi 0, %s101
    %s116 = sphi 0, %s102
    %s122 = sphi 0, %s124
    %s125 = sphi 0, %s122
    %s126 = sphi 0, %s125
    %s142 = sphi 0, %s126
    %s150 = sphi 0, %s152
    %s153 = sphi 0, %s150
    %s154 = sphi 0, %s153
    %s170 = sphi 0, %s154
  $region4: #{cand_bottleneck_block.11} parent=0 // loop_header_branch
    %14 = sbr.rel (%p12) target = $region8
  $region5: #{cand_bottleneck_block.11} parent=0 // loop_body
    %s16 = ssub.s32 %s11, 1
    %s17 = ssub.s32 %s11, 2
    %s24 = sadd.s32 1, %s19
    %p25 = scmp.ge.s32.totalorder %s24, 1
    %s26 = scalar_select %p25, 0, %s24
    %s27 = sadd.s32 1, %s18
    %s28 = scalar_select %p25, %s27, %s18
    %p29 = scmp.ge.s32.totalorder %s28, 2
    %s30 = scalar_select %p29, 0, %s28
    %s31 = ssub.s32 %s19, %s26
    %p32 = scmp.eq.s32.totalorder %s31, 0
    %s34 = sadd.s32 %s33, 1
    %s35 = scalar_select %p32, %s33, %s34
    %p38 = pneg %p32
    %p39 = scmp.eq.s32.totalorder %s11, 1
    %p40 = por %p38, %p39
    %p41 = scmp.ne.s32.totalorder %s33, %s36
    %p42 = scmp.eq.s32.totalorder %s11, 0
    %p43 = por %p41, %p42
    %p44 = scmp.ne.s32.totalorder %s33, %s36
    %p45 = scmp.eq.s32.totalorder %s16, 1
    %p46 = por %p44, %p45
    %p47 = scmp.ne.s32.totalorder %s36, %s37
    %p48 = scmp.eq.s32.totalorder %s16, 0
    %p49 = por %p47, %p48
    %p50 = scmp.ne.s32.totalorder %s36, %s37
    %p51 = scmp.eq.s32.totalorder %s17, 1
    %p52 = por %p50, %p51
    %p54 = scmp.ne.s32.totalorder %s37, %s53
    %p55 = scmp.eq.s32.totalorder %s17, 0
    %p56 = por %p54, %p55
    %s58 = sadd.s32 %s57, 1
    %p61 = scmp.eq.s32.totalorder %s11, 1
    %p62 = scmp.ne.s32.totalorder %s57, %s59
    %p63 = scmp.eq.s32.totalorder %s11, 0
    %p64 = por %p62, %p63
    %p65 = scmp.ne.s32.totalorder %s57, %s59
    %p66 = scmp.eq.s32.totalorder %s16, 1
    %p67 = por %p65, %p66
    %p68 = scmp.ne.s32.totalorder %s59, %s60
    %p69 = scmp.eq.s32.totalorder %s16, 0
    %p70 = por %p68, %p69
    %p71 = scmp.ne.s32.totalorder %s59, %s60
    %p72 = scmp.eq.s32.totalorder %s17, 1
    %p73 = por %p71, %p72
    %p75 = scmp.ne.s32.totalorder %s60, %s74
    %p76 = scmp.eq.s32.totalorder %s17, 0
    %p77 = por %p75, %p76
    %s79 = sadd.s32 %s78, 1
    %p82 = scmp.eq.s32.totalorder %s11, 1
    %p83 = scmp.ne.s32.totalorder %s78, %s80
    %p84 = scmp.eq.s32.totalorder %s11, 0
    %p85 = por %p83, %p84
    %p86 = scmp.ne.s32.totalorder %s78, %s80
    %p87 = scmp.eq.s32.totalorder %s16, 1
    %p88 = por %p86, %p87
    %p89 = scmp.ne.s32.totalorder %s80, %s81
    %p90 = scmp.eq.s32.totalorder %s16, 0
    %p91 = por %p89, %p90
    %p92 = scmp.ne.s32.totalorder %s80, %s81
    %p93 = scmp.eq.s32.totalorder %s17, 1
    %p94 = por %p92, %p93
    %p96 = scmp.ne.s32.totalorder %s81, %s95
    %p97 = scmp.eq.s32.totalorder %s17, 0
    %p98 = por %p96, %p97
    %s100 = sadd.s32 %s99, 1
    %p103 = scmp.eq.s32.totalorder %s11, 1
    %p104 = scmp.ne.s32.totalorder %s99, %s101
    %p105 = scmp.eq.s32.totalorder %s11, 0
    %p106 = por %p104, %p105
    %p107 = scmp.ne.s32.totalorder %s99, %s101
    %p108 = scmp.eq.s32.totalorder %s16, 1
    %p109 = por %p107, %p108
    %p110 = scmp.ne.s32.totalorder %s101, %s102
    %p111 = scmp.eq.s32.totalorder %s16, 0
    %p112 = por %p110, %p111
    %p113 = scmp.ne.s32.totalorder %s101, %s102
    %p114 = scmp.eq.s32.totalorder %s17, 1
    %p115 = por %p113, %p114
    %p117 = scmp.ne.s32.totalorder %s102, %s116
    %p118 = scmp.eq.s32.totalorder %s17, 0
    %p119 = por %p117, %p118
    %s120 = ssub.s32 %s19, %s26
    %p121 = scmp.eq.s32.totalorder %s120, 0
    %s123 = sadd.s32 %s122, 1
    %s124 = scalar_select %p121, %s122, %s123
    %p127 = pneg %p121
    %p128 = scmp.eq.s32.totalorder %s11, 1
    %p129 = por %p127, %p128
    %p130 = scmp.ne.s32.totalorder %s122, %s125
    %p131 = scmp.eq.s32.totalorder %s11, 0
    %p132 = por %p130, %p131
    %p133 = scmp.ne.s32.totalorder %s122, %s125
    %p134 = scmp.eq.s32.totalorder %s16, 1
    %p135 = por %p133, %p134
    %p136 = scmp.ne.s32.totalorder %s125, %s126
    %p137 = scmp.eq.s32.totalorder %s16, 0
    %p138 = por %p136, %p137
    %p139 = scmp.ne.s32.totalorder %s125, %s126
    %p140 = scmp.eq.s32.totalorder %s17, 1
    %p141 = por %p139, %p140
    %p143 = scmp.ne.s32.totalorder %s126, %s142
    %p144 = scmp.eq.s32.totalorder %s17, 0
    %p145 = por %p143, %p144
    %s146 = smul.u32 %s19, %s18
    %s147 = smul.u32 %s26, %s30
    %s148 = ssub.s32 %s146, %s147
    %p149 = scmp.eq.s32.totalorder %s148, 0
    %s151 = sadd.s32 %s150, 1
    %s152 = scalar_select %p149, %s150, %s151
    %p155 = pneg %p149
    %p156 = scmp.eq.s32.totalorder %s11, 1
    %p157 = por %p155, %p156
    %p158 = scmp.ne.s32.totalorder %s150, %s153
    %p159 = scmp.eq.s32.totalorder %s11, 0
    %p160 = por %p158, %p159
    %p161 = scmp.ne.s32.totalorder %s150, %s153
    %p162 = scmp.eq.s32.totalorder %s16, 1
    %p163 = por %p161, %p162
    %p164 = scmp.ne.s32.totalorder %s153, %s154
    %p165 = scmp.eq.s32.totalorder %s16, 0
    %p166 = por %p164, %p165
    %p167 = scmp.ne.s32.totalorder %s153, %s154
    %p168 = scmp.eq.s32.totalorder %s17, 1
    %p169 = por %p167, %p168
    %p171 = scmp.ne.s32.totalorder %s154, %s170
    %p172 = scmp.eq.s32.totalorder %s17, 0
    %p173 = por %p171, %p172
    %p174 = scmp.le.s32.totalorder 1, %s11
    %p175 = scmp.lt.s32.totalorder %s11, 3
    %p176 = pnand %p174, %p175
    %p177 = pneg %p176
    // Predicated region
    $region9: #{cand_bottleneck_block.11} parent=5 // pred_check
      _
    $region10: #{cand_bottleneck_block.11} parent=5 // pred_check_branch
      %179 = sbr.rel (%p176) target = $region12
    $region11: #{cand_bottleneck_block.11} parent=5 // pred_region
      %s180 = ssub.s32 %s11, 1
      // Predicated region
      $region13: #{cand_bottleneck_block.11} parent=11 // pred_check
        %p181 = pneg %p49
      $region14: #{cand_bottleneck_block.11} parent=11 // pred_check_branch
        %183 = sbr.rel (%p181) target = $region16
      $region15: #{cand_bottleneck_block.11} parent=11 // pred_region
        %s184 = smul.u32 16, %s21
        %p185 = scmp.lt.s32.totalorder %s184, 15
        %s186 = scalar_select %p185, %s184, 15
        %s187 = smul.addr %s186, 4
        %s188 = scalar_lea.vmem %s0, %s187
        %s189 = smul.u32 16, %s21
      $region16: #{cand_bottleneck_block.11} parent=11 // pred_fallthru
        _
      // Predicated region
      $region17: #{cand_bottleneck_block.11} parent=11 // pred_check
        %p190 = pneg %p70
      $region18: #{cand_bottleneck_block.11} parent=11 // pred_check_branch
        %192 = sbr.rel (%p190) target = $region20
      $region19: #{cand_bottleneck_block.11} parent=11 // pred_region
        _
      $region20: #{cand_bottleneck_block.11} parent=11 // pred_fallthru
        _
      // Predicated region
      $region21: #{cand_bottleneck_block.11} parent=11 // pred_check
        %p193 = pneg %p91
      $region22: #{cand_bottleneck_block.11} parent=11 // pred_check_branch
        %195 = sbr.rel (%p193) target = $region24
      $region23: #{cand_bottleneck_block.11} parent=11 // pred_region
        _
      $region24: #{cand_bottleneck_block.11} parent=11 // pred_fallthru
        _
      // Predicated region
      $region25: #{cand_bottleneck_block.11} parent=11 // pred_check
        %p196 = pneg %p112
      $region26: #{cand_bottleneck_block.11} parent=11 // pred_check_branch
        %198 = sbr.rel (%p196) target = $region28
      $region27: #{cand_bottleneck_block.11} parent=11 // pred_region
        _
      $region28: #{cand_bottleneck_block.11} parent=11 // pred_fallthru
        _
      // Predicated region
      $region29: #{cand_bottleneck_block.11} parent=11 // pred_check
        %p199 = pneg %p138
      $region30: #{cand_bottleneck_block.11} parent=11 // pred_check_branch
        %201 = sbr.rel (%p199) target = $region32
      $region31: #{cand_bottleneck_block.11} parent=11 // pred_region
        %s202 = smul.u32 16, %s21
        %p203 = scmp.lt.s32.totalorder %s202, 15
        %s204 = scalar_select %p203, %s202, 15
        %s205 = smul.addr %s204, 4
        %s206 = scalar_lea.vmem %s4, %s205
        %s207 = smul.u32 16, %s21
      $region32: #{cand_bottleneck_block.11} parent=11 // pred_fallthru
        _
    $region12: #{cand_bottleneck_block.11} parent=5 // pred_fallthru
      _
    %p208 = scmp.lt.s32.totalorder %s11, 2
    // Predicated region
    $region33: #{cand_bottleneck_block.11} parent=5 // pred_check
      %p209 = pneg %p208
    $region34: #{cand_bottleneck_block.11} parent=5 // pred_check_branch
      %211 = sbr.rel (%p209) target = $region36
    $region35: #{cand_bottleneck_block.11} parent=5 // pred_region
      _
    $region36: #{cand_bottleneck_block.11} parent=5 // pred_fallthru
      _
    %p212 = scmp.le.s32.totalorder 1, %s11
    %p213 = scmp.lt.s32.totalorder %s11, 3
    %p214 = pnand %p212, %p213
    %p215 = pneg %p214
    // Predicated region
    $region37: #{cand_bottleneck_block.11} parent=5 // pred_check
      _
    $region38: #{cand_bottleneck_block.11} parent=5 // pred_check_branch
      %217 = sbr.rel (%p214) target = $region40
    $region39: #{cand_bottleneck_block.11} parent=5 // pred_region
      %s218 = ssub.s32 %s11, 1
      %s219 = smul.u32 16, %s21
      %p220 = scmp.lt.s32.totalorder %s219, 15
      %s221 = scalar_select %p220, %s219, 15
      %s222 = smul.addr %s221, 4
      %s223 = scalar_lea.vmem %s0, %s222
      %p224 = pneg %p49
      %p225 = pneg %p46
      %p226 = pneg %p70
      %p227 = pneg %p67
      %p228 = pneg %p91
      %p229 = pneg %p88
      %p230 = pneg %p112
      %p231 = pneg %p109
      %s232 = smul.u32 16, %s21
      %p233 = scmp.lt.s32.totalorder %s232, 15
      %s234 = scalar_select %p233, %s232, 15
      %s235 = smul.addr %s234, 4
      %s236 = scalar_lea.vmem %s4, %s235
      %p237 = pneg %p138
      %p238 = pneg %p135
      %p239 = pneg %p166
      %p240 = pneg %p163
      %s241 = smul.u32 %s21, %s20
      %s242 = smul.u32 16, %s241
      %p243 = scmp.lt.s32.totalorder %s242, 15
      %s244 = scalar_select %p243, %s242, 15
      %s245 = smul.addr %s244, 4
      %s246 = scalar_lea.vmem %s5, %s245
      %s247 = smul.u32 16, %s21
      %p248 = scmp.lt.s32.totalorder %s247, 15
      %s249 = scalar_select %p248, %s247, 15
      %s250 = smul.addr %s249, 4
      %s251 = scalar_lea.vmem %s0, %s250
      %s252 = smul.u32 16, %s21
      %s253 = smul.u32 16, %s21
      %p254 = scmp.lt.s32.totalorder %s253, 15
      %s255 = scalar_select %p254, %s253, 15
      %s256 = smul.addr %s255, 4
      %s257 = scalar_lea.vmem %s4, %s256
      %s258 = smul.u32 16, %s21
      %s259 = smul.u32 %s21, %s20
      %s260 = smul.u32 16, %s259
      %p261 = scmp.lt.s32.totalorder %s260, 15
      %s262 = scalar_select %p261, %s260, 15
      %s263 = smul.addr %s262, 4
      %s264 = scalar_lea.vmem %s5, %s263
      %s265 = smul.u32 %s21, %s20
      %s266 = smul.u32 16, %s265
      %p268 = scmp.eq.s32.totalorder %s20, 0
      %p269 = scmp.eq.s32.totalorder %s21, 0
      %p270 = pnand %p268, %p269
      %p271 = pneg %p270
      // Predicated region
      $region41: #{cand_bottleneck_block.11} parent=39 // pred_check
        _
      $region42: #{cand_bottleneck_block.11} parent=39 // pred_check_branch
        %273 = sbr.rel (%p270) target = $region44
      $region43: #{cand_bottleneck_block.11} parent=39 // pred_region
        %274 = vst [vmem:[#allocation2] sm:$0x1] 0.0
        %275 = vst [vmem:[#allocation3] sm:$0x1] 0.0
      $region44: #{cand_bottleneck_block.11} parent=39 // pred_fallthru
        _
      %v276 = vld [vmem:[%s251] sm:$0xf]
      %v277 = vld [vmem:[%s251 + $0x4] sm:$0xf]
      %v278 = vld [vmem:[%s251 + $0x8] sm:$0xf]
      %v279 = vld [vmem:[%s251 + $0xc] sm:$0xf]
      %v280 = vld [vmem:[%s251 + $0x10] sm:$0xf]
      %v281 = vld [vmem:[%s251 + $0x14] sm:$0xf]
      %v282 = vld [vmem:[%s251 + $0x18] sm:$0xf]
      %v283 = vld [vmem:[%s251 + $0x1c] sm:$0xf]
      %v284 = vld [vmem:[%s251 + $0x20] sm:$0xf]
      %v285 = vld [vmem:[%s251 + $0x24] sm:$0xf]
      %v286 = vld [vmem:[%s251 + $0x28] sm:$0xf]
      %v287 = vld [vmem:[%s251 + $0x2c] sm:$0xf]
      %v288 = vld [vmem:[%s251 + $0x30] sm:$0xf]
      %v289 = vld [vmem:[%s251 + $0x34] sm:$0xf]
      %v290 = vld [vmem:[%s251 + $0x38] sm:$0xf]
      %v291 = vld [vmem:[%s251 + $0x3c] sm:$0xf]
      %v292 = vld [vmem:[%s1] sm:$0xf]
      %v293 = vld [vmem:[%s1 + $0x4] sm:$0xf]
      %v294 = vld [vmem:[%s1 + $0x8] sm:$0xf]
      %v295 = vld [vmem:[%s1 + $0xc] sm:$0xf]
      %v296 = vld [vmem:[%s1 + $0x10] sm:$0xf]
      %v297 = vld [vmem:[%s1 + $0x14] sm:$0xf]
      %v298 = vld [vmem:[%s1 + $0x18] sm:$0xf]
      %v299 = vld [vmem:[%s1 + $0x1c] sm:$0xf]
      %v300 = vld [vmem:[%s1 + $0x20] sm:$0xf]
      %v301 = vld [vmem:[%s1 + $0x24] sm:$0xf]
      %v302 = vld [vmem:[%s1 + $0x28] sm:$0xf]
      %v303 = vld [vmem:[%s1 + $0x2c] sm:$0xf]
      %v304 = vld [vmem:[%s1 + $0x30] sm:$0xf]
      %v305 = vld [vmem:[%s1 + $0x34] sm:$0xf]
      %v306 = vld [vmem:[%s1 + $0x38] sm:$0xf]
      %v307 = vld [vmem:[%s1 + $0x3c] sm:$0xf]
      %v324 = vunpack.c.l.b16 %v276
      %v325 = vunpack.c.l.b16 %v277
      %v326 = vunpack.c.l.b16 %v278
      %v327 = vunpack.c.l.b16 %v279
      %v328 = vunpack.c.l.b16 %v280
      %v329 = vunpack.c.l.b16 %v281
      %v330 = vunpack.c.l.b16 %v282
      %v331 = vunpack.c.l.b16 %v283
      %v332 = vunpack.c.l.b16 %v284
      %v333 = vunpack.c.l.b16 %v285
      %v334 = vunpack.c.l.b16 %v286
      %v335 = vunpack.c.l.b16 %v287
      %v336 = vunpack.c.l.b16 %v288
      %v337 = vunpack.c.l.b16 %v289
      %v338 = vunpack.c.l.b16 %v290
      %v339 = vunpack.c.l.b16 %v291
      %v340 = vpack.c.b16 %v325, %v324
      %v341 = vpack.c.b16 %v327, %v326
      %v342 = vpack.c.b16 %v329, %v328
      %v343 = vpack.c.b16 %v331, %v330
      %v344 = vpack.c.b16 %v333, %v332
      %v345 = vpack.c.b16 %v335, %v334
      %v346 = vpack.c.b16 %v337, %v336
      %v347 = vpack.c.b16 %v339, %v338
      %v372 = vunpack.c.l.b16 %v292
      %v373 = vunpack.c.l.b16 %v293
      %v374 = vunpack.c.l.b16 %v294
      %v375 = vunpack.c.l.b16 %v295
      %v376 = vunpack.c.l.b16 %v296
      %v377 = vunpack.c.l.b16 %v297
      %v378 = vunpack.c.l.b16 %v298
      %v379 = vunpack.c.l.b16 %v299
      %v380 = vunpack.c.l.b16 %v300
      %v381 = vunpack.c.l.b16 %v301
      %v382 = vunpack.c.l.b16 %v302
      %v383 = vunpack.c.l.b16 %v303
      %v384 = vunpack.c.l.b16 %v304
      %v385 = vunpack.c.l.b16 %v305
      %v386 = vunpack.c.l.b16 %v306
      %v387 = vunpack.c.l.b16 %v307
      %v388 = vpack.c.b16 %v373, %v372
      %v389 = vpack.c.b16 %v375, %v374
      %v390 = vpack.c.b16 %v377, %v376
      %v391 = vpack.c.b16 %v379, %v378
      %v392 = vpack.c.b16 %v381, %v380
      %v393 = vpack.c.b16 %v383, %v382
      %v394 = vpack.c.b16 %v385, %v384
      %v395 = vpack.c.b16 %v387, %v386
      %404 = vmatprep.subr.bf16.mxu0 0
      %405 = vmatpush1.bf16.msra.mxu0 %v388
      %406 = vmatprep.subr.bf16.mxu0 0
      %407 = vmatpush1.bf16.msra.mxu0 %v389
      %408 = vmatprep.subr.bf16.mxu0 0
      %409 = vmatpush1.bf16.msra.mxu0 %v390
      %410 = vmatprep.subr.bf16.mxu0 0
      %411 = vmatpush1.bf16.msra.mxu0 %v391
      %412 = vmatprep.subr.bf16.mxu0 0
      %413 = vmatpush1.bf16.msra.mxu0 %v392
      %414 = vmatprep.subr.bf16.mxu0 0
      %415 = vmatpush1.bf16.msra.mxu0 %v393
      %416 = vmatprep.subr.bf16.mxu0 0
      %417 = vmatpush1.bf16.msra.mxu0 %v394
      %418 = vmatprep.subr.bf16.mxu0 0
      %419 = vmatpush1.bf16.msra.mxu0 %v395
      %420 = vmatprep.subr.bf16.mxu0 0
      %421 = vmatpush1.bf16.msra.mxu0 0
      %422 = vmatprep.subr.bf16.mxu0 0
      %423 = vmatpush1.bf16.msra.mxu0 0
      %424 = vmatprep.subr.bf16.mxu0 0
      %425 = vmatpush1.bf16.msra.mxu0 0
      %426 = vmatprep.subr.bf16.mxu0 0
      %427 = vmatpush1.bf16.msra.mxu0 0
      %428 = vmatprep.subr.bf16.mxu0 0
      %429 = vmatpush1.bf16.msra.mxu0 0
      %430 = vmatprep.subr.bf16.mxu0 0
      %431 = vmatpush1.bf16.msra.mxu0 0
      %432 = vmatprep.subr.bf16.mxu0 0
      %433 = vmatpush1.bf16.msra.mxu0 0
      %434 = vmatprep.subr.bf16.mxu0 0
      %435 = vmatpush1.bf16.msra.mxu0 0
      %436 = vmatprep.mubr.bf16.mxu0 0
      %437 = vmatmul.mubr.bf16.gmra.mrb[0].mxu0 %v340
      %v438 = vpop.f32.mrb[0].mxu0
      %v439 = vadd.f32 0.0, %v438
      %v440 = vpop.f32.mrb[0].mxu0
      %v441 = vpop.f32.mrb[0].mxu0
      %v442 = vadd.f32 0.0, %v441
      %v443 = vpop.f32.mrb[0].mxu0
      %444 = vmatprep.mubr.bf16.mxu0 0
      %445 = vmatmul.mubr.bf16.gmra.mrb[0].mxu0 %v341
      %v446 = vpop.f32.mrb[0].mxu0
      %v447 = vadd.f32 0.0, %v446
      %v448 = vpop.f32.mrb[0].mxu0
      %v449 = vpop.f32.mrb[0].mxu0
      %v450 = vadd.f32 0.0, %v449
      %v451 = vpop.f32.mrb[0].mxu0
      %452 = vmatprep.mubr.bf16.mxu0 0
      %453 = vmatmul.mubr.bf16.gmra.mrb[0].mxu0 %v342
      %v454 = vpop.f32.mrb[0].mxu0
      %v455 = vadd.f32 0.0, %v454
      %v456 = vpop.f32.mrb[0].mxu0
      %v457 = vpop.f32.mrb[0].mxu0
      %v458 = vadd.f32 0.0, %v457
      %v459 = vpop.f32.mrb[0].mxu0
      %460 = vmatprep.mubr.bf16.mxu0 0
      %461 = vmatmul.mubr.bf16.gmra.mrb[0].mxu0 %v343
      %v462 = vpop.f32.mrb[0].mxu0
      %v463 = vadd.f32 0.0, %v462
      %v464 = vpop.f32.mrb[0].mxu0
      %v465 = vpop.f32.mrb[0].mxu0
      %v466 = vadd.f32 0.0, %v465
      %v467 = vpop.f32.mrb[0].mxu0
      %468 = vmatprep.mubr.bf16.mxu0 0
      %469 = vmatmul.mubr.bf16.gmra.mrb[0].mxu0 %v344
      %v470 = vpop.f32.mrb[0].mxu0
      %v471 = vadd.f32 0.0, %v470
      %v472 = vpop.f32.mrb[0].mxu0
      %v473 = vpop.f32.mrb[0].mxu0
      %v474 = vadd.f32 0.0, %v473
      %v475 = vpop.f32.mrb[0].mxu0
      %476 = vmatprep.mubr.bf16.mxu0 0
      %477 = vmatmul.mubr.bf16.gmra.mrb[0].mxu0 %v345
      %v478 = vpop.f32.mrb[0].mxu0
      %v479 = vadd.f32 0.0, %v478
      %v480 = vpop.f32.mrb[0].mxu0
      %v481 = vpop.f32.mrb[0].mxu0
      %v482 = vadd.f32 0.0, %v481
      %v483 = vpop.f32.mrb[0].mxu0
      %484 = vmatprep.mubr.bf16.mxu0 0
      %485 = vmatmul.mubr.bf16.gmra.mrb[0].mxu0 %v346
      %v486 = vpop.f32.mrb[0].mxu0
      %v487 = vadd.f32 0.0, %v486
      %v488 = vpop.f32.mrb[0].mxu0
      %v489 = vpop.f32.mrb[0].mxu0
      %v490 = vadd.f32 0.0, %v489
      %v491 = vpop.f32.mrb[0].mxu0
      %492 = vmatprep.mubr.bf16.mxu0 0
      %493 = vmatmul.mubr.bf16.gmra.mrb[0].mxu0 %v347
      %v494 = vpop.f32.mrb[0].mxu0
      %v495 = vadd.f32 0.0, %v494
      %v496 = vpop.f32.mrb[0].mxu0
      %v497 = vpop.f32.mrb[0].mxu0
      %v498 = vadd.f32 0.0, %v497
      %v499 = vpop.f32.mrb[0].mxu0
      %500 = vdwg.mxu0
      // Predicated region
      $region45: #{cand_bottleneck_block.11} parent=39 // pred_check
        %p501 = pneg %p268
      $region46: #{cand_bottleneck_block.11} parent=39 // pred_check_branch
        %503 = sbr.rel (%p501) target = $region48
      $region47: #{cand_bottleneck_block.11} parent=39 // pred_region
        %v504 = vld [vmem:[#allocation2] sm:$0x1]
        %v505 = vadd.f32 %v439, %v442
        %v506 = vadd.f32 %v505, %v447
        %v507 = vadd.f32 %v506, %v450
        %v508 = vadd.f32 %v507, %v455
        %v509 = vadd.f32 %v508, %v458
        %v510 = vadd.f32 %v509, %v463
        %v511 = vadd.f32 %v510, %v466
        %v512 = vadd.f32 %v511, %v471
        %v513 = vadd.f32 %v512, %v474
        %v514 = vadd.f32 %v513, %v479
        %v515 = vadd.f32 %v514, %v482
        %v516 = vadd.f32 %v515, %v487
        %v517 = vadd.f32 %v516, %v490
        %v518 = vadd.f32 %v517, %v495
        %v519 = vadd.f32 %v518, %v498
        %v520 = vrot.slane %v519, 4
        %v521 = vadd.f32 %v519, %v520
        %v522 = vrot.slane %v521, 2
        %v523 = vadd.f32 %v521, %v522
        %v524 = vrot.slane %v523, 1
        %v525 = vadd.f32 %v523, %v524
        %v526 = vadd.f32 %v504, %v525
        %527 = vst [vmem:[#allocation2] sm:$0x1] %v526
        %v528 = vld [vmem:[#allocation3] sm:$0x1]
        %v529 = vmul.f32 %v439, %v439
        %v530 = vmul.f32 %v442, %v442
        %v531 = vmul.f32 %v447, %v447
        %v532 = vmul.f32 %v450, %v450
        %v533 = vmul.f32 %v455, %v455
        %v534 = vmul.f32 %v458, %v458
        %v535 = vmul.f32 %v463, %v463
        %v536 = vmul.f32 %v466, %v466
        %v537 = vmul.f32 %v471, %v471
        %v538 = vmul.f32 %v474, %v474
        %v539 = vmul.f32 %v479, %v479
        %v540 = vmul.f32 %v482, %v482
        %v541 = vmul.f32 %v487, %v487
        %v542 = vmul.f32 %v490, %v490
        %v543 = vmul.f32 %v495, %v495
        %v544 = vmul.f32 %v498, %v498
        %v545 = vadd.f32 %v529, %v530
        %v546 = vadd.f32 %v545, %v531
        %v547 = vadd.f32 %v546, %v532
        %v548 = vadd.f32 %v547, %v533
        %v549 = vadd.f32 %v548, %v534
        %v550 = vadd.f32 %v549, %v535
        %v551 = vadd.f32 %v550, %v536
        %v552 = vadd.f32 %v551, %v537
        %v553 = vadd.f32 %v552, %v538
        %v554 = vadd.f32 %v553, %v539
        %v555 = vadd.f32 %v554, %v540
        %v556 = vadd.f32 %v555, %v541
        %v557 = vadd.f32 %v556, %v542
        %v558 = vadd.f32 %v557, %v543
        %v559 = vadd.f32 %v558, %v544
        %v560 = vrot.slane %v559, 4
        %v561 = vadd.f32 %v559, %v560
        %v562 = vrot.slane %v561, 2
        %v563 = vadd.f32 %v561, %v562
        %v564 = vrot.slane %v563, 1
        %v565 = vadd.f32 %v563, %v564
        %v566 = vadd.f32 %v528, %v565
        %567 = vst [vmem:[#allocation3] sm:$0x1] %v566
      $region48: #{cand_bottleneck_block.11} parent=39 // pred_fallthru
        _
      %p568 = scmp.eq.s32.totalorder %s20, 1
      // Predicated region
      $region49: #{cand_bottleneck_block.11} parent=39 // pred_check
        %p569 = pneg %p568
      $region50: #{cand_bottleneck_block.11} parent=39 // pred_check_branch
        %571 = sbr.rel (%p569) target = $region52
      $region51: #{cand_bottleneck_block.11} parent=39 // pred_region
        %v572 = vld [vmem:[#allocation2] sm:$0x1]
        %v573 = vmul.f32 %v572, 0.0078125
        %v574 = vld [vmem:[#allocation3] sm:$0x1]
        %v575 = vmul.f32 %v574, 0.0078125
        %v576 = vmul.f32 %v573, %v573
        %v577 = vsub.f32 %v575, %v576
        %v578 = vmax.f32 %v577, 0.0
        %v580 = vlaneseq
        %v581 = vshrl.u32 %v580, 7
        %v582 = vsub.s32 0, %v581
        %v583 = vrot.slane %v573, %v582
        %v585 = vsub.f32 %v439, %v583
        %v586 = vsub.f32 %v442, %v583
        %v587 = vsub.f32 %v447, %v583
        %v588 = vsub.f32 %v450, %v583
        %v589 = vsub.f32 %v455, %v583
        %v590 = vsub.f32 %v458, %v583
        %v591 = vsub.f32 %v463, %v583
        %v592 = vsub.f32 %v466, %v583
        %v593 = vsub.f32 %v471, %v583
        %v594 = vsub.f32 %v474, %v583
        %v595 = vsub.f32 %v479, %v583
        %v596 = vsub.f32 %v482, %v583
        %v597 = vsub.f32 %v487, %v583
        %v598 = vsub.f32 %v490, %v583
        %v599 = vsub.f32 %v495, %v583
        %v600 = vsub.f32 %v498, %v583
        %v601 = vadd.f32 %v578, 1e-05
        %v602 = vrsqrt.pop %v601
        %v603 = vld [vmem:[%s2] sm:$0x1]
        %v604 = vmul.f32 %v602, %v603
        %v606 = vlaneseq
        %v607 = vshrl.u32 %v606, 7
        %v608 = vsub.s32 0, %v607
        %v609 = vrot.slane %v604, %v608
        %v611 = vmul.f32 %v585, %v609
        %v612 = vmul.f32 %v586, %v609
        %v613 = vmul.f32 %v587, %v609
        %v614 = vmul.f32 %v588, %v609
        %v615 = vmul.f32 %v589, %v609
        %v616 = vmul.f32 %v590, %v609
        %v617 = vmul.f32 %v591, %v609
        %v618 = vmul.f32 %v592, %v609
        %v619 = vmul.f32 %v593, %v609
        %v620 = vmul.f32 %v594, %v609
        %v621 = vmul.f32 %v595, %v609
        %v622 = vmul.f32 %v596, %v609
        %v623 = vmul.f32 %v597, %v609
        %v624 = vmul.f32 %v598, %v609
        %v625 = vmul.f32 %v599, %v609
        %v626 = vmul.f32 %v600, %v609
        %v627 = vld [vmem:[%s3] sm:$0x1]
        %v629 = vlaneseq
        %v630 = vshrl.u32 %v629, 7
        %v631 = vsub.s32 0, %v630
        %v632 = vrot.slane %v627, %v631
        %v634 = vadd.f32 %v611, %v632
        %v635 = vadd.f32 %v612, %v632
        %v636 = vadd.f32 %v613, %v632
        %v637 = vadd.f32 %v614, %v632
        %v638 = vadd.f32 %v615, %v632
        %v639 = vadd.f32 %v616, %v632
        %v640 = vadd.f32 %v617, %v632
        %v641 = vadd.f32 %v618, %v632
        %v642 = vadd.f32 %v619, %v632
        %v643 = vadd.f32 %v620, %v632
        %v644 = vadd.f32 %v621, %v632
        %v645 = vadd.f32 %v622, %v632
        %v646 = vadd.f32 %v623, %v632
        %v647 = vadd.f32 %v624, %v632
        %v648 = vadd.f32 %v625, %v632
        %v649 = vadd.f32 %v626, %v632
        %v650 = vld [vmem:[%s257] sm:$0xf]
        %v651 = vld [vmem:[%s257 + $0x4] sm:$0xf]
        %v652 = vld [vmem:[%s257 + $0x8] sm:$0xf]
        %v653 = vld [vmem:[%s257 + $0xc] sm:$0xf]
        %v654 = vld [vmem:[%s257 + $0x10] sm:$0xf]
        %v655 = vld [vmem:[%s257 + $0x14] sm:$0xf]
        %v656 = vld [vmem:[%s257 + $0x18] sm:$0xf]
        %v657 = vld [vmem:[%s257 + $0x1c] sm:$0xf]
        %v658 = vld [vmem:[%s257 + $0x20] sm:$0xf]
        %v659 = vld [vmem:[%s257 + $0x24] sm:$0xf]
        %v660 = vld [vmem:[%s257 + $0x28] sm:$0xf]
        %v661 = vld [vmem:[%s257 + $0x2c] sm:$0xf]
        %v662 = vld [vmem:[%s257 + $0x30] sm:$0xf]
        %v663 = vld [vmem:[%s257 + $0x34] sm:$0xf]
        %v664 = vld [vmem:[%s257 + $0x38] sm:$0xf]
        %v665 = vld [vmem:[%s257 + $0x3c] sm:$0xf]
        %v666 = vunpack.c.l.bf16 %v650
        %v667 = vunpack.c.l.bf16 %v651
        %v668 = vunpack.c.l.bf16 %v652
        %v669 = vunpack.c.l.bf16 %v653
        %v670 = vunpack.c.l.bf16 %v654
        %v671 = vunpack.c.l.bf16 %v655
        %v672 = vunpack.c.l.bf16 %v656
        %v673 = vunpack.c.l.bf16 %v657
        %v674 = vunpack.c.l.bf16 %v658
        %v675 = vunpack.c.l.bf16 %v659
        %v676 = vunpack.c.l.bf16 %v660
        %v677 = vunpack.c.l.bf16 %v661
        %v678 = vunpack.c.l.bf16 %v662
        %v679 = vunpack.c.l.bf16 %v663
        %v680 = vunpack.c.l.bf16 %v664
        %v681 = vunpack.c.l.bf16 %v665
        %v682 = vadd.f32 %v634, %v666
        %v683 = vadd.f32 %v635, %v667
        %v684 = vadd.f32 %v636, %v668
        %v685 = vadd.f32 %v637, %v669
        %v686 = vadd.f32 %v638, %v670
        %v687 = vadd.f32 %v639, %v671
        %v688 = vadd.f32 %v640, %v672
        %v689 = vadd.f32 %v641, %v673
        %v690 = vadd.f32 %v642, %v674
        %v691 = vadd.f32 %v643, %v675
        %v692 = vadd.f32 %v644, %v676
        %v693 = vadd.f32 %v645, %v677
        %v694 = vadd.f32 %v646, %v678
        %v695 = vadd.f32 %v647, %v679
        %v696 = vadd.f32 %v648, %v680
        %v697 = vadd.f32 %v649, %v681
        %v698 = vmax.f32 %v682, 0.0
        %v699 = vmax.f32 %v683, 0.0
        %v700 = vmax.f32 %v684, 0.0
        %v701 = vmax.f32 %v685, 0.0
        %v702 = vmax.f32 %v686, 0.0
        %v703 = vmax.f32 %v687, 0.0
        %v704 = vmax.f32 %v688, 0.0
        %v705 = vmax.f32 %v689, 0.0
        %v706 = vmax.f32 %v690, 0.0
        %v707 = vmax.f32 %v691, 0.0
        %v708 = vmax.f32 %v692, 0.0
        %v709 = vmax.f32 %v693, 0.0
        %v710 = vmax.f32 %v694, 0.0
        %v711 = vmax.f32 %v695, 0.0
        %v712 = vmax.f32 %v696, 0.0
        %v713 = vmax.f32 %v697, 0.0
        %v714 = vpack.c.bf16 %v699, %v698
        %v715 = vpack.c.bf16 %v701, %v700
        %v716 = vpack.c.bf16 %v703, %v702
        %v717 = vpack.c.bf16 %v705, %v704
        %v718 = vpack.c.bf16 %v707, %v706
        %v719 = vpack.c.bf16 %v709, %v708
        %v720 = vpack.c.bf16 %v711, %v710
        %v721 = vpack.c.bf16 %v713, %v712
        %v730 = vunpack.c.l.b16 %v714
        %v731 = vunpack.c.h.b16 %v714
        %v732 = vunpack.c.l.b16 %v715
        %v733 = vunpack.c.h.b16 %v715
        %v734 = vunpack.c.l.b16 %v716
        %v735 = vunpack.c.h.b16 %v716
        %v736 = vunpack.c.l.b16 %v717
        %v737 = vunpack.c.h.b16 %v717
        %v738 = vunpack.c.l.b16 %v718
        %v739 = vunpack.c.h.b16 %v718
        %v740 = vunpack.c.l.b16 %v719
        %v741 = vunpack.c.h.b16 %v719
        %v742 = vunpack.c.l.b16 %v720
        %v743 = vunpack.c.h.b16 %v720
        %v744 = vunpack.c.l.b16 %v721
        %v745 = vunpack.c.h.b16 %v721
        %v746 = vpack.c.b16 %v730, %v730
        %v747 = vpack.c.b16 %v731, %v731
        %v748 = vpack.c.b16 %v732, %v732
        %v749 = vpack.c.b16 %v733, %v733
        %v750 = vpack.c.b16 %v734, %v734
        %v751 = vpack.c.b16 %v735, %v735
        %v752 = vpack.c.b16 %v736, %v736
        %v753 = vpack.c.b16 %v737, %v737
        %v754 = vpack.c.b16 %v738, %v738
        %v755 = vpack.c.b16 %v739, %v739
        %v756 = vpack.c.b16 %v740, %v740
        %v757 = vpack.c.b16 %v741, %v741
        %v758 = vpack.c.b16 %v742, %v742
        %v759 = vpack.c.b16 %v743, %v743
        %v760 = vpack.c.b16 %v744, %v744
        %v761 = vpack.c.b16 %v745, %v745
        %778 = vst [vmem:[%s264] sm:$0xf] %v746
        %779 = vst [vmem:[%s264 + $0x4] sm:$0xf] %v747
        %780 = vst [vmem:[%s264 + $0x8] sm:$0xf] %v748
        %781 = vst [vmem:[%s264 + $0xc] sm:$0xf] %v749
        %782 = vst [vmem:[%s264 + $0x10] sm:$0xf] %v750
        %783 = vst [vmem:[%s264 + $0x14] sm:$0xf] %v751
        %784 = vst [vmem:[%s264 + $0x18] sm:$0xf] %v752
        %785 = vst [vmem:[%s264 + $0x1c] sm:$0xf] %v753
        %786 = vst [vmem:[%s264 + $0x20] sm:$0xf] %v754
        %787 = vst [vmem:[%s264 + $0x24] sm:$0xf] %v755
        %788 = vst [vmem:[%s264 + $0x28] sm:$0xf] %v756
        %789 = vst [vmem:[%s264 + $0x2c] sm:$0xf] %v757
        %790 = vst [vmem:[%s264 + $0x30] sm:$0xf] %v758
        %791 = vst [vmem:[%s264 + $0x34] sm:$0xf] %v759
        %792 = vst [vmem:[%s264 + $0x38] sm:$0xf] %v760
        %793 = vst [vmem:[%s264 + $0x3c] sm:$0xf] %v761
      $region52: #{cand_bottleneck_block.11} parent=39 // pred_fallthru
        _
      %s794 = smul.u32 %s21, %s20
      %s795 = smul.u32 16, %s794
      %p796 = scmp.lt.s32.totalorder %s795, 15
      %s797 = scalar_select %p796, %s795, 15
      %s798 = smul.addr %s797, 4
      %s799 = scalar_lea.vmem %s5, %s798
      // Predicated region
      $region53: #{cand_bottleneck_block.11} parent=39 // pred_check
        %p800 = pneg %p163
      $region54: #{cand_bottleneck_block.11} parent=39 // pred_check_branch
        %802 = sbr.rel (%p800) target = $region56
      $region55: #{cand_bottleneck_block.11} parent=39 // pred_region
        %s803 = smul.u32 %s21, %s20
        %s804 = smul.u32 16, %s803
      $region56: #{cand_bottleneck_block.11} parent=39 // pred_fallthru
        _
    $region40: #{cand_bottleneck_block.11} parent=5 // pred_fallthru
      _
    %p805 = scmp.le.s32.totalorder 2, %s11
    // Predicated region
    $region57: #{cand_bottleneck_block.11} parent=5 // pred_check
      %p806 = pneg %p805
    $region58: #{cand_bottleneck_block.11} parent=5 // pred_check_branch
      %808 = sbr.rel (%p806) target = $region60
    $region59: #{cand_bottleneck_block.11} parent=5 // pred_region
      %s809 = ssub.s32 %s11, 2
      // Predicated region
      $region61: #{cand_bottleneck_block.11} parent=59 // pred_check
        %p810 = pneg %p169
      $region62: #{cand_bottleneck_block.11} parent=59 // pred_check_branch
        %812 = sbr.rel (%p810) target = $region64
      $region63: #{cand_bottleneck_block.11} parent=59 // pred_region
        %s813 = smul.u32 %s23, %s22
        %s814 = smul.u32 16, %s813
        %p815 = scmp.lt.s32.totalorder %s814, 15
        %s816 = scalar_select %p815, %s814, 15
        %s817 = smul.addr %s816, 4
        %s818 = scalar_lea.vmem %s5, %s817
      $region64: #{cand_bottleneck_block.11} parent=59 // pred_fallthru
        _
    $region60: #{cand_bottleneck_block.11} parent=5 // pred_fallthru
      _
  $region6: #{cand_bottleneck_block.11} parent=0 // loop_footer
    %s15 = sadd.s32 1, %s11
  $region7: #{cand_bottleneck_block.11} parent=0 // loop_footer_branch
    %10 = sbr.rel target = $region3
  $region8: #{cand_bottleneck_block.11} parent=0 // loop_exit
    _

// kernel: cand_bottleneck_block.10
$region0: #{cand_bottleneck_block.10}
  #allocation0 [shape = 'u32[]', space=smem, size = 0x4, offset = 0x4, fixed_abs, tag = 'smem constant byte address 0x4 - core index']
  #allocation1 [shape = 'u32[144,128]{1,0:T(1,128)}', space=vmem, size = 0x12000, scoped, tag = 'internal scratch']
  #allocation2 [shape = 'f32[1,128]{1,0:T(1,128)}', space=vmem, size = 0x200, scoped, tag = 'scratch operand']
  #allocation3 [shape = 'f32[1,128]{1,0:T(1,128)}', space=vmem, size = 0x200, scoped, tag = 'scratch operand']
  %s0 = inlined_call_operand.vmem [shape: bf16[2,10,10,128], index: 0, kind: input, shape index: {}]
  %s1 = inlined_call_operand.vmem [shape: bf16[9,128,128], index: 1, kind: input, shape index: {}]
  %s2 = inlined_call_operand.vmem [shape: f32[1,128], index: 2, kind: input, shape index: {}]
  %s3 = inlined_call_operand.vmem [shape: f32[1,128], index: 3, kind: input, shape index: {}]
  %s4 = inlined_call_operand.vmem [shape: bf16[128,128], index: 4, kind: output, shape index: {}]
  %s5 = sld [smem:[#allocation0]]
  $region61: #{cand_bottleneck_block.10} parent=0
    _
  %s7 = ssub.s32 1, %s5
  %s8 = scalar_select 0, %s7, %s5
  loop: start=0, step=1, limit=6
  $region2: #{cand_bottleneck_block.10} parent=0 // loop_pre_header
    _
  $region3: #{cand_bottleneck_block.10} parent=0 // loop_header
    %s10 = sphi 0, %s14
    %p11 = scmp.ge.s32.totalorder %s10, 6
    %s17 = sphi 0, %s29
    %s18 = sphi 0, %s25
    %s19 = sphi 0, %s17
    %s20 = sphi 0, %s18
    %s21 = sphi 0, %s19
    %s22 = sphi 0, %s20
    %s32 = sphi 0, %s34
    %s35 = sphi 0, %s32
    %s36 = sphi 0, %s35
    %s52 = sphi 0, %s36
    %s56 = sphi 0, %s56
    %s58 = sphi 0, %s56
    %s59 = sphi 0, %s58
    %s73 = sphi 0, %s59
    %s77 = sphi 0, %s77
    %s79 = sphi 0, %s77
    %s80 = sphi 0, %s79
    %s94 = sphi 0, %s80
    %s98 = sphi 0, %s98
    %s100 = sphi 0, %s98
    %s101 = sphi 0, %s100
    %s115 = sphi 0, %s101
    %s123 = sphi 0, %s125
    %s126 = sphi 0, %s123
    %s127 = sphi 0, %s126
    %s143 = sphi 0, %s127
  $region4: #{cand_bottleneck_block.10} parent=0 // loop_header_branch
    %13 = sbr.rel (%p11) target = $region8
  $region5: #{cand_bottleneck_block.10} parent=0 // loop_body
    %s15 = ssub.s32 %s10, 1
    %s16 = ssub.s32 %s10, 2
    %s23 = sadd.s32 1, %s18
    %p24 = scmp.ge.s32.totalorder %s23, 2
    %s25 = scalar_select %p24, 0, %s23
    %s26 = sadd.s32 1, %s17
    %s27 = scalar_select %p24, %s26, %s17
    %p28 = scmp.ge.s32.totalorder %s27, 2
    %s29 = scalar_select %p28, 0, %s27
    %s30 = ssub.s32 %s18, %s25
    %p31 = scmp.eq.s32.totalorder %s30, 0
    %s33 = sadd.s32 %s32, 1
    %s34 = scalar_select %p31, %s32, %s33
    %p37 = pneg %p31
    %p38 = scmp.eq.s32.totalorder %s10, 3
    %p39 = por %p37, %p38
    %p40 = scmp.ne.s32.totalorder %s32, %s35
    %p41 = scmp.eq.s32.totalorder %s10, 0
    %p42 = por %p40, %p41
    %p43 = scmp.ne.s32.totalorder %s32, %s35
    %p44 = scmp.eq.s32.totalorder %s15, 3
    %p45 = por %p43, %p44
    %p46 = scmp.ne.s32.totalorder %s35, %s36
    %p47 = scmp.eq.s32.totalorder %s15, 0
    %p48 = por %p46, %p47
    %p49 = scmp.ne.s32.totalorder %s35, %s36
    %p50 = scmp.eq.s32.totalorder %s16, 3
    %p51 = por %p49, %p50
    %p53 = scmp.ne.s32.totalorder %s36, %s52
    %p54 = scmp.eq.s32.totalorder %s16, 0
    %p55 = por %p53, %p54
    %s57 = sadd.s32 %s56, 1
    %p60 = scmp.eq.s32.totalorder %s10, 3
    %p61 = scmp.ne.s32.totalorder %s56, %s58
    %p62 = scmp.eq.s32.totalorder %s10, 0
    %p63 = por %p61, %p62
    %p64 = scmp.ne.s32.totalorder %s56, %s58
    %p65 = scmp.eq.s32.totalorder %s15, 3
    %p66 = por %p64, %p65
    %p67 = scmp.ne.s32.totalorder %s58, %s59
    %p68 = scmp.eq.s32.totalorder %s15, 0
    %p69 = por %p67, %p68
    %p70 = scmp.ne.s32.totalorder %s58, %s59
    %p71 = scmp.eq.s32.totalorder %s16, 3
    %p72 = por %p70, %p71
    %p74 = scmp.ne.s32.totalorder %s59, %s73
    %p75 = scmp.eq.s32.totalorder %s16, 0
    %p76 = por %p74, %p75
    %s78 = sadd.s32 %s77, 1
    %p81 = scmp.eq.s32.totalorder %s10, 3
    %p82 = scmp.ne.s32.totalorder %s77, %s79
    %p83 = scmp.eq.s32.totalorder %s10, 0
    %p84 = por %p82, %p83
    %p85 = scmp.ne.s32.totalorder %s77, %s79
    %p86 = scmp.eq.s32.totalorder %s15, 3
    %p87 = por %p85, %p86
    %p88 = scmp.ne.s32.totalorder %s79, %s80
    %p89 = scmp.eq.s32.totalorder %s15, 0
    %p90 = por %p88, %p89
    %p91 = scmp.ne.s32.totalorder %s79, %s80
    %p92 = scmp.eq.s32.totalorder %s16, 3
    %p93 = por %p91, %p92
    %p95 = scmp.ne.s32.totalorder %s80, %s94
    %p96 = scmp.eq.s32.totalorder %s16, 0
    %p97 = por %p95, %p96
    %s99 = sadd.s32 %s98, 1
    %p102 = scmp.eq.s32.totalorder %s10, 3
    %p103 = scmp.ne.s32.totalorder %s98, %s100
    %p104 = scmp.eq.s32.totalorder %s10, 0
    %p105 = por %p103, %p104
    %p106 = scmp.ne.s32.totalorder %s98, %s100
    %p107 = scmp.eq.s32.totalorder %s15, 3
    %p108 = por %p106, %p107
    %p109 = scmp.ne.s32.totalorder %s100, %s101
    %p110 = scmp.eq.s32.totalorder %s15, 0
    %p111 = por %p109, %p110
    %p112 = scmp.ne.s32.totalorder %s100, %s101
    %p113 = scmp.eq.s32.totalorder %s16, 3
    %p114 = por %p112, %p113
    %p116 = scmp.ne.s32.totalorder %s101, %s115
    %p117 = scmp.eq.s32.totalorder %s16, 0
    %p118 = por %p116, %p117
    %s119 = smul.u32 %s18, %s17
    %s120 = smul.u32 %s25, %s29
    %s121 = ssub.s32 %s119, %s120
    %p122 = scmp.eq.s32.totalorder %s121, 0
    %s124 = sadd.s32 %s123, 1
    %s125 = scalar_select %p122, %s123, %s124
    %p128 = pneg %p122
    %p129 = scmp.eq.s32.totalorder %s10, 3
    %p130 = por %p128, %p129
    %p131 = scmp.ne.s32.totalorder %s123, %s126
    %p132 = scmp.eq.s32.totalorder %s10, 0
    %p133 = por %p131, %p132
    %p134 = scmp.ne.s32.totalorder %s123, %s126
    %p135 = scmp.eq.s32.totalorder %s15, 3
    %p136 = por %p134, %p135
    %p137 = scmp.ne.s32.totalorder %s126, %s127
    %p138 = scmp.eq.s32.totalorder %s15, 0
    %p139 = por %p137, %p138
    %p140 = scmp.ne.s32.totalorder %s126, %s127
    %p141 = scmp.eq.s32.totalorder %s16, 3
    %p142 = por %p140, %p141
    %p144 = scmp.ne.s32.totalorder %s127, %s143
    %p145 = scmp.eq.s32.totalorder %s16, 0
    %p146 = por %p144, %p145
    %p147 = scmp.le.s32.totalorder 1, %s10
    %p148 = scmp.lt.s32.totalorder %s10, 5
    %p149 = pnand %p147, %p148
    %p150 = pneg %p149
    // Predicated region
    $region9: #{cand_bottleneck_block.10} parent=5 // pred_check
      _
    $region10: #{cand_bottleneck_block.10} parent=5 // pred_check_branch
      %152 = sbr.rel (%p149) target = $region12
    $region11: #{cand_bottleneck_block.10} parent=5 // pred_region
      %s153 = ssub.s32 %s10, 1
      // Predicated region
      $region13: #{cand_bottleneck_block.10} parent=11 // pred_check
        %p154 = pneg %p69
      $region14: #{cand_bottleneck_block.10} parent=11 // pred_check_branch
        %156 = sbr.rel (%p154) target = $region16
      $region15: #{cand_bottleneck_block.10} parent=11 // pred_region
        _
      $region16: #{cand_bottleneck_block.10} parent=11 // pred_fallthru
        _
      // Predicated region
      $region17: #{cand_bottleneck_block.10} parent=11 // pred_check
        %p157 = pneg %p90
      $region18: #{cand_bottleneck_block.10} parent=11 // pred_check_branch
        %159 = sbr.rel (%p157) target = $region20
      $region19: #{cand_bottleneck_block.10} parent=11 // pred_region
        _
      $region20: #{cand_bottleneck_block.10} parent=11 // pred_fallthru
        _
      // Predicated region
      $region21: #{cand_bottleneck_block.10} parent=11 // pred_check
        %p160 = pneg %p111
      $region22: #{cand_bottleneck_block.10} parent=11 // pred_check_branch
        %162 = sbr.rel (%p160) target = $region24
      $region23: #{cand_bottleneck_block.10} parent=11 // pred_region
        _
      $region24: #{cand_bottleneck_block.10} parent=11 // pred_fallthru
        _
    $region12: #{cand_bottleneck_block.10} parent=5 // pred_fallthru
      _
    %p163 = scmp.lt.s32.totalorder %s10, 4
    // Predicated region
    $region25: #{cand_bottleneck_block.10} parent=5 // pred_check
      %p164 = pneg %p163
    $region26: #{cand_bottleneck_block.10} parent=5 // pred_check_branch
      %166 = sbr.rel (%p164) target = $region28
    $region27: #{cand_bottleneck_block.10} parent=5 // pred_region
      // Predicated region
      $region29: #{cand_bottleneck_block.10} parent=27 // pred_check
        %p167 = pneg %p42
      $region30: #{cand_bottleneck_block.10} parent=27 // pred_check_branch
        %169 = sbr.rel (%p167) target = $region32
      $region31: #{cand_bottleneck_block.10} parent=27 // pred_region
        %p170 = scmp.lt.s32.totalorder %s18, 1
        %s171 = scalar_select %p170, %s18, 1
        %s172 = smul.addr %s171, 20
        %s173 = smul.addr %s172, 4
        %s174 = scalar_lea.vmem %s0, %s173
      $region32: #{cand_bottleneck_block.10} parent=27 // pred_fallthru
        _
    $region28: #{cand_bottleneck_block.10} parent=5 // pred_fallthru
      _
    %p175 = scmp.le.s32.totalorder 1, %s10
    %p176 = scmp.lt.s32.totalorder %s10, 5
    %p177 = pnand %p175, %p176
    %p178 = pneg %p177
    // Predicated region
    $region33: #{cand_bottleneck_block.10} parent=5 // pred_check
      _
    $region34: #{cand_bottleneck_block.10} parent=5 // pred_check_branch
      %180 = sbr.rel (%p177) target = $region36
    $region35: #{cand_bottleneck_block.10} parent=5 // pred_region
      %s181 = ssub.s32 %s10, 1
      %p182 = scmp.lt.s32.totalorder %s20, 1
      %s183 = scalar_select %p182, %s20, 1
      %s184 = smul.addr %s183, 20
      %s185 = smul.addr %s184, 4
      %s186 = scalar_lea.vmem %s0, %s185
      %p187 = pneg %p48
      %p188 = pneg %p45
      %p189 = pneg %p69
      %p190 = pneg %p66
      %p191 = pneg %p90
      %p192 = pneg %p87
      %p193 = pneg %p111
      %p194 = pneg %p108
      %p195 = pneg %p139
      %p196 = pneg %p136
      %s197 = smul.u32 %s20, %s19
      %s198 = smul.u32 8, %s197
      %p199 = scmp.lt.s32.totalorder %s198, 15
      %s200 = scalar_select %p199, %s198, 15
      %s201 = smul.addr %s200, 4
      %s202 = scalar_lea.vmem %s4, %s201
      %p203 = scmp.lt.s32.totalorder %s20, 1
      %s204 = scalar_select %p203, %s20, 1
      %s205 = smul.addr %s204, 20
      %s206 = smul.addr %s205, 4
      %s207 = scalar_lea.vmem %s0, %s206
      %s208 = smul.u32 %s20, %s19
      %s209 = smul.u32 8, %s208
      %p210 = scmp.lt.s32.totalorder %s209, 15
      %s211 = scalar_select %p210, %s209, 15
      %s212 = smul.addr %s211, 4
      %s213 = scalar_lea.vmem %s4, %s212
      %s214 = smul.u32 %s20, %s19
      %s215 = smul.u32 8, %s214
      %p217 = scmp.eq.s32.totalorder %s19, 0
      %p218 = scmp.eq.s32.totalorder %s20, 0
      %p219 = pnand %p217, %p218
      %p220 = pneg %p219
      // Predicated region
      $region37: #{cand_bottleneck_block.10} parent=35 // pred_check
        _
      $region38: #{cand_bottleneck_block.10} parent=35 // pred_check_branch
        %222 = sbr.rel (%p219) target = $region40
      $region39: #{cand_bottleneck_block.10} parent=35 // pred_region
        %223 = vst [vmem:[#allocation2] sm:$0x1] 0.0
        %224 = vst [vmem:[#allocation3] sm:$0x1] 0.0
      $region40: #{cand_bottleneck_block.10} parent=35 // pred_fallthru
        _
      %v225 = vld [vmem:[%s207] sm:$0xf]
      %v226 = vld [vmem:[%s207 + $0x8] sm:$0xf]
      %v227 = vld [vmem:[%s207 + $0x10] sm:$0xf]
      %v228 = vld [vmem:[%s207 + $0x18] sm:$0xf]
      %v229 = vld [vmem:[%s207 + $0x20] sm:$0xf]
      %v230 = vld [vmem:[%s207 + $0x28] sm:$0xf]
      %v231 = vld [vmem:[%s207 + $0x30] sm:$0xf]
      %v232 = vld [vmem:[%s207 + $0x38] sm:$0xf]
      %v233 = vld [vmem:[%s1] sm:$0xf]
      %v234 = vld [vmem:[%s1 + $0x4] sm:$0xf]
      %v235 = vld [vmem:[%s1 + $0x8] sm:$0xf]
      %v236 = vld [vmem:[%s1 + $0xc] sm:$0xf]
      %v237 = vld [vmem:[%s1 + $0x10] sm:$0xf]
      %v238 = vld [vmem:[%s1 + $0x14] sm:$0xf]
      %v239 = vld [vmem:[%s1 + $0x18] sm:$0xf]
      %v240 = vld [vmem:[%s1 + $0x1c] sm:$0xf]
      %v241 = vld [vmem:[%s1 + $0x20] sm:$0xf]
      %v242 = vld [vmem:[%s1 + $0x24] sm:$0xf]
      %v243 = vld [vmem:[%s1 + $0x28] sm:$0xf]
      %v244 = vld [vmem:[%s1 + $0x2c] sm:$0xf]
      %v245 = vld [vmem:[%s1 + $0x30] sm:$0xf]
      %v246 = vld [vmem:[%s1 + $0x34] sm:$0xf]
      %v247 = vld [vmem:[%s1 + $0x38] sm:$0xf]
      %v248 = vld [vmem:[%s1 + $0x3c] sm:$0xf]
      %v249 = vld [vmem:[%s207 + $0x4] sm:$0x1]
      %v250 = vld [vmem:[%s207 + $0xc] sm:$0x1]
      %v251 = vld [vmem:[%s207 + $0x14] sm:$0x1]
      %v252 = vld [vmem:[%s207 + $0x1c] sm:$0x1]
      %v253 = vld [vmem:[%s207 + $0x24] sm:$0x1]
      %v254 = vld [vmem:[%s207 + $0x2c] sm:$0x1]
      %v255 = vld [vmem:[%s207 + $0x34] sm:$0x1]
      %v256 = vld [vmem:[%s207 + $0x3c] sm:$0x1]
      %vm257 = vsmask.f32 3328
      %vm258 = vsmask.f32 7440
      %vm259 = vmor %vm257, %vm258
      %v261 = vshrl.u32 %v225, 16
      %v263 = vrot.slane %v261, 4
      %v264 = vshll.u32 %v225, 16
      %v266 = vrot.slane %v264, 5
      %v267 = vor.u32 %v263, %v266
      %v268 = vrot.slane %v267, 4
      %v270 = vshll.u32 %v249, 16
      %v272 = vrot.slane %v270, 5
      %v273 = vsel %vm259, %v268, %v272
      %v275 = vshrl.u32 %v226, 16
      %v277 = vrot.slane %v275, 4
      %v278 = vshll.u32 %v226, 16
      %v280 = vrot.slane %v278, 5
      %v281 = vor.u32 %v277, %v280
      %v282 = vrot.slane %v281, 4
      %v284 = vshll.u32 %v250, 16
      %v286 = vrot.slane %v284, 5
      %v287 = vsel %vm259, %v282, %v286
      %v289 = vshrl.u32 %v227, 16
      %v291 = vrot.slane %v289, 4
      %v292 = vshll.u32 %v227, 16
      %v294 = vrot.slane %v292, 5
      %v295 = vor.u32 %v291, %v294
      %v296 = vrot.slane %v295, 4
      %v298 = vshll.u32 %v251, 16
      %v300 = vrot.slane %v298, 5
      %v301 = vsel %vm259, %v296, %v300
      %v303 = vshrl.u32 %v228, 16
      %v305 = vrot.slane %v303, 4
      %v306 = vshll.u32 %v228, 16
      %v308 = vrot.slane %v306, 5
      %v309 = vor.u32 %v305, %v308
      %v310 = vrot.slane %v309, 4
      %v312 = vshll.u32 %v252, 16
      %v314 = vrot.slane %v312, 5
      %v315 = vsel %vm259, %v310, %v314
      %v317 = vshrl.u32 %v229, 16
      %v319 = vrot.slane %v317, 4
      %v320 = vshll.u32 %v229, 16
      %v322 = vrot.slane %v320, 5
      %v323 = vor.u32 %v319, %v322
      %v324 = vrot.slane %v323, 4
      %v326 = vshll.u32 %v253, 16
      %v328 = vrot.slane %v326, 5
      %v329 = vsel %vm259, %v324, %v328
      %v331 = vshrl.u32 %v230, 16
      %v333 = vrot.slane %v331, 4
      %v334 = vshll.u32 %v230, 16
      %v336 = vrot.slane %v334, 5
      %v337 = vor.u32 %v333, %v336
      %v338 = vrot.slane %v337, 4
      %v340 = vshll.u32 %v254, 16
      %v342 = vrot.slane %v340, 5
      %v343 = vsel %vm259, %v338, %v342
      %v345 = vshrl.u32 %v231, 16
      %v347 = vrot.slane %v345, 4
      %v348 = vshll.u32 %v231, 16
      %v350 = vrot.slane %v348, 5
      %v351 = vor.u32 %v347, %v350
      %v352 = vrot.slane %v351, 4
      %v354 = vshll.u32 %v255, 16
      %v356 = vrot.slane %v354, 5
      %v357 = vsel %vm259, %v352, %v356
      %v359 = vshrl.u32 %v232, 16
      %v361 = vrot.slane %v359, 4
      %v362 = vshll.u32 %v232, 16
      %v364 = vrot.slane %v362, 5
      %v365 = vor.u32 %v361, %v364
      %v366 = vrot.slane %v365, 4
      %v368 = vshll.u32 %v256, 16
      %v370 = vrot.slane %v368, 5
      %v371 = vsel %vm259, %v366, %v370
      %s372 = scalar_lea.vmem %s1, 64
      %v373 = vld [vmem:[%s372] sm:$0xf]
      %v374 = vld [vmem:[%s372 + $0x4] sm:$0xf]
      %v375 = vld [vmem:[%s372 + $0x8] sm:$0xf]
      %v376 = vld [vmem:[%s372 + $0xc] sm:$0xf]
      %v377 = vld [vmem:[%s372 + $0x10] sm:$0xf]
      %v378 = vld [vmem:[%s372 + $0x14] sm:$0xf]
      %v379 = vld [vmem:[%s372 + $0x18] sm:$0xf]
      %v380 = vld [vmem:[%s372 + $0x1c] sm:$0xf]
      %v381 = vld [vmem:[%s372 + $0x20] sm:$0xf]
      %v382 = vld [vmem:[%s372 + $0x24] sm:$0xf]
      %v383 = vld [vmem:[%s372 + $0x28] sm:$0xf]
      %v384 = vld [vmem:[%s372 + $0x2c] sm:$0xf]
      %v385 = vld [vmem:[%s372 + $0x30] sm:$0xf]
      %v386 = vld [vmem:[%s372 + $0x34] sm:$0xf]
      %v387 = vld [vmem:[%s372 + $0x38] sm:$0xf]
      %v388 = vld [vmem:[%s372 + $0x3c] sm:$0xf]
      %v389 = vunpack.c.l.b16 %v273
      %v390 = vunpack.c.l.b16 %v287
      %v391 = vunpack.c.l.b16 %v301
      %v392 = vunpack.c.l.b16 %v315
      %v393 = vunpack.c.l.b16 %v329
      %v394 = vunpack.c.l.b16 %v343
      %v395 = vunpack.c.l.b16 %v357
      %v396 = vunpack.c.l.b16 %v371
      %v397 = vpack.c.b16 %v390, %v389
      %v398 = vpack.c.b16 %v392, %v391
      %v399 = vpack.c.b16 %v394, %v393
      %v400 = vpack.c.b16 %v396, %v395
      %v421 = vunpack.c.l.b16 %v373
      %v422 = vunpack.c.l.b16 %v374
      %v423 = vunpack.c.l.b16 %v375
      %v424 = vunpack.c.l.b16 %v376
      %v425 = vunpack.c.l.b16 %v377
      %v426 = vunpack.c.l.b16 %v378
      %v427 = vunpack.c.l.b16 %v379
      %v428 = vunpack.c.l.b16 %v380
      %v429 = vunpack.c.l.b16 %v381
      %v430 = vunpack.c.l.b16 %v382
      %v431 = vunpack.c.l.b16 %v383
      %v432 = vunpack.c.l.b16 %v384
      %v433 = vunpack.c.l.b16 %v385
      %v434 = vunpack.c.l.b16 %v386
      %v435 = vunpack.c.l.b16 %v387
      %v436 = vunpack.c.l.b16 %v388
      %v437 = vpack.c.b16 %v422, %v421
      %v438 = vpack.c.b16 %v424, %v423
      %v439 = vpack.c.b16 %v426, %v425
      %v440 = vpack.c.b16 %v428, %v427
      %v441 = vpack.c.b16 %v430, %v429
      %v442 = vpack.c.b16 %v432, %v431
      %v443 = vpack.c.b16 %v434, %v433
      %v444 = vpack.c.b16 %v436, %v435
      %453 = vmatprep.subr.bf16.mxu0 0
      %454 = vmatpush1.bf16.msra.mxu0 %v437
      %455 = vmatprep.subr.bf16.mxu0 0
      %456 = vmatpush1.bf16.msra.mxu0 %v438
      %457 = vmatprep.subr.bf16.mxu0 0
      %458 = vmatpush1.bf16.msra.mxu0 %v439
      %459 = vmatprep.subr.bf16.mxu0 0
      %460 = vmatpush1.bf16.msra.mxu0 %v440
      %461 = vmatprep.subr.bf16.mxu0 0
      %462 = vmatpush1.bf16.msra.mxu0 %v441
      %463 = vmatprep.subr.bf16.mxu0 0
      %464 = vmatpush1.bf16.msra.mxu0 %v442
      %465 = vmatprep.subr.bf16.mxu0 0
      %466 = vmatpush1.bf16.msra.mxu0 %v443
      %467 = vmatprep.subr.bf16.mxu0 0
      %468 = vmatpush1.bf16.msra.mxu0 %v444
      %469 = vmatprep.subr.bf16.mxu0 0
      %470 = vmatpush1.bf16.msra.mxu0 0
      %471 = vmatprep.subr.bf16.mxu0 0
      %472 = vmatpush1.bf16.msra.mxu0 0
      %473 = vmatprep.subr.bf16.mxu0 0
      %474 = vmatpush1.bf16.msra.mxu0 0
      %475 = vmatprep.subr.bf16.mxu0 0
      %476 = vmatpush1.bf16.msra.mxu0 0
      %477 = vmatprep.subr.bf16.mxu0 0
      %478 = vmatpush1.bf16.msra.mxu0 0
      %479 = vmatprep.subr.bf16.mxu0 0
      %480 = vmatpush1.bf16.msra.mxu0 0
      %481 = vmatprep.subr.bf16.mxu0 0
      %482 = vmatpush1.bf16.msra.mxu0 0
      %483 = vmatprep.subr.bf16.mxu0 0
      %484 = vmatpush1.bf16.msra.mxu0 0
      %485 = vmatprep.mubr.bf16.mxu0 0
      %486 = vmatmul.mubr.bf16.gmra.mrb[0].mxu0 %v397
      %v487 = vpop.f32.mrb[0].mxu0
      %v488 = vadd.f32 0.0, %v487
      %v489 = vpop.f32.mrb[0].mxu0
      %v490 = vpop.f32.mrb[0].mxu0
      %v491 = vadd.f32 0.0, %v490
      %v492 = vpop.f32.mrb[0].mxu0
      %493 = vmatprep.mubr.bf16.mxu0 0
      %494 = vmatmul.mubr.bf16.gmra.mrb[0].mxu0 %v398
      %v495 = vpop.f32.mrb[0].mxu0
      %v496 = vadd.f32 0.0, %v495
      %v497 = vpop.f32.mrb[0].mxu0
      %v498 = vpop.f32.mrb[0].mxu0
      %v499 = vadd.f32 0.0, %v498
      %v500 = vpop.f32.mrb[0].mxu0
      %501 = vmatprep.mubr.bf16.mxu0 0
      %502 = vmatmul.mubr.bf16.gmra.mrb[0].mxu0 %v399
      %v503 = vpop.f32.mrb[0].mxu0
      %v504 = vadd.f32 0.0, %v503
      %v505 = vpop.f32.mrb[0].mxu0
      %v506 = vpop.f32.mrb[0].mxu0
      %v507 = vadd.f32 0.0, %v506
      %v508 = vpop.f32.mrb[0].mxu0
      %509 = vmatprep.mubr.bf16.mxu0 0
      %510 = vmatmul.mubr.bf16.gmra.mrb[0].mxu0 %v400
      %v511 = vpop.f32.mrb[0].mxu0
      %v512 = vadd.f32 0.0, %v511
      %v513 = vpop.f32.mrb[0].mxu0
      %v514 = vpop.f32.mrb[0].mxu0
      %v515 = vadd.f32 0.0, %v514
      %v516 = vpop.f32.mrb[0].mxu0
      %517 = vdwg.mxu0
      %v526 = vunpack.c.l.b16 %v225
      %v527 = vunpack.c.l.b16 %v226
      %v528 = vunpack.c.l.b16 %v227
      %v529 = vunpack.c.l.b16 %v228
      %v530 = vunpack.c.l.b16 %v229
      %v531 = vunpack.c.l.b16 %v230
      %v532 = vunpack.c.l.b16 %v231
      %v533 = vunpack.c.l.b16 %v232
      %v534 = vpack.c.b16 %v527, %v526
      %v535 = vpack.c.b16 %v529, %v528
      %v536 = vpack.c.b16 %v531, %v530
      %v537 = vpack.c.b16 %v533, %v532
      %v558 = vunpack.c.l.b16 %v233
      %v559 = vunpack.c.l.b16 %v234
      %v560 = vunpack.c.l.b16 %v235
      %v561 = vunpack.c.l.b16 %v236
      %v562 = vunpack.c.l.b16 %v237
      %v563 = vunpack.c.l.b16 %v238
      %v564 = vunpack.c.l.b16 %v239
      %v565 = vunpack.c.l.b16 %v240
      %v566 = vunpack.c.l.b16 %v241
      %v567 = vunpack.c.l.b16 %v242
      %v568 = vunpack.c.l.b16 %v243
      %v569 = vunpack.c.l.b16 %v244
      %v570 = vunpack.c.l.b16 %v245
      %v571 = vunpack.c.l.b16 %v246
      %v572 = vunpack.c.l.b16 %v247
      %v573 = vunpack.c.l.b16 %v248
      %v574 = vpack.c.b16 %v559, %v558
      %v575 = vpack.c.b16 %v561, %v560
      %v576 = vpack.c.b16 %v563, %v562
      %v577 = vpack.c.b16 %v565, %v564
      %v578 = vpack.c.b16 %v567, %v566
      %v579 = vpack.c.b16 %v569, %v568
      %v580 = vpack.c.b16 %v571, %v570
      %v581 = vpack.c.b16 %v573, %v572
      %590 = vmatprep.subr.bf16.mxu0 0
      %591 = vmatpush1.bf16.msra.mxu0 %v574
      %592 = vmatprep.subr.bf16.mxu0 0
      %593 = vmatpush1.bf16.msra.mxu0 %v575
      %594 = vmatprep.subr.bf16.mxu0 0
      %595 = vmatpush1.bf16.msra.mxu0 %v576
      %596 = vmatprep.subr.bf16.mxu0 0
      %597 = vmatpush1.bf16.msra.mxu0 %v577
      %598 = vmatprep.subr.bf16.mxu0 0
      %599 = vmatpush1.bf16.msra.mxu0 %v578
      %600 = vmatprep.subr.bf16.mxu0 0
      %601 = vmatpush1.bf16.msra.mxu0 %v579
      %602 = vmatprep.subr.bf16.mxu0 0
      %603 = vmatpush1.bf16.msra.mxu0 %v580
      %604 = vmatprep.subr.bf16.mxu0 0
      %605 = vmatpush1.bf16.msra.mxu0 %v581
      %606 = vmatprep.subr.bf16.mxu0 0
      %607 = vmatpush1.bf16.msra.mxu0 0
      %608 = vmatprep.subr.bf16.mxu0 0
      %609 = vmatpush1.bf16.msra.mxu0 0
      %610 = vmatprep.subr.bf16.mxu0 0
      %611 = vmatpush1.bf16.msra.mxu0 0
      %612 = vmatprep.subr.bf16.mxu0 0
      %613 = vmatpush1.bf16.msra.mxu0 0
      %614 = vmatprep.subr.bf16.mxu0 0
      %615 = vmatpush1.bf16.msra.mxu0 0
      %616 = vmatprep.subr.bf16.mxu0 0
      %617 = vmatpush1.bf16.msra.mxu0 0
      %618 = vmatprep.subr.bf16.mxu0 0
      %619 = vmatpush1.bf16.msra.mxu0 0
      %620 = vmatprep.subr.bf16.mxu0 0
      %621 = vmatpush1.bf16.msra.mxu0 0
      %622 = vmatprep.mubr.bf16.mxu0 0
      %623 = vmatmul.mubr.bf16.gmra.mrb[0].mxu0 %v534
      %v624 = vpop.f32.mrb[0].mxu0
      %v625 = vadd.f32 %v488, %v624
      %v626 = vpop.f32.mrb[0].mxu0
      %v627 = vpop.f32.mrb[0].mxu0
      %v628 = vadd.f32 %v491, %v627
      %v629 = vpop.f32.mrb[0].mxu0
      %630 = vmatprep.mubr.bf16.mxu0 0
      %631 = vmatmul.mubr.bf16.gmra.mrb[0].mxu0 %v535
      %v632 = vpop.f32.mrb[0].mxu0
      %v633 = vadd.f32 %v496, %v632
      %v634 = vpop.f32.mrb[0].mxu0
      %v635 = vpop.f32.mrb[0].mxu0
      %v636 = vadd.f32 %v499, %v635
      %v637 = vpop.f32.mrb[0].mxu0
      %638 = vmatprep.mubr.bf16.mxu0 0
      %639 = vmatmul.mubr.bf16.gmra.mrb[0].mxu0 %v536
      %v640 = vpop.f32.mrb[0].mxu0
      %v641 = vadd.f32 %v504, %v640
      %v642 = vpop.f32.mrb[0].mxu0
      %v643 = vpop.f32.mrb[0].mxu0
      %v644 = vadd.f32 %v507, %v643
      %v645 = vpop.f32.mrb[0].mxu0
      %646 = vmatprep.mubr.bf16.mxu0 0
      %647 = vmatmul.mubr.bf16.gmra.mrb[0].mxu0 %v537
      %v648 = vpop.f32.mrb[0].mxu0
      %v649 = vadd.f32 %v512, %v648
      %v650 = vpop.f32.mrb[0].mxu0
      %v651 = vpop.f32.mrb[0].mxu0
      %v652 = vadd.f32 %v515, %v651
      %v653 = vpop.f32.mrb[0].mxu0
      %654 = vdwg.mxu0
      %v655 = vld [vmem:[%s207] sm:$0xe]
      %v656 = vld [vmem:[%s207 + $0x8] sm:$0xe]
      %v657 = vld [vmem:[%s207 + $0x10] sm:$0xe]
      %v658 = vld [vmem:[%s207 + $0x18] sm:$0xe]
      %v659 = vld [vmem:[%s207 + $0x20] sm:$0xe]
      %v660 = vld [vmem:[%s207 + $0x28] sm:$0xe]
      %v661 = vld [vmem:[%s207 + $0x30] sm:$0xe]
      %v662 = vld [vmem:[%s207 + $0x38] sm:$0xe]
      %vm679 = vcmask 1042432
      %vm680 = vcmask 1046532
      %vm681 = vmor %vm679, %vm680
      %v682 = vrot.slane %v655, 5
      %v683 = vrot.slane %v682, 4
      %v684 = vrot.slane %v249, 5
      %v685 = vsel %vm681, %v683, %v684
      %v686 = vrot.slane %v656, 5
      %v687 = vrot.slane %v686, 4
      %v688 = vrot.slane %v250, 5
      %v689 = vsel %vm681, %v687, %v688
      %v690 = vrot.slane %v657, 5
      %v691 = vrot.slane %v690, 4
      %v692 = vrot.slane %v251, 5
      %v693 = vsel %vm681, %v691, %v692
      %v694 = vrot.slane %v658, 5
      %v695 = vrot.slane %v694, 4
      %v696 = vrot.slane %v252, 5
      %v697 = vsel %vm681, %v695, %v696
      %v698 = vrot.slane %v659, 5
      %v699 = vrot.slane %v698, 4
      %v700 = vrot.slane %v253, 5
      %v701 = vsel %vm681, %v699, %v700
      %v702 = vrot.slane %v660, 5
      %v703 = vrot.slane %v702, 4
      %v704 = vrot.slane %v254, 5
      %v705 = vsel %vm681, %v703, %v704
      %v706 = vrot.slane %v661, 5
      %v707 = vrot.slane %v706, 4
      %v708 = vrot.slane %v255, 5
      %v709 = vsel %vm681, %v707, %v708
      %v710 = vrot.slane %v662, 5
      %v711 = vrot.slane %v710, 4
      %v712 = vrot.slane %v256, 5
      %v713 = vsel %vm681, %v711, %v712
      %s714 = scalar_lea.vmem %s1, 128
      %v715 = vld [vmem:[%s714] sm:$0xf]
      %v716 = vld [vmem:[%s714 + $0x4] sm:$0xf]
      %v717 = vld [vmem:[%s714 + $0x8] sm:$0xf]
      %v718 = vld [vmem:[%s714 + $0xc] sm:$0xf]
      %v719 = vld [vmem:[%s714 + $0x10] sm:$0xf]
      %v720 = vld [vmem:[%s714 + $0x14] sm:$0xf]
      %v721 = vld [vmem:[%s714 + $0x18] sm:$0xf]
      %v722 = vld [vmem:[%s714 + $0x1c] sm:$0xf]
      %v723 = vld [vmem:[%s714 + $0x20] sm:$0xf]
      %v724 = vld [vmem:[%s714 + $0x24] sm:$0xf]
      %v725 = vld [vmem:[%s714 + $0x28] sm:$0xf]
      %v726 = vld [vmem:[%s714 + $0x2c] sm:$0xf]
      %v727 = vld [vmem:[%s714 + $0x30] sm:$0xf]
      %v728 = vld [vmem:[%s714 + $0x34] sm:$0xf]
      %v729 = vld [vmem:[%s714 + $0x38] sm:$0xf]
      %v730 = vld [vmem:[%s714 + $0x3c] sm:$0xf]
      %v731 = vunpack.c.l.b16 %v685
      %v732 = vunpack.c.l.b16 %v689
      %v733 = vunpack.c.l.b16 %v693
      %v734 = vunpack.c.l.b16 %v697
      %v735 = vunpack.c.l.b16 %v701
      %v736 = vunpack.c.l.b16 %v705
      %v737 = vunpack.c.l.b16 %v709
      %v738 = vunpack.c.l.b16 %v713
      %v739 = vpack.c.b16 %v732, %v731
      %v740 = vpack.c.b16 %v734, %v733
      %v741 = vpack.c.b16 %v736, %v735
      %v742 = vpack.c.b16 %v738, %v737
      %v763 = vunpack.c.l.b16 %v715
      %v764 = vunpack.c.l.b16 %v716
      %v765 = vunpack.c.l.b16 %v717
      %v766 = vunpack.c.l.b16 %v718
      %v767 = vunpack.c.l.b16 %v719
      %v768 = vunpack.c.l.b16 %v720
      %v769 = vunpack.c.l.b16 %v721
      %v770 = vunpack.c.l.b16 %v722
      %v771 = vunpack.c.l.b16 %v723
      %v772 = vunpack.c.l.b16 %v724
      %v773 = vunpack.c.l.b16 %v725
      %v774 = vunpack.c.l.b16 %v726
      %v775 = vunpack.c.l.b16 %v727
      %v776 = vunpack.c.l.b16 %v728
      %v777 = vunpack.c.l.b16 %v729
      %v778 = vunpack.c.l.b16 %v730
      %v779 = vpack.c.b16 %v764, %v763
      %v780 = vpack.c.b16 %v766, %v765
      %v781 = vpack.c.b16 %v768, %v767
      %v782 = vpack.c.b16 %v770, %v769
      %v783 = vpack.c.b16 %v772, %v771
      %v784 = vpack.c.b16 %v774, %v773
      %v785 = vpack.c.b16 %v776, %v775
      %v786 = vpack.c.b16 %v778, %v777
      %795 = vmatprep.subr.bf16.mxu0 0
      %796 = vmatpush1.bf16.msra.mxu0 %v779
      %797 = vmatprep.subr.bf16.mxu0 0
      %798 = vmatpush1.bf16.msra.mxu0 %v780
      %799 = vmatprep.subr.bf16.mxu0 0
      %800 = vmatpush1.bf16.msra.mxu0 %v781
      %801 = vmatprep.subr.bf16.mxu0 0
      %802 = vmatpush1.bf16.msra.mxu0 %v782
      %803 = vmatprep.subr.bf16.mxu0 0
      %804 = vmatpush1.bf16.msra.mxu0 %v783
      %805 = vmatprep.subr.bf16.mxu0 0
      %806 = vmatpush1.bf16.msra.mxu0 %v784
      %807 = vmatprep.subr.bf16.mxu0 0
      %808 = vmatpush1.bf16.msra.mxu0 %v785
      %809 = vmatprep.subr.bf16.mxu0 0
      %810 = vmatpush1.bf16.msra.mxu0 %v786
      %811 = vmatprep.subr.bf16.mxu0 0
      %812 = vmatpush1.bf16.msra.mxu0 0
      %813 = vmatprep.subr.bf16.mxu0 0
      %814 = vmatpush1.bf16.msra.mxu0 0
      %815 = vmatprep.subr.bf16.mxu0 0
      %816 = vmatpush1.bf16.msra.mxu0 0
      %817 = vmatprep.subr.bf16.mxu0 0
      %818 = vmatpush1.bf16.msra.mxu0 0
      %819 = vmatprep.subr.bf16.mxu0 0
      %820 = vmatpush1.bf16.msra.mxu0 0
      %821 = vmatprep.subr.bf16.mxu0 0
      %822 = vmatpush1.bf16.msra.mxu0 0
      %823 = vmatprep.subr.bf16.mxu0 0
      %824 = vmatpush1.bf16.msra.mxu0 0
      %825 = vmatprep.subr.bf16.mxu0 0
      %826 = vmatpush1.bf16.msra.mxu0 0
      %827 = vmatprep.mubr.bf16.mxu0 0
      %828 = vmatmul.mubr.bf16.gmra.mrb[0].mxu0 %v739
      %v829 = vpop.f32.mrb[0].mxu0
      %v830 = vadd.f32 0.0, %v829
      %v831 = vpop.f32.mrb[0].mxu0
      %v832 = vpop.f32.mrb[0].mxu0
      %v833 = vadd.f32 0.0, %v832
      %v834 = vpop.f32.mrb[0].mxu0
      %835 = vmatprep.mubr.bf16.mxu0 0
      %836 = vmatmul.mubr.bf16.gmra.mrb[0].mxu0 %v740
      %v837 = vpop.f32.mrb[0].mxu0
      %v838 = vadd.f32 0.0, %v837
      %v839 = vpop.f32.mrb[0].mxu0
      %v840 = vpop.f32.mrb[0].mxu0
      %v841 = vadd.f32 0.0, %v840
      %v842 = vpop.f32.mrb[0].mxu0
      %843 = vmatprep.mubr.bf16.mxu0 0
      %844 = vmatmul.mubr.bf16.gmra.mrb[0].mxu0 %v741
      %v845 = vpop.f32.mrb[0].mxu0
      %v846 = vadd.f32 0.0, %v845
      %v847 = vpop.f32.mrb[0].mxu0
      %v848 = vpop.f32.mrb[0].mxu0
      %v849 = vadd.f32 0.0, %v848
      %v850 = vpop.f32.mrb[0].mxu0
      %851 = vmatprep.mubr.bf16.mxu0 0
      %852 = vmatmul.mubr.bf16.gmra.mrb[0].mxu0 %v742
      %v853 = vpop.f32.mrb[0].mxu0
      %v854 = vadd.f32 0.0, %v853
      %v855 = vpop.f32.mrb[0].mxu0
      %v856 = vpop.f32.mrb[0].mxu0
      %v857 = vadd.f32 0.0, %v856
      %v858 = vpop.f32.mrb[0].mxu0
      %859 = vdwg.mxu0
      %v860 = vadd.f32 %v625, %v830
      %v861 = vadd.f32 %v628, %v833
      %v862 = vadd.f32 %v633, %v838
      %v863 = vadd.f32 %v636, %v841
      %v864 = vadd.f32 %v641, %v846
      %v865 = vadd.f32 %v644, %v849
      %v866 = vadd.f32 %v649, %v854
      %v867 = vadd.f32 %v652, %v857
      %s868 = scalar_lea.vmem %s207, 8
      %v869 = vld [vmem:[%s868] sm:$0xf]
      %v870 = vld [vmem:[%s868 + $0x8] sm:$0xf]
      %v871 = vld [vmem:[%s868 + $0x10] sm:$0xf]
      %v872 = vld [vmem:[%s868 + $0x18] sm:$0xf]
      %v873 = vld [vmem:[%s868 + $0x20] sm:$0xf]
      %v874 = vld [vmem:[%s868 + $0x28] sm:$0xf]
      %v875 = vld [vmem:[%s868 + $0x30] sm:$0xf]
      %v876 = vld [vmem:[%s868 + $0x38] sm:$0xf]
      %s877 = scalar_lea.vmem %s1, 192
      %v878 = vld [vmem:[%s877] sm:$0xf]
      %v879 = vld [vmem:[%s877 + $0x4] sm:$0xf]
      %v880 = vld [vmem:[%s877 + $0x8] sm:$0xf]
      %v881 = vld [vmem:[%s877 + $0xc] sm:$0xf]
      %v882 = vld [vmem:[%s877 + $0x10] sm:$0xf]
      %v883 = vld [vmem:[%s877 + $0x14] sm:$0xf]
      %v884 = vld [vmem:[%s877 + $0x18] sm:$0xf]
      %v885 = vld [vmem:[%s877 + $0x1c] sm:$0xf]
      %v886 = vld [vmem:[%s877 + $0x20] sm:$0xf]
      %v887 = vld [vmem:[%s877 + $0x24] sm:$0xf]
      %v888 = vld [vmem:[%s877 + $0x28] sm:$0xf]
      %v889 = vld [vmem:[%s877 + $0x2c] sm:$0xf]
      %v890 = vld [vmem:[%s877 + $0x30] sm:$0xf]
      %v891 = vld [vmem:[%s877 + $0x34] sm:$0xf]
      %v892 = vld [vmem:[%s877 + $0x38] sm:$0xf]
      %v893 = vld [vmem:[%s877 + $0x3c] sm:$0xf]
      %v902 = vunpack.c.l.b16 %v869
      %v903 = vunpack.c.l.b16 %v870
      %v904 = vunpack.c.l.b16 %v871
      %v905 = vunpack.c.l.b16 %v872
      %v906 = vunpack.c.l.b16 %v873
      %v907 = vunpack.c.l.b16 %v874
      %v908 = vunpack.c.l.b16 %v875
      %v909 = vunpack.c.l.b16 %v876
      %v910 = vpack.c.b16 %v903, %v902
      %v911 = vpack.c.b16 %v905, %v904
      %v912 = vpack.c.b16 %v907, %v906
      %v913 = vpack.c.b16 %v909, %v908
      %v934 = vunpack.c.l.b16 %v878
      %v935 = vunpack.c.l.b16 %v879
      %v936 = vunpack.c.l.b16 %v880
      %v937 = vunpack.c.l.b16 %v881
      %v938 = vunpack.c.l.b16 %v882
      %v939 = vunpack.c.l.b16 %v883
      %v940 = vunpack.c.l.b16 %v884
      %v941 = vunpack.c.l.b16 %v885
      %v942 = vunpack.c.l.b16 %v886
      %v943 = vunpack.c.l.b16 %v887
      %v944 = vunpack.c.l.b16 %v888
      %v945 = vunpack.c.l.b16 %v889
      %v946 = vunpack.c.l.b16 %v890
      %v947 = vunpack.c.l.b16 %v891
      %v948 = vunpack.c.l.b16 %v892
      %v949 = vunpack.c.l.b16 %v893
      %v950 = vpack.c.b16 %v935, %v934
      %v951 = vpack.c.b16 %v937, %v936
      %v952 = vpack.c.b16 %v939, %v938
      %v953 = vpack.c.b16 %v941, %v940
      %v954 = vpack.c.b16 %v943, %v942
      %v955 = vpack.c.b16 %v945, %v944
      %v956 = vpack.c.b16 %v947, %v946
      %v957 = vpack.c.b16 %v949, %v948
      %966 = vmatprep.subr.bf16.mxu0 0
      %967 = vmatpush1.bf16.msra.mxu0 %v950
      %968 = vmatprep.subr.bf16.mxu0 0
      %969 = vmatpush1.bf16.msra.mxu0 %v951
      %970 = vmatprep.subr.bf16.mxu0 0
      %971 = vmatpush1.bf16.msra.mxu0 %v952
      %972 = vmatprep.subr.bf16.mxu0 0
      %973 = vmatpush1.bf16.msra.mxu0 %v953
      %974 = vmatprep.subr.bf16.mxu0 0
      %975 = vmatpush1.bf16.msra.mxu0 %v954
      %976 = vmatprep.subr.bf16.mxu0 0
      %977 = vmatpush1.bf16.msra.mxu0 %v955
      %978 = vmatprep.subr.bf16.mxu0 0
      %979 = vmatpush1.bf16.msra.mxu0 %v956
      %980 = vmatprep.subr.bf16.mxu0 0
      %981 = vmatpush1.bf16.msra.mxu0 %v957
      %982 = vmatprep.subr.bf16.mxu0 0
      %983 = vmatpush1.bf16.msra.mxu0 0
      %984 = vmatprep.subr.bf16.mxu0 0
      %985 = vmatpush1.bf16.msra.mxu0 0
      %986 = vmatprep.subr.bf16.mxu0 0
      %987 = vmatpush1.bf16.msra.mxu0 0
      %988 = vmatprep.subr.bf16.mxu0 0
      %989 = vmatpush1.bf16.msra.mxu0 0
      %990 = vmatprep.subr.bf16.mxu0 0
      %991 = vmatpush1.bf16.msra.mxu0 0
      %992 = vmatprep.subr.bf16.mxu0 0
      %993 = vmatpush1.bf16.msra.mxu0 0
      %994 = vmatprep.subr.bf16.mxu0 0
      %995 = vmatpush1.bf16.msra.mxu0 0
      %996 = vmatprep.subr.bf16.mxu0 0
      %997 = vmatpush1.bf16.msra.mxu0 0
      %998 = vmatprep.mubr.bf16.mxu0 0
      %999 = vmatmul.mubr.bf16.gmra.mrb[0].mxu0 %v910
      %v1000 = vpop.f32.mrb[0].mxu0
      %v1001 = vadd.f32 0.0, %v1000
      %v1002 = vpop.f32.mrb[0].mxu0
      %v1003 = vpop.f32.mrb[0].mxu0
      %v1004 = vadd.f32 0.0, %v1003
      %v1005 = vpop.f32.mrb[0].mxu0
      %1006 = vmatprep.mubr.bf16.mxu0 0
      %1007 = vmatmul.mubr.bf16.gmra.mrb[0].mxu0 %v911
      %v1008 = vpop.f32.mrb[0].mxu0
      %v1009 = vadd.f32 0.0, %v1008
      %v1010 = vpop.f32.mrb[0].mxu0
      %v1011 = vpop.f32.mrb[0].mxu0
      %v1012 = vadd.f32 0.0, %v1011
      %v1013 = vpop.f32.mrb[0].mxu0
      %1014 = vmatprep.mubr.bf16.mxu0 0
      %1015 = vmatmul.mubr.bf16.gmra.mrb[0].mxu0 %v912
      %v1016 = vpop.f32.mrb[0].mxu0
      %v1017 = vadd.f32 0.0, %v1016
      %v1018 = vpop.f32.mrb[0].mxu0
      %v1019 = vpop.f32.mrb[0].mxu0
      %v1020 = vadd.f32 0.0, %v1019
      %v1021 = vpop.f32.mrb[0].mxu0
      %1022 = vmatprep.mubr.bf16.mxu0 0
      %1023 = vmatmul.mubr.bf16.gmra.mrb[0].mxu0 %v913
      %v1024 = vpop.f32.mrb[0].mxu0
      %v1025 = vadd.f32 0.0, %v1024
      %v1026 = vpop.f32.mrb[0].mxu0
      %v1027 = vpop.f32.mrb[0].mxu0
      %v1028 = vadd.f32 0.0, %v1027
      %v1029 = vpop.f32.mrb[0].mxu0
      %1030 = vdwg.mxu0
      %v1031 = vadd.f32 %v860, %v1001
      %v1032 = vadd.f32 %v861, %v1004
      %v1033 = vadd.f32 %v862, %v1009
      %v1034 = vadd.f32 %v863, %v1012
      %v1035 = vadd.f32 %v864, %v1017
      %v1036 = vadd.f32 %v865, %v1020
      %v1037 = vadd.f32 %v866, %v1025
      %v1038 = vadd.f32 %v867, %v1028
      %v1039 = vld [vmem:[%s868] sm:$0xf]
      %v1040 = vld [vmem:[%s868 + $0x4] sm:$0x1]
      %v1041 = vld [vmem:[%s868 + $0x8] sm:$0xf]
      %v1042 = vld [vmem:[%s868 + $0xc] sm:$0x1]
      %v1043 = vld [vmem:[%s868 + $0x10] sm:$0xf]
      %v1044 = vld [vmem:[%s868 + $0x14] sm:$0x1]
      %v1045 = vld [vmem:[%s868 + $0x18] sm:$0xf]
      %v1046 = vld [vmem:[%s868 + $0x1c] sm:$0x1]
      %v1047 = vld [vmem:[%s868 + $0x20] sm:$0xf]
      %v1048 = vld [vmem:[%s868 + $0x24] sm:$0x1]
      %v1049 = vld [vmem:[%s868 + $0x28] sm:$0xf]
      %v1050 = vld [vmem:[%s868 + $0x2c] sm:$0x1]
      %v1051 = vld [vmem:[%s868 + $0x30] sm:$0xf]
      %v1052 = vld [vmem:[%s868 + $0x34] sm:$0x1]
      %v1053 = vld [vmem:[%s868 + $0x38] sm:$0xf]
      %v1054 = vld [vmem:[%s868 + $0x3c] sm:$0x1]
      %v1056 = vshrl.u32 %v1039, 16
      %v1058 = vrot.slane %v1056, 4
      %v1059 = vshll.u32 %v1039, 16
      %v1061 = vrot.slane %v1059, 5
      %v1062 = vor.u32 %v1058, %v1061
      %v1063 = vrot.slane %v1062, 4
      %v1065 = vshll.u32 %v1040, 16
      %v1067 = vrot.slane %v1065, 5
      %v1068 = vsel %vm259, %v1063, %v1067
      %v1070 = vshrl.u32 %v1041, 16
      %v1072 = vrot.slane %v1070, 4
      %v1073 = vshll.u32 %v1041, 16
      %v1075 = vrot.slane %v1073, 5
      %v1076 = vor.u32 %v1072, %v1075
      %v1077 = vrot.slane %v1076, 4
      %v1079 = vshll.u32 %v1042, 16
      %v1081 = vrot.slane %v1079, 5
      %v1082 = vsel %vm259, %v1077, %v1081
      %v1084 = vshrl.u32 %v1043, 16
      %v1086 = vrot.slane %v1084, 4
      %v1087 = vshll.u32 %v1043, 16
      %v1089 = vrot.slane %v1087, 5
      %v1090 = vor.u32 %v1086, %v1089
      %v1091 = vrot.slane %v1090, 4
      %v1093 = vshll.u32 %v1044, 16
      %v1095 = vrot.slane %v1093, 5
      %v1096 = vsel %vm259, %v1091, %v1095
      %v1098 = vshrl.u32 %v1045, 16
      %v1100 = vrot.slane %v1098, 4
      %v1101 = vshll.u32 %v1045, 16
      %v1103 = vrot.slane %v1101, 5
      %v1104 = vor.u32 %v1100, %v1103
      %v1105 = vrot.slane %v1104, 4
      %v1107 = vshll.u32 %v1046, 16
      %v1109 = vrot.slane %v1107, 5
      %v1110 = vsel %vm259, %v1105, %v1109
      %v1112 = vshrl.u32 %v1047, 16
      %v1114 = vrot.slane %v1112, 4
      %v1115 = vshll.u32 %v1047, 16
      %v1117 = vrot.slane %v1115, 5
      %v1118 = vor.u32 %v1114, %v1117
      %v1119 = vrot.slane %v1118, 4
      %v1121 = vshll.u32 %v1048, 16
      %v1123 = vrot.slane %v1121, 5
      %v1124 = vsel %vm259, %v1119, %v1123
      %v1126 = vshrl.u32 %v1049, 16
      %v1128 = vrot.slane %v1126, 4
      %v1129 = vshll.u32 %v1049, 16
      %v1131 = vrot.slane %v1129, 5
      %v1132 = vor.u32 %v1128, %v1131
      %v1133 = vrot.slane %v1132, 4
      %v1135 = vshll.u32 %v1050, 16
      %v1137 = vrot.slane %v1135, 5
      %v1138 = vsel %vm259, %v1133, %v1137
      %v1140 = vshrl.u32 %v1051, 16
      %v1142 = vrot.slane %v1140, 4
      %v1143 = vshll.u32 %v1051, 16
      %v1145 = vrot.slane %v1143, 5
      %v1146 = vor.u32 %v1142, %v1145
      %v1147 = vrot.slane %v1146, 4
      %v1149 = vshll.u32 %v1052, 16
      %v1151 = vrot.slane %v1149, 5
      %v1152 = vsel %vm259, %v1147, %v1151
      %v1154 = vshrl.u32 %v1053, 16
      %v1156 = vrot.slane %v1154, 4
      %v1157 = vshll.u32 %v1053, 16
      %v1159 = vrot.slane %v1157, 5
      %v1160 = vor.u32 %v1156, %v1159
      %v1161 = vrot.slane %v1160, 4
      %v1163 = vshll.u32 %v1054, 16
      %v1165 = vrot.slane %v1163, 5
      %v1166 = vsel %vm259, %v1161, %v1165
      %s1167 = scalar_lea.vmem %s1, 256
      %v1168 = vld [vmem:[%s1167] sm:$0xf]
      %v1169 = vld [vmem:[%s1167 + $0x4] sm:$0xf]
      %v1170 = vld [vmem:[%s1167 + $0x8] sm:$0xf]
      %v1171 = vld [vmem:[%s1167 + $0xc] sm:$0xf]
      %v1172 = vld [vmem:[%s1167 + $0x10] sm:$0xf]
      %v1173 = vld [vmem:[%s1167 + $0x14] sm:$0xf]
      %v1174 = vld [vmem:[%s1167 + $0x18] sm:$0xf]
      %v1175 = vld [vmem:[%s1167 + $0x1c] sm:$0xf]
      %v1176 = vld [vmem:[%s1167 + $0x20] sm:$0xf]
      %v1177 = vld [vmem:[%s1167 + $0x24] sm:$0xf]
      %v1178 = vld [vmem:[%s1167 + $0x28] sm:$0xf]
      %v1179 = vld [vmem:[%s1167 + $0x2c] sm:$0xf]
      %v1180 = vld [vmem:[%s1167 + $0x30] sm:$0xf]
      %v1181 = vld [vmem:[%s1167 + $0x34] sm:$0xf]
      %v1182 = vld [vmem:[%s1167 + $0x38] sm:$0xf]
      %v1183 = vld [vmem:[%s1167 + $0x3c] sm:$0xf]
      %v1184 = vunpack.c.l.b16 %v1068
      %v1185 = vunpack.c.l.b16 %v1082
      %v1186 = vunpack.c.l.b16 %v1096
      %v1187 = vunpack.c.l.b16 %v1110
      %v1188 = vunpack.c.l.b16 %v1124
      %v1189 = vunpack.c.l.b16 %v1138
      %v1190 = vunpack.c.l.b16 %v1152
      %v1191 = vunpack.c.l.b16 %v1166
      %v1192 = vpack.c.b16 %v1185, %v1184
      %v1193 = vpack.c.b16 %v1187, %v1186
      %v1194 = vpack.c.b16 %v1189, %v1188
      %v1195 = vpack.c.b16 %v1191, %v1190
      %v1216 = vunpack.c.l.b16 %v1168
      %v1217 = vunpack.c.l.b16 %v1169
      %v1218 = vunpack.c.l.b16 %v1170
      %v1219 = vunpack.c.l.b16 %v1171
      %v1220 = vunpack.c.l.b16 %v1172
      %v1221 = vunpack.c.l.b16 %v1173
      %v1222 = vunpack.c.l.b16 %v1174
      %v1223 = vunpack.c.l.b16 %v1175
      %v1224 = vunpack.c.l.b16 %v1176
      %v1225 = vunpack.c.l.b16 %v1177
      %v1226 = vunpack.c.l.b16 %v1178
      %v1227 = vunpack.c.l.b16 %v1179
      %v1228 = vunpack.c.l.b16 %v1180
      %v1229 = vunpack.c.l.b16 %v1181
      %v1230 = vunpack.c.l.b16 %v1182
      %v1231 = vunpack.c.l.b16 %v1183
      %v1232 = vpack.c.b16 %v1217, %v1216
      %v1233 = vpack.c.b16 %v1219, %v1218
      %v1234 = vpack.c.b16 %v1221, %v1220
      %v1235 = vpack.c.b16 %v1223, %v1222
      %v1236 = vpack.c.b16 %v1225, %v1224
      %v1237 = vpack.c.b16 %v1227, %v1226
      %v1238 = vpack.c.b16 %v1229, %v1228
      %v1239 = vpack.c.b16 %v1231, %v1230
      %1248 = vmatprep.subr.bf16.mxu0 0
      %1249 = vmatpush1.bf16.msra.mxu0 %v1232
      %1250 = vmatprep.subr.bf16.mxu0 0
      %1251 = vmatpush1.bf16.msra.mxu0 %v1233
      %1252 = vmatprep.subr.bf16.mxu0 0
      %1253 = vmatpush1.bf16.msra.mxu0 %v1234
      %1254 = vmatprep.subr.bf16.mxu0 0
      %1255 = vmatpush1.bf16.msra.mxu0 %v1235
      %1256 = vmatprep.subr.bf16.mxu0 0
      %1257 = vmatpush1.bf16.msra.mxu0 %v1236
      %1258 = vmatprep.subr.bf16.mxu0 0
      %1259 = vmatpush1.bf16.msra.mxu0 %v1237
      %1260 = vmatprep.subr.bf16.mxu0 0
      %1261 = vmatpush1.bf16.msra.mxu0 %v1238
      %1262 = vmatprep.subr.bf16.mxu0 0
      %1263 = vmatpush1.bf16.msra.mxu0 %v1239
      %1264 = vmatprep.subr.bf16.mxu0 0
      %1265 = vmatpush1.bf16.msra.mxu0 0
      %1266 = vmatprep.subr.bf16.mxu0 0
      %1267 = vmatpush1.bf16.msra.mxu0 0
      %1268 = vmatprep.subr.bf16.mxu0 0
      %1269 = vmatpush1.bf16.msra.mxu0 0
      %1270 = vmatprep.subr.bf16.mxu0 0
      %1271 = vmatpush1.bf16.msra.mxu0 0
      %1272 = vmatprep.subr.bf16.mxu0 0
      %1273 = vmatpush1.bf16.msra.mxu0 0
      %1274 = vmatprep.subr.bf16.mxu0 0
      %1275 = vmatpush1.bf16.msra.mxu0 0
      %1276 = vmatprep.subr.bf16.mxu0 0
      %1277 = vmatpush1.bf16.msra.mxu0 0
      %1278 = vmatprep.subr.bf16.mxu0 0
      %1279 = vmatpush1.bf16.msra.mxu0 0
      %1280 = vmatprep.mubr.bf16.mxu0 0
      %1281 = vmatmul.mubr.bf16.gmra.mrb[0].mxu0 %v1192
      %v1282 = vpop.f32.mrb[0].mxu0
      %v1283 = vadd.f32 0.0, %v1282
      %v1284 = vpop.f32.mrb[0].mxu0
      %v1285 = vpop.f32.mrb[0].mxu0
      %v1286 = vadd.f32 0.0, %v1285
      %v1287 = vpop.f32.mrb[0].mxu0
      %1288 = vmatprep.mubr.bf16.mxu0 0
      %1289 = vmatmul.mubr.bf16.gmra.mrb[0].mxu0 %v1193
      %v1290 = vpop.f32.mrb[0].mxu0
      %v1291 = vadd.f32 0.0, %v1290
      %v1292 = vpop.f32.mrb[0].mxu0
      %v1293 = vpop.f32.mrb[0].mxu0
      %v1294 = vadd.f32 0.0, %v1293
      %v1295 = vpop.f32.mrb[0].mxu0
      %1296 = vmatprep.mubr.bf16.mxu0 0
      %1297 = vmatmul.mubr.bf16.gmra.mrb[0].mxu0 %v1194
      %v1298 = vpop.f32.mrb[0].mxu0
      %v1299 = vadd.f32 0.0, %v1298
      %v1300 = vpop.f32.mrb[0].mxu0
      %v1301 = vpop.f32.mrb[0].mxu0
      %v1302 = vadd.f32 0.0, %v1301
      %v1303 = vpop.f32.mrb[0].mxu0
      %1304 = vmatprep.mubr.bf16.mxu0 0
      %1305 = vmatmul.mubr.bf16.gmra.mrb[0].mxu0 %v1195
      %v1306 = vpop.f32.mrb[0].mxu0
      %v1307 = vadd.f32 0.0, %v1306
      %v1308 = vpop.f32.mrb[0].mxu0
      %v1309 = vpop.f32.mrb[0].mxu0
      %v1310 = vadd.f32 0.0, %v1309
      %v1311 = vpop.f32.mrb[0].mxu0
      %1312 = vdwg.mxu0
      %v1313 = vadd.f32 %v1031, %v1283
      %v1314 = vadd.f32 %v1032, %v1286
      %v1315 = vadd.f32 %v1033, %v1291
      %v1316 = vadd.f32 %v1034, %v1294
      %v1317 = vadd.f32 %v1035, %v1299
      %v1318 = vadd.f32 %v1036, %v1302
      %v1319 = vadd.f32 %v1037, %v1307
      %v1320 = vadd.f32 %v1038, %v1310
      %v1321 = vld [vmem:[%s868] sm:$0xe]
      %v1322 = vld [vmem:[%s868 + $0x8] sm:$0xe]
      %v1323 = vld [vmem:[%s868 + $0x10] sm:$0xe]
      %v1324 = vld [vmem:[%s868 + $0x18] sm:$0xe]
      %v1325 = vld [vmem:[%s868 + $0x20] sm:$0xe]
      %v1326 = vld [vmem:[%s868 + $0x28] sm:$0xe]
      %v1327 = vld [vmem:[%s868 + $0x30] sm:$0xe]
      %v1328 = vld [vmem:[%s868 + $0x38] sm:$0xe]
      %v1345 = vrot.slane %v1321, 5
      %v1346 = vrot.slane %v1345, 4
      %v1347 = vrot.slane %v1040, 5
      %v1348 = vsel %vm681, %v1346, %v1347
      %v1349 = vrot.slane %v1322, 5
      %v1350 = vrot.slane %v1349, 4
      %v1351 = vrot.slane %v1042, 5
      %v1352 = vsel %vm681, %v1350, %v1351
      %v1353 = vrot.slane %v1323, 5
      %v1354 = vrot.slane %v1353, 4
      %v1355 = vrot.slane %v1044, 5
      %v1356 = vsel %vm681, %v1354, %v1355
      %v1357 = vrot.slane %v1324, 5
      %v1358 = vrot.slane %v1357, 4
      %v1359 = vrot.slane %v1046, 5
      %v1360 = vsel %vm681, %v1358, %v1359
      %v1361 = vrot.slane %v1325, 5
      %v1362 = vrot.slane %v1361, 4
      %v1363 = vrot.slane %v1048, 5
      %v1364 = vsel %vm681, %v1362, %v1363
      %v1365 = vrot.slane %v1326, 5
      %v1366 = vrot.slane %v1365, 4
      %v1367 = vrot.slane %v1050, 5
      %v1368 = vsel %vm681, %v1366, %v1367
      %v1369 = vrot.slane %v1327, 5
      %v1370 = vrot.slane %v1369, 4
      %v1371 = vrot.slane %v1052, 5
      %v1372 = vsel %vm681, %v1370, %v1371
      %v1373 = vrot.slane %v1328, 5
      %v1374 = vrot.slane %v1373, 4
      %v1375 = vrot.slane %v1054, 5
      %v1376 = vsel %vm681, %v1374, %v1375
      %s1377 = scalar_lea.vmem %s1, 320
      %v1378 = vld [vmem:[%s1377] sm:$0xf]
      %v1379 = vld [vmem:[%s1377 + $0x4] sm:$0xf]
      %v1380 = vld [vmem:[%s1377 + $0x8] sm:$0xf]
      %v1381 = vld [vmem:[%s1377 + $0xc] sm:$0xf]
      %v1382 = vld [vmem:[%s1377 + $0x10] sm:$0xf]
      %v1383 = vld [vmem:[%s1377 + $0x14] sm:$0xf]
      %v1384 = vld [vmem:[%s1377 + $0x18] sm:$0xf]
      %v1385 = vld [vmem:[%s1377 + $0x1c] sm:$0xf]
      %v1386 = vld [vmem:[%s1377 + $0x20] sm:$0xf]
      %v1387 = vld [vmem:[%s1377 + $0x24] sm:$0xf]
      %v1388 = vld [vmem:[%s1377 + $0x28] sm:$0xf]
      %v1389 = vld [vmem:[%s1377 + $0x2c] sm:$0xf]
      %v1390 = vld [vmem:[%s1377 + $0x30] sm:$0xf]
      %v1391 = vld [vmem:[%s1377 + $0x34] sm:$0xf]
      %v1392 = vld [vmem:[%s1377 + $0x38] sm:$0xf]
      %v1393 = vld [vmem:[%s1377 + $0x3c] sm:$0xf]
      %v1394 = vunpack.c.l.b16 %v1348
      %v1395 = vunpack.c.l.b16 %v1352
      %v1396 = vunpack.c.l.b16 %v1356
      %v1397 = vunpack.c.l.b16 %v1360
      %v1398 = vunpack.c.l.b16 %v1364
      %v1399 = vunpack.c.l.b16 %v1368
      %v1400 = vunpack.c.l.b16 %v1372
      %v1401 = vunpack.c.l.b16 %v1376
      %v1402 = vpack.c.b16 %v1395, %v1394
      %v1403 = vpack.c.b16 %v1397, %v1396
      %v1404 = vpack.c.b16 %v1399, %v1398
      %v1405 = vpack.c.b16 %v1401, %v1400
      %v1426 = vunpack.c.l.b16 %v1378
      %v1427 = vunpack.c.l.b16 %v1379
      %v1428 = vunpack.c.l.b16 %v1380
      %v1429 = vunpack.c.l.b16 %v1381
      %v1430 = vunpack.c.l.b16 %v1382
      %v1431 = vunpack.c.l.b16 %v1383
      %v1432 = vunpack.c.l.b16 %v1384
      %v1433 = vunpack.c.l.b16 %v1385
      %v1434 = vunpack.c.l.b16 %v1386
      %v1435 = vunpack.c.l.b16 %v1387
      %v1436 = vunpack.c.l.b16 %v1388
      %v1437 = vunpack.c.l.b16 %v1389
      %v1438 = vunpack.c.l.b16 %v1390
      %v1439 = vunpack.c.l.b16 %v1391
      %v1440 = vunpack.c.l.b16 %v1392
      %v1441 = vunpack.c.l.b16 %v1393
      %v1442 = vpack.c.b16 %v1427, %v1426
      %v1443 = vpack.c.b16 %v1429, %v1428
      %v1444 = vpack.c.b16 %v1431, %v1430
      %v1445 = vpack.c.b16 %v1433, %v1432
      %v1446 = vpack.c.b16 %v1435, %v1434
      %v1447 = vpack.c.b16 %v1437, %v1436
      %v1448 = vpack.c.b16 %v1439, %v1438
      %v1449 = vpack.c.b16 %v1441, %v1440
      %1458 = vmatprep.subr.bf16.mxu0 0
      %1459 = vmatpush1.bf16.msra.mxu0 %v1442
      %1460 = vmatprep.subr.bf16.mxu0 0
      %1461 = vmatpush1.bf16.msra.mxu0 %v1443
      %1462 = vmatprep.subr.bf16.mxu0 0
      %1463 = vmatpush1.bf16.msra.mxu0 %v1444
      %1464 = vmatprep.subr.bf16.mxu0 0
      %1465 = vmatpush1.bf16.msra.mxu0 %v1445
      %1466 = vmatprep.subr.bf16.mxu0 0
      %1467 = vmatpush1.bf16.msra.mxu0 %v1446
      %1468 = vmatprep.subr.bf16.mxu0 0
      %1469 = vmatpush1.bf16.msra.mxu0 %v1447
      %1470 = vmatprep.subr.bf16.mxu0 0
      %1471 = vmatpush1.bf16.msra.mxu0 %v1448
      %1472 = vmatprep.subr.bf16.mxu0 0
      %1473 = vmatpush1.bf16.msra.mxu0 %v1449
      %1474 = vmatprep.subr.bf16.mxu0 0
      %1475 = vmatpush1.bf16.msra.mxu0 0
      %1476 = vmatprep.subr.bf16.mxu0 0
      %1477 = vmatpush1.bf16.msra.mxu0 0
      %1478 = vmatprep.subr.bf16.mxu0 0
      %1479 = vmatpush1.bf16.msra.mxu0 0
      %1480 = vmatprep.subr.bf16.mxu0 0
      %1481 = vmatpush1.bf16.msra.mxu0 0
      %1482 = vmatprep.subr.bf16.mxu0 0
      %1483 = vmatpush1.bf16.msra.mxu0 0
      %1484 = vmatprep.subr.bf16.mxu0 0
      %1485 = vmatpush1.bf16.msra.mxu0 0
      %1486 = vmatprep.subr.bf16.mxu0 0
      %1487 = vmatpush1.bf16.msra.mxu0 0
      %1488 = vmatprep.subr.bf16.mxu0 0
      %1489 = vmatpush1.bf16.msra.mxu0 0
      %1490 = vmatprep.mubr.bf16.mxu0 0
      %1491 = vmatmul.mubr.bf16.gmra.mrb[0].mxu0 %v1402
      %v1492 = vpop.f32.mrb[0].mxu0
      %v1493 = vadd.f32 0.0, %v1492
      %v1494 = vpop.f32.mrb[0].mxu0
      %v1495 = vpop.f32.mrb[0].mxu0
      %v1496 = vadd.f32 0.0, %v1495
      %v1497 = vpop.f32.mrb[0].mxu0
      %1498 = vmatprep.mubr.bf16.mxu0 0
      %1499 = vmatmul.mubr.bf16.gmra.mrb[0].mxu0 %v1403
      %v1500 = vpop.f32.mrb[0].mxu0
      %v1501 = vadd.f32 0.0, %v1500
      %v1502 = vpop.f32.mrb[0].mxu0
      %v1503 = vpop.f32.mrb[0].mxu0
      %v1504 = vadd.f32 0.0, %v1503
      %v1505 = vpop.f32.mrb[0].mxu0
      %1506 = vmatprep.mubr.bf16.mxu0 0
      %1507 = vmatmul.mubr.bf16.gmra.mrb[0].mxu0 %v1404
      %v1508 = vpop.f32.mrb[0].mxu0
      %v1509 = vadd.f32 0.0, %v1508
      %v1510 = vpop.f32.mrb[0].mxu0
      %v1511 = vpop.f32.mrb[0].mxu0
      %v1512 = vadd.f32 0.0, %v1511
      %v1513 = vpop.f32.mrb[0].mxu0
      %1514 = vmatprep.mubr.bf16.mxu0 0
      %1515 = vmatmul.mubr.bf16.gmra.mrb[0].mxu0 %v1405
      %v1516 = vpop.f32.mrb[0].mxu0
      %v1517 = vadd.f32 0.0, %v1516
      %v1518 = vpop.f32.mrb[0].mxu0
      %v1519 = vpop.f32.mrb[0].mxu0
      %v1520 = vadd.f32 0.0, %v1519
      %v1521 = vpop.f32.mrb[0].mxu0
      %1522 = vdwg.mxu0
      %v1523 = vadd.f32 %v1313, %v1493
      %v1524 = vadd.f32 %v1314, %v1496
      %v1525 = vadd.f32 %v1315, %v1501
      %v1526 = vadd.f32 %v1316, %v1504
      %v1527 = vadd.f32 %v1317, %v1509
      %v1528 = vadd.f32 %v1318, %v1512
      %v1529 = vadd.f32 %v1319, %v1517
      %v1530 = vadd.f32 %v1320, %v1520
      %s1531 = scalar_lea.vmem %s207, 16
      %v1532 = vld [vmem:[%s1531] sm:$0xf]
      %v1533 = vld [vmem:[%s1531 + $0x8] sm:$0xf]
      %v1534 = vld [vmem:[%s1531 + $0x10] sm:$0xf]
      %v1535 = vld [vmem:[%s1531 + $0x18] sm:$0xf]
      %v1536 = vld [vmem:[%s1531 + $0x20] sm:$0xf]
      %v1537 = vld [vmem:[%s1531 + $0x28] sm:$0xf]
      %v1538 = vld [vmem:[%s1531 + $0x30] sm:$0xf]
      %v1539 = vld [vmem:[%s1531 + $0x38] sm:$0xf]
      %s1540 = scalar_lea.vmem %s1, 384
      %v1541 = vld [vmem:[%s1540] sm:$0xf]
      %v1542 = vld [vmem:[%s1540 + $0x4] sm:$0xf]
      %v1543 = vld [vmem:[%s1540 + $0x8] sm:$0xf]
      %v1544 = vld [vmem:[%s1540 + $0xc] sm:$0xf]
      %v1545 = vld [vmem:[%s1540 + $0x10] sm:$0xf]
      %v1546 = vld [vmem:[%s1540 + $0x14] sm:$0xf]
      %v1547 = vld [vmem:[%s1540 + $0x18] sm:$0xf]
      %v1548 = vld [vmem:[%s1540 + $0x1c] sm:$0xf]
      %v1549 = vld [vmem:[%s1540 + $0x20] sm:$0xf]
      %v1550 = vld [vmem:[%s1540 + $0x24] sm:$0xf]
      %v1551 = vld [vmem:[%s1540 + $0x28] sm:$0xf]
      %v1552 = vld [vmem:[%s1540 + $0x2c] sm:$0xf]
      %v1553 = vld [vmem:[%s1540 + $0x30] sm:$0xf]
      %v1554 = vld [vmem:[%s1540 + $0x34] sm:$0xf]
      %v1555 = vld [vmem:[%s1540 + $0x38] sm:$0xf]
      %v1556 = vld [vmem:[%s1540 + $0x3c] sm:$0xf]
      %v1565 = vunpack.c.l.b16 %v1532
      %v1566 = vunpack.c.l.b16 %v1533
      %v1567 = vunpack.c.l.b16 %v1534
      %v1568 = vunpack.c.l.b16 %v1535
      %v1569 = vunpack.c.l.b16 %v1536
      %v1570 = vunpack.c.l.b16 %v1537
      %v1571 = vunpack.c.l.b16 %v1538
      %v1572 = vunpack.c.l.b16 %v1539
      %v1573 = vpack.c.b16 %v1566, %v1565
      %v1574 = vpack.c.b16 %v1568, %v1567
      %v1575 = vpack.c.b16 %v1570, %v1569
      %v1576 = vpack.c.b16 %v1572, %v1571
      %v1597 = vunpack.c.l.b16 %v1541
      %v1598 = vunpack.c.l.b16 %v1542
      %v1599 = vunpack.c.l.b16 %v1543
      %v1600 = vunpack.c.l.b16 %v1544
      %v1601 = vunpack.c.l.b16 %v1545
      %v1602 = vunpack.c.l.b16 %v1546
      %v1603 = vunpack.c.l.b16 %v1547
      %v1604 = vunpack.c.l.b16 %v1548
      %v1605 = vunpack.c.l.b16 %v1549
      %v1606 = vunpack.c.l.b16 %v1550
      %v1607 = vunpack.c.l.b16 %v1551
      %v1608 = vunpack.c.l.b16 %v1552
      %v1609 = vunpack.c.l.b16 %v1553
      %v1610 = vunpack.c.l.b16 %v1554
      %v1611 = vunpack.c.l.b16 %v1555
      %v1612 = vunpack.c.l.b16 %v1556
      %v1613 = vpack.c.b16 %v1598, %v1597
      %v1614 = vpack.c.b16 %v1600, %v1599
      %v1615 = vpack.c.b16 %v1602, %v1601
      %v1616 = vpack.c.b16 %v1604, %v1603
      %v1617 = vpack.c.b16 %v1606, %v1605
      %v1618 = vpack.c.b16 %v1608, %v1607
      %v1619 = vpack.c.b16 %v1610, %v1609
      %v1620 = vpack.c.b16 %v1612, %v1611
      %1629 = vmatprep.subr.bf16.mxu0 0
      %1630 = vmatpush1.bf16.msra.mxu0 %v1613
      %1631 = vmatprep.subr.bf16.mxu0 0
      %1632 = vmatpush1.bf16.msra.mxu0 %v1614
      %1633 = vmatprep.subr.bf16.mxu0 0
      %1634 = vmatpush1.bf16.msra.mxu0 %v1615
      %1635 = vmatprep.subr.bf16.mxu0 0
      %1636 = vmatpush1.bf16.msra.mxu0 %v1616
      %1637 = vmatprep.subr.bf16.mxu0 0
      %1638 = vmatpush1.bf16.msra.mxu0 %v1617
      %1639 = vmatprep.subr.bf16.mxu0 0
      %1640 = vmatpush1.bf16.msra.mxu0 %v1618
      %1641 = vmatprep.subr.bf16.mxu0 0
      %1642 = vmatpush1.bf16.msra.mxu0 %v1619
      %1643 = vmatprep.subr.bf16.mxu0 0
      %1644 = vmatpush1.bf16.msra.mxu0 %v1620
      %1645 = vmatprep.subr.bf16.mxu0 0
      %1646 = vmatpush1.bf16.msra.mxu0 0
      %1647 = vmatprep.subr.bf16.mxu0 0
      %1648 = vmatpush1.bf16.msra.mxu0 0
      %1649 = vmatprep.subr.bf16.mxu0 0
      %1650 = vmatpush1.bf16.msra.mxu0 0
      %1651 = vmatprep.subr.bf16.mxu0 0
      %1652 = vmatpush1.bf16.msra.mxu0 0
      %1653 = vmatprep.subr.bf16.mxu0 0
      %1654 = vmatpush1.bf16.msra.mxu0 0
      %1655 = vmatprep.subr.bf16.mxu0 0
      %1656 = vmatpush1.bf16.msra.mxu0 0
      %1657 = vmatprep.subr.bf16.mxu0 0
      %1658 = vmatpush1.bf16.msra.mxu0 0
      %1659 = vmatprep.subr.bf16.mxu0 0
      %1660 = vmatpush1.bf16.msra.mxu0 0
      %1661 = vmatprep.mubr.bf16.mxu0 0
      %1662 = vmatmul.mubr.bf16.gmra.mrb[0].mxu0 %v1573
      %v1663 = vpop.f32.mrb[0].mxu0
      %v1664 = vadd.f32 0.0, %v1663
      %v1665 = vpop.f32.mrb[0].mxu0
      %v1666 = vpop.f32.mrb[0].mxu0
      %v1667 = vadd.f32 0.0, %v1666
      %v1668 = vpop.f32.mrb[0].mxu0
      %1669 = vmatprep.mubr.bf16.mxu0 0
      %1670 = vmatmul.mubr.bf16.gmra.mrb[0].mxu0 %v1574
      %v1671 = vpop.f32.mrb[0].mxu0
      %v1672 = vadd.f32 0.0, %v1671
      %v1673 = vpop.f32.mrb[0].mxu0
      %v1674 = vpop.f32.mrb[0].mxu0
      %v1675 = vadd.f32 0.0, %v1674
      %v1676 = vpop.f32.mrb[0].mxu0
      %1677 = vmatprep.mubr.bf16.mxu0 0
      %1678 = vmatmul.mubr.bf16.gmra.mrb[0].mxu0 %v1575
      %v1679 = vpop.f32.mrb[0].mxu0
      %v1680 = vadd.f32 0.0, %v1679
      %v1681 = vpop.f32.mrb[0].mxu0
      %v1682 = vpop.f32.mrb[0].mxu0
      %v1683 = vadd.f32 0.0, %v1682
      %v1684 = vpop.f32.mrb[0].mxu0
      %1685 = vmatprep.mubr.bf16.mxu0 0
      %1686 = vmatmul.mubr.bf16.gmra.mrb[0].mxu0 %v1576
      %v1687 = vpop.f32.mrb[0].mxu0
      %v1688 = vadd.f32 0.0, %v1687
      %v1689 = vpop.f32.mrb[0].mxu0
      %v1690 = vpop.f32.mrb[0].mxu0
      %v1691 = vadd.f32 0.0, %v1690
      %v1692 = vpop.f32.mrb[0].mxu0
      %1693 = vdwg.mxu0
      %v1694 = vadd.f32 %v1523, %v1664
      %v1695 = vadd.f32 %v1524, %v1667
      %v1696 = vadd.f32 %v1525, %v1672
      %v1697 = vadd.f32 %v1526, %v1675
      %v1698 = vadd.f32 %v1527, %v1680
      %v1699 = vadd.f32 %v1528, %v1683
      %v1700 = vadd.f32 %v1529, %v1688
      %v1701 = vadd.f32 %v1530, %v1691
      %v1702 = vld [vmem:[%s1531] sm:$0xf]
      %v1703 = vld [vmem:[%s1531 + $0x4] sm:$0x1]
      %v1704 = vld [vmem:[%s1531 + $0x8] sm:$0xf]
      %v1705 = vld [vmem:[%s1531 + $0xc] sm:$0x1]
      %v1706 = vld [vmem:[%s1531 + $0x10] sm:$0xf]
      %v1707 = vld [vmem:[%s1531 + $0x14] sm:$0x1]
      %v1708 = vld [vmem:[%s1531 + $0x18] sm:$0xf]
      %v1709 = vld [vmem:[%s1531 + $0x1c] sm:$0x1]
      %v1710 = vld [vmem:[%s1531 + $0x20] sm:$0xf]
      %v1711 = vld [vmem:[%s1531 + $0x24] sm:$0x1]
      %v1712 = vld [vmem:[%s1531 + $0x28] sm:$0xf]
      %v1713 = vld [vmem:[%s1531 + $0x2c] sm:$0x1]
      %v1714 = vld [vmem:[%s1531 + $0x30] sm:$0xf]
      %v1715 = vld [vmem:[%s1531 + $0x34] sm:$0x1]
      %v1716 = vld [vmem:[%s1531 + $0x38] sm:$0xf]
      %v1717 = vld [vmem:[%s1531 + $0x3c] sm:$0x1]
      %v1719 = vshrl.u32 %v1702, 16
      %v1721 = vrot.slane %v1719, 4
      %v1722 = vshll.u32 %v1702, 16
      %v1724 = vrot.slane %v1722, 5
      %v1725 = vor.u32 %v1721, %v1724
      %v1726 = vrot.slane %v1725, 4
      %v1728 = vshll.u32 %v1703, 16
      %v1730 = vrot.slane %v1728, 5
      %v1731 = vsel %vm259, %v1726, %v1730
      %v1733 = vshrl.u32 %v1704, 16
      %v1735 = vrot.slane %v1733, 4
      %v1736 = vshll.u32 %v1704, 16
      %v1738 = vrot.slane %v1736, 5
      %v1739 = vor.u32 %v1735, %v1738
      %v1740 = vrot.slane %v1739, 4
      %v1742 = vshll.u32 %v1705, 16
      %v1744 = vrot.slane %v1742, 5
      %v1745 = vsel %vm259, %v1740, %v1744
      %v1747 = vshrl.u32 %v1706, 16
      %v1749 = vrot.slane %v1747, 4
      %v1750 = vshll.u32 %v1706, 16
      %v1752 = vrot.slane %v1750, 5
      %v1753 = vor.u32 %v1749, %v1752
      %v1754 = vrot.slane %v1753, 4
      %v1756 = vshll.u32 %v1707, 16
      %v1758 = vrot.slane %v1756, 5
      %v1759 = vsel %vm259, %v1754, %v1758
      %v1761 = vshrl.u32 %v1708, 16
      %v1763 = vrot.slane %v1761, 4
      %v1764 = vshll.u32 %v1708, 16
      %v1766 = vrot.slane %v1764, 5
      %v1767 = vor.u32 %v1763, %v1766
      %v1768 = vrot.slane %v1767, 4
      %v1770 = vshll.u32 %v1709, 16
      %v1772 = vrot.slane %v1770, 5
      %v1773 = vsel %vm259, %v1768, %v1772
      %v1775 = vshrl.u32 %v1710, 16
      %v1777 = vrot.slane %v1775, 4
      %v1778 = vshll.u32 %v1710, 16
      %v1780 = vrot.slane %v1778, 5
      %v1781 = vor.u32 %v1777, %v1780
      %v1782 = vrot.slane %v1781, 4
      %v1784 = vshll.u32 %v1711, 16
      %v1786 = vrot.slane %v1784, 5
      %v1787 = vsel %vm259, %v1782, %v1786
      %v1789 = vshrl.u32 %v1712, 16
      %v1791 = vrot.slane %v1789, 4
      %v1792 = vshll.u32 %v1712, 16
      %v1794 = vrot.slane %v1792, 5
      %v1795 = vor.u32 %v1791, %v1794
      %v1796 = vrot.slane %v1795, 4
      %v1798 = vshll.u32 %v1713, 16
      %v1800 = vrot.slane %v1798, 5
      %v1801 = vsel %vm259, %v1796, %v1800
      %v1803 = vshrl.u32 %v1714, 16
      %v1805 = vrot.slane %v1803, 4
      %v1806 = vshll.u32 %v1714, 16
      %v1808 = vrot.slane %v1806, 5
      %v1809 = vor.u32 %v1805, %v1808
      %v1810 = vrot.slane %v1809, 4
      %v1812 = vshll.u32 %v1715, 16
      %v1814 = vrot.slane %v1812, 5
      %v1815 = vsel %vm259, %v1810, %v1814
      %v1817 = vshrl.u32 %v1716, 16
      %v1819 = vrot.slane %v1817, 4
      %v1820 = vshll.u32 %v1716, 16
      %v1822 = vrot.slane %v1820, 5
      %v1823 = vor.u32 %v1819, %v1822
      %v1824 = vrot.slane %v1823, 4
      %v1826 = vshll.u32 %v1717, 16
      %v1828 = vrot.slane %v1826, 5
      %v1829 = vsel %vm259, %v1824, %v1828
      %s1830 = scalar_lea.vmem %s1, 448
      %v1831 = vld [vmem:[%s1830] sm:$0xf]
      %v1832 = vld [vmem:[%s1830 + $0x4] sm:$0xf]
      %v1833 = vld [vmem:[%s1830 + $0x8] sm:$0xf]
      %v1834 = vld [vmem:[%s1830 + $0xc] sm:$0xf]
      %v1835 = vld [vmem:[%s1830 + $0x10] sm:$0xf]
      %v1836 = vld [vmem:[%s1830 + $0x14] sm:$0xf]
      %v1837 = vld [vmem:[%s1830 + $0x18] sm:$0xf]
      %v1838 = vld [vmem:[%s1830 + $0x1c] sm:$0xf]
      %v1839 = vld [vmem:[%s1830 + $0x20] sm:$0xf]
      %v1840 = vld [vmem:[%s1830 + $0x24] sm:$0xf]
      %v1841 = vld [vmem:[%s1830 + $0x28] sm:$0xf]
      %v1842 = vld [vmem:[%s1830 + $0x2c] sm:$0xf]
      %v1843 = vld [vmem:[%s1830 + $0x30] sm:$0xf]
      %v1844 = vld [vmem:[%s1830 + $0x34] sm:$0xf]
      %v1845 = vld [vmem:[%s1830 + $0x38] sm:$0xf]
      %v1846 = vld [vmem:[%s1830 + $0x3c] sm:$0xf]
      %v1847 = vunpack.c.l.b16 %v1731
      %v1848 = vunpack.c.l.b16 %v1745
      %v1849 = vunpack.c.l.b16 %v1759
      %v1850 = vunpack.c.l.b16 %v1773
      %v1851 = vunpack.c.l.b16 %v1787
      %v1852 = vunpack.c.l.b16 %v1801
      %v1853 = vunpack.c.l.b16 %v1815
      %v1854 = vunpack.c.l.b16 %v1829
      %v1855 = vpack.c.b16 %v1848, %v1847
      %v1856 = vpack.c.b16 %v1850, %v1849
      %v1857 = vpack.c.b16 %v1852, %v1851
      %v1858 = vpack.c.b16 %v1854, %v1853
      %v1879 = vunpack.c.l.b16 %v1831
      %v1880 = vunpack.c.l.b16 %v1832
      %v1881 = vunpack.c.l.b16 %v1833
      %v1882 = vunpack.c.l.b16 %v1834
      %v1883 = vunpack.c.l.b16 %v1835
      %v1884 = vunpack.c.l.b16 %v1836
      %v1885 = vunpack.c.l.b16 %v1837
      %v1886 = vunpack.c.l.b16 %v1838
      %v1887 = vunpack.c.l.b16 %v1839
      %v1888 = vunpack.c.l.b16 %v1840
      %v1889 = vunpack.c.l.b16 %v1841
      %v1890 = vunpack.c.l.b16 %v1842
      %v1891 = vunpack.c.l.b16 %v1843
      %v1892 = vunpack.c.l.b16 %v1844
      %v1893 = vunpack.c.l.b16 %v1845
      %v1894 = vunpack.c.l.b16 %v1846
      %v1895 = vpack.c.b16 %v1880, %v1879
      %v1896 = vpack.c.b16 %v1882, %v1881
      %v1897 = vpack.c.b16 %v1884, %v1883
      %v1898 = vpack.c.b16 %v1886, %v1885
      %v1899 = vpack.c.b16 %v1888, %v1887
      %v1900 = vpack.c.b16 %v1890, %v1889
      %v1901 = vpack.c.b16 %v1892, %v1891
      %v1902 = vpack.c.b16 %v1894, %v1893
      %1911 = vmatprep.subr.bf16.mxu0 0
      %1912 = vmatpush1.bf16.msra.mxu0 %v1895
      %1913 = vmatprep.subr.bf16.mxu0 0
      %1914 = vmatpush1.bf16.msra.mxu0 %v1896
      %1915 = vmatprep.subr.bf16.mxu0 0
      %1916 = vmatpush1.bf16.msra.mxu0 %v1897
      %1917 = vmatprep.subr.bf16.mxu0 0
      %1918 = vmatpush1.bf16.msra.mxu0 %v1898
      %1919 = vmatprep.subr.bf16.mxu0 0
      %1920 = vmatpush1.bf16.msra.mxu0 %v1899
      %1921 = vmatprep.subr.bf16.mxu0 0
      %1922 = vmatpush1.bf16.msra.mxu0 %v1900
      %1923 = vmatprep.subr.bf16.mxu0 0
      %1924 = vmatpush1.bf16.msra.mxu0 %v1901
      %1925 = vmatprep.subr.bf16.mxu0 0
      %1926 = vmatpush1.bf16.msra.mxu0 %v1902
      %1927 = vmatprep.subr.bf16.mxu0 0
      %1928 = vmatpush1.bf16.msra.mxu0 0
      %1929 = vmatprep.subr.bf16.mxu0 0
      %1930 = vmatpush1.bf16.msra.mxu0 0
      %1931 = vmatprep.subr.bf16.mxu0 0
      %1932 = vmatpush1.bf16.msra.mxu0 0
      %1933 = vmatprep.subr.bf16.mxu0 0
      %1934 = vmatpush1.bf16.msra.mxu0 0
      %1935 = vmatprep.subr.bf16.mxu0 0
      %1936 = vmatpush1.bf16.msra.mxu0 0
      %1937 = vmatprep.subr.bf16.mxu0 0
      %1938 = vmatpush1.bf16.msra.mxu0 0
      %1939 = vmatprep.subr.bf16.mxu0 0
      %1940 = vmatpush1.bf16.msra.mxu0 0
      %1941 = vmatprep.subr.bf16.mxu0 0
      %1942 = vmatpush1.bf16.msra.mxu0 0
      %1943 = vmatprep.mubr.bf16.mxu0 0
      %1944 = vmatmul.mubr.bf16.gmra.mrb[0].mxu0 %v1855
      %v1945 = vpop.f32.mrb[0].mxu0
      %v1946 = vadd.f32 0.0, %v1945
      %v1947 = vpop.f32.mrb[0].mxu0
      %v1948 = vpop.f32.mrb[0].mxu0
      %v1949 = vadd.f32 0.0, %v1948
      %v1950 = vpop.f32.mrb[0].mxu0
      %1951 = vmatprep.mubr.bf16.mxu0 0
      %1952 = vmatmul.mubr.bf16.gmra.mrb[0].mxu0 %v1856
      %v1953 = vpop.f32.mrb[0].mxu0
      %v1954 = vadd.f32 0.0, %v1953
      %v1955 = vpop.f32.mrb[0].mxu0
      %v1956 = vpop.f32.mrb[0].mxu0
      %v1957 = vadd.f32 0.0, %v1956
      %v1958 = vpop.f32.mrb[0].mxu0
      %1959 = vmatprep.mubr.bf16.mxu0 0
      %1960 = vmatmul.mubr.bf16.gmra.mrb[0].mxu0 %v1857
      %v1961 = vpop.f32.mrb[0].mxu0
      %v1962 = vadd.f32 0.0, %v1961
      %v1963 = vpop.f32.mrb[0].mxu0
      %v1964 = vpop.f32.mrb[0].mxu0
      %v1965 = vadd.f32 0.0, %v1964
      %v1966 = vpop.f32.mrb[0].mxu0
      %1967 = vmatprep.mubr.bf16.mxu0 0
      %1968 = vmatmul.mubr.bf16.gmra.mrb[0].mxu0 %v1858
      %v1969 = vpop.f32.mrb[0].mxu0
      %v1970 = vadd.f32 0.0, %v1969
      %v1971 = vpop.f32.mrb[0].mxu0
      %v1972 = vpop.f32.mrb[0].mxu0
      %v1973 = vadd.f32 0.0, %v1972
      %v1974 = vpop.f32.mrb[0].mxu0
      %1975 = vdwg.mxu0
      %v1976 = vadd.f32 %v1694, %v1946
      %v1977 = vadd.f32 %v1695, %v1949
      %v1978 = vadd.f32 %v1696, %v1954
      %v1979 = vadd.f32 %v1697, %v1957
      %v1980 = vadd.f32 %v1698, %v1962
      %v1981 = vadd.f32 %v1699, %v1965
      %v1982 = vadd.f32 %v1700, %v1970
      %v1983 = vadd.f32 %v1701, %v1973
      %v1984 = vld [vmem:[%s1531] sm:$0xe]
      %v1985 = vld [vmem:[%s1531 + $0x8] sm:$0xe]
      %v1986 = vld [vmem:[%s1531 + $0x10] sm:$0xe]
      %v1987 = vld [vmem:[%s1531 + $0x18] sm:$0xe]
      %v1988 = vld [vmem:[%s1531 + $0x20] sm:$0xe]
      %v1989 = vld [vmem:[%s1531 + $0x28] sm:$0xe]
      %v1990 = vld [vmem:[%s1531 + $0x30] sm:$0xe]
      %v1991 = vld [vmem:[%s1531 + $0x38] sm:$0xe]
      %v2008 = vrot.slane %v1984, 5
      %v2009 = vrot.slane %v2008, 4
      %v2010 = vrot.slane %v1703, 5
      %v2011 = vsel %vm681, %v2009, %v2010
      %v2012 = vrot.slane %v1985, 5
      %v2013 = vrot.slane %v2012, 4
      %v2014 = vrot.slane %v1705, 5
      %v2015 = vsel %vm681, %v2013, %v2014
      %v2016 = vrot.slane %v1986, 5
      %v2017 = vrot.slane %v2016, 4
      %v2018 = vrot.slane %v1707, 5
      %v2019 = vsel %vm681, %v2017, %v2018
      %v2020 = vrot.slane %v1987, 5
      %v2021 = vrot.slane %v2020, 4
      %v2022 = vrot.slane %v1709, 5
      %v2023 = vsel %vm681, %v2021, %v2022
      %v2024 = vrot.slane %v1988, 5
      %v2025 = vrot.slane %v2024, 4
      %v2026 = vrot.slane %v1711, 5
      %v2027 = vsel %vm681, %v2025, %v2026
      %v2028 = vrot.slane %v1989, 5
      %v2029 = vrot.slane %v2028, 4
      %v2030 = vrot.slane %v1713, 5
      %v2031 = vsel %vm681, %v2029, %v2030
      %v2032 = vrot.slane %v1990, 5
      %v2033 = vrot.slane %v2032, 4
      %v2034 = vrot.slane %v1715, 5
      %v2035 = vsel %vm681, %v2033, %v2034
      %v2036 = vrot.slane %v1991, 5
      %v2037 = vrot.slane %v2036, 4
      %v2038 = vrot.slane %v1717, 5
      %v2039 = vsel %vm681, %v2037, %v2038
      %s2040 = scalar_lea.vmem %s1, 512
      %v2041 = vld [vmem:[%s2040] sm:$0xf]
      %v2042 = vld [vmem:[%s2040 + $0x4] sm:$0xf]
      %v2043 = vld [vmem:[%s2040 + $0x8] sm:$0xf]
      %v2044 = vld [vmem:[%s2040 + $0xc] sm:$0xf]
      %v2045 = vld [vmem:[%s2040 + $0x10] sm:$0xf]
      %v2046 = vld [vmem:[%s2040 + $0x14] sm:$0xf]
      %v2047 = vld [vmem:[%s2040 + $0x18] sm:$0xf]
      %v2048 = vld [vmem:[%s2040 + $0x1c] sm:$0xf]
      %v2049 = vld [vmem:[%s2040 + $0x20] sm:$0xf]
      %v2050 = vld [vmem:[%s2040 + $0x24] sm:$0xf]
      %v2051 = vld [vmem:[%s2040 + $0x28] sm:$0xf]
      %v2052 = vld [vmem:[%s2040 + $0x2c] sm:$0xf]
      %v2053 = vld [vmem:[%s2040 + $0x30] sm:$0xf]
      %v2054 = vld [vmem:[%s2040 + $0x34] sm:$0xf]
      %v2055 = vld [vmem:[%s2040 + $0x38] sm:$0xf]
      %v2056 = vld [vmem:[%s2040 + $0x3c] sm:$0xf]
      %v2057 = vunpack.c.l.b16 %v2011
      %v2058 = vunpack.c.l.b16 %v2015
      %v2059 = vunpack.c.l.b16 %v2019
      %v2060 = vunpack.c.l.b16 %v2023
      %v2061 = vunpack.c.l.b16 %v2027
      %v2062 = vunpack.c.l.b16 %v2031
      %v2063 = vunpack.c.l.b16 %v2035
      %v2064 = vunpack.c.l.b16 %v2039
      %v2065 = vpack.c.b16 %v2058, %v2057
      %v2066 = vpack.c.b16 %v2060, %v2059
      %v2067 = vpack.c.b16 %v2062, %v2061
      %v2068 = vpack.c.b16 %v2064, %v2063
      %v2089 = vunpack.c.l.b16 %v2041
      %v2090 = vunpack.c.l.b16 %v2042
      %v2091 = vunpack.c.l.b16 %v2043
      %v2092 = vunpack.c.l.b16 %v2044
      %v2093 = vunpack.c.l.b16 %v2045
      %v2094 = vunpack.c.l.b16 %v2046
      %v2095 = vunpack.c.l.b16 %v2047
      %v2096 = vunpack.c.l.b16 %v2048
      %v2097 = vunpack.c.l.b16 %v2049
      %v2098 = vunpack.c.l.b16 %v2050
      %v2099 = vunpack.c.l.b16 %v2051
      %v2100 = vunpack.c.l.b16 %v2052
      %v2101 = vunpack.c.l.b16 %v2053
      %v2102 = vunpack.c.l.b16 %v2054
      %v2103 = vunpack.c.l.b16 %v2055
      %v2104 = vunpack.c.l.b16 %v2056
      %v2105 = vpack.c.b16 %v2090, %v2089
      %v2106 = vpack.c.b16 %v2092, %v2091
      %v2107 = vpack.c.b16 %v2094, %v2093
      %v2108 = vpack.c.b16 %v2096, %v2095
      %v2109 = vpack.c.b16 %v2098, %v2097
      %v2110 = vpack.c.b16 %v2100, %v2099
      %v2111 = vpack.c.b16 %v2102, %v2101
      %v2112 = vpack.c.b16 %v2104, %v2103
      %2121 = vmatprep.subr.bf16.mxu0 0
      %2122 = vmatpush1.bf16.msra.mxu0 %v2105
      %2123 = vmatprep.subr.bf16.mxu0 0
      %2124 = vmatpush1.bf16.msra.mxu0 %v2106
      %2125 = vmatprep.subr.bf16.mxu0 0
      %2126 = vmatpush1.bf16.msra.mxu0 %v2107
      %2127 = vmatprep.subr.bf16.mxu0 0
      %2128 = vmatpush1.bf16.msra.mxu0 %v2108
      %2129 = vmatprep.subr.bf16.mxu0 0
      %2130 = vmatpush1.bf16.msra.mxu0 %v2109
      %2131 = vmatprep.subr.bf16.mxu0 0
      %2132 = vmatpush1.bf16.msra.mxu0 %v2110
      %2133 = vmatprep.subr.bf16.mxu0 0
      %2134 = vmatpush1.bf16.msra.mxu0 %v2111
      %2135 = vmatprep.subr.bf16.mxu0 0
      %2136 = vmatpush1.bf16.msra.mxu0 %v2112
      %2137 = vmatprep.subr.bf16.mxu0 0
      %2138 = vmatpush1.bf16.msra.mxu0 0
      %2139 = vmatprep.subr.bf16.mxu0 0
      %2140 = vmatpush1.bf16.msra.mxu0 0
      %2141 = vmatprep.subr.bf16.mxu0 0
      %2142 = vmatpush1.bf16.msra.mxu0 0
      %2143 = vmatprep.subr.bf16.mxu0 0
      %2144 = vmatpush1.bf16.msra.mxu0 0
      %2145 = vmatprep.subr.bf16.mxu0 0
      %2146 = vmatpush1.bf16.msra.mxu0 0
      %2147 = vmatprep.subr.bf16.mxu0 0
      %2148 = vmatpush1.bf16.msra.mxu0 0
      %2149 = vmatprep.subr.bf16.mxu0 0
      %2150 = vmatpush1.bf16.msra.mxu0 0
      %2151 = vmatprep.subr.bf16.mxu0 0
      %2152 = vmatpush1.bf16.msra.mxu0 0
      %2153 = vmatprep.mubr.bf16.mxu0 0
      %2154 = vmatmul.mubr.bf16.gmra.mrb[0].mxu0 %v2065
      %v2155 = vpop.f32.mrb[0].mxu0
      %v2156 = vadd.f32 0.0, %v2155
      %v2157 = vpop.f32.mrb[0].mxu0
      %v2158 = vpop.f32.mrb[0].mxu0
      %v2159 = vadd.f32 0.0, %v2158
      %v2160 = vpop.f32.mrb[0].mxu0
      %2161 = vmatprep.mubr.bf16.mxu0 0
      %2162 = vmatmul.mubr.bf16.gmra.mrb[0].mxu0 %v2066
      %v2163 = vpop.f32.mrb[0].mxu0
      %v2164 = vadd.f32 0.0, %v2163
      %v2165 = vpop.f32.mrb[0].mxu0
      %v2166 = vpop.f32.mrb[0].mxu0
      %v2167 = vadd.f32 0.0, %v2166
      %v2168 = vpop.f32.mrb[0].mxu0
      %2169 = vmatprep.mubr.bf16.mxu0 0
      %2170 = vmatmul.mubr.bf16.gmra.mrb[0].mxu0 %v2067
      %v2171 = vpop.f32.mrb[0].mxu0
      %v2172 = vadd.f32 0.0, %v2171
      %v2173 = vpop.f32.mrb[0].mxu0
      %v2174 = vpop.f32.mrb[0].mxu0
      %v2175 = vadd.f32 0.0, %v2174
      %v2176 = vpop.f32.mrb[0].mxu0
      %2177 = vmatprep.mubr.bf16.mxu0 0
      %2178 = vmatmul.mubr.bf16.gmra.mrb[0].mxu0 %v2068
      %v2179 = vpop.f32.mrb[0].mxu0
      %v2180 = vadd.f32 0.0, %v2179
      %v2181 = vpop.f32.mrb[0].mxu0
      %v2182 = vpop.f32.mrb[0].mxu0
      %v2183 = vadd.f32 0.0, %v2182
      %v2184 = vpop.f32.mrb[0].mxu0
      %2185 = vdwg.mxu0
      %v2186 = vadd.f32 %v1976, %v2156
      %v2187 = vadd.f32 %v1977, %v2159
      %v2188 = vadd.f32 %v1978, %v2164
      %v2189 = vadd.f32 %v1979, %v2167
      %v2190 = vadd.f32 %v1980, %v2172
      %v2191 = vadd.f32 %v1981, %v2175
      %v2192 = vadd.f32 %v1982, %v2180
      %v2193 = vadd.f32 %v1983, %v2183
      // Predicated region
      $region41: #{cand_bottleneck_block.10} parent=35 // pred_check
        %p2194 = pneg %p217
      $region42: #{cand_bottleneck_block.10} parent=35 // pred_check_branch
        %2196 = sbr.rel (%p2194) target = $region44
      $region43: #{cand_bottleneck_block.10} parent=35 // pred_region
        %v2197 = vld [vmem:[#allocation2] sm:$0x1]
        %v2198 = vadd.f32 %v2186, %v2187
        %v2199 = vadd.f32 %v2198, %v2188
        %v2200 = vadd.f32 %v2199, %v2189
        %v2201 = vadd.f32 %v2200, %v2190
        %v2202 = vadd.f32 %v2201, %v2191
        %v2203 = vadd.f32 %v2202, %v2192
        %v2204 = vadd.f32 %v2203, %v2193
        %v2205 = vrot.slane %v2204, 4
        %v2206 = vadd.f32 %v2204, %v2205
        %v2207 = vrot.slane %v2206, 2
        %v2208 = vadd.f32 %v2206, %v2207
        %v2209 = vrot.slane %v2208, 1
        %v2210 = vadd.f32 %v2208, %v2209
        %v2211 = vadd.f32 %v2197, %v2210
        %2212 = vst [vmem:[#allocation2] sm:$0x1] %v2211
        %v2213 = vld [vmem:[#allocation3] sm:$0x1]
        %v2214 = vmul.f32 %v2186, %v2186
        %v2215 = vmul.f32 %v2187, %v2187
        %v2216 = vmul.f32 %v2188, %v2188
        %v2217 = vmul.f32 %v2189, %v2189
        %v2218 = vmul.f32 %v2190, %v2190
        %v2219 = vmul.f32 %v2191, %v2191
        %v2220 = vmul.f32 %v2192, %v2192
        %v2221 = vmul.f32 %v2193, %v2193
        %v2222 = vadd.f32 %v2214, %v2215
        %v2223 = vadd.f32 %v2222, %v2216
        %v2224 = vadd.f32 %v2223, %v2217
        %v2225 = vadd.f32 %v2224, %v2218
        %v2226 = vadd.f32 %v2225, %v2219
        %v2227 = vadd.f32 %v2226, %v2220
        %v2228 = vadd.f32 %v2227, %v2221
        %v2229 = vrot.slane %v2228, 4
        %v2230 = vadd.f32 %v2228, %v2229
        %v2231 = vrot.slane %v2230, 2
        %v2232 = vadd.f32 %v2230, %v2231
        %v2233 = vrot.slane %v2232, 1
        %v2234 = vadd.f32 %v2232, %v2233
        %v2235 = vadd.f32 %v2213, %v2234
        %2236 = vst [vmem:[#allocation3] sm:$0x1] %v2235
      $region44: #{cand_bottleneck_block.10} parent=35 // pred_fallthru
        _
      %p2237 = scmp.eq.s32.totalorder %s19, 1
      // Predicated region
      $region45: #{cand_bottleneck_block.10} parent=35 // pred_check
        %p2238 = pneg %p2237
      $region46: #{cand_bottleneck_block.10} parent=35 // pred_check_branch
        %2240 = sbr.rel (%p2238) target = $region48
      $region47: #{cand_bottleneck_block.10} parent=35 // pred_region
        %v2241 = vld [vmem:[#allocation2] sm:$0x1]
        %v2242 = vmul.f32 %v2241, 0.0078125
        %v2243 = vld [vmem:[#allocation3] sm:$0x1]
        %v2244 = vmul.f32 %v2243, 0.0078125
        %v2245 = vmul.f32 %v2242, %v2242
        %v2246 = vsub.f32 %v2244, %v2245
        %v2247 = vmax.f32 %v2246, 0.0
        %v2248 = vadd.f32 %v2247, 1e-05
        %v2249 = vrsqrt.pop %v2248
        %v2250 = vld [vmem:[%s2] sm:$0x1]
        %v2251 = vmul.f32 %v2249, %v2250
        %v2253 = vlaneseq
        %v2254 = vshrl.u32 %v2253, 7
        %v2255 = vsub.s32 0, %v2254
        %v2256 = vrot.slane %v2242, %v2255
        %v2258 = vsub.f32 %v2186, %v2256
        %v2259 = vsub.f32 %v2187, %v2256
        %v2260 = vsub.f32 %v2188, %v2256
        %v2261 = vsub.f32 %v2189, %v2256
        %v2262 = vsub.f32 %v2190, %v2256
        %v2263 = vsub.f32 %v2191, %v2256
        %v2264 = vsub.f32 %v2192, %v2256
        %v2265 = vsub.f32 %v2193, %v2256
        %v2267 = vlaneseq
        %v2268 = vshrl.u32 %v2267, 7
        %v2269 = vsub.s32 0, %v2268
        %v2270 = vrot.slane %v2251, %v2269
        %v2272 = vmul.f32 %v2258, %v2270
        %v2273 = vmul.f32 %v2259, %v2270
        %v2274 = vmul.f32 %v2260, %v2270
        %v2275 = vmul.f32 %v2261, %v2270
        %v2276 = vmul.f32 %v2262, %v2270
        %v2277 = vmul.f32 %v2263, %v2270
        %v2278 = vmul.f32 %v2264, %v2270
        %v2279 = vmul.f32 %v2265, %v2270
        %v2280 = vld [vmem:[%s3] sm:$0x1]
        %v2282 = vlaneseq
        %v2283 = vshrl.u32 %v2282, 7
        %v2284 = vsub.s32 0, %v2283
        %v2285 = vrot.slane %v2280, %v2284
        %v2287 = vadd.f32 %v2272, %v2285
        %v2288 = vadd.f32 %v2273, %v2285
        %v2289 = vadd.f32 %v2274, %v2285
        %v2290 = vadd.f32 %v2275, %v2285
        %v2291 = vadd.f32 %v2276, %v2285
        %v2292 = vadd.f32 %v2277, %v2285
        %v2293 = vadd.f32 %v2278, %v2285
        %v2294 = vadd.f32 %v2279, %v2285
        %v2295 = vmax.f32 %v2287, 0.0
        %v2296 = vmax.f32 %v2288, 0.0
        %v2297 = vmax.f32 %v2289, 0.0
        %v2298 = vmax.f32 %v2290, 0.0
        %v2299 = vmax.f32 %v2291, 0.0
        %v2300 = vmax.f32 %v2292, 0.0
        %v2301 = vmax.f32 %v2293, 0.0
        %v2302 = vmax.f32 %v2294, 0.0
        %v2303 = vpack.c.bf16 %v2296, %v2295
        %v2304 = vpack.c.bf16 %v2298, %v2297
        %v2305 = vpack.c.bf16 %v2300, %v2299
        %v2306 = vpack.c.bf16 %v2302, %v2301
        %v2311 = vunpack.c.l.b16 %v2303
        %v2312 = vunpack.c.h.b16 %v2303
        %v2313 = vunpack.c.l.b16 %v2304
        %v2314 = vunpack.c.h.b16 %v2304
        %v2315 = vunpack.c.l.b16 %v2305
        %v2316 = vunpack.c.h.b16 %v2305
        %v2317 = vunpack.c.l.b16 %v2306
        %v2318 = vunpack.c.h.b16 %v2306
        %v2319 = vpack.c.b16 %v2311, %v2311
        %v2320 = vpack.c.b16 %v2312, %v2312
        %v2321 = vpack.c.b16 %v2313, %v2313
        %v2322 = vpack.c.b16 %v2314, %v2314
        %v2323 = vpack.c.b16 %v2315, %v2315
        %v2324 = vpack.c.b16 %v2316, %v2316
        %v2325 = vpack.c.b16 %v2317, %v2317
        %v2326 = vpack.c.b16 %v2318, %v2318
        %2335 = vst [vmem:[%s213] sm:$0xf] %v2319
        %2336 = vst [vmem:[%s213 + $0x4] sm:$0xf] %v2320
        %2337 = vst [vmem:[%s213 + $0x8] sm:$0xf] %v2321
        %2338 = vst [vmem:[%s213 + $0xc] sm:$0xf] %v2322
        %2339 = vst [vmem:[%s213 + $0x10] sm:$0xf] %v2323
        %2340 = vst [vmem:[%s213 + $0x14] sm:$0xf] %v2324
        %2341 = vst [vmem:[%s213 + $0x18] sm:$0xf] %v2325
        %2342 = vst [vmem:[%s213 + $0x1c] sm:$0xf] %v2326
      $region48: #{cand_bottleneck_block.10} parent=35 // pred_fallthru
        _
      %s2343 = smul.u32 %s20, %s19
      %s2344 = smul.u32 8, %s2343
      %p2345 = scmp.lt.s32.totalorder %s2344, 15
      %s2346 = scalar_select %p2345, %s2344, 15
      %s2347 = smul.addr %s2346, 4
      %s2348 = scalar_lea.vmem %s4, %s2347
      // Predicated region
      $region49: #{cand_bottleneck_block.10} parent=35 // pred_check
        %p2349 = pneg %p136
      $region50: #{cand_bottleneck_block.10} parent=35 // pred_check_branch
        %2351 = sbr.rel (%p2349) target = $region52
      $region51: #{cand_bottleneck_block.10} parent=35 // pred_region
        %s2352 = smul.u32 %s20, %s19
        %s2353 = smul.u32 8, %s2352
      $region52: #{cand_bottleneck_block.10} parent=35 // pred_fallthru
        _
    $region36: #{cand_bottleneck_block.10} parent=5 // pred_fallthru
      _
    %p2354 = scmp.le.s32.totalorder 2, %s10
    // Predicated region
    $region53: #{cand_bottleneck_block.10} parent=5 // pred_check
      %p2355 = pneg %p2354
    $region54: #{cand_bottleneck_block.10} parent=5 // pred_check_branch
      %2357 = sbr.rel (%p2355) target = $region56
    $region55: #{cand_bottleneck_block.10} parent=5 // pred_region
      %s2358 = ssub.s32 %s10, 2
      // Predicated region
      $region57: #{cand_bottleneck_block.10} parent=55 // pred_check
        %p2359 = pneg %p142
      $region58: #{cand_bottleneck_block.10} parent=55 // pred_check_branch
        %2361 = sbr.rel (%p2359) target = $region60
      $region59: #{cand_bottleneck_block.10} parent=55 // pred_region
        %s2362 = smul.u32 %s22, %s21
        %s2363 = smul.u32 8, %s2362
        %p2364 = scmp.lt.s32.totalorder %s2363, 15
        %s2365 = scalar_select %p2364, %s2363, 15
        %s2366 = smul.addr %s2365, 4
        %s2367 = scalar_lea.vmem %s4, %s2366
      $region60: #{cand_bottleneck_block.10} parent=55 // pred_fallthru
        _
    $region56: #{cand_bottleneck_block.10} parent=5 // pred_fallthru
      _
  $region6: #{cand_bottleneck_block.10} parent=0 // loop_footer
    %s14 = sadd.s32 1, %s10
  $region7: #{cand_bottleneck_block.10} parent=0 // loop_footer_branch
    %9 = sbr.rel target = $region3
  $region8: #{cand_bottleneck_block.10} parent=0 // loop_exit
    _

</llo_original>
